<compile_context>
chip_gen: v6e
topology: v6e:2x2x1
jax: 0.10.0
libtpu: 0.0.40
codegen_flags: <defaults>
</compile_context>

<pallas_src>
import jax
import jax.numpy as jnp
from jax.experimental import pallas as pl
from jax.experimental.pallas import tpu as pltpu

DECODER_DIMS = [2048, 1024, 512, 256, 128, 64, 32, 3]  # num_channels = 3
_LANE = 128


def init_decoder_params(key):
    """Deterministic params with the module's ConvTranspose2d shapes (Cin,Cout,3,3)."""
    params = []
    for cin, cout in zip(DECODER_DIMS[:-1], DECODER_DIMS[1:]):
        key, kw, kb = jax.random.split(key, 3)
        bound = 1.0 / jnp.sqrt(cin * 9.0)
        w = jax.random.uniform(kw, (cin, cout, 3, 3), jnp.float32, -bound, bound)
        b = jax.random.uniform(kb, (cout,), jnp.float32, -bound, bound)
        params.append((w, b))
    return params


def prepare_decoder_params(params):
    """One-time preprocessing, hoisted out of the per-call path.

    - centre tap of each 3x3 ConvTranspose2d kernel -> (Cin, Cout), cast to bf16
    - all biases packed into one (1, N) f32 buffer, each lane-aligned (pad to 128)
    Returns (weights_bf16_tuple, bias_packed, bias_offsets).
    """
    weights = tuple(w[:, :, 1, 1].astype(jnp.bfloat16) for w, _ in params)
    chunks, offsets, off = [], [], 0
    for _, b in params:
        cout = b.shape[0]
        pad = (-cout) % _LANE
        chunks.append(jnp.pad(b.astype(jnp.float32), (0, pad)))
        offsets.append(off)
        off += cout + pad
    bias_packed = jnp.concatenate(chunks).reshape(1, -1)
    return weights, bias_packed, tuple(offsets)


def _make_decoder_kernel(bias_offsets, dims):
    n_layers = len(dims) - 1

    def kernel(feat_ref, bias_ref, *rest):
        """feat_ref : (B, Hf*Wf, 2048) f32   backbone feature map (spatial flat)
        bias_ref : (1, N_pad)        f32   all biases, lane-padded
        rest     : w1..w7 bf16 (Cin, Cout) centre taps, then out_ref (B, 3) f32
        """
        out_ref = rest[-1]
        w_refs = rest[:-1]

        # ResNet's AdaptiveAvgPool2d((1,1)) -> mean over flattened spatial axis.
        x = jnp.mean(feat_ref[...], axis=1)                    # (B, 2048) f32

        for l in range(n_layers):
            w = w_refs[l][...]                                 # (Cin, Cout) bf16
            cout = dims[l + 1]
            off = bias_offsets[l]
            b = bias_ref[:, off:off + cout]                    # (1, Cout) f32
            y = jnp.dot(x.astype(jnp.bfloat16), w,
                        preferred_element_type=jnp.float32) + b
            if l < n_layers - 1:
                x = jnp.maximum(y, 0.0)                        # ReLU
            else:
                x = jnp.tanh(y)                                # final Tanh
        out_ref[...] = x                                       # (B, 3)

    return kernel


def _full_spec(a):
    nd = a.ndim
    return pl.BlockSpec(a.shape, lambda i, _nd=nd: (0,) * _nd)


def multimodal_guided_diffusion_decode(backbone_feat_nchw, prepared):
    """backbone_feat_nchw: (B, 2048, Hf, Wf) — ResNet50 layer4 output (NCHW).

    Runs avgpool + the full decoder inside one Pallas kernel. Returns (B, 3, 1, 1).
    """
    weights, bias_packed, bias_offsets = prepared
    B, C0, Hf, Wf = backbone_feat_nchw.shape
    assert C0 == DECODER_DIMS[0]
    # NCHW -> (B, Hf*Wf, C0): channels on the lane axis.
    feat = jnp.transpose(backbone_feat_nchw, (0, 2, 3, 1)).reshape(B, Hf * Wf, C0)

    flat_inputs = [feat, bias_packed, *weights]
    kernel = _make_decoder_kernel(bias_offsets, DECODER_DIMS)

    out = pl.pallas_call(
        kernel,
        out_shape=jax.ShapeDtypeStruct((B, DECODER_DIMS[-1]), jnp.float32),
        grid=(1,),
        in_specs=[_full_spec(a) for a in flat_inputs],
        out_specs=pl.BlockSpec((B, DECODER_DIMS[-1]), lambda i: (0, 0)),
        compiler_params=pltpu.CompilerParams(
            dimension_semantics=("arbitrary",),
            vmem_limit_bytes=32 * 1024 * 1024,   # bf16 weights 2x-buffered ~11 MiB
        ),
    )(*flat_inputs)
    return out.reshape(B, DECODER_DIMS[-1], 1, 1)


def _reference(backbone_feat_nchw, prepared):
    """Pure-JAX reference mirroring the kernel's bf16-weight numerics."""
    weights, bias_packed, bias_offsets = prepared
    x = jnp.mean(backbone_feat_nchw, axis=(2, 3))              # avgpool -> (B, 2048)
    n = len(weights)
    for l, w in enumerate(weights):
        cout = DECODER_DIMS[l + 1]
        b = bias_packed[:, bias_offsets[l]:bias_offsets[l] + cout]
        y = jnp.dot(x.astype(jnp.bfloat16).astype(jnp.float32),
                    w.astype(jnp.float32),
                    precision=jax.lax.Precision.HIGHEST) + b
        x = jnp.maximum(y, 0.0) if l < n - 1 else jnp.tanh(y)
    return x.reshape(x.shape[0], -1, 1, 1)


if __name__ == "__main__":
    key = jax.random.PRNGKey(0)
    k_feat, k_params = jax.random.split(key)

    B, Hf, Wf = 2, 2, 2
    # TODO(synk): the pretrained ResNet50 trunk (children[:-1] up to layer4) is not
    # reproduced (no checkpoint loading allowed); this array stands for its layer4
    # output feature map. The avgpool + the full decoder run inside the Pallas kernel.
    backbone_feat = jax.random.normal(k_feat, (B, DECODER_DIMS[0], Hf, Wf), jnp.float32)

    params = init_decoder_params(k_params)
    prepared = prepare_decoder_params(params)   # hoisted, one-time: centre tap + bf16 + bias pack

    out = multimodal_guided_diffusion_decode(backbone_feat, prepared)
    out = jax.block_until_ready(out)

    ref = _reference(backbone_feat, prepared)
    assert out.shape == (B, 3, 1, 1), out.shape
    assert jnp.allclose(out, ref, rtol=1e-3, atol=1e-3), (out, ref)
    print("KERNEL_OK")
</pallas_src>

<mosaic_0001>
module attributes {stable_mosaic.version = 11 : i64} {
  func.func @kernel(%arg0: i32, %arg1: memref<2x4x2048xf32, #tpu.memory_space<vmem>>, %arg2: memref<1x2304xf32, #tpu.memory_space<vmem>>, %arg3: memref<2048x1024xbf16, #tpu.memory_space<vmem>>, %arg4: memref<1024x512xbf16, #tpu.memory_space<vmem>>, %arg5: memref<512x256xbf16, #tpu.memory_space<vmem>>, %arg6: memref<256x128xbf16, #tpu.memory_space<vmem>>, %arg7: memref<128x64xbf16, #tpu.memory_space<vmem>>, %arg8: memref<64x32xbf16, #tpu.memory_space<vmem>>, %arg9: memref<32x3xbf16, #tpu.memory_space<vmem>>, %arg10: memref<2x3xf32, #tpu.memory_space<vmem>>) attributes {dimension_semantics = [#tpu.dimension_semantics<arbitrary>], iteration_bounds = array<i64: 1>, scalar_prefetch = 0 : i64, scratch_operands = 0 : i64, tpu.core_type = #tpu.core_type<tc>, window_params = [{pipeline_mode = #tpu.pipeline_mode<synchronous>, transform_indices = @transform_0, window_bounds = array<i64: 2, 4, 2048>}, {pipeline_mode = #tpu.pipeline_mode<synchronous>, transform_indices = @transform_1, window_bounds = array<i64: 1, 2304>}, {pipeline_mode = #tpu.pipeline_mode<synchronous>, transform_indices = @transform_2, window_bounds = array<i64: 2048, 1024>}, {pipeline_mode = #tpu.pipeline_mode<synchronous>, transform_indices = @transform_3, window_bounds = array<i64: 1024, 512>}, {pipeline_mode = #tpu.pipeline_mode<synchronous>, transform_indices = @transform_4, window_bounds = array<i64: 512, 256>}, {pipeline_mode = #tpu.pipeline_mode<synchronous>, transform_indices = @transform_5, window_bounds = array<i64: 256, 128>}, {pipeline_mode = #tpu.pipeline_mode<synchronous>, transform_indices = @transform_6, window_bounds = array<i64: 128, 64>}, {pipeline_mode = #tpu.pipeline_mode<synchronous>, transform_indices = @transform_7, window_bounds = array<i64: 64, 32>}, {pipeline_mode = #tpu.pipeline_mode<synchronous>, transform_indices = @transform_8, window_bounds = array<i64: 32, 3>}, {pipeline_mode = #tpu.pipeline_mode<synchronous>, transform_indices = @transform_9, window_bounds = array<i64: 2, 3>}]} {
    %c0 = arith.constant 0 : index
    %c0_0 = arith.constant 0 : index
    %c0_1 = arith.constant 0 : index
    %0 = vector.load %arg1[%c0, %c0_0, %c0_1] : memref<2x4x2048xf32, #tpu.memory_space<vmem>>, vector<2x4x2048xf32>
    %cst = arith.constant dense<0.000000e+00> : vector<2x2048xf32>
    %1 = vector.multi_reduction <add>, %0, %cst [1] : vector<2x4x2048xf32> to vector<2x2048xf32>
    %cst_2 = arith.constant 4.000000e+00 : f32
    %2 = vector.broadcast %cst_2 : f32 to vector<2x2048xf32>
    %3 = arith.divf %1, %2 : vector<2x2048xf32>
    %c0_3 = arith.constant 0 : index
    %c0_4 = arith.constant 0 : index
    %4 = vector.load %arg3[%c0_3, %c0_4] : memref<2048x1024xbf16, #tpu.memory_space<vmem>>, vector<2048x1024xbf16>
    %c0_5 = arith.constant 0 : index
    %c0_6 = arith.constant 0 : index
    %5 = vector.load %arg2[%c0_5, %c0_6] : memref<1x2304xf32, #tpu.memory_space<vmem>>, vector<1x1024xf32>
    %6 = arith.truncf %3 : vector<2x2048xf32> to vector<2x2048xbf16>
    %cst_7 = arith.constant dense<0.000000e+00> : vector<2x1024xf32>
    %7 = tpu.matmul %6, %4, %cst_7 {dimension_numbers = #tpu.dot_dimension_numbers<[1], [0], [0], [1], [0, 0, 1, 1], [], []>} : vector<2x2048xbf16>, vector<2048x1024xbf16>, vector<2x1024xf32> -> vector<2x1024xf32>
    %8 = vector.broadcast %5 : vector<1x1024xf32> to vector<2x1024xf32>
    %9 = arith.addf %7, %8 : vector<2x1024xf32>
    %cst_8 = arith.constant 0.000000e+00 : f32
    %10 = vector.broadcast %cst_8 : f32 to vector<2x1024xf32>
    %11 = arith.maximumf %9, %10 : vector<2x1024xf32>
    %c0_9 = arith.constant 0 : index
    %c0_10 = arith.constant 0 : index
    %12 = vector.load %arg4[%c0_9, %c0_10] : memref<1024x512xbf16, #tpu.memory_space<vmem>>, vector<1024x512xbf16>
    %c0_11 = arith.constant 0 : index
    %c1024 = arith.constant 1024 : index
    %13 = vector.load %arg2[%c0_11, %c1024] : memref<1x2304xf32, #tpu.memory_space<vmem>>, vector<1x512xf32>
    %14 = arith.truncf %11 : vector<2x1024xf32> to vector<2x1024xbf16>
    %cst_12 = arith.constant dense<0.000000e+00> : vector<2x512xf32>
    %15 = tpu.matmul %14, %12, %cst_12 {dimension_numbers = #tpu.dot_dimension_numbers<[1], [0], [0], [1], [0, 0, 1, 1], [], []>} : vector<2x1024xbf16>, vector<1024x512xbf16>, vector<2x512xf32> -> vector<2x512xf32>
    %16 = vector.broadcast %13 : vector<1x512xf32> to vector<2x512xf32>
    %17 = arith.addf %15, %16 : vector<2x512xf32>
    %cst_13 = arith.constant 0.000000e+00 : f32
    %18 = vector.broadcast %cst_13 : f32 to vector<2x512xf32>
    %19 = arith.maximumf %17, %18 : vector<2x512xf32>
    %c0_14 = arith.constant 0 : index
    %c0_15 = arith.constant 0 : index
    %20 = vector.load %arg5[%c0_14, %c0_15] : memref<512x256xbf16, #tpu.memory_space<vmem>>, vector<512x256xbf16>
    %c0_16 = arith.constant 0 : index
    %c1536 = arith.constant 1536 : index
    %21 = vector.load %arg2[%c0_16, %c1536] : memref<1x2304xf32, #tpu.memory_space<vmem>>, vector<1x256xf32>
    %22 = arith.truncf %19 : vector<2x512xf32> to vector<2x512xbf16>
    %cst_17 = arith.constant dense<0.000000e+00> : vector<2x256xf32>
    %23 = tpu.matmul %22, %20, %cst_17 {dimension_numbers = #tpu.dot_dimension_numbers<[1], [0], [0], [1], [0, 0, 1, 1], [], []>} : vector<2x512xbf16>, vector<512x256xbf16>, vector<2x256xf32> -> vector<2x256xf32>
    %24 = vector.broadcast %21 : vector<1x256xf32> to vector<2x256xf32>
    %25 = arith.addf %23, %24 : vector<2x256xf32>
    %cst_18 = arith.constant 0.000000e+00 : f32
    %26 = vector.broadcast %cst_18 : f32 to vector<2x256xf32>
    %27 = arith.maximumf %25, %26 : vector<2x256xf32>
    %c0_19 = arith.constant 0 : index
    %c0_20 = arith.constant 0 : index
    %28 = vector.load %arg6[%c0_19, %c0_20] : memref<256x128xbf16, #tpu.memory_space<vmem>>, vector<256x128xbf16>
    %c0_21 = arith.constant 0 : index
    %c1792 = arith.constant 1792 : index
    %29 = vector.load %arg2[%c0_21, %c1792] : memref<1x2304xf32, #tpu.memory_space<vmem>>, vector<1x128xf32>
    %30 = arith.truncf %27 : vector<2x256xf32> to vector<2x256xbf16>
    %cst_22 = arith.constant dense<0.000000e+00> : vector<2x128xf32>
    %31 = tpu.matmul %30, %28, %cst_22 {dimension_numbers = #tpu.dot_dimension_numbers<[1], [0], [0], [1], [0, 0, 1, 1], [], []>} : vector<2x256xbf16>, vector<256x128xbf16>, vector<2x128xf32> -> vector<2x128xf32>
    %32 = vector.broadcast %29 : vector<1x128xf32> to vector<2x128xf32>
    %33 = arith.addf %31, %32 : vector<2x128xf32>
    %cst_23 = arith.constant 0.000000e+00 : f32
    %34 = vector.broadcast %cst_23 : f32 to vector<2x128xf32>
    %35 = arith.maximumf %33, %34 : vector<2x128xf32>
    %c0_24 = arith.constant 0 : index
    %c0_25 = arith.constant 0 : index
    %36 = vector.load %arg7[%c0_24, %c0_25] : memref<128x64xbf16, #tpu.memory_space<vmem>>, vector<128x64xbf16>
    %c0_26 = arith.constant 0 : index
    %c1920 = arith.constant 1920 : index
    %37 = vector.load %arg2[%c0_26, %c1920] : memref<1x2304xf32, #tpu.memory_space<vmem>>, vector<1x64xf32>
    %38 = arith.truncf %35 : vector<2x128xf32> to vector<2x128xbf16>
    %cst_27 = arith.constant dense<0.000000e+00> : vector<2x64xf32>
    %39 = tpu.matmul %38, %36, %cst_27 {dimension_numbers = #tpu.dot_dimension_numbers<[1], [0], [0], [1], [0, 0, 1, 1], [], []>} : vector<2x128xbf16>, vector<128x64xbf16>, vector<2x64xf32> -> vector<2x64xf32>
    %40 = vector.broadcast %37 : vector<1x64xf32> to vector<2x64xf32>
    %41 = arith.addf %39, %40 : vector<2x64xf32>
    %cst_28 = arith.constant 0.000000e+00 : f32
    %42 = vector.broadcast %cst_28 : f32 to vector<2x64xf32>
    %43 = arith.maximumf %41, %42 : vector<2x64xf32>
    %c0_29 = arith.constant 0 : index
    %c0_30 = arith.constant 0 : index
    %44 = vector.load %arg8[%c0_29, %c0_30] : memref<64x32xbf16, #tpu.memory_space<vmem>>, vector<64x32xbf16>
    %c0_31 = arith.constant 0 : index
    %c2048 = arith.constant 2048 : index
    %45 = vector.load %arg2[%c0_31, %c2048] : memref<1x2304xf32, #tpu.memory_space<vmem>>, vector<1x32xf32>
    %46 = arith.truncf %43 : vector<2x64xf32> to vector<2x64xbf16>
    %cst_32 = arith.constant dense<0.000000e+00> : vector<2x32xf32>
    %47 = tpu.matmul %46, %44, %cst_32 {dimension_numbers = #tpu.dot_dimension_numbers<[1], [0], [0], [1], [0, 0, 1, 1], [], []>} : vector<2x64xbf16>, vector<64x32xbf16>, vector<2x32xf32> -> vector<2x32xf32>
    %48 = vector.broadcast %45 : vector<1x32xf32> to vector<2x32xf32>
    %49 = arith.addf %47, %48 : vector<2x32xf32>
    %cst_33 = arith.constant 0.000000e+00 : f32
    %50 = vector.broadcast %cst_33 : f32 to vector<2x32xf32>
    %51 = arith.maximumf %49, %50 : vector<2x32xf32>
    %c0_34 = arith.constant 0 : index
    %c0_35 = arith.constant 0 : index
    %52 = vector.load %arg9[%c0_34, %c0_35] : memref<32x3xbf16, #tpu.memory_space<vmem>>, vector<32x3xbf16>
    %c0_36 = arith.constant 0 : index
    %c2176 = arith.constant 2176 : index
    %53 = vector.load %arg2[%c0_36, %c2176] : memref<1x2304xf32, #tpu.memory_space<vmem>>, vector<1x3xf32>
    %54 = arith.truncf %51 : vector<2x32xf32> to vector<2x32xbf16>
    %cst_37 = arith.constant dense<0.000000e+00> : vector<2x3xf32>
    %55 = tpu.matmul %54, %52, %cst_37 {dimension_numbers = #tpu.dot_dimension_numbers<[1], [0], [0], [1], [0, 0, 1, 1], [], []>} : vector<2x32xbf16>, vector<32x3xbf16>, vector<2x3xf32> -> vector<2x3xf32>
    %56 = vector.broadcast %53 : vector<1x3xf32> to vector<2x3xf32>
    %57 = arith.addf %55, %56 : vector<2x3xf32>
    %58 = math.tanh %57 : vector<2x3xf32>
    %c0_38 = arith.constant 0 : index
    %c0_39 = arith.constant 0 : index
    %59 = vector.load %arg10[%c0_38, %c0_39] : memref<2x3xf32, #tpu.memory_space<vmem>>, vector<2x3xf32>
    tpu.vector_store %arg10[%c0_38, %c0_39], %58 {strides = array<i32>} : memref<2x3xf32, #tpu.memory_space<vmem>>, vector<2x3xf32>,
    return
  }
  func.func @transform_0(%arg0: i32) -> (i32, i32, i32) {
    %c0_i32 = arith.constant 0 : i32
    %c0_i32_0 = arith.constant 0 : i32
    %c0_i32_1 = arith.constant 0 : i32
    %c0_i32_2 = arith.constant 0 : i32
    return %c0_i32, %c0_i32_0, %c0_i32_1 : i32, i32, i32
  }
  func.func @transform_1(%arg0: i32) -> (i32, i32) {
    %c0_i32 = arith.constant 0 : i32
    %c0_i32_0 = arith.constant 0 : i32
    %c0_i32_1 = arith.constant 0 : i32
    return %c0_i32, %c0_i32_0 : i32, i32
  }
  func.func @transform_2(%arg0: i32) -> (i32, i32) {
    %c0_i32 = arith.constant 0 : i32
    %c0_i32_0 = arith.constant 0 : i32
    %c0_i32_1 = arith.constant 0 : i32
    return %c0_i32, %c0_i32_0 : i32, i32
  }
  func.func @transform_3(%arg0: i32) -> (i32, i32) {
    %c0_i32 = arith.constant 0 : i32
    %c0_i32_0 = arith.constant 0 : i32
    %c0_i32_1 = arith.constant 0 : i32
    return %c0_i32, %c0_i32_0 : i32, i32
  }
  func.func @transform_4(%arg0: i32) -> (i32, i32) {
    %c0_i32 = arith.constant 0 : i32
    %c0_i32_0 = arith.constant 0 : i32
    %c0_i32_1 = arith.constant 0 : i32
    return %c0_i32, %c0_i32_0 : i32, i32
  }
  func.func @transform_5(%arg0: i32) -> (i32, i32) {
    %c0_i32 = arith.constant 0 : i32
    %c0_i32_0 = arith.constant 0 : i32
    %c0_i32_1 = arith.constant 0 : i32
    return %c0_i32, %c0_i32_0 : i32, i32
  }
  func.func @transform_6(%arg0: i32) -> (i32, i32) {
    %c0_i32 = arith.constant 0 : i32
    %c0_i32_0 = arith.constant 0 : i32
    %c0_i32_1 = arith.constant 0 : i32
    return %c0_i32, %c0_i32_0 : i32, i32
  }
  func.func @transform_7(%arg0: i32) -> (i32, i32) {
    %c0_i32 = arith.constant 0 : i32
    %c0_i32_0 = arith.constant 0 : i32
    %c0_i32_1 = arith.constant 0 : i32
    return %c0_i32, %c0_i32_0 : i32, i32
  }
  func.func @transform_8(%arg0: i32) -> (i32, i32) {
    %c0_i32 = arith.constant 0 : i32
    %c0_i32_0 = arith.constant 0 : i32
    %c0_i32_1 = arith.constant 0 : i32
    return %c0_i32, %c0_i32_0 : i32, i32
  }
  func.func @transform_9(%arg0: i32) -> (i32, i32) {
    %c0_i32 = arith.constant 0 : i32
    %c0_i32_0 = arith.constant 0 : i32
    %c0_i32_1 = arith.constant 0 : i32
    return %c0_i32, %c0_i32_0 : i32, i32
  }
}

</mosaic_0001>

<llo_original>
// kernel: tpu_custom_call.1
$region0: #{tpu_custom_call.1}
  #allocation0 [shape = 'u32[]', space=smem, size = 0x4, offset = 0x4, fixed_abs, tag = 'smem constant byte address 0x4 - core index']
  #allocation1 [shape = 'u32[144,128]{1,0:T(1,128)}', space=vmem, size = 0x12000, scoped, tag = 'internal scratch']
  %s0 = inlined_call_operand.hbm [shape: f32[2,4,2048], index: 0, kind: input, shape index: {}]
  %s1 = inlined_call_operand.hbm [shape: f32[1,2304], index: 1, kind: input, shape index: {}]
  %s2 = inlined_call_operand.hbm [shape: bf16[2048,1024], index: 2, kind: input, shape index: {}]
  %s3 = inlined_call_operand.hbm [shape: bf16[1024,512], index: 3, kind: input, shape index: {}]
  %s4 = inlined_call_operand.hbm [shape: bf16[512,256], index: 4, kind: input, shape index: {}]
  %s5 = inlined_call_operand.hbm [shape: bf16[256,128], index: 5, kind: input, shape index: {}]
  %s6 = inlined_call_operand.vmem [shape: bf16[128,64], index: 6, kind: input, shape index: {}]
  %s7 = inlined_call_operand.vmem [shape: bf16[64,32], index: 7, kind: input, shape index: {}]
  %s8 = inlined_call_operand.vmem [shape: bf16[32,3], index: 8, kind: input, shape index: {}]
  %s9 = inlined_call_operand.hbm [shape: f32[2,3], index: 9, kind: output, shape index: {}]
  %s10 = sld [smem:[#allocation0]]
  $region70: #{tpu_custom_call.1} parent=0
    _
  %s12 = ssub.s32 1, %s10
  %s13 = scalar_select 0, %s12, %s10
  $region1: #{tpu_custom_call.1} parent=0
    #allocation2 [shape = 'u8[65536]{0}', space=vmem, size = 0x10000, scoped, tag = 'input window, operand 0, single buffered']
    #allocation3 [shape = 's32[1]{0}', space=sflag, size = 0x4, scoped, tag = 'scoped memory for tpu_custom_call.1']
    #allocation4 [shape = 's32[1]{0}', space=sflag, size = 0x4, scoped, tag = 'scoped memory for tpu_custom_call.1']
    #allocation5 [shape = 'u8[9216]{0}', space=vmem, size = 0x2400, scoped, tag = 'input window, operand 1, single buffered']
    #allocation6 [shape = 's32[1]{0}', space=sflag, size = 0x4, scoped, tag = 'scoped memory for tpu_custom_call.1']
    #allocation7 [shape = 'u8[4194304]{0}', space=vmem, size = 0x400000, scoped, tag = 'input window, operand 2, single buffered']
    #allocation8 [shape = 'u8[1048576]{0}', space=vmem, size = 0x100000, scoped, tag = 'input window, operand 3, single buffered']
    #allocation9 [shape = 's32[1]{0}', space=sflag, size = 0x4, scoped, tag = 'scoped memory for tpu_custom_call.1']
    #allocation10 [shape = 'u8[262144]{0}', space=vmem, size = 0x40000, scoped, tag = 'input window, operand 4, single buffered']
    #allocation11 [shape = 'u8[65536]{0}', space=vmem, size = 0x10000, scoped, tag = 'input window, operand 5, single buffered']
    #allocation12 [shape = 's32[1]{0}', space=sflag, size = 0x4, scoped, tag = 'scoped memory for tpu_custom_call.1']
    #allocation13 [shape = 'u8[1024]{0}', space=vmem, size = 0x400, scoped, tag = 'output window, operand 0, single buffered']
    %14 = vsyncpa [#allocation3], 0
    %15 = vsyncpa [#allocation6], 0
    %16 = vsyncpa [#allocation9], 0
    %17 = vsyncpa [#allocation12], 0
    %18 = vsyncpa [#allocation4], 0
    // Predicated region
    $region2: #{tpu_custom_call.1} parent=1 // pred_check
      _
    $region3: #{tpu_custom_call.1} parent=1 // pred_check_branch
      %20 = sbr.rel (0) target = $region5
    $region4: #{tpu_custom_call.1} parent=1 // pred_region
      %s22 = ssub.s32 2048, 2048
      %23 = vsyncadd [#allocation3], %s22
      %s24 = sshll.u32 [#allocation2], 4
      %s25 = int_to_ptr.vmem [resolvable:$true] %s24
      %30 = dma.hbm_to_vmem [thread:$0]  %s0, 2048, %s25, [#allocation3], 1024, 1024, 64
    $region5: #{tpu_custom_call.1} parent=1 // pred_fallthru
      _
    // Predicated region
    $region6: #{tpu_custom_call.1} parent=1 // pred_check
      _
    $region7: #{tpu_custom_call.1} parent=1 // pred_check_branch
      %32 = sbr.rel (0) target = $region9
    $region8: #{tpu_custom_call.1} parent=1 // pred_region
      %s34 = ssub.s32 288, 288
      %35 = vsyncadd [#allocation6], %s34
      %s37 = sshll.u32 [#allocation5], 4
      %s38 = int_to_ptr.vmem [resolvable:$true] %s37
      %40 = dma.hbm_to_vmem [thread:$0]  %s1, 288, %s38, [#allocation6]
    $region9: #{tpu_custom_call.1} parent=1 // pred_fallthru
      _
    // Predicated region
    $region10: #{tpu_custom_call.1} parent=1 // pred_check
      _
    $region11: #{tpu_custom_call.1} parent=1 // pred_check_branch
      %42 = sbr.rel (0) target = $region13
    $region12: #{tpu_custom_call.1} parent=1 // pred_region
      %s44 = ssub.s32 131072, 131072
      %45 = vsyncadd [#allocation6], %s44
      %s46 = sshll.u32 [#allocation7], 4
      %s47 = int_to_ptr.vmem [resolvable:$true] %s46
      %52 = dma.hbm_to_vmem [thread:$0]  %s2, 131072, %s47, [#allocation6], 512, 512, 32
    $region13: #{tpu_custom_call.1} parent=1 // pred_fallthru
      _
    // Predicated region
    $region14: #{tpu_custom_call.1} parent=1 // pred_check
      _
    $region15: #{tpu_custom_call.1} parent=1 // pred_check_branch
      %54 = sbr.rel (0) target = $region17
    $region16: #{tpu_custom_call.1} parent=1 // pred_region
      %s56 = ssub.s32 32768, 32768
      %57 = vsyncadd [#allocation9], %s56
      %s58 = sshll.u32 [#allocation8], 4
      %s59 = int_to_ptr.vmem [resolvable:$true] %s58
      %64 = dma.hbm_to_vmem [thread:$0]  %s3, 32768, %s59, [#allocation9], 256, 256, 16
    $region17: #{tpu_custom_call.1} parent=1 // pred_fallthru
      _
    // Predicated region
    $region18: #{tpu_custom_call.1} parent=1 // pred_check
      _
    $region19: #{tpu_custom_call.1} parent=1 // pred_check_branch
      %66 = sbr.rel (0) target = $region21
    $region20: #{tpu_custom_call.1} parent=1 // pred_region
      %s68 = ssub.s32 8192, 8192
      %69 = vsyncadd [#allocation9], %s68
      %s70 = sshll.u32 [#allocation10], 4
      %s71 = int_to_ptr.vmem [resolvable:$true] %s70
      %76 = dma.hbm_to_vmem [thread:$0]  %s4, 8192, %s71, [#allocation9], 128, 128, 8
    $region21: #{tpu_custom_call.1} parent=1 // pred_fallthru
      _
    // Predicated region
    $region22: #{tpu_custom_call.1} parent=1 // pred_check
      _
    $region23: #{tpu_custom_call.1} parent=1 // pred_check_branch
      %78 = sbr.rel (0) target = $region25
    $region24: #{tpu_custom_call.1} parent=1 // pred_region
      %s80 = ssub.s32 2048, 2048
      %81 = vsyncadd [#allocation12], %s80
      %s82 = sshll.u32 [#allocation11], 4
      %s83 = int_to_ptr.vmem [resolvable:$true] %s82
      %88 = dma.hbm_to_vmem [thread:$0]  %s5, 2048, %s83, [#allocation12], 64, 64, 4
    $region25: #{tpu_custom_call.1} parent=1 // pred_fallthru
      _
    // Predicated region
    $region26: #{tpu_custom_call.1} parent=1 // pred_check
      _
    $region27: #{tpu_custom_call.1} parent=1 // pred_check_branch
      %90 = sbr.rel (0) target = $region29
    $region28: #{tpu_custom_call.1} parent=1 // pred_region
      _
    $region29: #{tpu_custom_call.1} parent=1 // pred_fallthru
      _
    // Predicated region
    $region30: #{tpu_custom_call.1} parent=1 // pred_check
      _
    $region31: #{tpu_custom_call.1} parent=1 // pred_check_branch
      %92 = sbr.rel (0) target = $region33
    $region32: #{tpu_custom_call.1} parent=1 // pred_region
      _
    $region33: #{tpu_custom_call.1} parent=1 // pred_fallthru
      _
    // Predicated region
    $region34: #{tpu_custom_call.1} parent=1 // pred_check
      _
    $region35: #{tpu_custom_call.1} parent=1 // pred_check_branch
      %94 = sbr.rel (0) target = $region37
    $region36: #{tpu_custom_call.1} parent=1 // pred_region
      _
    $region37: #{tpu_custom_call.1} parent=1 // pred_fallthru
      _
    // Predicated region
    $region38: #{tpu_custom_call.1} parent=1 // pred_check
      _
    $region39: #{tpu_custom_call.1} parent=1 // pred_check_branch
      %96 = sbr.rel (0) target = $region41
    $region40: #{tpu_custom_call.1} parent=1 // pred_region
      %97 = dma.done [#allocation3], 2048
    $region41: #{tpu_custom_call.1} parent=1 // pred_fallthru
      _
    // Predicated region
    $region42: #{tpu_custom_call.1} parent=1 // pred_check
      _
    $region43: #{tpu_custom_call.1} parent=1 // pred_check_branch
      %99 = sbr.rel (0) target = $region45
    $region44: #{tpu_custom_call.1} parent=1 // pred_region
      %100 = dma.done [#allocation6], 288
    $region45: #{tpu_custom_call.1} parent=1 // pred_fallthru
      _
    // Predicated region
    $region46: #{tpu_custom_call.1} parent=1 // pred_check
      _
    $region47: #{tpu_custom_call.1} parent=1 // pred_check_branch
      %102 = sbr.rel (0) target = $region49
    $region48: #{tpu_custom_call.1} parent=1 // pred_region
      %103 = dma.done [#allocation6], 131072
    $region49: #{tpu_custom_call.1} parent=1 // pred_fallthru
      _
    // Predicated region
    $region50: #{tpu_custom_call.1} parent=1 // pred_check
      _
    $region51: #{tpu_custom_call.1} parent=1 // pred_check_branch
      %105 = sbr.rel (0) target = $region53
    $region52: #{tpu_custom_call.1} parent=1 // pred_region
      %106 = dma.done [#allocation9], 32768
    $region53: #{tpu_custom_call.1} parent=1 // pred_fallthru
      _
    // Predicated region
    $region54: #{tpu_custom_call.1} parent=1 // pred_check
      _
    $region55: #{tpu_custom_call.1} parent=1 // pred_check_branch
      %108 = sbr.rel (0) target = $region57
    $region56: #{tpu_custom_call.1} parent=1 // pred_region
      %109 = dma.done [#allocation9], 8192
    $region57: #{tpu_custom_call.1} parent=1 // pred_fallthru
      _
    // Predicated region
    $region58: #{tpu_custom_call.1} parent=1 // pred_check
      _
    $region59: #{tpu_custom_call.1} parent=1 // pred_check_branch
      %111 = sbr.rel (0) target = $region61
    $region60: #{tpu_custom_call.1} parent=1 // pred_region
      %112 = dma.done [#allocation12], 2048
    $region61: #{tpu_custom_call.1} parent=1 // pred_fallthru
      _
    %v114 = vld [vmem:[#allocation2] sm:$0xff]
    %v115 = vld [vmem:[#allocation2 + $0x8] sm:$0xff]
    %v116 = vld [vmem:[#allocation2 + $0x10] sm:$0xff]
    %v117 = vld [vmem:[#allocation2 + $0x18] sm:$0xff]
    %v118 = vld [vmem:[#allocation2 + $0x20] sm:$0xff]
    %v119 = vld [vmem:[#allocation2 + $0x28] sm:$0xff]
    %v120 = vld [vmem:[#allocation2 + $0x30] sm:$0xff]
    %v121 = vld [vmem:[#allocation2 + $0x38] sm:$0xff]
    %v122 = vld [vmem:[#allocation2 + $0x40] sm:$0xff]
    %v123 = vld [vmem:[#allocation2 + $0x48] sm:$0xff]
    %v124 = vld [vmem:[#allocation2 + $0x50] sm:$0xff]
    %v125 = vld [vmem:[#allocation2 + $0x58] sm:$0xff]
    %v126 = vld [vmem:[#allocation2 + $0x60] sm:$0xff]
    %v127 = vld [vmem:[#allocation2 + $0x68] sm:$0xff]
    %v128 = vld [vmem:[#allocation2 + $0x70] sm:$0xff]
    %v129 = vld [vmem:[#allocation2 + $0x78] sm:$0xff]
    %v146 = vcombine.high %v114, %v114
    %v147 = vcombine.high %v115, %v115
    %v148 = vcombine.high %v116, %v116
    %v149 = vcombine.high %v117, %v117
    %v150 = vcombine.high %v118, %v118
    %v151 = vcombine.high %v119, %v119
    %v152 = vcombine.high %v120, %v120
    %v153 = vcombine.high %v121, %v121
    %v154 = vcombine.high %v122, %v122
    %v155 = vcombine.high %v123, %v123
    %v156 = vcombine.high %v124, %v124
    %v157 = vcombine.high %v125, %v125
    %v158 = vcombine.high %v126, %v126
    %v159 = vcombine.high %v127, %v127
    %v160 = vcombine.high %v128, %v128
    %v161 = vcombine.high %v129, %v129
    %vm178 = vcmask 1043456
    %v179 = vsel %vm178, %v114, 0.0
    %v180 = vrot.slane %v179, 4
    %v181 = vadd.f32 %v179, %v180
    %v182 = vrot.slane %v181, 2
    %v183 = vadd.f32 %v181, %v182
    %v184 = vrot.slane %v183, 1
    %v185 = vadd.f32 %v183, %v184
    %v186 = vsel %vm178, %v146, 0.0
    %v187 = vrot.slane %v186, 4
    %v188 = vadd.f32 %v186, %v187
    %v189 = vrot.slane %v188, 2
    %v190 = vadd.f32 %v188, %v189
    %v191 = vrot.slane %v190, 1
    %v192 = vadd.f32 %v190, %v191
    %v193 = vsel %vm178, %v115, 0.0
    %v194 = vrot.slane %v193, 4
    %v195 = vadd.f32 %v193, %v194
    %v196 = vrot.slane %v195, 2
    %v197 = vadd.f32 %v195, %v196
    %v198 = vrot.slane %v197, 1
    %v199 = vadd.f32 %v197, %v198
    %v200 = vsel %vm178, %v147, 0.0
    %v201 = vrot.slane %v200, 4
    %v202 = vadd.f32 %v200, %v201
    %v203 = vrot.slane %v202, 2
    %v204 = vadd.f32 %v202, %v203
    %v205 = vrot.slane %v204, 1
    %v206 = vadd.f32 %v204, %v205
    %v207 = vsel %vm178, %v116, 0.0
    %v208 = vrot.slane %v207, 4
    %v209 = vadd.f32 %v207, %v208
    %v210 = vrot.slane %v209, 2
    %v211 = vadd.f32 %v209, %v210
    %v212 = vrot.slane %v211, 1
    %v213 = vadd.f32 %v211, %v212
    %v214 = vsel %vm178, %v148, 0.0
    %v215 = vrot.slane %v214, 4
    %v216 = vadd.f32 %v214, %v215
    %v217 = vrot.slane %v216, 2
    %v218 = vadd.f32 %v216, %v217
    %v219 = vrot.slane %v218, 1
    %v220 = vadd.f32 %v218, %v219
    %v221 = vsel %vm178, %v117, 0.0
    %v222 = vrot.slane %v221, 4
    %v223 = vadd.f32 %v221, %v222
    %v224 = vrot.slane %v223, 2
    %v225 = vadd.f32 %v223, %v224
    %v226 = vrot.slane %v225, 1
    %v227 = vadd.f32 %v225, %v226
    %v228 = vsel %vm178, %v149, 0.0
    %v229 = vrot.slane %v228, 4
    %v230 = vadd.f32 %v228, %v229
    %v231 = vrot.slane %v230, 2
    %v232 = vadd.f32 %v230, %v231
    %v233 = vrot.slane %v232, 1
    %v234 = vadd.f32 %v232, %v233
    %v235 = vsel %vm178, %v118, 0.0
    %v236 = vrot.slane %v235, 4
    %v237 = vadd.f32 %v235, %v236
    %v238 = vrot.slane %v237, 2
    %v239 = vadd.f32 %v237, %v238
    %v240 = vrot.slane %v239, 1
    %v241 = vadd.f32 %v239, %v240
    %v242 = vsel %vm178, %v150, 0.0
    %v243 = vrot.slane %v242, 4
    %v244 = vadd.f32 %v242, %v243
    %v245 = vrot.slane %v244, 2
    %v246 = vadd.f32 %v244, %v245
    %v247 = vrot.slane %v246, 1
    %v248 = vadd.f32 %v246, %v247
    %v249 = vsel %vm178, %v119, 0.0
    %v250 = vrot.slane %v249, 4
    %v251 = vadd.f32 %v249, %v250
    %v252 = vrot.slane %v251, 2
    %v253 = vadd.f32 %v251, %v252
    %v254 = vrot.slane %v253, 1
    %v255 = vadd.f32 %v253, %v254
    %v256 = vsel %vm178, %v151, 0.0
    %v257 = vrot.slane %v256, 4
    %v258 = vadd.f32 %v256, %v257
    %v259 = vrot.slane %v258, 2
    %v260 = vadd.f32 %v258, %v259
    %v261 = vrot.slane %v260, 1
    %v262 = vadd.f32 %v260, %v261
    %v263 = vsel %vm178, %v120, 0.0
    %v264 = vrot.slane %v263, 4
    %v265 = vadd.f32 %v263, %v264
    %v266 = vrot.slane %v265, 2
    %v267 = vadd.f32 %v265, %v266
    %v268 = vrot.slane %v267, 1
    %v269 = vadd.f32 %v267, %v268
    %v270 = vsel %vm178, %v152, 0.0
    %v271 = vrot.slane %v270, 4
    %v272 = vadd.f32 %v270, %v271
    %v273 = vrot.slane %v272, 2
    %v274 = vadd.f32 %v272, %v273
    %v275 = vrot.slane %v274, 1
    %v276 = vadd.f32 %v274, %v275
    %v277 = vsel %vm178, %v121, 0.0
    %v278 = vrot.slane %v277, 4
    %v279 = vadd.f32 %v277, %v278
    %v280 = vrot.slane %v279, 2
    %v281 = vadd.f32 %v279, %v280
    %v282 = vrot.slane %v281, 1
    %v283 = vadd.f32 %v281, %v282
    %v284 = vsel %vm178, %v153, 0.0
    %v285 = vrot.slane %v284, 4
    %v286 = vadd.f32 %v284, %v285
    %v287 = vrot.slane %v286, 2
    %v288 = vadd.f32 %v286, %v287
    %v289 = vrot.slane %v288, 1
    %v290 = vadd.f32 %v288, %v289
    %v291 = vsel %vm178, %v122, 0.0
    %v292 = vrot.slane %v291, 4
    %v293 = vadd.f32 %v291, %v292
    %v294 = vrot.slane %v293, 2
    %v295 = vadd.f32 %v293, %v294
    %v296 = vrot.slane %v295, 1
    %v297 = vadd.f32 %v295, %v296
    %v298 = vsel %vm178, %v154, 0.0
    %v299 = vrot.slane %v298, 4
    %v300 = vadd.f32 %v298, %v299
    %v301 = vrot.slane %v300, 2
    %v302 = vadd.f32 %v300, %v301
    %v303 = vrot.slane %v302, 1
    %v304 = vadd.f32 %v302, %v303
    %v305 = vsel %vm178, %v123, 0.0
    %v306 = vrot.slane %v305, 4
    %v307 = vadd.f32 %v305, %v306
    %v308 = vrot.slane %v307, 2
    %v309 = vadd.f32 %v307, %v308
    %v310 = vrot.slane %v309, 1
    %v311 = vadd.f32 %v309, %v310
    %v312 = vsel %vm178, %v155, 0.0
    %v313 = vrot.slane %v312, 4
    %v314 = vadd.f32 %v312, %v313
    %v315 = vrot.slane %v314, 2
    %v316 = vadd.f32 %v314, %v315
    %v317 = vrot.slane %v316, 1
    %v318 = vadd.f32 %v316, %v317
    %v319 = vsel %vm178, %v124, 0.0
    %v320 = vrot.slane %v319, 4
    %v321 = vadd.f32 %v319, %v320
    %v322 = vrot.slane %v321, 2
    %v323 = vadd.f32 %v321, %v322
    %v324 = vrot.slane %v323, 1
    %v325 = vadd.f32 %v323, %v324
    %v326 = vsel %vm178, %v156, 0.0
    %v327 = vrot.slane %v326, 4
    %v328 = vadd.f32 %v326, %v327
    %v329 = vrot.slane %v328, 2
    %v330 = vadd.f32 %v328, %v329
    %v331 = vrot.slane %v330, 1
    %v332 = vadd.f32 %v330, %v331
    %v333 = vsel %vm178, %v125, 0.0
    %v334 = vrot.slane %v333, 4
    %v335 = vadd.f32 %v333, %v334
    %v336 = vrot.slane %v335, 2
    %v337 = vadd.f32 %v335, %v336
    %v338 = vrot.slane %v337, 1
    %v339 = vadd.f32 %v337, %v338
    %v340 = vsel %vm178, %v157, 0.0
    %v341 = vrot.slane %v340, 4
    %v342 = vadd.f32 %v340, %v341
    %v343 = vrot.slane %v342, 2
    %v344 = vadd.f32 %v342, %v343
    %v345 = vrot.slane %v344, 1
    %v346 = vadd.f32 %v344, %v345
    %v347 = vsel %vm178, %v126, 0.0
    %v348 = vrot.slane %v347, 4
    %v349 = vadd.f32 %v347, %v348
    %v350 = vrot.slane %v349, 2
    %v351 = vadd.f32 %v349, %v350
    %v352 = vrot.slane %v351, 1
    %v353 = vadd.f32 %v351, %v352
    %v354 = vsel %vm178, %v158, 0.0
    %v355 = vrot.slane %v354, 4
    %v356 = vadd.f32 %v354, %v355
    %v357 = vrot.slane %v356, 2
    %v358 = vadd.f32 %v356, %v357
    %v359 = vrot.slane %v358, 1
    %v360 = vadd.f32 %v358, %v359
    %v361 = vsel %vm178, %v127, 0.0
    %v362 = vrot.slane %v361, 4
    %v363 = vadd.f32 %v361, %v362
    %v364 = vrot.slane %v363, 2
    %v365 = vadd.f32 %v363, %v364
    %v366 = vrot.slane %v365, 1
    %v367 = vadd.f32 %v365, %v366
    %v368 = vsel %vm178, %v159, 0.0
    %v369 = vrot.slane %v368, 4
    %v370 = vadd.f32 %v368, %v369
    %v371 = vrot.slane %v370, 2
    %v372 = vadd.f32 %v370, %v371
    %v373 = vrot.slane %v372, 1
    %v374 = vadd.f32 %v372, %v373
    %v375 = vsel %vm178, %v128, 0.0
    %v376 = vrot.slane %v375, 4
    %v377 = vadd.f32 %v375, %v376
    %v378 = vrot.slane %v377, 2
    %v379 = vadd.f32 %v377, %v378
    %v380 = vrot.slane %v379, 1
    %v381 = vadd.f32 %v379, %v380
    %v382 = vsel %vm178, %v160, 0.0
    %v383 = vrot.slane %v382, 4
    %v384 = vadd.f32 %v382, %v383
    %v385 = vrot.slane %v384, 2
    %v386 = vadd.f32 %v384, %v385
    %v387 = vrot.slane %v386, 1
    %v388 = vadd.f32 %v386, %v387
    %v389 = vsel %vm178, %v129, 0.0
    %v390 = vrot.slane %v389, 4
    %v391 = vadd.f32 %v389, %v390
    %v392 = vrot.slane %v391, 2
    %v393 = vadd.f32 %v391, %v392
    %v394 = vrot.slane %v393, 1
    %v395 = vadd.f32 %v393, %v394
    %v396 = vsel %vm178, %v161, 0.0
    %v397 = vrot.slane %v396, 4
    %v398 = vadd.f32 %v396, %v397
    %v399 = vrot.slane %v398, 2
    %v400 = vadd.f32 %v398, %v399
    %v401 = vrot.slane %v400, 1
    %v402 = vadd.f32 %v400, %v401
    %v403 = vrcp.pop 4.0
    %v404 = vmul.f32 %v185, %v403
    %v405 = vmul.f32 %v192, %v403
    %v406 = vmul.f32 %v199, %v403
    %v407 = vmul.f32 %v206, %v403
    %v408 = vmul.f32 %v213, %v403
    %v409 = vmul.f32 %v220, %v403
    %v410 = vmul.f32 %v227, %v403
    %v411 = vmul.f32 %v234, %v403
    %v412 = vmul.f32 %v241, %v403
    %v413 = vmul.f32 %v248, %v403
    %v414 = vmul.f32 %v255, %v403
    %v415 = vmul.f32 %v262, %v403
    %v416 = vmul.f32 %v269, %v403
    %v417 = vmul.f32 %v276, %v403
    %v418 = vmul.f32 %v283, %v403
    %v419 = vmul.f32 %v290, %v403
    %v420 = vmul.f32 %v297, %v403
    %v421 = vmul.f32 %v304, %v403
    %v422 = vmul.f32 %v311, %v403
    %v423 = vmul.f32 %v318, %v403
    %v424 = vmul.f32 %v325, %v403
    %v425 = vmul.f32 %v332, %v403
    %v426 = vmul.f32 %v339, %v403
    %v427 = vmul.f32 %v346, %v403
    %v428 = vmul.f32 %v353, %v403
    %v429 = vmul.f32 %v360, %v403
    %v430 = vmul.f32 %v367, %v403
    %v431 = vmul.f32 %v374, %v403
    %v432 = vmul.f32 %v381, %v403
    %v433 = vmul.f32 %v388, %v403
    %v434 = vmul.f32 %v395, %v403
    %v435 = vmul.f32 %v402, %v403
    %v436 = vld [vmem:[#allocation7] sm:$0xff]
    %v437 = vld [vmem:[#allocation7 + $0x8] sm:$0xff]
    %v438 = vld [vmem:[#allocation7 + $0x10] sm:$0xff]
    %v439 = vld [vmem:[#allocation7 + $0x18] sm:$0xff]
    %v440 = vld [vmem:[#allocation7 + $0x20] sm:$0xff]
    %v441 = vld [vmem:[#allocation7 + $0x28] sm:$0xff]
    %v442 = vld [vmem:[#allocation7 + $0x30] sm:$0xff]
    %v443 = vld [vmem:[#allocation7 + $0x38] sm:$0xff]
    %v444 = vld [vmem:[#allocation7 + $0x40] sm:$0xff]
    %v445 = vld [vmem:[#allocation7 + $0x48] sm:$0xff]
    %v446 = vld [vmem:[#allocation7 + $0x50] sm:$0xff]
    %v447 = vld [vmem:[#allocation7 + $0x58] sm:$0xff]
    %v448 = vld [vmem:[#allocation7 + $0x60] sm:$0xff]
    %v449 = vld [vmem:[#allocation7 + $0x68] sm:$0xff]
    %v450 = vld [vmem:[#allocation7 + $0x70] sm:$0xff]
    %v451 = vld [vmem:[#allocation7 + $0x78] sm:$0xff]
    %v452 = vld [vmem:[#allocation7 + $0x80] sm:$0xff]
    %v453 = vld [vmem:[#allocation7 + $0x88] sm:$0xff]
    %v454 = vld [vmem:[#allocation7 + $0x90] sm:$0xff]
    %v455 = vld [vmem:[#allocation7 + $0x98] sm:$0xff]
    %v456 = vld [vmem:[#allocation7 + $0xa0] sm:$0xff]
    %v457 = vld [vmem:[#allocation7 + $0xa8] sm:$0xff]
    %v458 = vld [vmem:[#allocation7 + $0xb0] sm:$0xff]
    %v459 = vld [vmem:[#allocation7 + $0xb8] sm:$0xff]
    %v460 = vld [vmem:[#allocation7 + $0xc0] sm:$0xff]
    %v461 = vld [vmem:[#allocation7 + $0xc8] sm:$0xff]
    %v462 = vld [vmem:[#allocation7 + $0xd0] sm:$0xff]
    %v463 = vld [vmem:[#allocation7 + $0xd8] sm:$0xff]
    %v464 = vld [vmem:[#allocation7 + $0xe0] sm:$0xff]
    %v465 = vld [vmem:[#allocation7 + $0xe8] sm:$0xff]
    %v466 = vld [vmem:[#allocation7 + $0xf0] sm:$0xff]
    %v467 = vld [vmem:[#allocation7 + $0xf8] sm:$0xff]
    %v468 = vld [vmem:[#allocation7 + $0x100] sm:$0xff]
    %v469 = vld [vmem:[#allocation7 + $0x108] sm:$0xff]
    %v470 = vld [vmem:[#allocation7 + $0x110] sm:$0xff]
    %v471 = vld [vmem:[#allocation7 + $0x118] sm:$0xff]
    %v472 = vld [vmem:[#allocation7 + $0x120] sm:$0xff]
    %v473 = vld [vmem:[#allocation7 + $0x128] sm:$0xff]
    %v474 = vld [vmem:[#allocation7 + $0x130] sm:$0xff]
    %v475 = vld [vmem:[#allocation7 + $0x138] sm:$0xff]
    %v476 = vld [vmem:[#allocation7 + $0x140] sm:$0xff]
    %v477 = vld [vmem:[#allocation7 + $0x148] sm:$0xff]
    %v478 = vld [vmem:[#allocation7 + $0x150] sm:$0xff]
    %v479 = vld [vmem:[#allocation7 + $0x158] sm:$0xff]
    %v480 = vld [vmem:[#allocation7 + $0x160] sm:$0xff]
    %v481 = vld [vmem:[#allocation7 + $0x168] sm:$0xff]
    %v482 = vld [vmem:[#allocation7 + $0x170] sm:$0xff]
    %v483 = vld [vmem:[#allocation7 + $0x178] sm:$0xff]
    %v484 = vld [vmem:[#allocation7 + $0x180] sm:$0xff]
    %v485 = vld [vmem:[#allocation7 + $0x188] sm:$0xff]
    %v486 = vld [vmem:[#allocation7 + $0x190] sm:$0xff]
    %v487 = vld [vmem:[#allocation7 + $0x198] sm:$0xff]
    %v488 = vld [vmem:[#allocation7 + $0x1a0] sm:$0xff]
    %v489 = vld [vmem:[#allocation7 + $0x1a8] sm:$0xff]
    %v490 = vld [vmem:[#allocation7 + $0x1b0] sm:$0xff]
    %v491 = vld [vmem:[#allocation7 + $0x1b8] sm:$0xff]
    %v492 = vld [vmem:[#allocation7 + $0x1c0] sm:$0xff]
    %v493 = vld [vmem:[#allocation7 + $0x1c8] sm:$0xff]
    %v494 = vld [vmem:[#allocation7 + $0x1d0] sm:$0xff]
    %v495 = vld [vmem:[#allocation7 + $0x1d8] sm:$0xff]
    %v496 = vld [vmem:[#allocation7 + $0x1e0] sm:$0xff]
    %v497 = vld [vmem:[#allocation7 + $0x1e8] sm:$0xff]
    %v498 = vld [vmem:[#allocation7 + $0x1f0] sm:$0xff]
    %v499 = vld [vmem:[#allocation7 + $0x1f8] sm:$0xff]
    %v500 = vld [vmem:[#allocation7 + $0x200] sm:$0xff]
    %v501 = vld [vmem:[#allocation7 + $0x208] sm:$0xff]
    %v502 = vld [vmem:[#allocation7 + $0x210] sm:$0xff]
    %v503 = vld [vmem:[#allocation7 + $0x218] sm:$0xff]
    %v504 = vld [vmem:[#allocation7 + $0x220] sm:$0xff]
    %v505 = vld [vmem:[#allocation7 + $0x228] sm:$0xff]
    %v506 = vld [vmem:[#allocation7 + $0x230] sm:$0xff]
    %v507 = vld [vmem:[#allocation7 + $0x238] sm:$0xff]
    %v508 = vld [vmem:[#allocation7 + $0x240] sm:$0xff]
    %v509 = vld [vmem:[#allocation7 + $0x248] sm:$0xff]
    %v510 = vld [vmem:[#allocation7 + $0x250] sm:$0xff]
    %v511 = vld [vmem:[#allocation7 + $0x258] sm:$0xff]
    %v512 = vld [vmem:[#allocation7 + $0x260] sm:$0xff]
    %v513 = vld [vmem:[#allocation7 + $0x268] sm:$0xff]
    %v514 = vld [vmem:[#allocation7 + $0x270] sm:$0xff]
    %v515 = vld [vmem:[#allocation7 + $0x278] sm:$0xff]
    %v516 = vld [vmem:[#allocation7 + $0x280] sm:$0xff]
    %v517 = vld [vmem:[#allocation7 + $0x288] sm:$0xff]
    %v518 = vld [vmem:[#allocation7 + $0x290] sm:$0xff]
    %v519 = vld [vmem:[#allocation7 + $0x298] sm:$0xff]
    %v520 = vld [vmem:[#allocation7 + $0x2a0] sm:$0xff]
    %v521 = vld [vmem:[#allocation7 + $0x2a8] sm:$0xff]
    %v522 = vld [vmem:[#allocation7 + $0x2b0] sm:$0xff]
    %v523 = vld [vmem:[#allocation7 + $0x2b8] sm:$0xff]
    %v524 = vld [vmem:[#allocation7 + $0x2c0] sm:$0xff]
    %v525 = vld [vmem:[#allocation7 + $0x2c8] sm:$0xff]
    %v526 = vld [vmem:[#allocation7 + $0x2d0] sm:$0xff]
    %v527 = vld [vmem:[#allocation7 + $0x2d8] sm:$0xff]
    %v528 = vld [vmem:[#allocation7 + $0x2e0] sm:$0xff]
    %v529 = vld [vmem:[#allocation7 + $0x2e8] sm:$0xff]
    %v530 = vld [vmem:[#allocation7 + $0x2f0] sm:$0xff]
    %v531 = vld [vmem:[#allocation7 + $0x2f8] sm:$0xff]
    %v532 = vld [vmem:[#allocation7 + $0x300] sm:$0xff]
    %v533 = vld [vmem:[#allocation7 + $0x308] sm:$0xff]
    %v534 = vld [vmem:[#allocation7 + $0x310] sm:$0xff]
    %v535 = vld [vmem:[#allocation7 + $0x318] sm:$0xff]
    %v536 = vld [vmem:[#allocation7 + $0x320] sm:$0xff]
    %v537 = vld [vmem:[#allocation7 + $0x328] sm:$0xff]
    %v538 = vld [vmem:[#allocation7 + $0x330] sm:$0xff]
    %v539 = vld [vmem:[#allocation7 + $0x338] sm:$0xff]
    %v540 = vld [vmem:[#allocation7 + $0x340] sm:$0xff]
    %v541 = vld [vmem:[#allocation7 + $0x348] sm:$0xff]
    %v542 = vld [vmem:[#allocation7 + $0x350] sm:$0xff]
    %v543 = vld [vmem:[#allocation7 + $0x358] sm:$0xff]
    %v544 = vld [vmem:[#allocation7 + $0x360] sm:$0xff]
    %v545 = vld [vmem:[#allocation7 + $0x368] sm:$0xff]
    %v546 = vld [vmem:[#allocation7 + $0x370] sm:$0xff]
    %v547 = vld [vmem:[#allocation7 + $0x378] sm:$0xff]
    %v548 = vld [vmem:[#allocation7 + $0x380] sm:$0xff]
    %v549 = vld [vmem:[#allocation7 + $0x388] sm:$0xff]
    %v550 = vld [vmem:[#allocation7 + $0x390] sm:$0xff]
    %v551 = vld [vmem:[#allocation7 + $0x398] sm:$0xff]
    %v552 = vld [vmem:[#allocation7 + $0x3a0] sm:$0xff]
    %v553 = vld [vmem:[#allocation7 + $0x3a8] sm:$0xff]
    %v554 = vld [vmem:[#allocation7 + $0x3b0] sm:$0xff]
    %v555 = vld [vmem:[#allocation7 + $0x3b8] sm:$0xff]
    %v556 = vld [vmem:[#allocation7 + $0x3c0] sm:$0xff]
    %v557 = vld [vmem:[#allocation7 + $0x3c8] sm:$0xff]
    %v558 = vld [vmem:[#allocation7 + $0x3d0] sm:$0xff]
    %v559 = vld [vmem:[#allocation7 + $0x3d8] sm:$0xff]
    %v560 = vld [vmem:[#allocation7 + $0x3e0] sm:$0xff]
    %v561 = vld [vmem:[#allocation7 + $0x3e8] sm:$0xff]
    %v562 = vld [vmem:[#allocation7 + $0x3f0] sm:$0xff]
    %v563 = vld [vmem:[#allocation7 + $0x3f8] sm:$0xff]
    %v564 = vld [vmem:[#allocation7 + $0x400] sm:$0xff]
    %v565 = vld [vmem:[#allocation7 + $0x408] sm:$0xff]
    %v566 = vld [vmem:[#allocation7 + $0x410] sm:$0xff]
    %v567 = vld [vmem:[#allocation7 + $0x418] sm:$0xff]
    %v568 = vld [vmem:[#allocation7 + $0x420] sm:$0xff]
    %v569 = vld [vmem:[#allocation7 + $0x428] sm:$0xff]
    %v570 = vld [vmem:[#allocation7 + $0x430] sm:$0xff]
    %v571 = vld [vmem:[#allocation7 + $0x438] sm:$0xff]
    %v572 = vld [vmem:[#allocation7 + $0x440] sm:$0xff]
    %v573 = vld [vmem:[#allocation7 + $0x448] sm:$0xff]
    %v574 = vld [vmem:[#allocation7 + $0x450] sm:$0xff]
    %v575 = vld [vmem:[#allocation7 + $0x458] sm:$0xff]
    %v576 = vld [vmem:[#allocation7 + $0x460] sm:$0xff]
    %v577 = vld [vmem:[#allocation7 + $0x468] sm:$0xff]
    %v578 = vld [vmem:[#allocation7 + $0x470] sm:$0xff]
    %v579 = vld [vmem:[#allocation7 + $0x478] sm:$0xff]
    %v580 = vld [vmem:[#allocation7 + $0x480] sm:$0xff]
    %v581 = vld [vmem:[#allocation7 + $0x488] sm:$0xff]
    %v582 = vld [vmem:[#allocation7 + $0x490] sm:$0xff]
    %v583 = vld [vmem:[#allocation7 + $0x498] sm:$0xff]
    %v584 = vld [vmem:[#allocation7 + $0x4a0] sm:$0xff]
    %v585 = vld [vmem:[#allocation7 + $0x4a8] sm:$0xff]
    %v586 = vld [vmem:[#allocation7 + $0x4b0] sm:$0xff]
    %v587 = vld [vmem:[#allocation7 + $0x4b8] sm:$0xff]
    %v588 = vld [vmem:[#allocation7 + $0x4c0] sm:$0xff]
    %v589 = vld [vmem:[#allocation7 + $0x4c8] sm:$0xff]
    %v590 = vld [vmem:[#allocation7 + $0x4d0] sm:$0xff]
    %v591 = vld [vmem:[#allocation7 + $0x4d8] sm:$0xff]
    %v592 = vld [vmem:[#allocation7 + $0x4e0] sm:$0xff]
    %v593 = vld [vmem:[#allocation7 + $0x4e8] sm:$0xff]
    %v594 = vld [vmem:[#allocation7 + $0x4f0] sm:$0xff]
    %v595 = vld [vmem:[#allocation7 + $0x4f8] sm:$0xff]
    %v596 = vld [vmem:[#allocation7 + $0x500] sm:$0xff]
    %v597 = vld [vmem:[#allocation7 + $0x508] sm:$0xff]
    %v598 = vld [vmem:[#allocation7 + $0x510] sm:$0xff]
    %v599 = vld [vmem:[#allocation7 + $0x518] sm:$0xff]
    %v600 = vld [vmem:[#allocation7 + $0x520] sm:$0xff]
    %v601 = vld [vmem:[#allocation7 + $0x528] sm:$0xff]
    %v602 = vld [vmem:[#allocation7 + $0x530] sm:$0xff]
    %v603 = vld [vmem:[#allocation7 + $0x538] sm:$0xff]
    %v604 = vld [vmem:[#allocation7 + $0x540] sm:$0xff]
    %v605 = vld [vmem:[#allocation7 + $0x548] sm:$0xff]
    %v606 = vld [vmem:[#allocation7 + $0x550] sm:$0xff]
    %v607 = vld [vmem:[#allocation7 + $0x558] sm:$0xff]
    %v608 = vld [vmem:[#allocation7 + $0x560] sm:$0xff]
    %v609 = vld [vmem:[#allocation7 + $0x568] sm:$0xff]
    %v610 = vld [vmem:[#allocation7 + $0x570] sm:$0xff]
    %v611 = vld [vmem:[#allocation7 + $0x578] sm:$0xff]
    %v612 = vld [vmem:[#allocation7 + $0x580] sm:$0xff]
    %v613 = vld [vmem:[#allocation7 + $0x588] sm:$0xff]
    %v614 = vld [vmem:[#allocation7 + $0x590] sm:$0xff]
    %v615 = vld [vmem:[#allocation7 + $0x598] sm:$0xff]
    %v616 = vld [vmem:[#allocation7 + $0x5a0] sm:$0xff]
    %v617 = vld [vmem:[#allocation7 + $0x5a8] sm:$0xff]
    %v618 = vld [vmem:[#allocation7 + $0x5b0] sm:$0xff]
    %v619 = vld [vmem:[#allocation7 + $0x5b8] sm:$0xff]
    %v620 = vld [vmem:[#allocation7 + $0x5c0] sm:$0xff]
    %v621 = vld [vmem:[#allocation7 + $0x5c8] sm:$0xff]
    %v622 = vld [vmem:[#allocation7 + $0x5d0] sm:$0xff]
    %v623 = vld [vmem:[#allocation7 + $0x5d8] sm:$0xff]
    %v624 = vld [vmem:[#allocation7 + $0x5e0] sm:$0xff]
    %v625 = vld [vmem:[#allocation7 + $0x5e8] sm:$0xff]
    %v626 = vld [vmem:[#allocation7 + $0x5f0] sm:$0xff]
    %v627 = vld [vmem:[#allocation7 + $0x5f8] sm:$0xff]
    %v628 = vld [vmem:[#allocation7 + $0x600] sm:$0xff]
    %v629 = vld [vmem:[#allocation7 + $0x608] sm:$0xff]
    %v630 = vld [vmem:[#allocation7 + $0x610] sm:$0xff]
    %v631 = vld [vmem:[#allocation7 + $0x618] sm:$0xff]
    %v632 = vld [vmem:[#allocation7 + $0x620] sm:$0xff]
    %v633 = vld [vmem:[#allocation7 + $0x628] sm:$0xff]
    %v634 = vld [vmem:[#allocation7 + $0x630] sm:$0xff]
    %v635 = vld [vmem:[#allocation7 + $0x638] sm:$0xff]
    %v636 = vld [vmem:[#allocation7 + $0x640] sm:$0xff]
    %v637 = vld [vmem:[#allocation7 + $0x648] sm:$0xff]
    %v638 = vld [vmem:[#allocation7 + $0x650] sm:$0xff]
    %v639 = vld [vmem:[#allocation7 + $0x658] sm:$0xff]
    %v640 = vld [vmem:[#allocation7 + $0x660] sm:$0xff]
    %v641 = vld [vmem:[#allocation7 + $0x668] sm:$0xff]
    %v642 = vld [vmem:[#allocation7 + $0x670] sm:$0xff]
    %v643 = vld [vmem:[#allocation7 + $0x678] sm:$0xff]
    %v644 = vld [vmem:[#allocation7 + $0x680] sm:$0xff]
    %v645 = vld [vmem:[#allocation7 + $0x688] sm:$0xff]
    %v646 = vld [vmem:[#allocation7 + $0x690] sm:$0xff]
    %v647 = vld [vmem:[#allocation7 + $0x698] sm:$0xff]
    %v648 = vld [vmem:[#allocation7 + $0x6a0] sm:$0xff]
    %v649 = vld [vmem:[#allocation7 + $0x6a8] sm:$0xff]
    %v650 = vld [vmem:[#allocation7 + $0x6b0] sm:$0xff]
    %v651 = vld [vmem:[#allocation7 + $0x6b8] sm:$0xff]
    %v652 = vld [vmem:[#allocation7 + $0x6c0] sm:$0xff]
    %v653 = vld [vmem:[#allocation7 + $0x6c8] sm:$0xff]
    %v654 = vld [vmem:[#allocation7 + $0x6d0] sm:$0xff]
    %v655 = vld [vmem:[#allocation7 + $0x6d8] sm:$0xff]
    %v656 = vld [vmem:[#allocation7 + $0x6e0] sm:$0xff]
    %v657 = vld [vmem:[#allocation7 + $0x6e8] sm:$0xff]
    %v658 = vld [vmem:[#allocation7 + $0x6f0] sm:$0xff]
    %v659 = vld [vmem:[#allocation7 + $0x6f8] sm:$0xff]
    %v660 = vld [vmem:[#allocation7 + $0x700] sm:$0xff]
    %v661 = vld [vmem:[#allocation7 + $0x708] sm:$0xff]
    %v662 = vld [vmem:[#allocation7 + $0x710] sm:$0xff]
    %v663 = vld [vmem:[#allocation7 + $0x718] sm:$0xff]
    %v664 = vld [vmem:[#allocation7 + $0x720] sm:$0xff]
    %v665 = vld [vmem:[#allocation7 + $0x728] sm:$0xff]
    %v666 = vld [vmem:[#allocation7 + $0x730] sm:$0xff]
    %v667 = vld [vmem:[#allocation7 + $0x738] sm:$0xff]
    %v668 = vld [vmem:[#allocation7 + $0x740] sm:$0xff]
    %v669 = vld [vmem:[#allocation7 + $0x748] sm:$0xff]
    %v670 = vld [vmem:[#allocation7 + $0x750] sm:$0xff]
    %v671 = vld [vmem:[#allocation7 + $0x758] sm:$0xff]
    %v672 = vld [vmem:[#allocation7 + $0x760] sm:$0xff]
    %v673 = vld [vmem:[#allocation7 + $0x768] sm:$0xff]
    %v674 = vld [vmem:[#allocation7 + $0x770] sm:$0xff]
    %v675 = vld [vmem:[#allocation7 + $0x778] sm:$0xff]
    %v676 = vld [vmem:[#allocation7 + $0x780] sm:$0xff]
    %v677 = vld [vmem:[#allocation7 + $0x788] sm:$0xff]
    %v678 = vld [vmem:[#allocation7 + $0x790] sm:$0xff]
    %v679 = vld [vmem:[#allocation7 + $0x798] sm:$0xff]
    %v680 = vld [vmem:[#allocation7 + $0x7a0] sm:$0xff]
    %v681 = vld [vmem:[#allocation7 + $0x7a8] sm:$0xff]
    %v682 = vld [vmem:[#allocation7 + $0x7b0] sm:$0xff]
    %v683 = vld [vmem:[#allocation7 + $0x7b8] sm:$0xff]
    %v684 = vld [vmem:[#allocation7 + $0x7c0] sm:$0xff]
    %v685 = vld [vmem:[#allocation7 + $0x7c8] sm:$0xff]
    %v686 = vld [vmem:[#allocation7 + $0x7d0] sm:$0xff]
    %v687 = vld [vmem:[#allocation7 + $0x7d8] sm:$0xff]
    %v688 = vld [vmem:[#allocation7 + $0x7e0] sm:$0xff]
    %v689 = vld [vmem:[#allocation7 + $0x7e8] sm:$0xff]
    %v690 = vld [vmem:[#allocation7 + $0x7f0] sm:$0xff]
    %v691 = vld [vmem:[#allocation7 + $0x7f8] sm:$0xff]
    %v692 = vld [vmem:[#allocation7 + $0x800] sm:$0xff]
    %v693 = vld [vmem:[#allocation7 + $0x808] sm:$0xff]
    %v694 = vld [vmem:[#allocation7 + $0x810] sm:$0xff]
    %v695 = vld [vmem:[#allocation7 + $0x818] sm:$0xff]
    %v696 = vld [vmem:[#allocation7 + $0x820] sm:$0xff]
    %v697 = vld [vmem:[#allocation7 + $0x828] sm:$0xff]
    %v698 = vld [vmem:[#allocation7 + $0x830] sm:$0xff]
    %v699 = vld [vmem:[#allocation7 + $0x838] sm:$0xff]
    %v700 = vld [vmem:[#allocation7 + $0x840] sm:$0xff]
    %v701 = vld [vmem:[#allocation7 + $0x848] sm:$0xff]
    %v702 = vld [vmem:[#allocation7 + $0x850] sm:$0xff]
    %v703 = vld [vmem:[#allocation7 + $0x858] sm:$0xff]
    %v704 = vld [vmem:[#allocation7 + $0x860] sm:$0xff]
    %v705 = vld [vmem:[#allocation7 + $0x868] sm:$0xff]
    %v706 = vld [vmem:[#allocation7 + $0x870] sm:$0xff]
    %v707 = vld [vmem:[#allocation7 + $0x878] sm:$0xff]
    %v708 = vld [vmem:[#allocation7 + $0x880] sm:$0xff]
    %v709 = vld [vmem:[#allocation7 + $0x888] sm:$0xff]
    %v710 = vld [vmem:[#allocation7 + $0x890] sm:$0xff]
    %v711 = vld [vmem:[#allocation7 + $0x898] sm:$0xff]
    %v712 = vld [vmem:[#allocation7 + $0x8a0] sm:$0xff]
    %v713 = vld [vmem:[#allocation7 + $0x8a8] sm:$0xff]
    %v714 = vld [vmem:[#allocation7 + $0x8b0] sm:$0xff]
    %v715 = vld [vmem:[#allocation7 + $0x8b8] sm:$0xff]
    %v716 = vld [vmem:[#allocation7 + $0x8c0] sm:$0xff]
    %v717 = vld [vmem:[#allocation7 + $0x8c8] sm:$0xff]
    %v718 = vld [vmem:[#allocation7 + $0x8d0] sm:$0xff]
    %v719 = vld [vmem:[#allocation7 + $0x8d8] sm:$0xff]
    %v720 = vld [vmem:[#allocation7 + $0x8e0] sm:$0xff]
    %v721 = vld [vmem:[#allocation7 + $0x8e8] sm:$0xff]
    %v722 = vld [vmem:[#allocation7 + $0x8f0] sm:$0xff]
    %v723 = vld [vmem:[#allocation7 + $0x8f8] sm:$0xff]
    %v724 = vld [vmem:[#allocation7 + $0x900] sm:$0xff]
    %v725 = vld [vmem:[#allocation7 + $0x908] sm:$0xff]
    %v726 = vld [vmem:[#allocation7 + $0x910] sm:$0xff]
    %v727 = vld [vmem:[#allocation7 + $0x918] sm:$0xff]
    %v728 = vld [vmem:[#allocation7 + $0x920] sm:$0xff]
    %v729 = vld [vmem:[#allocation7 + $0x928] sm:$0xff]
    %v730 = vld [vmem:[#allocation7 + $0x930] sm:$0xff]
    %v731 = vld [vmem:[#allocation7 + $0x938] sm:$0xff]
    %v732 = vld [vmem:[#allocation7 + $0x940] sm:$0xff]
    %v733 = vld [vmem:[#allocation7 + $0x948] sm:$0xff]
    %v734 = vld [vmem:[#allocation7 + $0x950] sm:$0xff]
    %v735 = vld [vmem:[#allocation7 + $0x958] sm:$0xff]
    %v736 = vld [vmem:[#allocation7 + $0x960] sm:$0xff]
    %v737 = vld [vmem:[#allocation7 + $0x968] sm:$0xff]
    %v738 = vld [vmem:[#allocation7 + $0x970] sm:$0xff]
    %v739 = vld [vmem:[#allocation7 + $0x978] sm:$0xff]
    %v740 = vld [vmem:[#allocation7 + $0x980] sm:$0xff]
    %v741 = vld [vmem:[#allocation7 + $0x988] sm:$0xff]
    %v742 = vld [vmem:[#allocation7 + $0x990] sm:$0xff]
    %v743 = vld [vmem:[#allocation7 + $0x998] sm:$0xff]
    %v744 = vld [vmem:[#allocation7 + $0x9a0] sm:$0xff]
    %v745 = vld [vmem:[#allocation7 + $0x9a8] sm:$0xff]
    %v746 = vld [vmem:[#allocation7 + $0x9b0] sm:$0xff]
    %v747 = vld [vmem:[#allocation7 + $0x9b8] sm:$0xff]
    %v748 = vld [vmem:[#allocation7 + $0x9c0] sm:$0xff]
    %v749 = vld [vmem:[#allocation7 + $0x9c8] sm:$0xff]
    %v750 = vld [vmem:[#allocation7 + $0x9d0] sm:$0xff]
    %v751 = vld [vmem:[#allocation7 + $0x9d8] sm:$0xff]
    %v752 = vld [vmem:[#allocation7 + $0x9e0] sm:$0xff]
    %v753 = vld [vmem:[#allocation7 + $0x9e8] sm:$0xff]
    %v754 = vld [vmem:[#allocation7 + $0x9f0] sm:$0xff]
    %v755 = vld [vmem:[#allocation7 + $0x9f8] sm:$0xff]
    %v756 = vld [vmem:[#allocation7 + $0xa00] sm:$0xff]
    %v757 = vld [vmem:[#allocation7 + $0xa08] sm:$0xff]
    %v758 = vld [vmem:[#allocation7 + $0xa10] sm:$0xff]
    %v759 = vld [vmem:[#allocation7 + $0xa18] sm:$0xff]
    %v760 = vld [vmem:[#allocation7 + $0xa20] sm:$0xff]
    %v761 = vld [vmem:[#allocation7 + $0xa28] sm:$0xff]
    %v762 = vld [vmem:[#allocation7 + $0xa30] sm:$0xff]
    %v763 = vld [vmem:[#allocation7 + $0xa38] sm:$0xff]
    %v764 = vld [vmem:[#allocation7 + $0xa40] sm:$0xff]
    %v765 = vld [vmem:[#allocation7 + $0xa48] sm:$0xff]
    %v766 = vld [vmem:[#allocation7 + $0xa50] sm:$0xff]
    %v767 = vld [vmem:[#allocation7 + $0xa58] sm:$0xff]
    %v768 = vld [vmem:[#allocation7 + $0xa60] sm:$0xff]
    %v769 = vld [vmem:[#allocation7 + $0xa68] sm:$0xff]
    %v770 = vld [vmem:[#allocation7 + $0xa70] sm:$0xff]
    %v771 = vld [vmem:[#allocation7 + $0xa78] sm:$0xff]
    %v772 = vld [vmem:[#allocation7 + $0xa80] sm:$0xff]
    %v773 = vld [vmem:[#allocation7 + $0xa88] sm:$0xff]
    %v774 = vld [vmem:[#allocation7 + $0xa90] sm:$0xff]
    %v775 = vld [vmem:[#allocation7 + $0xa98] sm:$0xff]
    %v776 = vld [vmem:[#allocation7 + $0xaa0] sm:$0xff]
    %v777 = vld [vmem:[#allocation7 + $0xaa8] sm:$0xff]
    %v778 = vld [vmem:[#allocation7 + $0xab0] sm:$0xff]
    %v779 = vld [vmem:[#allocation7 + $0xab8] sm:$0xff]
    %v780 = vld [vmem:[#allocation7 + $0xac0] sm:$0xff]
    %v781 = vld [vmem:[#allocation7 + $0xac8] sm:$0xff]
    %v782 = vld [vmem:[#allocation7 + $0xad0] sm:$0xff]
    %v783 = vld [vmem:[#allocation7 + $0xad8] sm:$0xff]
    %v784 = vld [vmem:[#allocation7 + $0xae0] sm:$0xff]
    %v785 = vld [vmem:[#allocation7 + $0xae8] sm:$0xff]
    %v786 = vld [vmem:[#allocation7 + $0xaf0] sm:$0xff]
    %v787 = vld [vmem:[#allocation7 + $0xaf8] sm:$0xff]
    %v788 = vld [vmem:[#allocation7 + $0xb00] sm:$0xff]
    %v789 = vld [vmem:[#allocation7 + $0xb08] sm:$0xff]
    %v790 = vld [vmem:[#allocation7 + $0xb10] sm:$0xff]
    %v791 = vld [vmem:[#allocation7 + $0xb18] sm:$0xff]
    %v792 = vld [vmem:[#allocation7 + $0xb20] sm:$0xff]
    %v793 = vld [vmem:[#allocation7 + $0xb28] sm:$0xff]
    %v794 = vld [vmem:[#allocation7 + $0xb30] sm:$0xff]
    %v795 = vld [vmem:[#allocation7 + $0xb38] sm:$0xff]
    %v796 = vld [vmem:[#allocation7 + $0xb40] sm:$0xff]
    %v797 = vld [vmem:[#allocation7 + $0xb48] sm:$0xff]
    %v798 = vld [vmem:[#allocation7 + $0xb50] sm:$0xff]
    %v799 = vld [vmem:[#allocation7 + $0xb58] sm:$0xff]
    %v800 = vld [vmem:[#allocation7 + $0xb60] sm:$0xff]
    %v801 = vld [vmem:[#allocation7 + $0xb68] sm:$0xff]
    %v802 = vld [vmem:[#allocation7 + $0xb70] sm:$0xff]
    %v803 = vld [vmem:[#allocation7 + $0xb78] sm:$0xff]
    %v804 = vld [vmem:[#allocation7 + $0xb80] sm:$0xff]
    %v805 = vld [vmem:[#allocation7 + $0xb88] sm:$0xff]
    %v806 = vld [vmem:[#allocation7 + $0xb90] sm:$0xff]
    %v807 = vld [vmem:[#allocation7 + $0xb98] sm:$0xff]
    %v808 = vld [vmem:[#allocation7 + $0xba0] sm:$0xff]
    %v809 = vld [vmem:[#allocation7 + $0xba8] sm:$0xff]
    %v810 = vld [vmem:[#allocation7 + $0xbb0] sm:$0xff]
    %v811 = vld [vmem:[#allocation7 + $0xbb8] sm:$0xff]
    %v812 = vld [vmem:[#allocation7 + $0xbc0] sm:$0xff]
    %v813 = vld [vmem:[#allocation7 + $0xbc8] sm:$0xff]
    %v814 = vld [vmem:[#allocation7 + $0xbd0] sm:$0xff]
    %v815 = vld [vmem:[#allocation7 + $0xbd8] sm:$0xff]
    %v816 = vld [vmem:[#allocation7 + $0xbe0] sm:$0xff]
    %v817 = vld [vmem:[#allocation7 + $0xbe8] sm:$0xff]
    %v818 = vld [vmem:[#allocation7 + $0xbf0] sm:$0xff]
    %v819 = vld [vmem:[#allocation7 + $0xbf8] sm:$0xff]
    %v820 = vld [vmem:[#allocation7 + $0xc00] sm:$0xff]
    %v821 = vld [vmem:[#allocation7 + $0xc08] sm:$0xff]
    %v822 = vld [vmem:[#allocation7 + $0xc10] sm:$0xff]
    %v823 = vld [vmem:[#allocation7 + $0xc18] sm:$0xff]
    %v824 = vld [vmem:[#allocation7 + $0xc20] sm:$0xff]
    %v825 = vld [vmem:[#allocation7 + $0xc28] sm:$0xff]
    %v826 = vld [vmem:[#allocation7 + $0xc30] sm:$0xff]
    %v827 = vld [vmem:[#allocation7 + $0xc38] sm:$0xff]
    %v828 = vld [vmem:[#allocation7 + $0xc40] sm:$0xff]
    %v829 = vld [vmem:[#allocation7 + $0xc48] sm:$0xff]
    %v830 = vld [vmem:[#allocation7 + $0xc50] sm:$0xff]
    %v831 = vld [vmem:[#allocation7 + $0xc58] sm:$0xff]
    %v832 = vld [vmem:[#allocation7 + $0xc60] sm:$0xff]
    %v833 = vld [vmem:[#allocation7 + $0xc68] sm:$0xff]
    %v834 = vld [vmem:[#allocation7 + $0xc70] sm:$0xff]
    %v835 = vld [vmem:[#allocation7 + $0xc78] sm:$0xff]
    %v836 = vld [vmem:[#allocation7 + $0xc80] sm:$0xff]
    %v837 = vld [vmem:[#allocation7 + $0xc88] sm:$0xff]
    %v838 = vld [vmem:[#allocation7 + $0xc90] sm:$0xff]
    %v839 = vld [vmem:[#allocation7 + $0xc98] sm:$0xff]
    %v840 = vld [vmem:[#allocation7 + $0xca0] sm:$0xff]
    %v841 = vld [vmem:[#allocation7 + $0xca8] sm:$0xff]
    %v842 = vld [vmem:[#allocation7 + $0xcb0] sm:$0xff]
    %v843 = vld [vmem:[#allocation7 + $0xcb8] sm:$0xff]
    %v844 = vld [vmem:[#allocation7 + $0xcc0] sm:$0xff]
    %v845 = vld [vmem:[#allocation7 + $0xcc8] sm:$0xff]
    %v846 = vld [vmem:[#allocation7 + $0xcd0] sm:$0xff]
    %v847 = vld [vmem:[#allocation7 + $0xcd8] sm:$0xff]
    %v848 = vld [vmem:[#allocation7 + $0xce0] sm:$0xff]
    %v849 = vld [vmem:[#allocation7 + $0xce8] sm:$0xff]
    %v850 = vld [vmem:[#allocation7 + $0xcf0] sm:$0xff]
    %v851 = vld [vmem:[#allocation7 + $0xcf8] sm:$0xff]
    %v852 = vld [vmem:[#allocation7 + $0xd00] sm:$0xff]
    %v853 = vld [vmem:[#allocation7 + $0xd08] sm:$0xff]
    %v854 = vld [vmem:[#allocation7 + $0xd10] sm:$0xff]
    %v855 = vld [vmem:[#allocation7 + $0xd18] sm:$0xff]
    %v856 = vld [vmem:[#allocation7 + $0xd20] sm:$0xff]
    %v857 = vld [vmem:[#allocation7 + $0xd28] sm:$0xff]
    %v858 = vld [vmem:[#allocation7 + $0xd30] sm:$0xff]
    %v859 = vld [vmem:[#allocation7 + $0xd38] sm:$0xff]
    %v860 = vld [vmem:[#allocation7 + $0xd40] sm:$0xff]
    %v861 = vld [vmem:[#allocation7 + $0xd48] sm:$0xff]
    %v862 = vld [vmem:[#allocation7 + $0xd50] sm:$0xff]
    %v863 = vld [vmem:[#allocation7 + $0xd58] sm:$0xff]
    %v864 = vld [vmem:[#allocation7 + $0xd60] sm:$0xff]
    %v865 = vld [vmem:[#allocation7 + $0xd68] sm:$0xff]
    %v866 = vld [vmem:[#allocation7 + $0xd70] sm:$0xff]
    %v867 = vld [vmem:[#allocation7 + $0xd78] sm:$0xff]
    %v868 = vld [vmem:[#allocation7 + $0xd80] sm:$0xff]
    %v869 = vld [vmem:[#allocation7 + $0xd88] sm:$0xff]
    %v870 = vld [vmem:[#allocation7 + $0xd90] sm:$0xff]
    %v871 = vld [vmem:[#allocation7 + $0xd98] sm:$0xff]
    %v872 = vld [vmem:[#allocation7 + $0xda0] sm:$0xff]
    %v873 = vld [vmem:[#allocation7 + $0xda8] sm:$0xff]
    %v874 = vld [vmem:[#allocation7 + $0xdb0] sm:$0xff]
    %v875 = vld [vmem:[#allocation7 + $0xdb8] sm:$0xff]
    %v876 = vld [vmem:[#allocation7 + $0xdc0] sm:$0xff]
    %v877 = vld [vmem:[#allocation7 + $0xdc8] sm:$0xff]
    %v878 = vld [vmem:[#allocation7 + $0xdd0] sm:$0xff]
    %v879 = vld [vmem:[#allocation7 + $0xdd8] sm:$0xff]
    %v880 = vld [vmem:[#allocation7 + $0xde0] sm:$0xff]
    %v881 = vld [vmem:[#allocation7 + $0xde8] sm:$0xff]
    %v882 = vld [vmem:[#allocation7 + $0xdf0] sm:$0xff]
    %v883 = vld [vmem:[#allocation7 + $0xdf8] sm:$0xff]
    %v884 = vld [vmem:[#allocation7 + $0xe00] sm:$0xff]
    %v885 = vld [vmem:[#allocation7 + $0xe08] sm:$0xff]
    %v886 = vld [vmem:[#allocation7 + $0xe10] sm:$0xff]
    %v887 = vld [vmem:[#allocation7 + $0xe18] sm:$0xff]
    %v888 = vld [vmem:[#allocation7 + $0xe20] sm:$0xff]
    %v889 = vld [vmem:[#allocation7 + $0xe28] sm:$0xff]
    %v890 = vld [vmem:[#allocation7 + $0xe30] sm:$0xff]
    %v891 = vld [vmem:[#allocation7 + $0xe38] sm:$0xff]
    %v892 = vld [vmem:[#allocation7 + $0xe40] sm:$0xff]
    %v893 = vld [vmem:[#allocation7 + $0xe48] sm:$0xff]
    %v894 = vld [vmem:[#allocation7 + $0xe50] sm:$0xff]
    %v895 = vld [vmem:[#allocation7 + $0xe58] sm:$0xff]
    %v896 = vld [vmem:[#allocation7 + $0xe60] sm:$0xff]
    %v897 = vld [vmem:[#allocation7 + $0xe68] sm:$0xff]
    %v898 = vld [vmem:[#allocation7 + $0xe70] sm:$0xff]
    %v899 = vld [vmem:[#allocation7 + $0xe78] sm:$0xff]
    %v900 = vld [vmem:[#allocation7 + $0xe80] sm:$0xff]
    %v901 = vld [vmem:[#allocation7 + $0xe88] sm:$0xff]
    %v902 = vld [vmem:[#allocation7 + $0xe90] sm:$0xff]
    %v903 = vld [vmem:[#allocation7 + $0xe98] sm:$0xff]
    %v904 = vld [vmem:[#allocation7 + $0xea0] sm:$0xff]
    %v905 = vld [vmem:[#allocation7 + $0xea8] sm:$0xff]
    %v906 = vld [vmem:[#allocation7 + $0xeb0] sm:$0xff]
    %v907 = vld [vmem:[#allocation7 + $0xeb8] sm:$0xff]
    %v908 = vld [vmem:[#allocation7 + $0xec0] sm:$0xff]
    %v909 = vld [vmem:[#allocation7 + $0xec8] sm:$0xff]
    %v910 = vld [vmem:[#allocation7 + $0xed0] sm:$0xff]
    %v911 = vld [vmem:[#allocation7 + $0xed8] sm:$0xff]
    %v912 = vld [vmem:[#allocation7 + $0xee0] sm:$0xff]
    %v913 = vld [vmem:[#allocation7 + $0xee8] sm:$0xff]
    %v914 = vld [vmem:[#allocation7 + $0xef0] sm:$0xff]
    %v915 = vld [vmem:[#allocation7 + $0xef8] sm:$0xff]
    %v916 = vld [vmem:[#allocation7 + $0xf00] sm:$0xff]
    %v917 = vld [vmem:[#allocation7 + $0xf08] sm:$0xff]
    %v918 = vld [vmem:[#allocation7 + $0xf10] sm:$0xff]
    %v919 = vld [vmem:[#allocation7 + $0xf18] sm:$0xff]
    %v920 = vld [vmem:[#allocation7 + $0xf20] sm:$0xff]
    %v921 = vld [vmem:[#allocation7 + $0xf28] sm:$0xff]
    %v922 = vld [vmem:[#allocation7 + $0xf30] sm:$0xff]
    %v923 = vld [vmem:[#allocation7 + $0xf38] sm:$0xff]
    %v924 = vld [vmem:[#allocation7 + $0xf40] sm:$0xff]
    %v925 = vld [vmem:[#allocation7 + $0xf48] sm:$0xff]
    %v926 = vld [vmem:[#allocation7 + $0xf50] sm:$0xff]
    %v927 = vld [vmem:[#allocation7 + $0xf58] sm:$0xff]
    %v928 = vld [vmem:[#allocation7 + $0xf60] sm:$0xff]
    %v929 = vld [vmem:[#allocation7 + $0xf68] sm:$0xff]
    %v930 = vld [vmem:[#allocation7 + $0xf70] sm:$0xff]
    %v931 = vld [vmem:[#allocation7 + $0xf78] sm:$0xff]
    %v932 = vld [vmem:[#allocation7 + $0xf80] sm:$0xff]
    %v933 = vld [vmem:[#allocation7 + $0xf88] sm:$0xff]
    %v934 = vld [vmem:[#allocation7 + $0xf90] sm:$0xff]
    %v935 = vld [vmem:[#allocation7 + $0xf98] sm:$0xff]
    %v936 = vld [vmem:[#allocation7 + $0xfa0] sm:$0xff]
    %v937 = vld [vmem:[#allocation7 + $0xfa8] sm:$0xff]
    %v938 = vld [vmem:[#allocation7 + $0xfb0] sm:$0xff]
    %v939 = vld [vmem:[#allocation7 + $0xfb8] sm:$0xff]
    %v940 = vld [vmem:[#allocation7 + $0xfc0] sm:$0xff]
    %v941 = vld [vmem:[#allocation7 + $0xfc8] sm:$0xff]
    %v942 = vld [vmem:[#allocation7 + $0xfd0] sm:$0xff]
    %v943 = vld [vmem:[#allocation7 + $0xfd8] sm:$0xff]
    %v944 = vld [vmem:[#allocation7 + $0xfe0] sm:$0xff]
    %v945 = vld [vmem:[#allocation7 + $0xfe8] sm:$0xff]
    %v946 = vld [vmem:[#allocation7 + $0xff0] sm:$0xff]
    %v947 = vld [vmem:[#allocation7 + $0xff8] sm:$0xff]
    %v948 = vld [vmem:[#allocation7 + $0x1000] sm:$0xff]
    %v949 = vld [vmem:[#allocation7 + $0x1008] sm:$0xff]
    %v950 = vld [vmem:[#allocation7 + $0x1010] sm:$0xff]
    %v951 = vld [vmem:[#allocation7 + $0x1018] sm:$0xff]
    %v952 = vld [vmem:[#allocation7 + $0x1020] sm:$0xff]
    %v953 = vld [vmem:[#allocation7 + $0x1028] sm:$0xff]
    %v954 = vld [vmem:[#allocation7 + $0x1030] sm:$0xff]
    %v955 = vld [vmem:[#allocation7 + $0x1038] sm:$0xff]
    %v956 = vld [vmem:[#allocation7 + $0x1040] sm:$0xff]
    %v957 = vld [vmem:[#allocation7 + $0x1048] sm:$0xff]
    %v958 = vld [vmem:[#allocation7 + $0x1050] sm:$0xff]
    %v959 = vld [vmem:[#allocation7 + $0x1058] sm:$0xff]
    %v960 = vld [vmem:[#allocation7 + $0x1060] sm:$0xff]
    %v961 = vld [vmem:[#allocation7 + $0x1068] sm:$0xff]
    %v962 = vld [vmem:[#allocation7 + $0x1070] sm:$0xff]
    %v963 = vld [vmem:[#allocation7 + $0x1078] sm:$0xff]
    %v964 = vld [vmem:[#allocation7 + $0x1080] sm:$0xff]
    %v965 = vld [vmem:[#allocation7 + $0x1088] sm:$0xff]
    %v966 = vld [vmem:[#allocation7 + $0x1090] sm:$0xff]
    %v967 = vld [vmem:[#allocation7 + $0x1098] sm:$0xff]
    %v968 = vld [vmem:[#allocation7 + $0x10a0] sm:$0xff]
    %v969 = vld [vmem:[#allocation7 + $0x10a8] sm:$0xff]
    %v970 = vld [vmem:[#allocation7 + $0x10b0] sm:$0xff]
    %v971 = vld [vmem:[#allocation7 + $0x10b8] sm:$0xff]
    %v972 = vld [vmem:[#allocation7 + $0x10c0] sm:$0xff]
    %v973 = vld [vmem:[#allocation7 + $0x10c8] sm:$0xff]
    %v974 = vld [vmem:[#allocation7 + $0x10d0] sm:$0xff]
    %v975 = vld [vmem:[#allocation7 + $0x10d8] sm:$0xff]
    %v976 = vld [vmem:[#allocation7 + $0x10e0] sm:$0xff]
    %v977 = vld [vmem:[#allocation7 + $0x10e8] sm:$0xff]
    %v978 = vld [vmem:[#allocation7 + $0x10f0] sm:$0xff]
    %v979 = vld [vmem:[#allocation7 + $0x10f8] sm:$0xff]
    %v980 = vld [vmem:[#allocation7 + $0x1100] sm:$0xff]
    %v981 = vld [vmem:[#allocation7 + $0x1108] sm:$0xff]
    %v982 = vld [vmem:[#allocation7 + $0x1110] sm:$0xff]
    %v983 = vld [vmem:[#allocation7 + $0x1118] sm:$0xff]
    %v984 = vld [vmem:[#allocation7 + $0x1120] sm:$0xff]
    %v985 = vld [vmem:[#allocation7 + $0x1128] sm:$0xff]
    %v986 = vld [vmem:[#allocation7 + $0x1130] sm:$0xff]
    %v987 = vld [vmem:[#allocation7 + $0x1138] sm:$0xff]
    %v988 = vld [vmem:[#allocation7 + $0x1140] sm:$0xff]
    %v989 = vld [vmem:[#allocation7 + $0x1148] sm:$0xff]
    %v990 = vld [vmem:[#allocation7 + $0x1150] sm:$0xff]
    %v991 = vld [vmem:[#allocation7 + $0x1158] sm:$0xff]
    %v992 = vld [vmem:[#allocation7 + $0x1160] sm:$0xff]
    %v993 = vld [vmem:[#allocation7 + $0x1168] sm:$0xff]
    %v994 = vld [vmem:[#allocation7 + $0x1170] sm:$0xff]
    %v995 = vld [vmem:[#allocation7 + $0x1178] sm:$0xff]
    %v996 = vld [vmem:[#allocation7 + $0x1180] sm:$0xff]
    %v997 = vld [vmem:[#allocation7 + $0x1188] sm:$0xff]
    %v998 = vld [vmem:[#allocation7 + $0x1190] sm:$0xff]
    %v999 = vld [vmem:[#allocation7 + $0x1198] sm:$0xff]
    %v1000 = vld [vmem:[#allocation7 + $0x11a0] sm:$0xff]
    %v1001 = vld [vmem:[#allocation7 + $0x11a8] sm:$0xff]
    %v1002 = vld [vmem:[#allocation7 + $0x11b0] sm:$0xff]
    %v1003 = vld [vmem:[#allocation7 + $0x11b8] sm:$0xff]
    %v1004 = vld [vmem:[#allocation7 + $0x11c0] sm:$0xff]
    %v1005 = vld [vmem:[#allocation7 + $0x11c8] sm:$0xff]
    %v1006 = vld [vmem:[#allocation7 + $0x11d0] sm:$0xff]
    %v1007 = vld [vmem:[#allocation7 + $0x11d8] sm:$0xff]
    %v1008 = vld [vmem:[#allocation7 + $0x11e0] sm:$0xff]
    %v1009 = vld [vmem:[#allocation7 + $0x11e8] sm:$0xff]
    %v1010 = vld [vmem:[#allocation7 + $0x11f0] sm:$0xff]
    %v1011 = vld [vmem:[#allocation7 + $0x11f8] sm:$0xff]
    %v1012 = vld [vmem:[#allocation7 + $0x1200] sm:$0xff]
    %v1013 = vld [vmem:[#allocation7 + $0x1208] sm:$0xff]
    %v1014 = vld [vmem:[#allocation7 + $0x1210] sm:$0xff]
    %v1015 = vld [vmem:[#allocation7 + $0x1218] sm:$0xff]
    %v1016 = vld [vmem:[#allocation7 + $0x1220] sm:$0xff]
    %v1017 = vld [vmem:[#allocation7 + $0x1228] sm:$0xff]
    %v1018 = vld [vmem:[#allocation7 + $0x1230] sm:$0xff]
    %v1019 = vld [vmem:[#allocation7 + $0x1238] sm:$0xff]
    %v1020 = vld [vmem:[#allocation7 + $0x1240] sm:$0xff]
    %v1021 = vld [vmem:[#allocation7 + $0x1248] sm:$0xff]
    %v1022 = vld [vmem:[#allocation7 + $0x1250] sm:$0xff]
    %v1023 = vld [vmem:[#allocation7 + $0x1258] sm:$0xff]
    %v1024 = vld [vmem:[#allocation7 + $0x1260] sm:$0xff]
    %v1025 = vld [vmem:[#allocation7 + $0x1268] sm:$0xff]
    %v1026 = vld [vmem:[#allocation7 + $0x1270] sm:$0xff]
    %v1027 = vld [vmem:[#allocation7 + $0x1278] sm:$0xff]
    %v1028 = vld [vmem:[#allocation7 + $0x1280] sm:$0xff]
    %v1029 = vld [vmem:[#allocation7 + $0x1288] sm:$0xff]
    %v1030 = vld [vmem:[#allocation7 + $0x1290] sm:$0xff]
    %v1031 = vld [vmem:[#allocation7 + $0x1298] sm:$0xff]
    %v1032 = vld [vmem:[#allocation7 + $0x12a0] sm:$0xff]
    %v1033 = vld [vmem:[#allocation7 + $0x12a8] sm:$0xff]
    %v1034 = vld [vmem:[#allocation7 + $0x12b0] sm:$0xff]
    %v1035 = vld [vmem:[#allocation7 + $0x12b8] sm:$0xff]
    %v1036 = vld [vmem:[#allocation7 + $0x12c0] sm:$0xff]
    %v1037 = vld [vmem:[#allocation7 + $0x12c8] sm:$0xff]
    %v1038 = vld [vmem:[#allocation7 + $0x12d0] sm:$0xff]
    %v1039 = vld [vmem:[#allocation7 + $0x12d8] sm:$0xff]
    %v1040 = vld [vmem:[#allocation7 + $0x12e0] sm:$0xff]
    %v1041 = vld [vmem:[#allocation7 + $0x12e8] sm:$0xff]
    %v1042 = vld [vmem:[#allocation7 + $0x12f0] sm:$0xff]
    %v1043 = vld [vmem:[#allocation7 + $0x12f8] sm:$0xff]
    %v1044 = vld [vmem:[#allocation7 + $0x1300] sm:$0xff]
    %v1045 = vld [vmem:[#allocation7 + $0x1308] sm:$0xff]
    %v1046 = vld [vmem:[#allocation7 + $0x1310] sm:$0xff]
    %v1047 = vld [vmem:[#allocation7 + $0x1318] sm:$0xff]
    %v1048 = vld [vmem:[#allocation7 + $0x1320] sm:$0xff]
    %v1049 = vld [vmem:[#allocation7 + $0x1328] sm:$0xff]
    %v1050 = vld [vmem:[#allocation7 + $0x1330] sm:$0xff]
    %v1051 = vld [vmem:[#allocation7 + $0x1338] sm:$0xff]
    %v1052 = vld [vmem:[#allocation7 + $0x1340] sm:$0xff]
    %v1053 = vld [vmem:[#allocation7 + $0x1348] sm:$0xff]
    %v1054 = vld [vmem:[#allocation7 + $0x1350] sm:$0xff]
    %v1055 = vld [vmem:[#allocation7 + $0x1358] sm:$0xff]
    %v1056 = vld [vmem:[#allocation7 + $0x1360] sm:$0xff]
    %v1057 = vld [vmem:[#allocation7 + $0x1368] sm:$0xff]
    %v1058 = vld [vmem:[#allocation7 + $0x1370] sm:$0xff]
    %v1059 = vld [vmem:[#allocation7 + $0x1378] sm:$0xff]
    %v1060 = vld [vmem:[#allocation7 + $0x1380] sm:$0xff]
    %v1061 = vld [vmem:[#allocation7 + $0x1388] sm:$0xff]
    %v1062 = vld [vmem:[#allocation7 + $0x1390] sm:$0xff]
    %v1063 = vld [vmem:[#allocation7 + $0x1398] sm:$0xff]
    %v1064 = vld [vmem:[#allocation7 + $0x13a0] sm:$0xff]
    %v1065 = vld [vmem:[#allocation7 + $0x13a8] sm:$0xff]
    %v1066 = vld [vmem:[#allocation7 + $0x13b0] sm:$0xff]
    %v1067 = vld [vmem:[#allocation7 + $0x13b8] sm:$0xff]
    %v1068 = vld [vmem:[#allocation7 + $0x13c0] sm:$0xff]
    %v1069 = vld [vmem:[#allocation7 + $0x13c8] sm:$0xff]
    %v1070 = vld [vmem:[#allocation7 + $0x13d0] sm:$0xff]
    %v1071 = vld [vmem:[#allocation7 + $0x13d8] sm:$0xff]
    %v1072 = vld [vmem:[#allocation7 + $0x13e0] sm:$0xff]
    %v1073 = vld [vmem:[#allocation7 + $0x13e8] sm:$0xff]
    %v1074 = vld [vmem:[#allocation7 + $0x13f0] sm:$0xff]
    %v1075 = vld [vmem:[#allocation7 + $0x13f8] sm:$0xff]
    %v1076 = vld [vmem:[#allocation7 + $0x1400] sm:$0xff]
    %v1077 = vld [vmem:[#allocation7 + $0x1408] sm:$0xff]
    %v1078 = vld [vmem:[#allocation7 + $0x1410] sm:$0xff]
    %v1079 = vld [vmem:[#allocation7 + $0x1418] sm:$0xff]
    %v1080 = vld [vmem:[#allocation7 + $0x1420] sm:$0xff]
    %v1081 = vld [vmem:[#allocation7 + $0x1428] sm:$0xff]
    %v1082 = vld [vmem:[#allocation7 + $0x1430] sm:$0xff]
    %v1083 = vld [vmem:[#allocation7 + $0x1438] sm:$0xff]
    %v1084 = vld [vmem:[#allocation7 + $0x1440] sm:$0xff]
    %v1085 = vld [vmem:[#allocation7 + $0x1448] sm:$0xff]
    %v1086 = vld [vmem:[#allocation7 + $0x1450] sm:$0xff]
    %v1087 = vld [vmem:[#allocation7 + $0x1458] sm:$0xff]
    %v1088 = vld [vmem:[#allocation7 + $0x1460] sm:$0xff]
    %v1089 = vld [vmem:[#allocation7 + $0x1468] sm:$0xff]
    %v1090 = vld [vmem:[#allocation7 + $0x1470] sm:$0xff]
    %v1091 = vld [vmem:[#allocation7 + $0x1478] sm:$0xff]
    %v1092 = vld [vmem:[#allocation7 + $0x1480] sm:$0xff]
    %v1093 = vld [vmem:[#allocation7 + $0x1488] sm:$0xff]
    %v1094 = vld [vmem:[#allocation7 + $0x1490] sm:$0xff]
    %v1095 = vld [vmem:[#allocation7 + $0x1498] sm:$0xff]
    %v1096 = vld [vmem:[#allocation7 + $0x14a0] sm:$0xff]
    %v1097 = vld [vmem:[#allocation7 + $0x14a8] sm:$0xff]
    %v1098 = vld [vmem:[#allocation7 + $0x14b0] sm:$0xff]
    %v1099 = vld [vmem:[#allocation7 + $0x14b8] sm:$0xff]
    %v1100 = vld [vmem:[#allocation7 + $0x14c0] sm:$0xff]
    %v1101 = vld [vmem:[#allocation7 + $0x14c8] sm:$0xff]
    %v1102 = vld [vmem:[#allocation7 + $0x14d0] sm:$0xff]
    %v1103 = vld [vmem:[#allocation7 + $0x14d8] sm:$0xff]
    %v1104 = vld [vmem:[#allocation7 + $0x14e0] sm:$0xff]
    %v1105 = vld [vmem:[#allocation7 + $0x14e8] sm:$0xff]
    %v1106 = vld [vmem:[#allocation7 + $0x14f0] sm:$0xff]
    %v1107 = vld [vmem:[#allocation7 + $0x14f8] sm:$0xff]
    %v1108 = vld [vmem:[#allocation7 + $0x1500] sm:$0xff]
    %v1109 = vld [vmem:[#allocation7 + $0x1508] sm:$0xff]
    %v1110 = vld [vmem:[#allocation7 + $0x1510] sm:$0xff]
    %v1111 = vld [vmem:[#allocation7 + $0x1518] sm:$0xff]
    %v1112 = vld [vmem:[#allocation7 + $0x1520] sm:$0xff]
    %v1113 = vld [vmem:[#allocation7 + $0x1528] sm:$0xff]
    %v1114 = vld [vmem:[#allocation7 + $0x1530] sm:$0xff]
    %v1115 = vld [vmem:[#allocation7 + $0x1538] sm:$0xff]
    %v1116 = vld [vmem:[#allocation7 + $0x1540] sm:$0xff]
    %v1117 = vld [vmem:[#allocation7 + $0x1548] sm:$0xff]
    %v1118 = vld [vmem:[#allocation7 + $0x1550] sm:$0xff]
    %v1119 = vld [vmem:[#allocation7 + $0x1558] sm:$0xff]
    %v1120 = vld [vmem:[#allocation7 + $0x1560] sm:$0xff]
    %v1121 = vld [vmem:[#allocation7 + $0x1568] sm:$0xff]
    %v1122 = vld [vmem:[#allocation7 + $0x1570] sm:$0xff]
    %v1123 = vld [vmem:[#allocation7 + $0x1578] sm:$0xff]
    %v1124 = vld [vmem:[#allocation7 + $0x1580] sm:$0xff]
    %v1125 = vld [vmem:[#allocation7 + $0x1588] sm:$0xff]
    %v1126 = vld [vmem:[#allocation7 + $0x1590] sm:$0xff]
    %v1127 = vld [vmem:[#allocation7 + $0x1598] sm:$0xff]
    %v1128 = vld [vmem:[#allocation7 + $0x15a0] sm:$0xff]
    %v1129 = vld [vmem:[#allocation7 + $0x15a8] sm:$0xff]
    %v1130 = vld [vmem:[#allocation7 + $0x15b0] sm:$0xff]
    %v1131 = vld [vmem:[#allocation7 + $0x15b8] sm:$0xff]
    %v1132 = vld [vmem:[#allocation7 + $0x15c0] sm:$0xff]
    %v1133 = vld [vmem:[#allocation7 + $0x15c8] sm:$0xff]
    %v1134 = vld [vmem:[#allocation7 + $0x15d0] sm:$0xff]
    %v1135 = vld [vmem:[#allocation7 + $0x15d8] sm:$0xff]
    %v1136 = vld [vmem:[#allocation7 + $0x15e0] sm:$0xff]
    %v1137 = vld [vmem:[#allocation7 + $0x15e8] sm:$0xff]
    %v1138 = vld [vmem:[#allocation7 + $0x15f0] sm:$0xff]
    %v1139 = vld [vmem:[#allocation7 + $0x15f8] sm:$0xff]
    %v1140 = vld [vmem:[#allocation7 + $0x1600] sm:$0xff]
    %v1141 = vld [vmem:[#allocation7 + $0x1608] sm:$0xff]
    %v1142 = vld [vmem:[#allocation7 + $0x1610] sm:$0xff]
    %v1143 = vld [vmem:[#allocation7 + $0x1618] sm:$0xff]
    %v1144 = vld [vmem:[#allocation7 + $0x1620] sm:$0xff]
    %v1145 = vld [vmem:[#allocation7 + $0x1628] sm:$0xff]
    %v1146 = vld [vmem:[#allocation7 + $0x1630] sm:$0xff]
    %v1147 = vld [vmem:[#allocation7 + $0x1638] sm:$0xff]
    %v1148 = vld [vmem:[#allocation7 + $0x1640] sm:$0xff]
    %v1149 = vld [vmem:[#allocation7 + $0x1648] sm:$0xff]
    %v1150 = vld [vmem:[#allocation7 + $0x1650] sm:$0xff]
    %v1151 = vld [vmem:[#allocation7 + $0x1658] sm:$0xff]
    %v1152 = vld [vmem:[#allocation7 + $0x1660] sm:$0xff]
    %v1153 = vld [vmem:[#allocation7 + $0x1668] sm:$0xff]
    %v1154 = vld [vmem:[#allocation7 + $0x1670] sm:$0xff]
    %v1155 = vld [vmem:[#allocation7 + $0x1678] sm:$0xff]
    %v1156 = vld [vmem:[#allocation7 + $0x1680] sm:$0xff]
    %v1157 = vld [vmem:[#allocation7 + $0x1688] sm:$0xff]
    %v1158 = vld [vmem:[#allocation7 + $0x1690] sm:$0xff]
    %v1159 = vld [vmem:[#allocation7 + $0x1698] sm:$0xff]
    %v1160 = vld [vmem:[#allocation7 + $0x16a0] sm:$0xff]
    %v1161 = vld [vmem:[#allocation7 + $0x16a8] sm:$0xff]
    %v1162 = vld [vmem:[#allocation7 + $0x16b0] sm:$0xff]
    %v1163 = vld [vmem:[#allocation7 + $0x16b8] sm:$0xff]
    %v1164 = vld [vmem:[#allocation7 + $0x16c0] sm:$0xff]
    %v1165 = vld [vmem:[#allocation7 + $0x16c8] sm:$0xff]
    %v1166 = vld [vmem:[#allocation7 + $0x16d0] sm:$0xff]
    %v1167 = vld [vmem:[#allocation7 + $0x16d8] sm:$0xff]
    %v1168 = vld [vmem:[#allocation7 + $0x16e0] sm:$0xff]
    %v1169 = vld [vmem:[#allocation7 + $0x16e8] sm:$0xff]
    %v1170 = vld [vmem:[#allocation7 + $0x16f0] sm:$0xff]
    %v1171 = vld [vmem:[#allocation7 + $0x16f8] sm:$0xff]
    %v1172 = vld [vmem:[#allocation7 + $0x1700] sm:$0xff]
    %v1173 = vld [vmem:[#allocation7 + $0x1708] sm:$0xff]
    %v1174 = vld [vmem:[#allocation7 + $0x1710] sm:$0xff]
    %v1175 = vld [vmem:[#allocation7 + $0x1718] sm:$0xff]
    %v1176 = vld [vmem:[#allocation7 + $0x1720] sm:$0xff]
    %v1177 = vld [vmem:[#allocation7 + $0x1728] sm:$0xff]
    %v1178 = vld [vmem:[#allocation7 + $0x1730] sm:$0xff]
    %v1179 = vld [vmem:[#allocation7 + $0x1738] sm:$0xff]
    %v1180 = vld [vmem:[#allocation7 + $0x1740] sm:$0xff]
    %v1181 = vld [vmem:[#allocation7 + $0x1748] sm:$0xff]
    %v1182 = vld [vmem:[#allocation7 + $0x1750] sm:$0xff]
    %v1183 = vld [vmem:[#allocation7 + $0x1758] sm:$0xff]
    %v1184 = vld [vmem:[#allocation7 + $0x1760] sm:$0xff]
    %v1185 = vld [vmem:[#allocation7 + $0x1768] sm:$0xff]
    %v1186 = vld [vmem:[#allocation7 + $0x1770] sm:$0xff]
    %v1187 = vld [vmem:[#allocation7 + $0x1778] sm:$0xff]
    %v1188 = vld [vmem:[#allocation7 + $0x1780] sm:$0xff]
    %v1189 = vld [vmem:[#allocation7 + $0x1788] sm:$0xff]
    %v1190 = vld [vmem:[#allocation7 + $0x1790] sm:$0xff]
    %v1191 = vld [vmem:[#allocation7 + $0x1798] sm:$0xff]
    %v1192 = vld [vmem:[#allocation7 + $0x17a0] sm:$0xff]
    %v1193 = vld [vmem:[#allocation7 + $0x17a8] sm:$0xff]
    %v1194 = vld [vmem:[#allocation7 + $0x17b0] sm:$0xff]
    %v1195 = vld [vmem:[#allocation7 + $0x17b8] sm:$0xff]
    %v1196 = vld [vmem:[#allocation7 + $0x17c0] sm:$0xff]
    %v1197 = vld [vmem:[#allocation7 + $0x17c8] sm:$0xff]
    %v1198 = vld [vmem:[#allocation7 + $0x17d0] sm:$0xff]
    %v1199 = vld [vmem:[#allocation7 + $0x17d8] sm:$0xff]
    %v1200 = vld [vmem:[#allocation7 + $0x17e0] sm:$0xff]
    %v1201 = vld [vmem:[#allocation7 + $0x17e8] sm:$0xff]
    %v1202 = vld [vmem:[#allocation7 + $0x17f0] sm:$0xff]
    %v1203 = vld [vmem:[#allocation7 + $0x17f8] sm:$0xff]
    %v1204 = vld [vmem:[#allocation7 + $0x1800] sm:$0xff]
    %v1205 = vld [vmem:[#allocation7 + $0x1808] sm:$0xff]
    %v1206 = vld [vmem:[#allocation7 + $0x1810] sm:$0xff]
    %v1207 = vld [vmem:[#allocation7 + $0x1818] sm:$0xff]
    %v1208 = vld [vmem:[#allocation7 + $0x1820] sm:$0xff]
    %v1209 = vld [vmem:[#allocation7 + $0x1828] sm:$0xff]
    %v1210 = vld [vmem:[#allocation7 + $0x1830] sm:$0xff]
    %v1211 = vld [vmem:[#allocation7 + $0x1838] sm:$0xff]
    %v1212 = vld [vmem:[#allocation7 + $0x1840] sm:$0xff]
    %v1213 = vld [vmem:[#allocation7 + $0x1848] sm:$0xff]
    %v1214 = vld [vmem:[#allocation7 + $0x1850] sm:$0xff]
    %v1215 = vld [vmem:[#allocation7 + $0x1858] sm:$0xff]
    %v1216 = vld [vmem:[#allocation7 + $0x1860] sm:$0xff]
    %v1217 = vld [vmem:[#allocation7 + $0x1868] sm:$0xff]
    %v1218 = vld [vmem:[#allocation7 + $0x1870] sm:$0xff]
    %v1219 = vld [vmem:[#allocation7 + $0x1878] sm:$0xff]
    %v1220 = vld [vmem:[#allocation7 + $0x1880] sm:$0xff]
    %v1221 = vld [vmem:[#allocation7 + $0x1888] sm:$0xff]
    %v1222 = vld [vmem:[#allocation7 + $0x1890] sm:$0xff]
    %v1223 = vld [vmem:[#allocation7 + $0x1898] sm:$0xff]
    %v1224 = vld [vmem:[#allocation7 + $0x18a0] sm:$0xff]
    %v1225 = vld [vmem:[#allocation7 + $0x18a8] sm:$0xff]
    %v1226 = vld [vmem:[#allocation7 + $0x18b0] sm:$0xff]
    %v1227 = vld [vmem:[#allocation7 + $0x18b8] sm:$0xff]
    %v1228 = vld [vmem:[#allocation7 + $0x18c0] sm:$0xff]
    %v1229 = vld [vmem:[#allocation7 + $0x18c8] sm:$0xff]
    %v1230 = vld [vmem:[#allocation7 + $0x18d0] sm:$0xff]
    %v1231 = vld [vmem:[#allocation7 + $0x18d8] sm:$0xff]
    %v1232 = vld [vmem:[#allocation7 + $0x18e0] sm:$0xff]
    %v1233 = vld [vmem:[#allocation7 + $0x18e8] sm:$0xff]
    %v1234 = vld [vmem:[#allocation7 + $0x18f0] sm:$0xff]
    %v1235 = vld [vmem:[#allocation7 + $0x18f8] sm:$0xff]
    %v1236 = vld [vmem:[#allocation7 + $0x1900] sm:$0xff]
    %v1237 = vld [vmem:[#allocation7 + $0x1908] sm:$0xff]
    %v1238 = vld [vmem:[#allocation7 + $0x1910] sm:$0xff]
    %v1239 = vld [vmem:[#allocation7 + $0x1918] sm:$0xff]
    %v1240 = vld [vmem:[#allocation7 + $0x1920] sm:$0xff]
    %v1241 = vld [vmem:[#allocation7 + $0x1928] sm:$0xff]
    %v1242 = vld [vmem:[#allocation7 + $0x1930] sm:$0xff]
    %v1243 = vld [vmem:[#allocation7 + $0x1938] sm:$0xff]
    %v1244 = vld [vmem:[#allocation7 + $0x1940] sm:$0xff]
    %v1245 = vld [vmem:[#allocation7 + $0x1948] sm:$0xff]
    %v1246 = vld [vmem:[#allocation7 + $0x1950] sm:$0xff]
    %v1247 = vld [vmem:[#allocation7 + $0x1958] sm:$0xff]
    %v1248 = vld [vmem:[#allocation7 + $0x1960] sm:$0xff]
    %v1249 = vld [vmem:[#allocation7 + $0x1968] sm:$0xff]
    %v1250 = vld [vmem:[#allocation7 + $0x1970] sm:$0xff]
    %v1251 = vld [vmem:[#allocation7 + $0x1978] sm:$0xff]
    %v1252 = vld [vmem:[#allocation7 + $0x1980] sm:$0xff]
    %v1253 = vld [vmem:[#allocation7 + $0x1988] sm:$0xff]
    %v1254 = vld [vmem:[#allocation7 + $0x1990] sm:$0xff]
    %v1255 = vld [vmem:[#allocation7 + $0x1998] sm:$0xff]
    %v1256 = vld [vmem:[#allocation7 + $0x19a0] sm:$0xff]
    %v1257 = vld [vmem:[#allocation7 + $0x19a8] sm:$0xff]
    %v1258 = vld [vmem:[#allocation7 + $0x19b0] sm:$0xff]
    %v1259 = vld [vmem:[#allocation7 + $0x19b8] sm:$0xff]
    %v1260 = vld [vmem:[#allocation7 + $0x19c0] sm:$0xff]
    %v1261 = vld [vmem:[#allocation7 + $0x19c8] sm:$0xff]
    %v1262 = vld [vmem:[#allocation7 + $0x19d0] sm:$0xff]
    %v1263 = vld [vmem:[#allocation7 + $0x19d8] sm:$0xff]
    %v1264 = vld [vmem:[#allocation7 + $0x19e0] sm:$0xff]
    %v1265 = vld [vmem:[#allocation7 + $0x19e8] sm:$0xff]
    %v1266 = vld [vmem:[#allocation7 + $0x19f0] sm:$0xff]
    %v1267 = vld [vmem:[#allocation7 + $0x19f8] sm:$0xff]
    %v1268 = vld [vmem:[#allocation7 + $0x1a00] sm:$0xff]
    %v1269 = vld [vmem:[#allocation7 + $0x1a08] sm:$0xff]
    %v1270 = vld [vmem:[#allocation7 + $0x1a10] sm:$0xff]
    %v1271 = vld [vmem:[#allocation7 + $0x1a18] sm:$0xff]
    %v1272 = vld [vmem:[#allocation7 + $0x1a20] sm:$0xff]
    %v1273 = vld [vmem:[#allocation7 + $0x1a28] sm:$0xff]
    %v1274 = vld [vmem:[#allocation7 + $0x1a30] sm:$0xff]
    %v1275 = vld [vmem:[#allocation7 + $0x1a38] sm:$0xff]
    %v1276 = vld [vmem:[#allocation7 + $0x1a40] sm:$0xff]
    %v1277 = vld [vmem:[#allocation7 + $0x1a48] sm:$0xff]
    %v1278 = vld [vmem:[#allocation7 + $0x1a50] sm:$0xff]
    %v1279 = vld [vmem:[#allocation7 + $0x1a58] sm:$0xff]
    %v1280 = vld [vmem:[#allocation7 + $0x1a60] sm:$0xff]
    %v1281 = vld [vmem:[#allocation7 + $0x1a68] sm:$0xff]
    %v1282 = vld [vmem:[#allocation7 + $0x1a70] sm:$0xff]
    %v1283 = vld [vmem:[#allocation7 + $0x1a78] sm:$0xff]
    %v1284 = vld [vmem:[#allocation7 + $0x1a80] sm:$0xff]
    %v1285 = vld [vmem:[#allocation7 + $0x1a88] sm:$0xff]
    %v1286 = vld [vmem:[#allocation7 + $0x1a90] sm:$0xff]
    %v1287 = vld [vmem:[#allocation7 + $0x1a98] sm:$0xff]
    %v1288 = vld [vmem:[#allocation7 + $0x1aa0] sm:$0xff]
    %v1289 = vld [vmem:[#allocation7 + $0x1aa8] sm:$0xff]
    %v1290 = vld [vmem:[#allocation7 + $0x1ab0] sm:$0xff]
    %v1291 = vld [vmem:[#allocation7 + $0x1ab8] sm:$0xff]
    %v1292 = vld [vmem:[#allocation7 + $0x1ac0] sm:$0xff]
    %v1293 = vld [vmem:[#allocation7 + $0x1ac8] sm:$0xff]
    %v1294 = vld [vmem:[#allocation7 + $0x1ad0] sm:$0xff]
    %v1295 = vld [vmem:[#allocation7 + $0x1ad8] sm:$0xff]
    %v1296 = vld [vmem:[#allocation7 + $0x1ae0] sm:$0xff]
    %v1297 = vld [vmem:[#allocation7 + $0x1ae8] sm:$0xff]
    %v1298 = vld [vmem:[#allocation7 + $0x1af0] sm:$0xff]
    %v1299 = vld [vmem:[#allocation7 + $0x1af8] sm:$0xff]
    %v1300 = vld [vmem:[#allocation7 + $0x1b00] sm:$0xff]
    %v1301 = vld [vmem:[#allocation7 + $0x1b08] sm:$0xff]
    %v1302 = vld [vmem:[#allocation7 + $0x1b10] sm:$0xff]
    %v1303 = vld [vmem:[#allocation7 + $0x1b18] sm:$0xff]
    %v1304 = vld [vmem:[#allocation7 + $0x1b20] sm:$0xff]
    %v1305 = vld [vmem:[#allocation7 + $0x1b28] sm:$0xff]
    %v1306 = vld [vmem:[#allocation7 + $0x1b30] sm:$0xff]
    %v1307 = vld [vmem:[#allocation7 + $0x1b38] sm:$0xff]
    %v1308 = vld [vmem:[#allocation7 + $0x1b40] sm:$0xff]
    %v1309 = vld [vmem:[#allocation7 + $0x1b48] sm:$0xff]
    %v1310 = vld [vmem:[#allocation7 + $0x1b50] sm:$0xff]
    %v1311 = vld [vmem:[#allocation7 + $0x1b58] sm:$0xff]
    %v1312 = vld [vmem:[#allocation7 + $0x1b60] sm:$0xff]
    %v1313 = vld [vmem:[#allocation7 + $0x1b68] sm:$0xff]
    %v1314 = vld [vmem:[#allocation7 + $0x1b70] sm:$0xff]
    %v1315 = vld [vmem:[#allocation7 + $0x1b78] sm:$0xff]
    %v1316 = vld [vmem:[#allocation7 + $0x1b80] sm:$0xff]
    %v1317 = vld [vmem:[#allocation7 + $0x1b88] sm:$0xff]
    %v1318 = vld [vmem:[#allocation7 + $0x1b90] sm:$0xff]
    %v1319 = vld [vmem:[#allocation7 + $0x1b98] sm:$0xff]
    %v1320 = vld [vmem:[#allocation7 + $0x1ba0] sm:$0xff]
    %v1321 = vld [vmem:[#allocation7 + $0x1ba8] sm:$0xff]
    %v1322 = vld [vmem:[#allocation7 + $0x1bb0] sm:$0xff]
    %v1323 = vld [vmem:[#allocation7 + $0x1bb8] sm:$0xff]
    %v1324 = vld [vmem:[#allocation7 + $0x1bc0] sm:$0xff]
    %v1325 = vld [vmem:[#allocation7 + $0x1bc8] sm:$0xff]
    %v1326 = vld [vmem:[#allocation7 + $0x1bd0] sm:$0xff]
    %v1327 = vld [vmem:[#allocation7 + $0x1bd8] sm:$0xff]
    %v1328 = vld [vmem:[#allocation7 + $0x1be0] sm:$0xff]
    %v1329 = vld [vmem:[#allocation7 + $0x1be8] sm:$0xff]
    %v1330 = vld [vmem:[#allocation7 + $0x1bf0] sm:$0xff]
    %v1331 = vld [vmem:[#allocation7 + $0x1bf8] sm:$0xff]
    %v1332 = vld [vmem:[#allocation7 + $0x1c00] sm:$0xff]
    %v1333 = vld [vmem:[#allocation7 + $0x1c08] sm:$0xff]
    %v1334 = vld [vmem:[#allocation7 + $0x1c10] sm:$0xff]
    %v1335 = vld [vmem:[#allocation7 + $0x1c18] sm:$0xff]
    %v1336 = vld [vmem:[#allocation7 + $0x1c20] sm:$0xff]
    %v1337 = vld [vmem:[#allocation7 + $0x1c28] sm:$0xff]
    %v1338 = vld [vmem:[#allocation7 + $0x1c30] sm:$0xff]
    %v1339 = vld [vmem:[#allocation7 + $0x1c38] sm:$0xff]
    %v1340 = vld [vmem:[#allocation7 + $0x1c40] sm:$0xff]
    %v1341 = vld [vmem:[#allocation7 + $0x1c48] sm:$0xff]
    %v1342 = vld [vmem:[#allocation7 + $0x1c50] sm:$0xff]
    %v1343 = vld [vmem:[#allocation7 + $0x1c58] sm:$0xff]
    %v1344 = vld [vmem:[#allocation7 + $0x1c60] sm:$0xff]
    %v1345 = vld [vmem:[#allocation7 + $0x1c68] sm:$0xff]
    %v1346 = vld [vmem:[#allocation7 + $0x1c70] sm:$0xff]
    %v1347 = vld [vmem:[#allocation7 + $0x1c78] sm:$0xff]
    %v1348 = vld [vmem:[#allocation7 + $0x1c80] sm:$0xff]
    %v1349 = vld [vmem:[#allocation7 + $0x1c88] sm:$0xff]
    %v1350 = vld [vmem:[#allocation7 + $0x1c90] sm:$0xff]
    %v1351 = vld [vmem:[#allocation7 + $0x1c98] sm:$0xff]
    %v1352 = vld [vmem:[#allocation7 + $0x1ca0] sm:$0xff]
    %v1353 = vld [vmem:[#allocation7 + $0x1ca8] sm:$0xff]
    %v1354 = vld [vmem:[#allocation7 + $0x1cb0] sm:$0xff]
    %v1355 = vld [vmem:[#allocation7 + $0x1cb8] sm:$0xff]
    %v1356 = vld [vmem:[#allocation7 + $0x1cc0] sm:$0xff]
    %v1357 = vld [vmem:[#allocation7 + $0x1cc8] sm:$0xff]
    %v1358 = vld [vmem:[#allocation7 + $0x1cd0] sm:$0xff]
    %v1359 = vld [vmem:[#allocation7 + $0x1cd8] sm:$0xff]
    %v1360 = vld [vmem:[#allocation7 + $0x1ce0] sm:$0xff]
    %v1361 = vld [vmem:[#allocation7 + $0x1ce8] sm:$0xff]
    %v1362 = vld [vmem:[#allocation7 + $0x1cf0] sm:$0xff]
    %v1363 = vld [vmem:[#allocation7 + $0x1cf8] sm:$0xff]
    %v1364 = vld [vmem:[#allocation7 + $0x1d00] sm:$0xff]
    %v1365 = vld [vmem:[#allocation7 + $0x1d08] sm:$0xff]
    %v1366 = vld [vmem:[#allocation7 + $0x1d10] sm:$0xff]
    %v1367 = vld [vmem:[#allocation7 + $0x1d18] sm:$0xff]
    %v1368 = vld [vmem:[#allocation7 + $0x1d20] sm:$0xff]
    %v1369 = vld [vmem:[#allocation7 + $0x1d28] sm:$0xff]
    %v1370 = vld [vmem:[#allocation7 + $0x1d30] sm:$0xff]
    %v1371 = vld [vmem:[#allocation7 + $0x1d38] sm:$0xff]
    %v1372 = vld [vmem:[#allocation7 + $0x1d40] sm:$0xff]
    %v1373 = vld [vmem:[#allocation7 + $0x1d48] sm:$0xff]
    %v1374 = vld [vmem:[#allocation7 + $0x1d50] sm:$0xff]
    %v1375 = vld [vmem:[#allocation7 + $0x1d58] sm:$0xff]
    %v1376 = vld [vmem:[#allocation7 + $0x1d60] sm:$0xff]
    %v1377 = vld [vmem:[#allocation7 + $0x1d68] sm:$0xff]
    %v1378 = vld [vmem:[#allocation7 + $0x1d70] sm:$0xff]
    %v1379 = vld [vmem:[#allocation7 + $0x1d78] sm:$0xff]
    %v1380 = vld [vmem:[#allocation7 + $0x1d80] sm:$0xff]
    %v1381 = vld [vmem:[#allocation7 + $0x1d88] sm:$0xff]
    %v1382 = vld [vmem:[#allocation7 + $0x1d90] sm:$0xff]
    %v1383 = vld [vmem:[#allocation7 + $0x1d98] sm:$0xff]
    %v1384 = vld [vmem:[#allocation7 + $0x1da0] sm:$0xff]
    %v1385 = vld [vmem:[#allocation7 + $0x1da8] sm:$0xff]
    %v1386 = vld [vmem:[#allocation7 + $0x1db0] sm:$0xff]
    %v1387 = vld [vmem:[#allocation7 + $0x1db8] sm:$0xff]
    %v1388 = vld [vmem:[#allocation7 + $0x1dc0] sm:$0xff]
    %v1389 = vld [vmem:[#allocation7 + $0x1dc8] sm:$0xff]
    %v1390 = vld [vmem:[#allocation7 + $0x1dd0] sm:$0xff]
    %v1391 = vld [vmem:[#allocation7 + $0x1dd8] sm:$0xff]
    %v1392 = vld [vmem:[#allocation7 + $0x1de0] sm:$0xff]
    %v1393 = vld [vmem:[#allocation7 + $0x1de8] sm:$0xff]
    %v1394 = vld [vmem:[#allocation7 + $0x1df0] sm:$0xff]
    %v1395 = vld [vmem:[#allocation7 + $0x1df8] sm:$0xff]
    %v1396 = vld [vmem:[#allocation7 + $0x1e00] sm:$0xff]
    %v1397 = vld [vmem:[#allocation7 + $0x1e08] sm:$0xff]
    %v1398 = vld [vmem:[#allocation7 + $0x1e10] sm:$0xff]
    %v1399 = vld [vmem:[#allocation7 + $0x1e18] sm:$0xff]
    %v1400 = vld [vmem:[#allocation7 + $0x1e20] sm:$0xff]
    %v1401 = vld [vmem:[#allocation7 + $0x1e28] sm:$0xff]
    %v1402 = vld [vmem:[#allocation7 + $0x1e30] sm:$0xff]
    %v1403 = vld [vmem:[#allocation7 + $0x1e38] sm:$0xff]
    %v1404 = vld [vmem:[#allocation7 + $0x1e40] sm:$0xff]
    %v1405 = vld [vmem:[#allocation7 + $0x1e48] sm:$0xff]
    %v1406 = vld [vmem:[#allocation7 + $0x1e50] sm:$0xff]
    %v1407 = vld [vmem:[#allocation7 + $0x1e58] sm:$0xff]
    %v1408 = vld [vmem:[#allocation7 + $0x1e60] sm:$0xff]
    %v1409 = vld [vmem:[#allocation7 + $0x1e68] sm:$0xff]
    %v1410 = vld [vmem:[#allocation7 + $0x1e70] sm:$0xff]
    %v1411 = vld [vmem:[#allocation7 + $0x1e78] sm:$0xff]
    %v1412 = vld [vmem:[#allocation7 + $0x1e80] sm:$0xff]
    %v1413 = vld [vmem:[#allocation7 + $0x1e88] sm:$0xff]
    %v1414 = vld [vmem:[#allocation7 + $0x1e90] sm:$0xff]
    %v1415 = vld [vmem:[#allocation7 + $0x1e98] sm:$0xff]
    %v1416 = vld [vmem:[#allocation7 + $0x1ea0] sm:$0xff]
    %v1417 = vld [vmem:[#allocation7 + $0x1ea8] sm:$0xff]
    %v1418 = vld [vmem:[#allocation7 + $0x1eb0] sm:$0xff]
    %v1419 = vld [vmem:[#allocation7 + $0x1eb8] sm:$0xff]
    %v1420 = vld [vmem:[#allocation7 + $0x1ec0] sm:$0xff]
    %v1421 = vld [vmem:[#allocation7 + $0x1ec8] sm:$0xff]
    %v1422 = vld [vmem:[#allocation7 + $0x1ed0] sm:$0xff]
    %v1423 = vld [vmem:[#allocation7 + $0x1ed8] sm:$0xff]
    %v1424 = vld [vmem:[#allocation7 + $0x1ee0] sm:$0xff]
    %v1425 = vld [vmem:[#allocation7 + $0x1ee8] sm:$0xff]
    %v1426 = vld [vmem:[#allocation7 + $0x1ef0] sm:$0xff]
    %v1427 = vld [vmem:[#allocation7 + $0x1ef8] sm:$0xff]
    %v1428 = vld [vmem:[#allocation7 + $0x1f00] sm:$0xff]
    %v1429 = vld [vmem:[#allocation7 + $0x1f08] sm:$0xff]
    %v1430 = vld [vmem:[#allocation7 + $0x1f10] sm:$0xff]
    %v1431 = vld [vmem:[#allocation7 + $0x1f18] sm:$0xff]
    %v1432 = vld [vmem:[#allocation7 + $0x1f20] sm:$0xff]
    %v1433 = vld [vmem:[#allocation7 + $0x1f28] sm:$0xff]
    %v1434 = vld [vmem:[#allocation7 + $0x1f30] sm:$0xff]
    %v1435 = vld [vmem:[#allocation7 + $0x1f38] sm:$0xff]
    %v1436 = vld [vmem:[#allocation7 + $0x1f40] sm:$0xff]
    %v1437 = vld [vmem:[#allocation7 + $0x1f48] sm:$0xff]
    %v1438 = vld [vmem:[#allocation7 + $0x1f50] sm:$0xff]
    %v1439 = vld [vmem:[#allocation7 + $0x1f58] sm:$0xff]
    %v1440 = vld [vmem:[#allocation7 + $0x1f60] sm:$0xff]
    %v1441 = vld [vmem:[#allocation7 + $0x1f68] sm:$0xff]
    %v1442 = vld [vmem:[#allocation7 + $0x1f70] sm:$0xff]
    %v1443 = vld [vmem:[#allocation7 + $0x1f78] sm:$0xff]
    %v1444 = vld [vmem:[#allocation7 + $0x1f80] sm:$0xff]
    %v1445 = vld [vmem:[#allocation7 + $0x1f88] sm:$0xff]
    %v1446 = vld [vmem:[#allocation7 + $0x1f90] sm:$0xff]
    %v1447 = vld [vmem:[#allocation7 + $0x1f98] sm:$0xff]
    %v1448 = vld [vmem:[#allocation7 + $0x1fa0] sm:$0xff]
    %v1449 = vld [vmem:[#allocation7 + $0x1fa8] sm:$0xff]
    %v1450 = vld [vmem:[#allocation7 + $0x1fb0] sm:$0xff]
    %v1451 = vld [vmem:[#allocation7 + $0x1fb8] sm:$0xff]
    %v1452 = vld [vmem:[#allocation7 + $0x1fc0] sm:$0xff]
    %v1453 = vld [vmem:[#allocation7 + $0x1fc8] sm:$0xff]
    %v1454 = vld [vmem:[#allocation7 + $0x1fd0] sm:$0xff]
    %v1455 = vld [vmem:[#allocation7 + $0x1fd8] sm:$0xff]
    %v1456 = vld [vmem:[#allocation7 + $0x1fe0] sm:$0xff]
    %v1457 = vld [vmem:[#allocation7 + $0x1fe8] sm:$0xff]
    %v1458 = vld [vmem:[#allocation7 + $0x1ff0] sm:$0xff]
    %v1459 = vld [vmem:[#allocation7 + $0x1ff8] sm:$0xff]
    %v1460 = vld [vmem:[#allocation5] sm:$0xff]
    %v1461 = vpack.c.bf16 %v404, %v404
    %v1462 = vpack.c.bf16 %v405, %v405
    %v1463 = vpack.c.bf16 %v406, %v406
    %v1464 = vpack.c.bf16 %v407, %v407
    %v1465 = vpack.c.bf16 %v408, %v408
    %v1466 = vpack.c.bf16 %v409, %v409
    %v1467 = vpack.c.bf16 %v410, %v410
    %v1468 = vpack.c.bf16 %v411, %v411
    %v1469 = vpack.c.bf16 %v412, %v412
    %v1470 = vpack.c.bf16 %v413, %v413
    %v1471 = vpack.c.bf16 %v414, %v414
    %v1472 = vpack.c.bf16 %v415, %v415
    %v1473 = vpack.c.bf16 %v416, %v416
    %v1474 = vpack.c.bf16 %v417, %v417
    %v1475 = vpack.c.bf16 %v418, %v418
    %v1476 = vpack.c.bf16 %v419, %v419
    %v1477 = vpack.c.bf16 %v420, %v420
    %v1478 = vpack.c.bf16 %v421, %v421
    %v1479 = vpack.c.bf16 %v422, %v422
    %v1480 = vpack.c.bf16 %v423, %v423
    %v1481 = vpack.c.bf16 %v424, %v424
    %v1482 = vpack.c.bf16 %v425, %v425
    %v1483 = vpack.c.bf16 %v426, %v426
    %v1484 = vpack.c.bf16 %v427, %v427
    %v1485 = vpack.c.bf16 %v428, %v428
    %v1486 = vpack.c.bf16 %v429, %v429
    %v1487 = vpack.c.bf16 %v430, %v430
    %v1488 = vpack.c.bf16 %v431, %v431
    %v1489 = vpack.c.bf16 %v432, %v432
    %v1490 = vpack.c.bf16 %v433, %v433
    %v1491 = vpack.c.bf16 %v434, %v434
    %v1492 = vpack.c.bf16 %v435, %v435
    %v1494 = vlaneseq
    %v1495 = vshrl.u32 %v1494, 7
    %v1496 = vsub.s32 0, %v1495
    %v1497 = vrot.slane %v1460, %v1496
    %v1498 = vlaneseq
    %v1499 = vshrl.u32 %v1498, 7
    %v1500 = vsub.s32 1, %v1499
    %v1501 = vrot.slane %v1460, %v1500
    %v1502 = vlaneseq
    %v1503 = vshrl.u32 %v1502, 7
    %v1504 = vsub.s32 2, %v1503
    %v1505 = vrot.slane %v1460, %v1504
    %v1506 = vlaneseq
    %v1507 = vshrl.u32 %v1506, 7
    %v1508 = vsub.s32 3, %v1507
    %v1509 = vrot.slane %v1460, %v1508
    %v1510 = vlaneseq
    %v1511 = vshrl.u32 %v1510, 7
    %v1512 = vsub.s32 4, %v1511
    %v1513 = vrot.slane %v1460, %v1512
    %v1514 = vlaneseq
    %v1515 = vshrl.u32 %v1514, 7
    %v1516 = vsub.s32 5, %v1515
    %v1517 = vrot.slane %v1460, %v1516
    %v1518 = vlaneseq
    %v1519 = vshrl.u32 %v1518, 7
    %v1520 = vsub.s32 6, %v1519
    %v1521 = vrot.slane %v1460, %v1520
    %v1522 = vlaneseq
    %v1523 = vshrl.u32 %v1522, 7
    %v1524 = vsub.s32 7, %v1523
    %v1525 = vrot.slane %v1460, %v1524
    %v1566 = vunpack.c.l.b16 %v1461
    %v1567 = vunpack.c.l.b16 %v1462
    %v1568 = vunpack.c.l.b16 %v1463
    %v1569 = vunpack.c.l.b16 %v1464
    %v1570 = vunpack.c.l.b16 %v1465
    %v1571 = vunpack.c.l.b16 %v1466
    %v1572 = vunpack.c.l.b16 %v1467
    %v1573 = vunpack.c.l.b16 %v1468
    %v1574 = vunpack.c.l.b16 %v1469
    %v1575 = vunpack.c.l.b16 %v1470
    %v1576 = vunpack.c.l.b16 %v1471
    %v1577 = vunpack.c.l.b16 %v1472
    %v1578 = vunpack.c.l.b16 %v1473
    %v1579 = vunpack.c.l.b16 %v1474
    %v1580 = vunpack.c.l.b16 %v1475
    %v1581 = vunpack.c.l.b16 %v1476
    %v1582 = vunpack.c.l.b16 %v1477
    %v1583 = vunpack.c.l.b16 %v1478
    %v1584 = vunpack.c.l.b16 %v1479
    %v1585 = vunpack.c.l.b16 %v1480
    %v1586 = vunpack.c.l.b16 %v1481
    %v1587 = vunpack.c.l.b16 %v1482
    %v1588 = vunpack.c.l.b16 %v1483
    %v1589 = vunpack.c.l.b16 %v1484
    %v1590 = vunpack.c.l.b16 %v1485
    %v1591 = vunpack.c.l.b16 %v1486
    %v1592 = vunpack.c.l.b16 %v1487
    %v1593 = vunpack.c.l.b16 %v1488
    %v1594 = vunpack.c.l.b16 %v1489
    %v1595 = vunpack.c.l.b16 %v1490
    %v1596 = vunpack.c.l.b16 %v1491
    %v1597 = vunpack.c.l.b16 %v1492
    %vm1598 = vcmask 1041409
    %v1599 = vsel %vm1598, %v1582, %v1566
    %v1600 = vsel %vm1598, %v1583, %v1567
    %v1601 = vsel %vm1598, %v1584, %v1568
    %v1602 = vsel %vm1598, %v1585, %v1569
    %v1603 = vsel %vm1598, %v1586, %v1570
    %v1604 = vsel %vm1598, %v1587, %v1571
    %v1605 = vsel %vm1598, %v1588, %v1572
    %v1606 = vsel %vm1598, %v1589, %v1573
    %v1607 = vsel %vm1598, %v1590, %v1574
    %v1608 = vsel %vm1598, %v1591, %v1575
    %v1609 = vsel %vm1598, %v1592, %v1576
    %v1610 = vsel %vm1598, %v1593, %v1577
    %v1611 = vsel %vm1598, %v1594, %v1578
    %v1612 = vsel %vm1598, %v1595, %v1579
    %v1613 = vsel %vm1598, %v1596, %v1580
    %v1614 = vsel %vm1598, %v1597, %v1581
    %v1615 = vpack.c.b16 %v1599, %v1599
    %v1616 = vpack.c.b16 %v1600, %v1600
    %v1617 = vpack.c.b16 %v1601, %v1601
    %v1618 = vpack.c.b16 %v1602, %v1602
    %v1619 = vpack.c.b16 %v1603, %v1603
    %v1620 = vpack.c.b16 %v1604, %v1604
    %v1621 = vpack.c.b16 %v1605, %v1605
    %v1622 = vpack.c.b16 %v1606, %v1606
    %v1623 = vpack.c.b16 %v1607, %v1607
    %v1624 = vpack.c.b16 %v1608, %v1608
    %v1625 = vpack.c.b16 %v1609, %v1609
    %v1626 = vpack.c.b16 %v1610, %v1610
    %v1627 = vpack.c.b16 %v1611, %v1611
    %v1628 = vpack.c.b16 %v1612, %v1612
    %v1629 = vpack.c.b16 %v1613, %v1613
    %v1630 = vpack.c.b16 %v1614, %v1614
    %v2671 = vunpack.c.l.b16 %v436
    %v2672 = vunpack.c.h.b16 %v436
    %v2673 = vunpack.c.l.b16 %v437
    %v2674 = vunpack.c.h.b16 %v437
    %v2675 = vunpack.c.l.b16 %v438
    %v2676 = vunpack.c.h.b16 %v438
    %v2677 = vunpack.c.l.b16 %v439
    %v2678 = vunpack.c.h.b16 %v439
    %v2679 = vunpack.c.l.b16 %v440
    %v2680 = vunpack.c.h.b16 %v440
    %v2681 = vunpack.c.l.b16 %v441
    %v2682 = vunpack.c.h.b16 %v441
    %v2683 = vunpack.c.l.b16 %v442
    %v2684 = vunpack.c.h.b16 %v442
    %v2685 = vunpack.c.l.b16 %v443
    %v2686 = vunpack.c.h.b16 %v443
    %v2687 = vunpack.c.l.b16 %v444
    %v2688 = vunpack.c.h.b16 %v444
    %v2689 = vunpack.c.l.b16 %v445
    %v2690 = vunpack.c.h.b16 %v445
    %v2691 = vunpack.c.l.b16 %v446
    %v2692 = vunpack.c.h.b16 %v446
    %v2693 = vunpack.c.l.b16 %v447
    %v2694 = vunpack.c.h.b16 %v447
    %v2695 = vunpack.c.l.b16 %v448
    %v2696 = vunpack.c.h.b16 %v448
    %v2697 = vunpack.c.l.b16 %v449
    %v2698 = vunpack.c.h.b16 %v449
    %v2699 = vunpack.c.l.b16 %v450
    %v2700 = vunpack.c.h.b16 %v450
    %v2701 = vunpack.c.l.b16 %v451
    %v2702 = vunpack.c.h.b16 %v451
    %v2703 = vunpack.c.l.b16 %v452
    %v2704 = vunpack.c.h.b16 %v452
    %v2705 = vunpack.c.l.b16 %v453
    %v2706 = vunpack.c.h.b16 %v453
    %v2707 = vunpack.c.l.b16 %v454
    %v2708 = vunpack.c.h.b16 %v454
    %v2709 = vunpack.c.l.b16 %v455
    %v2710 = vunpack.c.h.b16 %v455
    %v2711 = vunpack.c.l.b16 %v456
    %v2712 = vunpack.c.h.b16 %v456
    %v2713 = vunpack.c.l.b16 %v457
    %v2714 = vunpack.c.h.b16 %v457
    %v2715 = vunpack.c.l.b16 %v458
    %v2716 = vunpack.c.h.b16 %v458
    %v2717 = vunpack.c.l.b16 %v459
    %v2718 = vunpack.c.h.b16 %v459
    %v2719 = vunpack.c.l.b16 %v460
    %v2720 = vunpack.c.h.b16 %v460
    %v2721 = vunpack.c.l.b16 %v461
    %v2722 = vunpack.c.h.b16 %v461
    %v2723 = vunpack.c.l.b16 %v462
    %v2724 = vunpack.c.h.b16 %v462
    %v2725 = vunpack.c.l.b16 %v463
    %v2726 = vunpack.c.h.b16 %v463
    %v2727 = vunpack.c.l.b16 %v464
    %v2728 = vunpack.c.h.b16 %v464
    %v2729 = vunpack.c.l.b16 %v465
    %v2730 = vunpack.c.h.b16 %v465
    %v2731 = vunpack.c.l.b16 %v466
    %v2732 = vunpack.c.h.b16 %v466
    %v2733 = vunpack.c.l.b16 %v467
    %v2734 = vunpack.c.h.b16 %v467
    %v2735 = vunpack.c.l.b16 %v468
    %v2736 = vunpack.c.h.b16 %v468
    %v2737 = vunpack.c.l.b16 %v469
    %v2738 = vunpack.c.h.b16 %v469
    %v2739 = vunpack.c.l.b16 %v470
    %v2740 = vunpack.c.h.b16 %v470
    %v2741 = vunpack.c.l.b16 %v471
    %v2742 = vunpack.c.h.b16 %v471
    %v2743 = vunpack.c.l.b16 %v472
    %v2744 = vunpack.c.h.b16 %v472
    %v2745 = vunpack.c.l.b16 %v473
    %v2746 = vunpack.c.h.b16 %v473
    %v2747 = vunpack.c.l.b16 %v474
    %v2748 = vunpack.c.h.b16 %v474
    %v2749 = vunpack.c.l.b16 %v475
    %v2750 = vunpack.c.h.b16 %v475
    %v2751 = vunpack.c.l.b16 %v476
    %v2752 = vunpack.c.h.b16 %v476
    %v2753 = vunpack.c.l.b16 %v477
    %v2754 = vunpack.c.h.b16 %v477
    %v2755 = vunpack.c.l.b16 %v478
    %v2756 = vunpack.c.h.b16 %v478
    %v2757 = vunpack.c.l.b16 %v479
    %v2758 = vunpack.c.h.b16 %v479
    %v2759 = vunpack.c.l.b16 %v480
    %v2760 = vunpack.c.h.b16 %v480
    %v2761 = vunpack.c.l.b16 %v481
    %v2762 = vunpack.c.h.b16 %v481
    %v2763 = vunpack.c.l.b16 %v482
    %v2764 = vunpack.c.h.b16 %v482
    %v2765 = vunpack.c.l.b16 %v483
    %v2766 = vunpack.c.h.b16 %v483
    %v2767 = vunpack.c.l.b16 %v484
    %v2768 = vunpack.c.h.b16 %v484
    %v2769 = vunpack.c.l.b16 %v485
    %v2770 = vunpack.c.h.b16 %v485
    %v2771 = vunpack.c.l.b16 %v486
    %v2772 = vunpack.c.h.b16 %v486
    %v2773 = vunpack.c.l.b16 %v487
    %v2774 = vunpack.c.h.b16 %v487
    %v2775 = vunpack.c.l.b16 %v488
    %v2776 = vunpack.c.h.b16 %v488
    %v2777 = vunpack.c.l.b16 %v489
    %v2778 = vunpack.c.h.b16 %v489
    %v2779 = vunpack.c.l.b16 %v490
    %v2780 = vunpack.c.h.b16 %v490
    %v2781 = vunpack.c.l.b16 %v491
    %v2782 = vunpack.c.h.b16 %v491
    %v2783 = vunpack.c.l.b16 %v492
    %v2784 = vunpack.c.h.b16 %v492
    %v2785 = vunpack.c.l.b16 %v493
    %v2786 = vunpack.c.h.b16 %v493
    %v2787 = vunpack.c.l.b16 %v494
    %v2788 = vunpack.c.h.b16 %v494
    %v2789 = vunpack.c.l.b16 %v495
    %v2790 = vunpack.c.h.b16 %v495
    %v2791 = vunpack.c.l.b16 %v496
    %v2792 = vunpack.c.h.b16 %v496
    %v2793 = vunpack.c.l.b16 %v497
    %v2794 = vunpack.c.h.b16 %v497
    %v2795 = vunpack.c.l.b16 %v498
    %v2796 = vunpack.c.h.b16 %v498
    %v2797 = vunpack.c.l.b16 %v499
    %v2798 = vunpack.c.h.b16 %v499
    %v2799 = vunpack.c.l.b16 %v500
    %v2800 = vunpack.c.h.b16 %v500
    %v2801 = vunpack.c.l.b16 %v501
    %v2802 = vunpack.c.h.b16 %v501
    %v2803 = vunpack.c.l.b16 %v502
    %v2804 = vunpack.c.h.b16 %v502
    %v2805 = vunpack.c.l.b16 %v503
    %v2806 = vunpack.c.h.b16 %v503
    %v2807 = vunpack.c.l.b16 %v504
    %v2808 = vunpack.c.h.b16 %v504
    %v2809 = vunpack.c.l.b16 %v505
    %v2810 = vunpack.c.h.b16 %v505
    %v2811 = vunpack.c.l.b16 %v506
    %v2812 = vunpack.c.h.b16 %v506
    %v2813 = vunpack.c.l.b16 %v507
    %v2814 = vunpack.c.h.b16 %v507
    %v2815 = vunpack.c.l.b16 %v508
    %v2816 = vunpack.c.h.b16 %v508
    %v2817 = vunpack.c.l.b16 %v509
    %v2818 = vunpack.c.h.b16 %v509
    %v2819 = vunpack.c.l.b16 %v510
    %v2820 = vunpack.c.h.b16 %v510
    %v2821 = vunpack.c.l.b16 %v511
    %v2822 = vunpack.c.h.b16 %v511
    %v2823 = vunpack.c.l.b16 %v512
    %v2824 = vunpack.c.h.b16 %v512
    %v2825 = vunpack.c.l.b16 %v513
    %v2826 = vunpack.c.h.b16 %v513
    %v2827 = vunpack.c.l.b16 %v514
    %v2828 = vunpack.c.h.b16 %v514
    %v2829 = vunpack.c.l.b16 %v515
    %v2830 = vunpack.c.h.b16 %v515
    %v2831 = vunpack.c.l.b16 %v516
    %v2832 = vunpack.c.h.b16 %v516
    %v2833 = vunpack.c.l.b16 %v517
    %v2834 = vunpack.c.h.b16 %v517
    %v2835 = vunpack.c.l.b16 %v518
    %v2836 = vunpack.c.h.b16 %v518
    %v2837 = vunpack.c.l.b16 %v519
    %v2838 = vunpack.c.h.b16 %v519
    %v2839 = vunpack.c.l.b16 %v520
    %v2840 = vunpack.c.h.b16 %v520
    %v2841 = vunpack.c.l.b16 %v521
    %v2842 = vunpack.c.h.b16 %v521
    %v2843 = vunpack.c.l.b16 %v522
    %v2844 = vunpack.c.h.b16 %v522
    %v2845 = vunpack.c.l.b16 %v523
    %v2846 = vunpack.c.h.b16 %v523
    %v2847 = vunpack.c.l.b16 %v524
    %v2848 = vunpack.c.h.b16 %v524
    %v2849 = vunpack.c.l.b16 %v525
    %v2850 = vunpack.c.h.b16 %v525
    %v2851 = vunpack.c.l.b16 %v526
    %v2852 = vunpack.c.h.b16 %v526
    %v2853 = vunpack.c.l.b16 %v527
    %v2854 = vunpack.c.h.b16 %v527
    %v2855 = vunpack.c.l.b16 %v528
    %v2856 = vunpack.c.h.b16 %v528
    %v2857 = vunpack.c.l.b16 %v529
    %v2858 = vunpack.c.h.b16 %v529
    %v2859 = vunpack.c.l.b16 %v530
    %v2860 = vunpack.c.h.b16 %v530
    %v2861 = vunpack.c.l.b16 %v531
    %v2862 = vunpack.c.h.b16 %v531
    %v2863 = vunpack.c.l.b16 %v532
    %v2864 = vunpack.c.h.b16 %v532
    %v2865 = vunpack.c.l.b16 %v533
    %v2866 = vunpack.c.h.b16 %v533
    %v2867 = vunpack.c.l.b16 %v534
    %v2868 = vunpack.c.h.b16 %v534
    %v2869 = vunpack.c.l.b16 %v535
    %v2870 = vunpack.c.h.b16 %v535
    %v2871 = vunpack.c.l.b16 %v536
    %v2872 = vunpack.c.h.b16 %v536
    %v2873 = vunpack.c.l.b16 %v537
    %v2874 = vunpack.c.h.b16 %v537
    %v2875 = vunpack.c.l.b16 %v538
    %v2876 = vunpack.c.h.b16 %v538
    %v2877 = vunpack.c.l.b16 %v539
    %v2878 = vunpack.c.h.b16 %v539
    %v2879 = vunpack.c.l.b16 %v540
    %v2880 = vunpack.c.h.b16 %v540
    %v2881 = vunpack.c.l.b16 %v541
    %v2882 = vunpack.c.h.b16 %v541
    %v2883 = vunpack.c.l.b16 %v542
    %v2884 = vunpack.c.h.b16 %v542
    %v2885 = vunpack.c.l.b16 %v543
    %v2886 = vunpack.c.h.b16 %v543
    %v2887 = vunpack.c.l.b16 %v544
    %v2888 = vunpack.c.h.b16 %v544
    %v2889 = vunpack.c.l.b16 %v545
    %v2890 = vunpack.c.h.b16 %v545
    %v2891 = vunpack.c.l.b16 %v546
    %v2892 = vunpack.c.h.b16 %v546
    %v2893 = vunpack.c.l.b16 %v547
    %v2894 = vunpack.c.h.b16 %v547
    %v2895 = vunpack.c.l.b16 %v548
    %v2896 = vunpack.c.h.b16 %v548
    %v2897 = vunpack.c.l.b16 %v549
    %v2898 = vunpack.c.h.b16 %v549
    %v2899 = vunpack.c.l.b16 %v550
    %v2900 = vunpack.c.h.b16 %v550
    %v2901 = vunpack.c.l.b16 %v551
    %v2902 = vunpack.c.h.b16 %v551
    %v2903 = vunpack.c.l.b16 %v552
    %v2904 = vunpack.c.h.b16 %v552
    %v2905 = vunpack.c.l.b16 %v553
    %v2906 = vunpack.c.h.b16 %v553
    %v2907 = vunpack.c.l.b16 %v554
    %v2908 = vunpack.c.h.b16 %v554
    %v2909 = vunpack.c.l.b16 %v555
    %v2910 = vunpack.c.h.b16 %v555
    %v2911 = vunpack.c.l.b16 %v556
    %v2912 = vunpack.c.h.b16 %v556
    %v2913 = vunpack.c.l.b16 %v557
    %v2914 = vunpack.c.h.b16 %v557
    %v2915 = vunpack.c.l.b16 %v558
    %v2916 = vunpack.c.h.b16 %v558
    %v2917 = vunpack.c.l.b16 %v559
    %v2918 = vunpack.c.h.b16 %v559
    %v2919 = vunpack.c.l.b16 %v560
    %v2920 = vunpack.c.h.b16 %v560
    %v2921 = vunpack.c.l.b16 %v561
    %v2922 = vunpack.c.h.b16 %v561
    %v2923 = vunpack.c.l.b16 %v562
    %v2924 = vunpack.c.h.b16 %v562
    %v2925 = vunpack.c.l.b16 %v563
    %v2926 = vunpack.c.h.b16 %v563
    %v2927 = vunpack.c.l.b16 %v564
    %v2928 = vunpack.c.h.b16 %v564
    %v2929 = vunpack.c.l.b16 %v565
    %v2930 = vunpack.c.h.b16 %v565
    %v2931 = vunpack.c.l.b16 %v566
    %v2932 = vunpack.c.h.b16 %v566
    %v2933 = vunpack.c.l.b16 %v567
    %v2934 = vunpack.c.h.b16 %v567
    %v2935 = vunpack.c.l.b16 %v568
    %v2936 = vunpack.c.h.b16 %v568
    %v2937 = vunpack.c.l.b16 %v569
    %v2938 = vunpack.c.h.b16 %v569
    %v2939 = vunpack.c.l.b16 %v570
    %v2940 = vunpack.c.h.b16 %v570
    %v2941 = vunpack.c.l.b16 %v571
    %v2942 = vunpack.c.h.b16 %v571
    %v2943 = vunpack.c.l.b16 %v572
    %v2944 = vunpack.c.h.b16 %v572
    %v2945 = vunpack.c.l.b16 %v573
    %v2946 = vunpack.c.h.b16 %v573
    %v2947 = vunpack.c.l.b16 %v574
    %v2948 = vunpack.c.h.b16 %v574
    %v2949 = vunpack.c.l.b16 %v575
    %v2950 = vunpack.c.h.b16 %v575
    %v2951 = vunpack.c.l.b16 %v576
    %v2952 = vunpack.c.h.b16 %v576
    %v2953 = vunpack.c.l.b16 %v577
    %v2954 = vunpack.c.h.b16 %v577
    %v2955 = vunpack.c.l.b16 %v578
    %v2956 = vunpack.c.h.b16 %v578
    %v2957 = vunpack.c.l.b16 %v579
    %v2958 = vunpack.c.h.b16 %v579
    %v2959 = vunpack.c.l.b16 %v580
    %v2960 = vunpack.c.h.b16 %v580
    %v2961 = vunpack.c.l.b16 %v581
    %v2962 = vunpack.c.h.b16 %v581
    %v2963 = vunpack.c.l.b16 %v582
    %v2964 = vunpack.c.h.b16 %v582
    %v2965 = vunpack.c.l.b16 %v583
    %v2966 = vunpack.c.h.b16 %v583
    %v2967 = vunpack.c.l.b16 %v584
    %v2968 = vunpack.c.h.b16 %v584
    %v2969 = vunpack.c.l.b16 %v585
    %v2970 = vunpack.c.h.b16 %v585
    %v2971 = vunpack.c.l.b16 %v586
    %v2972 = vunpack.c.h.b16 %v586
    %v2973 = vunpack.c.l.b16 %v587
    %v2974 = vunpack.c.h.b16 %v587
    %v2975 = vunpack.c.l.b16 %v588
    %v2976 = vunpack.c.h.b16 %v588
    %v2977 = vunpack.c.l.b16 %v589
    %v2978 = vunpack.c.h.b16 %v589
    %v2979 = vunpack.c.l.b16 %v590
    %v2980 = vunpack.c.h.b16 %v590
    %v2981 = vunpack.c.l.b16 %v591
    %v2982 = vunpack.c.h.b16 %v591
    %v2983 = vunpack.c.l.b16 %v592
    %v2984 = vunpack.c.h.b16 %v592
    %v2985 = vunpack.c.l.b16 %v593
    %v2986 = vunpack.c.h.b16 %v593
    %v2987 = vunpack.c.l.b16 %v594
    %v2988 = vunpack.c.h.b16 %v594
    %v2989 = vunpack.c.l.b16 %v595
    %v2990 = vunpack.c.h.b16 %v595
    %v2991 = vunpack.c.l.b16 %v596
    %v2992 = vunpack.c.h.b16 %v596
    %v2993 = vunpack.c.l.b16 %v597
    %v2994 = vunpack.c.h.b16 %v597
    %v2995 = vunpack.c.l.b16 %v598
    %v2996 = vunpack.c.h.b16 %v598
    %v2997 = vunpack.c.l.b16 %v599
    %v2998 = vunpack.c.h.b16 %v599
    %v2999 = vunpack.c.l.b16 %v600
    %v3000 = vunpack.c.h.b16 %v600
    %v3001 = vunpack.c.l.b16 %v601
    %v3002 = vunpack.c.h.b16 %v601
    %v3003 = vunpack.c.l.b16 %v602
    %v3004 = vunpack.c.h.b16 %v602
    %v3005 = vunpack.c.l.b16 %v603
    %v3006 = vunpack.c.h.b16 %v603
    %v3007 = vunpack.c.l.b16 %v604
    %v3008 = vunpack.c.h.b16 %v604
    %v3009 = vunpack.c.l.b16 %v605
    %v3010 = vunpack.c.h.b16 %v605
    %v3011 = vunpack.c.l.b16 %v606
    %v3012 = vunpack.c.h.b16 %v606
    %v3013 = vunpack.c.l.b16 %v607
    %v3014 = vunpack.c.h.b16 %v607
    %v3015 = vunpack.c.l.b16 %v608
    %v3016 = vunpack.c.h.b16 %v608
    %v3017 = vunpack.c.l.b16 %v609
    %v3018 = vunpack.c.h.b16 %v609
    %v3019 = vunpack.c.l.b16 %v610
    %v3020 = vunpack.c.h.b16 %v610
    %v3021 = vunpack.c.l.b16 %v611
    %v3022 = vunpack.c.h.b16 %v611
    %v3023 = vunpack.c.l.b16 %v612
    %v3024 = vunpack.c.h.b16 %v612
    %v3025 = vunpack.c.l.b16 %v613
    %v3026 = vunpack.c.h.b16 %v613
    %v3027 = vunpack.c.l.b16 %v614
    %v3028 = vunpack.c.h.b16 %v614
    %v3029 = vunpack.c.l.b16 %v615
    %v3030 = vunpack.c.h.b16 %v615
    %v3031 = vunpack.c.l.b16 %v616
    %v3032 = vunpack.c.h.b16 %v616
    %v3033 = vunpack.c.l.b16 %v617
    %v3034 = vunpack.c.h.b16 %v617
    %v3035 = vunpack.c.l.b16 %v618
    %v3036 = vunpack.c.h.b16 %v618
    %v3037 = vunpack.c.l.b16 %v619
    %v3038 = vunpack.c.h.b16 %v619
    %v3039 = vunpack.c.l.b16 %v620
    %v3040 = vunpack.c.h.b16 %v620
    %v3041 = vunpack.c.l.b16 %v621
    %v3042 = vunpack.c.h.b16 %v621
    %v3043 = vunpack.c.l.b16 %v622
    %v3044 = vunpack.c.h.b16 %v622
    %v3045 = vunpack.c.l.b16 %v623
    %v3046 = vunpack.c.h.b16 %v623
    %v3047 = vunpack.c.l.b16 %v624
    %v3048 = vunpack.c.h.b16 %v624
    %v3049 = vunpack.c.l.b16 %v625
    %v3050 = vunpack.c.h.b16 %v625
    %v3051 = vunpack.c.l.b16 %v626
    %v3052 = vunpack.c.h.b16 %v626
    %v3053 = vunpack.c.l.b16 %v627
    %v3054 = vunpack.c.h.b16 %v627
    %v3055 = vunpack.c.l.b16 %v628
    %v3056 = vunpack.c.h.b16 %v628
    %v3057 = vunpack.c.l.b16 %v629
    %v3058 = vunpack.c.h.b16 %v629
    %v3059 = vunpack.c.l.b16 %v630
    %v3060 = vunpack.c.h.b16 %v630
    %v3061 = vunpack.c.l.b16 %v631
    %v3062 = vunpack.c.h.b16 %v631
    %v3063 = vunpack.c.l.b16 %v632
    %v3064 = vunpack.c.h.b16 %v632
    %v3065 = vunpack.c.l.b16 %v633
    %v3066 = vunpack.c.h.b16 %v633
    %v3067 = vunpack.c.l.b16 %v634
    %v3068 = vunpack.c.h.b16 %v634
    %v3069 = vunpack.c.l.b16 %v635
    %v3070 = vunpack.c.h.b16 %v635
    %v3071 = vunpack.c.l.b16 %v636
    %v3072 = vunpack.c.h.b16 %v636
    %v3073 = vunpack.c.l.b16 %v637
    %v3074 = vunpack.c.h.b16 %v637
    %v3075 = vunpack.c.l.b16 %v638
    %v3076 = vunpack.c.h.b16 %v638
    %v3077 = vunpack.c.l.b16 %v639
    %v3078 = vunpack.c.h.b16 %v639
    %v3079 = vunpack.c.l.b16 %v640
    %v3080 = vunpack.c.h.b16 %v640
    %v3081 = vunpack.c.l.b16 %v641
    %v3082 = vunpack.c.h.b16 %v641
    %v3083 = vunpack.c.l.b16 %v642
    %v3084 = vunpack.c.h.b16 %v642
    %v3085 = vunpack.c.l.b16 %v643
    %v3086 = vunpack.c.h.b16 %v643
    %v3087 = vunpack.c.l.b16 %v644
    %v3088 = vunpack.c.h.b16 %v644
    %v3089 = vunpack.c.l.b16 %v645
    %v3090 = vunpack.c.h.b16 %v645
    %v3091 = vunpack.c.l.b16 %v646
    %v3092 = vunpack.c.h.b16 %v646
    %v3093 = vunpack.c.l.b16 %v647
    %v3094 = vunpack.c.h.b16 %v647
    %v3095 = vunpack.c.l.b16 %v648
    %v3096 = vunpack.c.h.b16 %v648
    %v3097 = vunpack.c.l.b16 %v649
    %v3098 = vunpack.c.h.b16 %v649
    %v3099 = vunpack.c.l.b16 %v650
    %v3100 = vunpack.c.h.b16 %v650
    %v3101 = vunpack.c.l.b16 %v651
    %v3102 = vunpack.c.h.b16 %v651
    %v3103 = vunpack.c.l.b16 %v652
    %v3104 = vunpack.c.h.b16 %v652
    %v3105 = vunpack.c.l.b16 %v653
    %v3106 = vunpack.c.h.b16 %v653
    %v3107 = vunpack.c.l.b16 %v654
    %v3108 = vunpack.c.h.b16 %v654
    %v3109 = vunpack.c.l.b16 %v655
    %v3110 = vunpack.c.h.b16 %v655
    %v3111 = vunpack.c.l.b16 %v656
    %v3112 = vunpack.c.h.b16 %v656
    %v3113 = vunpack.c.l.b16 %v657
    %v3114 = vunpack.c.h.b16 %v657
    %v3115 = vunpack.c.l.b16 %v658
    %v3116 = vunpack.c.h.b16 %v658
    %v3117 = vunpack.c.l.b16 %v659
    %v3118 = vunpack.c.h.b16 %v659
    %v3119 = vunpack.c.l.b16 %v660
    %v3120 = vunpack.c.h.b16 %v660
    %v3121 = vunpack.c.l.b16 %v661
    %v3122 = vunpack.c.h.b16 %v661
    %v3123 = vunpack.c.l.b16 %v662
    %v3124 = vunpack.c.h.b16 %v662
    %v3125 = vunpack.c.l.b16 %v663
    %v3126 = vunpack.c.h.b16 %v663
    %v3127 = vunpack.c.l.b16 %v664
    %v3128 = vunpack.c.h.b16 %v664
    %v3129 = vunpack.c.l.b16 %v665
    %v3130 = vunpack.c.h.b16 %v665
    %v3131 = vunpack.c.l.b16 %v666
    %v3132 = vunpack.c.h.b16 %v666
    %v3133 = vunpack.c.l.b16 %v667
    %v3134 = vunpack.c.h.b16 %v667
    %v3135 = vunpack.c.l.b16 %v668
    %v3136 = vunpack.c.h.b16 %v668
    %v3137 = vunpack.c.l.b16 %v669
    %v3138 = vunpack.c.h.b16 %v669
    %v3139 = vunpack.c.l.b16 %v670
    %v3140 = vunpack.c.h.b16 %v670
    %v3141 = vunpack.c.l.b16 %v671
    %v3142 = vunpack.c.h.b16 %v671
    %v3143 = vunpack.c.l.b16 %v672
    %v3144 = vunpack.c.h.b16 %v672
    %v3145 = vunpack.c.l.b16 %v673
    %v3146 = vunpack.c.h.b16 %v673
    %v3147 = vunpack.c.l.b16 %v674
    %v3148 = vunpack.c.h.b16 %v674
    %v3149 = vunpack.c.l.b16 %v675
    %v3150 = vunpack.c.h.b16 %v675
    %v3151 = vunpack.c.l.b16 %v676
    %v3152 = vunpack.c.h.b16 %v676
    %v3153 = vunpack.c.l.b16 %v677
    %v3154 = vunpack.c.h.b16 %v677
    %v3155 = vunpack.c.l.b16 %v678
    %v3156 = vunpack.c.h.b16 %v678
    %v3157 = vunpack.c.l.b16 %v679
    %v3158 = vunpack.c.h.b16 %v679
    %v3159 = vunpack.c.l.b16 %v680
    %v3160 = vunpack.c.h.b16 %v680
    %v3161 = vunpack.c.l.b16 %v681
    %v3162 = vunpack.c.h.b16 %v681
    %v3163 = vunpack.c.l.b16 %v682
    %v3164 = vunpack.c.h.b16 %v682
    %v3165 = vunpack.c.l.b16 %v683
    %v3166 = vunpack.c.h.b16 %v683
    %v3167 = vunpack.c.l.b16 %v684
    %v3168 = vunpack.c.h.b16 %v684
    %v3169 = vunpack.c.l.b16 %v685
    %v3170 = vunpack.c.h.b16 %v685
    %v3171 = vunpack.c.l.b16 %v686
    %v3172 = vunpack.c.h.b16 %v686
    %v3173 = vunpack.c.l.b16 %v687
    %v3174 = vunpack.c.h.b16 %v687
    %v3175 = vunpack.c.l.b16 %v688
    %v3176 = vunpack.c.h.b16 %v688
    %v3177 = vunpack.c.l.b16 %v689
    %v3178 = vunpack.c.h.b16 %v689
    %v3179 = vunpack.c.l.b16 %v690
    %v3180 = vunpack.c.h.b16 %v690
    %v3181 = vunpack.c.l.b16 %v691
    %v3182 = vunpack.c.h.b16 %v691
    %v3183 = vunpack.c.l.b16 %v692
    %v3184 = vunpack.c.h.b16 %v692
    %v3185 = vunpack.c.l.b16 %v693
    %v3186 = vunpack.c.h.b16 %v693
    %v3187 = vunpack.c.l.b16 %v694
    %v3188 = vunpack.c.h.b16 %v694
    %v3189 = vunpack.c.l.b16 %v695
    %v3190 = vunpack.c.h.b16 %v695
    %v3191 = vunpack.c.l.b16 %v696
    %v3192 = vunpack.c.h.b16 %v696
    %v3193 = vunpack.c.l.b16 %v697
    %v3194 = vunpack.c.h.b16 %v697
    %v3195 = vunpack.c.l.b16 %v698
    %v3196 = vunpack.c.h.b16 %v698
    %v3197 = vunpack.c.l.b16 %v699
    %v3198 = vunpack.c.h.b16 %v699
    %v3199 = vunpack.c.l.b16 %v700
    %v3200 = vunpack.c.h.b16 %v700
    %v3201 = vunpack.c.l.b16 %v701
    %v3202 = vunpack.c.h.b16 %v701
    %v3203 = vunpack.c.l.b16 %v702
    %v3204 = vunpack.c.h.b16 %v702
    %v3205 = vunpack.c.l.b16 %v703
    %v3206 = vunpack.c.h.b16 %v703
    %v3207 = vunpack.c.l.b16 %v704
    %v3208 = vunpack.c.h.b16 %v704
    %v3209 = vunpack.c.l.b16 %v705
    %v3210 = vunpack.c.h.b16 %v705
    %v3211 = vunpack.c.l.b16 %v706
    %v3212 = vunpack.c.h.b16 %v706
    %v3213 = vunpack.c.l.b16 %v707
    %v3214 = vunpack.c.h.b16 %v707
    %v3215 = vunpack.c.l.b16 %v708
    %v3216 = vunpack.c.h.b16 %v708
    %v3217 = vunpack.c.l.b16 %v709
    %v3218 = vunpack.c.h.b16 %v709
    %v3219 = vunpack.c.l.b16 %v710
    %v3220 = vunpack.c.h.b16 %v710
    %v3221 = vunpack.c.l.b16 %v711
    %v3222 = vunpack.c.h.b16 %v711
    %v3223 = vunpack.c.l.b16 %v712
    %v3224 = vunpack.c.h.b16 %v712
    %v3225 = vunpack.c.l.b16 %v713
    %v3226 = vunpack.c.h.b16 %v713
    %v3227 = vunpack.c.l.b16 %v714
    %v3228 = vunpack.c.h.b16 %v714
    %v3229 = vunpack.c.l.b16 %v715
    %v3230 = vunpack.c.h.b16 %v715
    %v3231 = vunpack.c.l.b16 %v716
    %v3232 = vunpack.c.h.b16 %v716
    %v3233 = vunpack.c.l.b16 %v717
    %v3234 = vunpack.c.h.b16 %v717
    %v3235 = vunpack.c.l.b16 %v718
    %v3236 = vunpack.c.h.b16 %v718
    %v3237 = vunpack.c.l.b16 %v719
    %v3238 = vunpack.c.h.b16 %v719
    %v3239 = vunpack.c.l.b16 %v720
    %v3240 = vunpack.c.h.b16 %v720
    %v3241 = vunpack.c.l.b16 %v721
    %v3242 = vunpack.c.h.b16 %v721
    %v3243 = vunpack.c.l.b16 %v722
    %v3244 = vunpack.c.h.b16 %v722
    %v3245 = vunpack.c.l.b16 %v723
    %v3246 = vunpack.c.h.b16 %v723
    %v3247 = vunpack.c.l.b16 %v724
    %v3248 = vunpack.c.h.b16 %v724
    %v3249 = vunpack.c.l.b16 %v725
    %v3250 = vunpack.c.h.b16 %v725
    %v3251 = vunpack.c.l.b16 %v726
    %v3252 = vunpack.c.h.b16 %v726
    %v3253 = vunpack.c.l.b16 %v727
    %v3254 = vunpack.c.h.b16 %v727
    %v3255 = vunpack.c.l.b16 %v728
    %v3256 = vunpack.c.h.b16 %v728
    %v3257 = vunpack.c.l.b16 %v729
    %v3258 = vunpack.c.h.b16 %v729
    %v3259 = vunpack.c.l.b16 %v730
    %v3260 = vunpack.c.h.b16 %v730
    %v3261 = vunpack.c.l.b16 %v731
    %v3262 = vunpack.c.h.b16 %v731
    %v3263 = vunpack.c.l.b16 %v732
    %v3264 = vunpack.c.h.b16 %v732
    %v3265 = vunpack.c.l.b16 %v733
    %v3266 = vunpack.c.h.b16 %v733
    %v3267 = vunpack.c.l.b16 %v734
    %v3268 = vunpack.c.h.b16 %v734
    %v3269 = vunpack.c.l.b16 %v735
    %v3270 = vunpack.c.h.b16 %v735
    %v3271 = vunpack.c.l.b16 %v736
    %v3272 = vunpack.c.h.b16 %v736
    %v3273 = vunpack.c.l.b16 %v737
    %v3274 = vunpack.c.h.b16 %v737
    %v3275 = vunpack.c.l.b16 %v738
    %v3276 = vunpack.c.h.b16 %v738
    %v3277 = vunpack.c.l.b16 %v739
    %v3278 = vunpack.c.h.b16 %v739
    %v3279 = vunpack.c.l.b16 %v740
    %v3280 = vunpack.c.h.b16 %v740
    %v3281 = vunpack.c.l.b16 %v741
    %v3282 = vunpack.c.h.b16 %v741
    %v3283 = vunpack.c.l.b16 %v742
    %v3284 = vunpack.c.h.b16 %v742
    %v3285 = vunpack.c.l.b16 %v743
    %v3286 = vunpack.c.h.b16 %v743
    %v3287 = vunpack.c.l.b16 %v744
    %v3288 = vunpack.c.h.b16 %v744
    %v3289 = vunpack.c.l.b16 %v745
    %v3290 = vunpack.c.h.b16 %v745
    %v3291 = vunpack.c.l.b16 %v746
    %v3292 = vunpack.c.h.b16 %v746
    %v3293 = vunpack.c.l.b16 %v747
    %v3294 = vunpack.c.h.b16 %v747
    %v3295 = vunpack.c.l.b16 %v748
    %v3296 = vunpack.c.h.b16 %v748
    %v3297 = vunpack.c.l.b16 %v749
    %v3298 = vunpack.c.h.b16 %v749
    %v3299 = vunpack.c.l.b16 %v750
    %v3300 = vunpack.c.h.b16 %v750
    %v3301 = vunpack.c.l.b16 %v751
    %v3302 = vunpack.c.h.b16 %v751
    %v3303 = vunpack.c.l.b16 %v752
    %v3304 = vunpack.c.h.b16 %v752
    %v3305 = vunpack.c.l.b16 %v753
    %v3306 = vunpack.c.h.b16 %v753
    %v3307 = vunpack.c.l.b16 %v754
    %v3308 = vunpack.c.h.b16 %v754
    %v3309 = vunpack.c.l.b16 %v755
    %v3310 = vunpack.c.h.b16 %v755
    %v3311 = vunpack.c.l.b16 %v756
    %v3312 = vunpack.c.h.b16 %v756
    %v3313 = vunpack.c.l.b16 %v757
    %v3314 = vunpack.c.h.b16 %v757
    %v3315 = vunpack.c.l.b16 %v758
    %v3316 = vunpack.c.h.b16 %v758
    %v3317 = vunpack.c.l.b16 %v759
    %v3318 = vunpack.c.h.b16 %v759
    %v3319 = vunpack.c.l.b16 %v760
    %v3320 = vunpack.c.h.b16 %v760
    %v3321 = vunpack.c.l.b16 %v761
    %v3322 = vunpack.c.h.b16 %v761
    %v3323 = vunpack.c.l.b16 %v762
    %v3324 = vunpack.c.h.b16 %v762
    %v3325 = vunpack.c.l.b16 %v763
    %v3326 = vunpack.c.h.b16 %v763
    %v3327 = vunpack.c.l.b16 %v764
    %v3328 = vunpack.c.h.b16 %v764
    %v3329 = vunpack.c.l.b16 %v765
    %v3330 = vunpack.c.h.b16 %v765
    %v3331 = vunpack.c.l.b16 %v766
    %v3332 = vunpack.c.h.b16 %v766
    %v3333 = vunpack.c.l.b16 %v767
    %v3334 = vunpack.c.h.b16 %v767
    %v3335 = vunpack.c.l.b16 %v768
    %v3336 = vunpack.c.h.b16 %v768
    %v3337 = vunpack.c.l.b16 %v769
    %v3338 = vunpack.c.h.b16 %v769
    %v3339 = vunpack.c.l.b16 %v770
    %v3340 = vunpack.c.h.b16 %v770
    %v3341 = vunpack.c.l.b16 %v771
    %v3342 = vunpack.c.h.b16 %v771
    %v3343 = vunpack.c.l.b16 %v772
    %v3344 = vunpack.c.h.b16 %v772
    %v3345 = vunpack.c.l.b16 %v773
    %v3346 = vunpack.c.h.b16 %v773
    %v3347 = vunpack.c.l.b16 %v774
    %v3348 = vunpack.c.h.b16 %v774
    %v3349 = vunpack.c.l.b16 %v775
    %v3350 = vunpack.c.h.b16 %v775
    %v3351 = vunpack.c.l.b16 %v776
    %v3352 = vunpack.c.h.b16 %v776
    %v3353 = vunpack.c.l.b16 %v777
    %v3354 = vunpack.c.h.b16 %v777
    %v3355 = vunpack.c.l.b16 %v778
    %v3356 = vunpack.c.h.b16 %v778
    %v3357 = vunpack.c.l.b16 %v779
    %v3358 = vunpack.c.h.b16 %v779
    %v3359 = vunpack.c.l.b16 %v780
    %v3360 = vunpack.c.h.b16 %v780
    %v3361 = vunpack.c.l.b16 %v781
    %v3362 = vunpack.c.h.b16 %v781
    %v3363 = vunpack.c.l.b16 %v782
    %v3364 = vunpack.c.h.b16 %v782
    %v3365 = vunpack.c.l.b16 %v783
    %v3366 = vunpack.c.h.b16 %v783
    %v3367 = vunpack.c.l.b16 %v784
    %v3368 = vunpack.c.h.b16 %v784
    %v3369 = vunpack.c.l.b16 %v785
    %v3370 = vunpack.c.h.b16 %v785
    %v3371 = vunpack.c.l.b16 %v786
    %v3372 = vunpack.c.h.b16 %v786
    %v3373 = vunpack.c.l.b16 %v787
    %v3374 = vunpack.c.h.b16 %v787
    %v3375 = vunpack.c.l.b16 %v788
    %v3376 = vunpack.c.h.b16 %v788
    %v3377 = vunpack.c.l.b16 %v789
    %v3378 = vunpack.c.h.b16 %v789
    %v3379 = vunpack.c.l.b16 %v790
    %v3380 = vunpack.c.h.b16 %v790
    %v3381 = vunpack.c.l.b16 %v791
    %v3382 = vunpack.c.h.b16 %v791
    %v3383 = vunpack.c.l.b16 %v792
    %v3384 = vunpack.c.h.b16 %v792
    %v3385 = vunpack.c.l.b16 %v793
    %v3386 = vunpack.c.h.b16 %v793
    %v3387 = vunpack.c.l.b16 %v794
    %v3388 = vunpack.c.h.b16 %v794
    %v3389 = vunpack.c.l.b16 %v795
    %v3390 = vunpack.c.h.b16 %v795
    %v3391 = vunpack.c.l.b16 %v796
    %v3392 = vunpack.c.h.b16 %v796
    %v3393 = vunpack.c.l.b16 %v797
    %v3394 = vunpack.c.h.b16 %v797
    %v3395 = vunpack.c.l.b16 %v798
    %v3396 = vunpack.c.h.b16 %v798
    %v3397 = vunpack.c.l.b16 %v799
    %v3398 = vunpack.c.h.b16 %v799
    %v3399 = vunpack.c.l.b16 %v800
    %v3400 = vunpack.c.h.b16 %v800
    %v3401 = vunpack.c.l.b16 %v801
    %v3402 = vunpack.c.h.b16 %v801
    %v3403 = vunpack.c.l.b16 %v802
    %v3404 = vunpack.c.h.b16 %v802
    %v3405 = vunpack.c.l.b16 %v803
    %v3406 = vunpack.c.h.b16 %v803
    %v3407 = vunpack.c.l.b16 %v804
    %v3408 = vunpack.c.h.b16 %v804
    %v3409 = vunpack.c.l.b16 %v805
    %v3410 = vunpack.c.h.b16 %v805
    %v3411 = vunpack.c.l.b16 %v806
    %v3412 = vunpack.c.h.b16 %v806
    %v3413 = vunpack.c.l.b16 %v807
    %v3414 = vunpack.c.h.b16 %v807
    %v3415 = vunpack.c.l.b16 %v808
    %v3416 = vunpack.c.h.b16 %v808
    %v3417 = vunpack.c.l.b16 %v809
    %v3418 = vunpack.c.h.b16 %v809
    %v3419 = vunpack.c.l.b16 %v810
    %v3420 = vunpack.c.h.b16 %v810
    %v3421 = vunpack.c.l.b16 %v811
    %v3422 = vunpack.c.h.b16 %v811
    %v3423 = vunpack.c.l.b16 %v812
    %v3424 = vunpack.c.h.b16 %v812
    %v3425 = vunpack.c.l.b16 %v813
    %v3426 = vunpack.c.h.b16 %v813
    %v3427 = vunpack.c.l.b16 %v814
    %v3428 = vunpack.c.h.b16 %v814
    %v3429 = vunpack.c.l.b16 %v815
    %v3430 = vunpack.c.h.b16 %v815
    %v3431 = vunpack.c.l.b16 %v816
    %v3432 = vunpack.c.h.b16 %v816
    %v3433 = vunpack.c.l.b16 %v817
    %v3434 = vunpack.c.h.b16 %v817
    %v3435 = vunpack.c.l.b16 %v818
    %v3436 = vunpack.c.h.b16 %v818
    %v3437 = vunpack.c.l.b16 %v819
    %v3438 = vunpack.c.h.b16 %v819
    %v3439 = vunpack.c.l.b16 %v820
    %v3440 = vunpack.c.h.b16 %v820
    %v3441 = vunpack.c.l.b16 %v821
    %v3442 = vunpack.c.h.b16 %v821
    %v3443 = vunpack.c.l.b16 %v822
    %v3444 = vunpack.c.h.b16 %v822
    %v3445 = vunpack.c.l.b16 %v823
    %v3446 = vunpack.c.h.b16 %v823
    %v3447 = vunpack.c.l.b16 %v824
    %v3448 = vunpack.c.h.b16 %v824
    %v3449 = vunpack.c.l.b16 %v825
    %v3450 = vunpack.c.h.b16 %v825
    %v3451 = vunpack.c.l.b16 %v826
    %v3452 = vunpack.c.h.b16 %v826
    %v3453 = vunpack.c.l.b16 %v827
    %v3454 = vunpack.c.h.b16 %v827
    %v3455 = vunpack.c.l.b16 %v828
    %v3456 = vunpack.c.h.b16 %v828
    %v3457 = vunpack.c.l.b16 %v829
    %v3458 = vunpack.c.h.b16 %v829
    %v3459 = vunpack.c.l.b16 %v830
    %v3460 = vunpack.c.h.b16 %v830
    %v3461 = vunpack.c.l.b16 %v831
    %v3462 = vunpack.c.h.b16 %v831
    %v3463 = vunpack.c.l.b16 %v832
    %v3464 = vunpack.c.h.b16 %v832
    %v3465 = vunpack.c.l.b16 %v833
    %v3466 = vunpack.c.h.b16 %v833
    %v3467 = vunpack.c.l.b16 %v834
    %v3468 = vunpack.c.h.b16 %v834
    %v3469 = vunpack.c.l.b16 %v835
    %v3470 = vunpack.c.h.b16 %v835
    %v3471 = vunpack.c.l.b16 %v836
    %v3472 = vunpack.c.h.b16 %v836
    %v3473 = vunpack.c.l.b16 %v837
    %v3474 = vunpack.c.h.b16 %v837
    %v3475 = vunpack.c.l.b16 %v838
    %v3476 = vunpack.c.h.b16 %v838
    %v3477 = vunpack.c.l.b16 %v839
    %v3478 = vunpack.c.h.b16 %v839
    %v3479 = vunpack.c.l.b16 %v840
    %v3480 = vunpack.c.h.b16 %v840
    %v3481 = vunpack.c.l.b16 %v841
    %v3482 = vunpack.c.h.b16 %v841
    %v3483 = vunpack.c.l.b16 %v842
    %v3484 = vunpack.c.h.b16 %v842
    %v3485 = vunpack.c.l.b16 %v843
    %v3486 = vunpack.c.h.b16 %v843
    %v3487 = vunpack.c.l.b16 %v844
    %v3488 = vunpack.c.h.b16 %v844
    %v3489 = vunpack.c.l.b16 %v845
    %v3490 = vunpack.c.h.b16 %v845
    %v3491 = vunpack.c.l.b16 %v846
    %v3492 = vunpack.c.h.b16 %v846
    %v3493 = vunpack.c.l.b16 %v847
    %v3494 = vunpack.c.h.b16 %v847
    %v3495 = vunpack.c.l.b16 %v848
    %v3496 = vunpack.c.h.b16 %v848
    %v3497 = vunpack.c.l.b16 %v849
    %v3498 = vunpack.c.h.b16 %v849
    %v3499 = vunpack.c.l.b16 %v850
    %v3500 = vunpack.c.h.b16 %v850
    %v3501 = vunpack.c.l.b16 %v851
    %v3502 = vunpack.c.h.b16 %v851
    %v3503 = vunpack.c.l.b16 %v852
    %v3504 = vunpack.c.h.b16 %v852
    %v3505 = vunpack.c.l.b16 %v853
    %v3506 = vunpack.c.h.b16 %v853
    %v3507 = vunpack.c.l.b16 %v854
    %v3508 = vunpack.c.h.b16 %v854
    %v3509 = vunpack.c.l.b16 %v855
    %v3510 = vunpack.c.h.b16 %v855
    %v3511 = vunpack.c.l.b16 %v856
    %v3512 = vunpack.c.h.b16 %v856
    %v3513 = vunpack.c.l.b16 %v857
    %v3514 = vunpack.c.h.b16 %v857
    %v3515 = vunpack.c.l.b16 %v858
    %v3516 = vunpack.c.h.b16 %v858
    %v3517 = vunpack.c.l.b16 %v859
    %v3518 = vunpack.c.h.b16 %v859
    %v3519 = vunpack.c.l.b16 %v860
    %v3520 = vunpack.c.h.b16 %v860
    %v3521 = vunpack.c.l.b16 %v861
    %v3522 = vunpack.c.h.b16 %v861
    %v3523 = vunpack.c.l.b16 %v862
    %v3524 = vunpack.c.h.b16 %v862
    %v3525 = vunpack.c.l.b16 %v863
    %v3526 = vunpack.c.h.b16 %v863
    %v3527 = vunpack.c.l.b16 %v864
    %v3528 = vunpack.c.h.b16 %v864
    %v3529 = vunpack.c.l.b16 %v865
    %v3530 = vunpack.c.h.b16 %v865
    %v3531 = vunpack.c.l.b16 %v866
    %v3532 = vunpack.c.h.b16 %v866
    %v3533 = vunpack.c.l.b16 %v867
    %v3534 = vunpack.c.h.b16 %v867
    %v3535 = vunpack.c.l.b16 %v868
    %v3536 = vunpack.c.h.b16 %v868
    %v3537 = vunpack.c.l.b16 %v869
    %v3538 = vunpack.c.h.b16 %v869
    %v3539 = vunpack.c.l.b16 %v870
    %v3540 = vunpack.c.h.b16 %v870
    %v3541 = vunpack.c.l.b16 %v871
    %v3542 = vunpack.c.h.b16 %v871
    %v3543 = vunpack.c.l.b16 %v872
    %v3544 = vunpack.c.h.b16 %v872
    %v3545 = vunpack.c.l.b16 %v873
    %v3546 = vunpack.c.h.b16 %v873
    %v3547 = vunpack.c.l.b16 %v874
    %v3548 = vunpack.c.h.b16 %v874
    %v3549 = vunpack.c.l.b16 %v875
    %v3550 = vunpack.c.h.b16 %v875
    %v3551 = vunpack.c.l.b16 %v876
    %v3552 = vunpack.c.h.b16 %v876
    %v3553 = vunpack.c.l.b16 %v877
    %v3554 = vunpack.c.h.b16 %v877
    %v3555 = vunpack.c.l.b16 %v878
    %v3556 = vunpack.c.h.b16 %v878
    %v3557 = vunpack.c.l.b16 %v879
    %v3558 = vunpack.c.h.b16 %v879
    %v3559 = vunpack.c.l.b16 %v880
    %v3560 = vunpack.c.h.b16 %v880
    %v3561 = vunpack.c.l.b16 %v881
    %v3562 = vunpack.c.h.b16 %v881
    %v3563 = vunpack.c.l.b16 %v882
    %v3564 = vunpack.c.h.b16 %v882
    %v3565 = vunpack.c.l.b16 %v883
    %v3566 = vunpack.c.h.b16 %v883
    %v3567 = vunpack.c.l.b16 %v884
    %v3568 = vunpack.c.h.b16 %v884
    %v3569 = vunpack.c.l.b16 %v885
    %v3570 = vunpack.c.h.b16 %v885
    %v3571 = vunpack.c.l.b16 %v886
    %v3572 = vunpack.c.h.b16 %v886
    %v3573 = vunpack.c.l.b16 %v887
    %v3574 = vunpack.c.h.b16 %v887
    %v3575 = vunpack.c.l.b16 %v888
    %v3576 = vunpack.c.h.b16 %v888
    %v3577 = vunpack.c.l.b16 %v889
    %v3578 = vunpack.c.h.b16 %v889
    %v3579 = vunpack.c.l.b16 %v890
    %v3580 = vunpack.c.h.b16 %v890
    %v3581 = vunpack.c.l.b16 %v891
    %v3582 = vunpack.c.h.b16 %v891
    %v3583 = vunpack.c.l.b16 %v892
    %v3584 = vunpack.c.h.b16 %v892
    %v3585 = vunpack.c.l.b16 %v893
    %v3586 = vunpack.c.h.b16 %v893
    %v3587 = vunpack.c.l.b16 %v894
    %v3588 = vunpack.c.h.b16 %v894
    %v3589 = vunpack.c.l.b16 %v895
    %v3590 = vunpack.c.h.b16 %v895
    %v3591 = vunpack.c.l.b16 %v896
    %v3592 = vunpack.c.h.b16 %v896
    %v3593 = vunpack.c.l.b16 %v897
    %v3594 = vunpack.c.h.b16 %v897
    %v3595 = vunpack.c.l.b16 %v898
    %v3596 = vunpack.c.h.b16 %v898
    %v3597 = vunpack.c.l.b16 %v899
    %v3598 = vunpack.c.h.b16 %v899
    %v3599 = vunpack.c.l.b16 %v900
    %v3600 = vunpack.c.h.b16 %v900
    %v3601 = vunpack.c.l.b16 %v901
    %v3602 = vunpack.c.h.b16 %v901
    %v3603 = vunpack.c.l.b16 %v902
    %v3604 = vunpack.c.h.b16 %v902
    %v3605 = vunpack.c.l.b16 %v903
    %v3606 = vunpack.c.h.b16 %v903
    %v3607 = vunpack.c.l.b16 %v904
    %v3608 = vunpack.c.h.b16 %v904
    %v3609 = vunpack.c.l.b16 %v905
    %v3610 = vunpack.c.h.b16 %v905
    %v3611 = vunpack.c.l.b16 %v906
    %v3612 = vunpack.c.h.b16 %v906
    %v3613 = vunpack.c.l.b16 %v907
    %v3614 = vunpack.c.h.b16 %v907
    %v3615 = vunpack.c.l.b16 %v908
    %v3616 = vunpack.c.h.b16 %v908
    %v3617 = vunpack.c.l.b16 %v909
    %v3618 = vunpack.c.h.b16 %v909
    %v3619 = vunpack.c.l.b16 %v910
    %v3620 = vunpack.c.h.b16 %v910
    %v3621 = vunpack.c.l.b16 %v911
    %v3622 = vunpack.c.h.b16 %v911
    %v3623 = vunpack.c.l.b16 %v912
    %v3624 = vunpack.c.h.b16 %v912
    %v3625 = vunpack.c.l.b16 %v913
    %v3626 = vunpack.c.h.b16 %v913
    %v3627 = vunpack.c.l.b16 %v914
    %v3628 = vunpack.c.h.b16 %v914
    %v3629 = vunpack.c.l.b16 %v915
    %v3630 = vunpack.c.h.b16 %v915
    %v3631 = vunpack.c.l.b16 %v916
    %v3632 = vunpack.c.h.b16 %v916
    %v3633 = vunpack.c.l.b16 %v917
    %v3634 = vunpack.c.h.b16 %v917
    %v3635 = vunpack.c.l.b16 %v918
    %v3636 = vunpack.c.h.b16 %v918
    %v3637 = vunpack.c.l.b16 %v919
    %v3638 = vunpack.c.h.b16 %v919
    %v3639 = vunpack.c.l.b16 %v920
    %v3640 = vunpack.c.h.b16 %v920
    %v3641 = vunpack.c.l.b16 %v921
    %v3642 = vunpack.c.h.b16 %v921
    %v3643 = vunpack.c.l.b16 %v922
    %v3644 = vunpack.c.h.b16 %v922
    %v3645 = vunpack.c.l.b16 %v923
    %v3646 = vunpack.c.h.b16 %v923
    %v3647 = vunpack.c.l.b16 %v924
    %v3648 = vunpack.c.h.b16 %v924
    %v3649 = vunpack.c.l.b16 %v925
    %v3650 = vunpack.c.h.b16 %v925
    %v3651 = vunpack.c.l.b16 %v926
    %v3652 = vunpack.c.h.b16 %v926
    %v3653 = vunpack.c.l.b16 %v927
    %v3654 = vunpack.c.h.b16 %v927
    %v3655 = vunpack.c.l.b16 %v928
    %v3656 = vunpack.c.h.b16 %v928
    %v3657 = vunpack.c.l.b16 %v929
    %v3658 = vunpack.c.h.b16 %v929
    %v3659 = vunpack.c.l.b16 %v930
    %v3660 = vunpack.c.h.b16 %v930
    %v3661 = vunpack.c.l.b16 %v931
    %v3662 = vunpack.c.h.b16 %v931
    %v3663 = vunpack.c.l.b16 %v932
    %v3664 = vunpack.c.h.b16 %v932
    %v3665 = vunpack.c.l.b16 %v933
    %v3666 = vunpack.c.h.b16 %v933
    %v3667 = vunpack.c.l.b16 %v934
    %v3668 = vunpack.c.h.b16 %v934
    %v3669 = vunpack.c.l.b16 %v935
    %v3670 = vunpack.c.h.b16 %v935
    %v3671 = vunpack.c.l.b16 %v936
    %v3672 = vunpack.c.h.b16 %v936
    %v3673 = vunpack.c.l.b16 %v937
    %v3674 = vunpack.c.h.b16 %v937
    %v3675 = vunpack.c.l.b16 %v938
    %v3676 = vunpack.c.h.b16 %v938
    %v3677 = vunpack.c.l.b16 %v939
    %v3678 = vunpack.c.h.b16 %v939
    %v3679 = vunpack.c.l.b16 %v940
    %v3680 = vunpack.c.h.b16 %v940
    %v3681 = vunpack.c.l.b16 %v941
    %v3682 = vunpack.c.h.b16 %v941
    %v3683 = vunpack.c.l.b16 %v942
    %v3684 = vunpack.c.h.b16 %v942
    %v3685 = vunpack.c.l.b16 %v943
    %v3686 = vunpack.c.h.b16 %v943
    %v3687 = vunpack.c.l.b16 %v944
    %v3688 = vunpack.c.h.b16 %v944
    %v3689 = vunpack.c.l.b16 %v945
    %v3690 = vunpack.c.h.b16 %v945
    %v3691 = vunpack.c.l.b16 %v946
    %v3692 = vunpack.c.h.b16 %v946
    %v3693 = vunpack.c.l.b16 %v947
    %v3694 = vunpack.c.h.b16 %v947
    %v3695 = vunpack.c.l.b16 %v948
    %v3696 = vunpack.c.h.b16 %v948
    %v3697 = vunpack.c.l.b16 %v949
    %v3698 = vunpack.c.h.b16 %v949
    %v3699 = vunpack.c.l.b16 %v950
    %v3700 = vunpack.c.h.b16 %v950
    %v3701 = vunpack.c.l.b16 %v951
    %v3702 = vunpack.c.h.b16 %v951
    %v3703 = vunpack.c.l.b16 %v952
    %v3704 = vunpack.c.h.b16 %v952
    %v3705 = vunpack.c.l.b16 %v953
    %v3706 = vunpack.c.h.b16 %v953
    %v3707 = vunpack.c.l.b16 %v954
    %v3708 = vunpack.c.h.b16 %v954
    %v3709 = vunpack.c.l.b16 %v955
    %v3710 = vunpack.c.h.b16 %v955
    %v3711 = vunpack.c.l.b16 %v956
    %v3712 = vunpack.c.h.b16 %v956
    %v3713 = vunpack.c.l.b16 %v957
    %v3714 = vunpack.c.h.b16 %v957
    %v3715 = vunpack.c.l.b16 %v958
    %v3716 = vunpack.c.h.b16 %v958
    %v3717 = vunpack.c.l.b16 %v959
    %v3718 = vunpack.c.h.b16 %v959
    %v3719 = vunpack.c.l.b16 %v960
    %v3720 = vunpack.c.h.b16 %v960
    %v3721 = vunpack.c.l.b16 %v961
    %v3722 = vunpack.c.h.b16 %v961
    %v3723 = vunpack.c.l.b16 %v962
    %v3724 = vunpack.c.h.b16 %v962
    %v3725 = vunpack.c.l.b16 %v963
    %v3726 = vunpack.c.h.b16 %v963
    %v3727 = vunpack.c.l.b16 %v964
    %v3728 = vunpack.c.h.b16 %v964
    %v3729 = vunpack.c.l.b16 %v965
    %v3730 = vunpack.c.h.b16 %v965
    %v3731 = vunpack.c.l.b16 %v966
    %v3732 = vunpack.c.h.b16 %v966
    %v3733 = vunpack.c.l.b16 %v967
    %v3734 = vunpack.c.h.b16 %v967
    %v3735 = vunpack.c.l.b16 %v968
    %v3736 = vunpack.c.h.b16 %v968
    %v3737 = vunpack.c.l.b16 %v969
    %v3738 = vunpack.c.h.b16 %v969
    %v3739 = vunpack.c.l.b16 %v970
    %v3740 = vunpack.c.h.b16 %v970
    %v3741 = vunpack.c.l.b16 %v971
    %v3742 = vunpack.c.h.b16 %v971
    %v3743 = vunpack.c.l.b16 %v972
    %v3744 = vunpack.c.h.b16 %v972
    %v3745 = vunpack.c.l.b16 %v973
    %v3746 = vunpack.c.h.b16 %v973
    %v3747 = vunpack.c.l.b16 %v974
    %v3748 = vunpack.c.h.b16 %v974
    %v3749 = vunpack.c.l.b16 %v975
    %v3750 = vunpack.c.h.b16 %v975
    %v3751 = vunpack.c.l.b16 %v976
    %v3752 = vunpack.c.h.b16 %v976
    %v3753 = vunpack.c.l.b16 %v977
    %v3754 = vunpack.c.h.b16 %v977
    %v3755 = vunpack.c.l.b16 %v978
    %v3756 = vunpack.c.h.b16 %v978
    %v3757 = vunpack.c.l.b16 %v979
    %v3758 = vunpack.c.h.b16 %v979
    %v3759 = vunpack.c.l.b16 %v980
    %v3760 = vunpack.c.h.b16 %v980
    %v3761 = vunpack.c.l.b16 %v981
    %v3762 = vunpack.c.h.b16 %v981
    %v3763 = vunpack.c.l.b16 %v982
    %v3764 = vunpack.c.h.b16 %v982
    %v3765 = vunpack.c.l.b16 %v983
    %v3766 = vunpack.c.h.b16 %v983
    %v3767 = vunpack.c.l.b16 %v984
    %v3768 = vunpack.c.h.b16 %v984
    %v3769 = vunpack.c.l.b16 %v985
    %v3770 = vunpack.c.h.b16 %v985
    %v3771 = vunpack.c.l.b16 %v986
    %v3772 = vunpack.c.h.b16 %v986
    %v3773 = vunpack.c.l.b16 %v987
    %v3774 = vunpack.c.h.b16 %v987
    %v3775 = vunpack.c.l.b16 %v988
    %v3776 = vunpack.c.h.b16 %v988
    %v3777 = vunpack.c.l.b16 %v989
    %v3778 = vunpack.c.h.b16 %v989
    %v3779 = vunpack.c.l.b16 %v990
    %v3780 = vunpack.c.h.b16 %v990
    %v3781 = vunpack.c.l.b16 %v991
    %v3782 = vunpack.c.h.b16 %v991
    %v3783 = vunpack.c.l.b16 %v992
    %v3784 = vunpack.c.h.b16 %v992
    %v3785 = vunpack.c.l.b16 %v993
    %v3786 = vunpack.c.h.b16 %v993
    %v3787 = vunpack.c.l.b16 %v994
    %v3788 = vunpack.c.h.b16 %v994
    %v3789 = vunpack.c.l.b16 %v995
    %v3790 = vunpack.c.h.b16 %v995
    %v3791 = vunpack.c.l.b16 %v996
    %v3792 = vunpack.c.h.b16 %v996
    %v3793 = vunpack.c.l.b16 %v997
    %v3794 = vunpack.c.h.b16 %v997
    %v3795 = vunpack.c.l.b16 %v998
    %v3796 = vunpack.c.h.b16 %v998
    %v3797 = vunpack.c.l.b16 %v999
    %v3798 = vunpack.c.h.b16 %v999
    %v3799 = vunpack.c.l.b16 %v1000
    %v3800 = vunpack.c.h.b16 %v1000
    %v3801 = vunpack.c.l.b16 %v1001
    %v3802 = vunpack.c.h.b16 %v1001
    %v3803 = vunpack.c.l.b16 %v1002
    %v3804 = vunpack.c.h.b16 %v1002
    %v3805 = vunpack.c.l.b16 %v1003
    %v3806 = vunpack.c.h.b16 %v1003
    %v3807 = vunpack.c.l.b16 %v1004
    %v3808 = vunpack.c.h.b16 %v1004
    %v3809 = vunpack.c.l.b16 %v1005
    %v3810 = vunpack.c.h.b16 %v1005
    %v3811 = vunpack.c.l.b16 %v1006
    %v3812 = vunpack.c.h.b16 %v1006
    %v3813 = vunpack.c.l.b16 %v1007
    %v3814 = vunpack.c.h.b16 %v1007
    %v3815 = vunpack.c.l.b16 %v1008
    %v3816 = vunpack.c.h.b16 %v1008
    %v3817 = vunpack.c.l.b16 %v1009
    %v3818 = vunpack.c.h.b16 %v1009
    %v3819 = vunpack.c.l.b16 %v1010
    %v3820 = vunpack.c.h.b16 %v1010
    %v3821 = vunpack.c.l.b16 %v1011
    %v3822 = vunpack.c.h.b16 %v1011
    %v3823 = vunpack.c.l.b16 %v1012
    %v3824 = vunpack.c.h.b16 %v1012
    %v3825 = vunpack.c.l.b16 %v1013
    %v3826 = vunpack.c.h.b16 %v1013
    %v3827 = vunpack.c.l.b16 %v1014
    %v3828 = vunpack.c.h.b16 %v1014
    %v3829 = vunpack.c.l.b16 %v1015
    %v3830 = vunpack.c.h.b16 %v1015
    %v3831 = vunpack.c.l.b16 %v1016
    %v3832 = vunpack.c.h.b16 %v1016
    %v3833 = vunpack.c.l.b16 %v1017
    %v3834 = vunpack.c.h.b16 %v1017
    %v3835 = vunpack.c.l.b16 %v1018
    %v3836 = vunpack.c.h.b16 %v1018
    %v3837 = vunpack.c.l.b16 %v1019
    %v3838 = vunpack.c.h.b16 %v1019
    %v3839 = vunpack.c.l.b16 %v1020
    %v3840 = vunpack.c.h.b16 %v1020
    %v3841 = vunpack.c.l.b16 %v1021
    %v3842 = vunpack.c.h.b16 %v1021
    %v3843 = vunpack.c.l.b16 %v1022
    %v3844 = vunpack.c.h.b16 %v1022
    %v3845 = vunpack.c.l.b16 %v1023
    %v3846 = vunpack.c.h.b16 %v1023
    %v3847 = vunpack.c.l.b16 %v1024
    %v3848 = vunpack.c.h.b16 %v1024
    %v3849 = vunpack.c.l.b16 %v1025
    %v3850 = vunpack.c.h.b16 %v1025
    %v3851 = vunpack.c.l.b16 %v1026
    %v3852 = vunpack.c.h.b16 %v1026
    %v3853 = vunpack.c.l.b16 %v1027
    %v3854 = vunpack.c.h.b16 %v1027
    %v3855 = vunpack.c.l.b16 %v1028
    %v3856 = vunpack.c.h.b16 %v1028
    %v3857 = vunpack.c.l.b16 %v1029
    %v3858 = vunpack.c.h.b16 %v1029
    %v3859 = vunpack.c.l.b16 %v1030
    %v3860 = vunpack.c.h.b16 %v1030
    %v3861 = vunpack.c.l.b16 %v1031
    %v3862 = vunpack.c.h.b16 %v1031
    %v3863 = vunpack.c.l.b16 %v1032
    %v3864 = vunpack.c.h.b16 %v1032
    %v3865 = vunpack.c.l.b16 %v1033
    %v3866 = vunpack.c.h.b16 %v1033
    %v3867 = vunpack.c.l.b16 %v1034
    %v3868 = vunpack.c.h.b16 %v1034
    %v3869 = vunpack.c.l.b16 %v1035
    %v3870 = vunpack.c.h.b16 %v1035
    %v3871 = vunpack.c.l.b16 %v1036
    %v3872 = vunpack.c.h.b16 %v1036
    %v3873 = vunpack.c.l.b16 %v1037
    %v3874 = vunpack.c.h.b16 %v1037
    %v3875 = vunpack.c.l.b16 %v1038
    %v3876 = vunpack.c.h.b16 %v1038
    %v3877 = vunpack.c.l.b16 %v1039
    %v3878 = vunpack.c.h.b16 %v1039
    %v3879 = vunpack.c.l.b16 %v1040
    %v3880 = vunpack.c.h.b16 %v1040
    %v3881 = vunpack.c.l.b16 %v1041
    %v3882 = vunpack.c.h.b16 %v1041
    %v3883 = vunpack.c.l.b16 %v1042
    %v3884 = vunpack.c.h.b16 %v1042
    %v3885 = vunpack.c.l.b16 %v1043
    %v3886 = vunpack.c.h.b16 %v1043
    %v3887 = vunpack.c.l.b16 %v1044
    %v3888 = vunpack.c.h.b16 %v1044
    %v3889 = vunpack.c.l.b16 %v1045
    %v3890 = vunpack.c.h.b16 %v1045
    %v3891 = vunpack.c.l.b16 %v1046
    %v3892 = vunpack.c.h.b16 %v1046
    %v3893 = vunpack.c.l.b16 %v1047
    %v3894 = vunpack.c.h.b16 %v1047
    %v3895 = vunpack.c.l.b16 %v1048
    %v3896 = vunpack.c.h.b16 %v1048
    %v3897 = vunpack.c.l.b16 %v1049
    %v3898 = vunpack.c.h.b16 %v1049
    %v3899 = vunpack.c.l.b16 %v1050
    %v3900 = vunpack.c.h.b16 %v1050
    %v3901 = vunpack.c.l.b16 %v1051
    %v3902 = vunpack.c.h.b16 %v1051
    %v3903 = vunpack.c.l.b16 %v1052
    %v3904 = vunpack.c.h.b16 %v1052
    %v3905 = vunpack.c.l.b16 %v1053
    %v3906 = vunpack.c.h.b16 %v1053
    %v3907 = vunpack.c.l.b16 %v1054
    %v3908 = vunpack.c.h.b16 %v1054
    %v3909 = vunpack.c.l.b16 %v1055
    %v3910 = vunpack.c.h.b16 %v1055
    %v3911 = vunpack.c.l.b16 %v1056
    %v3912 = vunpack.c.h.b16 %v1056
    %v3913 = vunpack.c.l.b16 %v1057
    %v3914 = vunpack.c.h.b16 %v1057
    %v3915 = vunpack.c.l.b16 %v1058
    %v3916 = vunpack.c.h.b16 %v1058
    %v3917 = vunpack.c.l.b16 %v1059
    %v3918 = vunpack.c.h.b16 %v1059
    %v3919 = vunpack.c.l.b16 %v1060
    %v3920 = vunpack.c.h.b16 %v1060
    %v3921 = vunpack.c.l.b16 %v1061
    %v3922 = vunpack.c.h.b16 %v1061
    %v3923 = vunpack.c.l.b16 %v1062
    %v3924 = vunpack.c.h.b16 %v1062
    %v3925 = vunpack.c.l.b16 %v1063
    %v3926 = vunpack.c.h.b16 %v1063
    %v3927 = vunpack.c.l.b16 %v1064
    %v3928 = vunpack.c.h.b16 %v1064
    %v3929 = vunpack.c.l.b16 %v1065
    %v3930 = vunpack.c.h.b16 %v1065
    %v3931 = vunpack.c.l.b16 %v1066
    %v3932 = vunpack.c.h.b16 %v1066
    %v3933 = vunpack.c.l.b16 %v1067
    %v3934 = vunpack.c.h.b16 %v1067
    %v3935 = vunpack.c.l.b16 %v1068
    %v3936 = vunpack.c.h.b16 %v1068
    %v3937 = vunpack.c.l.b16 %v1069
    %v3938 = vunpack.c.h.b16 %v1069
    %v3939 = vunpack.c.l.b16 %v1070
    %v3940 = vunpack.c.h.b16 %v1070
    %v3941 = vunpack.c.l.b16 %v1071
    %v3942 = vunpack.c.h.b16 %v1071
    %v3943 = vunpack.c.l.b16 %v1072
    %v3944 = vunpack.c.h.b16 %v1072
    %v3945 = vunpack.c.l.b16 %v1073
    %v3946 = vunpack.c.h.b16 %v1073
    %v3947 = vunpack.c.l.b16 %v1074
    %v3948 = vunpack.c.h.b16 %v1074
    %v3949 = vunpack.c.l.b16 %v1075
    %v3950 = vunpack.c.h.b16 %v1075
    %v3951 = vunpack.c.l.b16 %v1076
    %v3952 = vunpack.c.h.b16 %v1076
    %v3953 = vunpack.c.l.b16 %v1077
    %v3954 = vunpack.c.h.b16 %v1077
    %v3955 = vunpack.c.l.b16 %v1078
    %v3956 = vunpack.c.h.b16 %v1078
    %v3957 = vunpack.c.l.b16 %v1079
    %v3958 = vunpack.c.h.b16 %v1079
    %v3959 = vunpack.c.l.b16 %v1080
    %v3960 = vunpack.c.h.b16 %v1080
    %v3961 = vunpack.c.l.b16 %v1081
    %v3962 = vunpack.c.h.b16 %v1081
    %v3963 = vunpack.c.l.b16 %v1082
    %v3964 = vunpack.c.h.b16 %v1082
    %v3965 = vunpack.c.l.b16 %v1083
    %v3966 = vunpack.c.h.b16 %v1083
    %v3967 = vunpack.c.l.b16 %v1084
    %v3968 = vunpack.c.h.b16 %v1084
    %v3969 = vunpack.c.l.b16 %v1085
    %v3970 = vunpack.c.h.b16 %v1085
    %v3971 = vunpack.c.l.b16 %v1086
    %v3972 = vunpack.c.h.b16 %v1086
    %v3973 = vunpack.c.l.b16 %v1087
    %v3974 = vunpack.c.h.b16 %v1087
    %v3975 = vunpack.c.l.b16 %v1088
    %v3976 = vunpack.c.h.b16 %v1088
    %v3977 = vunpack.c.l.b16 %v1089
    %v3978 = vunpack.c.h.b16 %v1089
    %v3979 = vunpack.c.l.b16 %v1090
    %v3980 = vunpack.c.h.b16 %v1090
    %v3981 = vunpack.c.l.b16 %v1091
    %v3982 = vunpack.c.h.b16 %v1091
    %v3983 = vunpack.c.l.b16 %v1092
    %v3984 = vunpack.c.h.b16 %v1092
    %v3985 = vunpack.c.l.b16 %v1093
    %v3986 = vunpack.c.h.b16 %v1093
    %v3987 = vunpack.c.l.b16 %v1094
    %v3988 = vunpack.c.h.b16 %v1094
    %v3989 = vunpack.c.l.b16 %v1095
    %v3990 = vunpack.c.h.b16 %v1095
    %v3991 = vunpack.c.l.b16 %v1096
    %v3992 = vunpack.c.h.b16 %v1096
    %v3993 = vunpack.c.l.b16 %v1097
    %v3994 = vunpack.c.h.b16 %v1097
    %v3995 = vunpack.c.l.b16 %v1098
    %v3996 = vunpack.c.h.b16 %v1098
    %v3997 = vunpack.c.l.b16 %v1099
    %v3998 = vunpack.c.h.b16 %v1099
    %v3999 = vunpack.c.l.b16 %v1100
    %v4000 = vunpack.c.h.b16 %v1100
    %v4001 = vunpack.c.l.b16 %v1101
    %v4002 = vunpack.c.h.b16 %v1101
    %v4003 = vunpack.c.l.b16 %v1102
    %v4004 = vunpack.c.h.b16 %v1102
    %v4005 = vunpack.c.l.b16 %v1103
    %v4006 = vunpack.c.h.b16 %v1103
    %v4007 = vunpack.c.l.b16 %v1104
    %v4008 = vunpack.c.h.b16 %v1104
    %v4009 = vunpack.c.l.b16 %v1105
    %v4010 = vunpack.c.h.b16 %v1105
    %v4011 = vunpack.c.l.b16 %v1106
    %v4012 = vunpack.c.h.b16 %v1106
    %v4013 = vunpack.c.l.b16 %v1107
    %v4014 = vunpack.c.h.b16 %v1107
    %v4015 = vunpack.c.l.b16 %v1108
    %v4016 = vunpack.c.h.b16 %v1108
    %v4017 = vunpack.c.l.b16 %v1109
    %v4018 = vunpack.c.h.b16 %v1109
    %v4019 = vunpack.c.l.b16 %v1110
    %v4020 = vunpack.c.h.b16 %v1110
    %v4021 = vunpack.c.l.b16 %v1111
    %v4022 = vunpack.c.h.b16 %v1111
    %v4023 = vunpack.c.l.b16 %v1112
    %v4024 = vunpack.c.h.b16 %v1112
    %v4025 = vunpack.c.l.b16 %v1113
    %v4026 = vunpack.c.h.b16 %v1113
    %v4027 = vunpack.c.l.b16 %v1114
    %v4028 = vunpack.c.h.b16 %v1114
    %v4029 = vunpack.c.l.b16 %v1115
    %v4030 = vunpack.c.h.b16 %v1115
    %v4031 = vunpack.c.l.b16 %v1116
    %v4032 = vunpack.c.h.b16 %v1116
    %v4033 = vunpack.c.l.b16 %v1117
    %v4034 = vunpack.c.h.b16 %v1117
    %v4035 = vunpack.c.l.b16 %v1118
    %v4036 = vunpack.c.h.b16 %v1118
    %v4037 = vunpack.c.l.b16 %v1119
    %v4038 = vunpack.c.h.b16 %v1119
    %v4039 = vunpack.c.l.b16 %v1120
    %v4040 = vunpack.c.h.b16 %v1120
    %v4041 = vunpack.c.l.b16 %v1121
    %v4042 = vunpack.c.h.b16 %v1121
    %v4043 = vunpack.c.l.b16 %v1122
    %v4044 = vunpack.c.h.b16 %v1122
    %v4045 = vunpack.c.l.b16 %v1123
    %v4046 = vunpack.c.h.b16 %v1123
    %v4047 = vunpack.c.l.b16 %v1124
    %v4048 = vunpack.c.h.b16 %v1124
    %v4049 = vunpack.c.l.b16 %v1125
    %v4050 = vunpack.c.h.b16 %v1125
    %v4051 = vunpack.c.l.b16 %v1126
    %v4052 = vunpack.c.h.b16 %v1126
    %v4053 = vunpack.c.l.b16 %v1127
    %v4054 = vunpack.c.h.b16 %v1127
    %v4055 = vunpack.c.l.b16 %v1128
    %v4056 = vunpack.c.h.b16 %v1128
    %v4057 = vunpack.c.l.b16 %v1129
    %v4058 = vunpack.c.h.b16 %v1129
    %v4059 = vunpack.c.l.b16 %v1130
    %v4060 = vunpack.c.h.b16 %v1130
    %v4061 = vunpack.c.l.b16 %v1131
    %v4062 = vunpack.c.h.b16 %v1131
    %v4063 = vunpack.c.l.b16 %v1132
    %v4064 = vunpack.c.h.b16 %v1132
    %v4065 = vunpack.c.l.b16 %v1133
    %v4066 = vunpack.c.h.b16 %v1133
    %v4067 = vunpack.c.l.b16 %v1134
    %v4068 = vunpack.c.h.b16 %v1134
    %v4069 = vunpack.c.l.b16 %v1135
    %v4070 = vunpack.c.h.b16 %v1135
    %v4071 = vunpack.c.l.b16 %v1136
    %v4072 = vunpack.c.h.b16 %v1136
    %v4073 = vunpack.c.l.b16 %v1137
    %v4074 = vunpack.c.h.b16 %v1137
    %v4075 = vunpack.c.l.b16 %v1138
    %v4076 = vunpack.c.h.b16 %v1138
    %v4077 = vunpack.c.l.b16 %v1139
    %v4078 = vunpack.c.h.b16 %v1139
    %v4079 = vunpack.c.l.b16 %v1140
    %v4080 = vunpack.c.h.b16 %v1140
    %v4081 = vunpack.c.l.b16 %v1141
    %v4082 = vunpack.c.h.b16 %v1141
    %v4083 = vunpack.c.l.b16 %v1142
    %v4084 = vunpack.c.h.b16 %v1142
    %v4085 = vunpack.c.l.b16 %v1143
    %v4086 = vunpack.c.h.b16 %v1143
    %v4087 = vunpack.c.l.b16 %v1144
    %v4088 = vunpack.c.h.b16 %v1144
    %v4089 = vunpack.c.l.b16 %v1145
    %v4090 = vunpack.c.h.b16 %v1145
    %v4091 = vunpack.c.l.b16 %v1146
    %v4092 = vunpack.c.h.b16 %v1146
    %v4093 = vunpack.c.l.b16 %v1147
    %v4094 = vunpack.c.h.b16 %v1147
    %v4095 = vunpack.c.l.b16 %v1148
    %v4096 = vunpack.c.h.b16 %v1148
    %v4097 = vunpack.c.l.b16 %v1149
    %v4098 = vunpack.c.h.b16 %v1149
    %v4099 = vunpack.c.l.b16 %v1150
    %v4100 = vunpack.c.h.b16 %v1150
    %v4101 = vunpack.c.l.b16 %v1151
    %v4102 = vunpack.c.h.b16 %v1151
    %v4103 = vunpack.c.l.b16 %v1152
    %v4104 = vunpack.c.h.b16 %v1152
    %v4105 = vunpack.c.l.b16 %v1153
    %v4106 = vunpack.c.h.b16 %v1153
    %v4107 = vunpack.c.l.b16 %v1154
    %v4108 = vunpack.c.h.b16 %v1154
    %v4109 = vunpack.c.l.b16 %v1155
    %v4110 = vunpack.c.h.b16 %v1155
    %v4111 = vunpack.c.l.b16 %v1156
    %v4112 = vunpack.c.h.b16 %v1156
    %v4113 = vunpack.c.l.b16 %v1157
    %v4114 = vunpack.c.h.b16 %v1157
    %v4115 = vunpack.c.l.b16 %v1158
    %v4116 = vunpack.c.h.b16 %v1158
    %v4117 = vunpack.c.l.b16 %v1159
    %v4118 = vunpack.c.h.b16 %v1159
    %v4119 = vunpack.c.l.b16 %v1160
    %v4120 = vunpack.c.h.b16 %v1160
    %v4121 = vunpack.c.l.b16 %v1161
    %v4122 = vunpack.c.h.b16 %v1161
    %v4123 = vunpack.c.l.b16 %v1162
    %v4124 = vunpack.c.h.b16 %v1162
    %v4125 = vunpack.c.l.b16 %v1163
    %v4126 = vunpack.c.h.b16 %v1163
    %v4127 = vunpack.c.l.b16 %v1164
    %v4128 = vunpack.c.h.b16 %v1164
    %v4129 = vunpack.c.l.b16 %v1165
    %v4130 = vunpack.c.h.b16 %v1165
    %v4131 = vunpack.c.l.b16 %v1166
    %v4132 = vunpack.c.h.b16 %v1166
    %v4133 = vunpack.c.l.b16 %v1167
    %v4134 = vunpack.c.h.b16 %v1167
    %v4135 = vunpack.c.l.b16 %v1168
    %v4136 = vunpack.c.h.b16 %v1168
    %v4137 = vunpack.c.l.b16 %v1169
    %v4138 = vunpack.c.h.b16 %v1169
    %v4139 = vunpack.c.l.b16 %v1170
    %v4140 = vunpack.c.h.b16 %v1170
    %v4141 = vunpack.c.l.b16 %v1171
    %v4142 = vunpack.c.h.b16 %v1171
    %v4143 = vunpack.c.l.b16 %v1172
    %v4144 = vunpack.c.h.b16 %v1172
    %v4145 = vunpack.c.l.b16 %v1173
    %v4146 = vunpack.c.h.b16 %v1173
    %v4147 = vunpack.c.l.b16 %v1174
    %v4148 = vunpack.c.h.b16 %v1174
    %v4149 = vunpack.c.l.b16 %v1175
    %v4150 = vunpack.c.h.b16 %v1175
    %v4151 = vunpack.c.l.b16 %v1176
    %v4152 = vunpack.c.h.b16 %v1176
    %v4153 = vunpack.c.l.b16 %v1177
    %v4154 = vunpack.c.h.b16 %v1177
    %v4155 = vunpack.c.l.b16 %v1178
    %v4156 = vunpack.c.h.b16 %v1178
    %v4157 = vunpack.c.l.b16 %v1179
    %v4158 = vunpack.c.h.b16 %v1179
    %v4159 = vunpack.c.l.b16 %v1180
    %v4160 = vunpack.c.h.b16 %v1180
    %v4161 = vunpack.c.l.b16 %v1181
    %v4162 = vunpack.c.h.b16 %v1181
    %v4163 = vunpack.c.l.b16 %v1182
    %v4164 = vunpack.c.h.b16 %v1182
    %v4165 = vunpack.c.l.b16 %v1183
    %v4166 = vunpack.c.h.b16 %v1183
    %v4167 = vunpack.c.l.b16 %v1184
    %v4168 = vunpack.c.h.b16 %v1184
    %v4169 = vunpack.c.l.b16 %v1185
    %v4170 = vunpack.c.h.b16 %v1185
    %v4171 = vunpack.c.l.b16 %v1186
    %v4172 = vunpack.c.h.b16 %v1186
    %v4173 = vunpack.c.l.b16 %v1187
    %v4174 = vunpack.c.h.b16 %v1187
    %v4175 = vunpack.c.l.b16 %v1188
    %v4176 = vunpack.c.h.b16 %v1188
    %v4177 = vunpack.c.l.b16 %v1189
    %v4178 = vunpack.c.h.b16 %v1189
    %v4179 = vunpack.c.l.b16 %v1190
    %v4180 = vunpack.c.h.b16 %v1190
    %v4181 = vunpack.c.l.b16 %v1191
    %v4182 = vunpack.c.h.b16 %v1191
    %v4183 = vunpack.c.l.b16 %v1192
    %v4184 = vunpack.c.h.b16 %v1192
    %v4185 = vunpack.c.l.b16 %v1193
    %v4186 = vunpack.c.h.b16 %v1193
    %v4187 = vunpack.c.l.b16 %v1194
    %v4188 = vunpack.c.h.b16 %v1194
    %v4189 = vunpack.c.l.b16 %v1195
    %v4190 = vunpack.c.h.b16 %v1195
    %v4191 = vunpack.c.l.b16 %v1196
    %v4192 = vunpack.c.h.b16 %v1196
    %v4193 = vunpack.c.l.b16 %v1197
    %v4194 = vunpack.c.h.b16 %v1197
    %v4195 = vunpack.c.l.b16 %v1198
    %v4196 = vunpack.c.h.b16 %v1198
    %v4197 = vunpack.c.l.b16 %v1199
    %v4198 = vunpack.c.h.b16 %v1199
    %v4199 = vunpack.c.l.b16 %v1200
    %v4200 = vunpack.c.h.b16 %v1200
    %v4201 = vunpack.c.l.b16 %v1201
    %v4202 = vunpack.c.h.b16 %v1201
    %v4203 = vunpack.c.l.b16 %v1202
    %v4204 = vunpack.c.h.b16 %v1202
    %v4205 = vunpack.c.l.b16 %v1203
    %v4206 = vunpack.c.h.b16 %v1203
    %v4207 = vunpack.c.l.b16 %v1204
    %v4208 = vunpack.c.h.b16 %v1204
    %v4209 = vunpack.c.l.b16 %v1205
    %v4210 = vunpack.c.h.b16 %v1205
    %v4211 = vunpack.c.l.b16 %v1206
    %v4212 = vunpack.c.h.b16 %v1206
    %v4213 = vunpack.c.l.b16 %v1207
    %v4214 = vunpack.c.h.b16 %v1207
    %v4215 = vunpack.c.l.b16 %v1208
    %v4216 = vunpack.c.h.b16 %v1208
    %v4217 = vunpack.c.l.b16 %v1209
    %v4218 = vunpack.c.h.b16 %v1209
    %v4219 = vunpack.c.l.b16 %v1210
    %v4220 = vunpack.c.h.b16 %v1210
    %v4221 = vunpack.c.l.b16 %v1211
    %v4222 = vunpack.c.h.b16 %v1211
    %v4223 = vunpack.c.l.b16 %v1212
    %v4224 = vunpack.c.h.b16 %v1212
    %v4225 = vunpack.c.l.b16 %v1213
    %v4226 = vunpack.c.h.b16 %v1213
    %v4227 = vunpack.c.l.b16 %v1214
    %v4228 = vunpack.c.h.b16 %v1214
    %v4229 = vunpack.c.l.b16 %v1215
    %v4230 = vunpack.c.h.b16 %v1215
    %v4231 = vunpack.c.l.b16 %v1216
    %v4232 = vunpack.c.h.b16 %v1216
    %v4233 = vunpack.c.l.b16 %v1217
    %v4234 = vunpack.c.h.b16 %v1217
    %v4235 = vunpack.c.l.b16 %v1218
    %v4236 = vunpack.c.h.b16 %v1218
    %v4237 = vunpack.c.l.b16 %v1219
    %v4238 = vunpack.c.h.b16 %v1219
    %v4239 = vunpack.c.l.b16 %v1220
    %v4240 = vunpack.c.h.b16 %v1220
    %v4241 = vunpack.c.l.b16 %v1221
    %v4242 = vunpack.c.h.b16 %v1221
    %v4243 = vunpack.c.l.b16 %v1222
    %v4244 = vunpack.c.h.b16 %v1222
    %v4245 = vunpack.c.l.b16 %v1223
    %v4246 = vunpack.c.h.b16 %v1223
    %v4247 = vunpack.c.l.b16 %v1224
    %v4248 = vunpack.c.h.b16 %v1224
    %v4249 = vunpack.c.l.b16 %v1225
    %v4250 = vunpack.c.h.b16 %v1225
    %v4251 = vunpack.c.l.b16 %v1226
    %v4252 = vunpack.c.h.b16 %v1226
    %v4253 = vunpack.c.l.b16 %v1227
    %v4254 = vunpack.c.h.b16 %v1227
    %v4255 = vunpack.c.l.b16 %v1228
    %v4256 = vunpack.c.h.b16 %v1228
    %v4257 = vunpack.c.l.b16 %v1229
    %v4258 = vunpack.c.h.b16 %v1229
    %v4259 = vunpack.c.l.b16 %v1230
    %v4260 = vunpack.c.h.b16 %v1230
    %v4261 = vunpack.c.l.b16 %v1231
    %v4262 = vunpack.c.h.b16 %v1231
    %v4263 = vunpack.c.l.b16 %v1232
    %v4264 = vunpack.c.h.b16 %v1232
    %v4265 = vunpack.c.l.b16 %v1233
    %v4266 = vunpack.c.h.b16 %v1233
    %v4267 = vunpack.c.l.b16 %v1234
    %v4268 = vunpack.c.h.b16 %v1234
    %v4269 = vunpack.c.l.b16 %v1235
    %v4270 = vunpack.c.h.b16 %v1235
    %v4271 = vunpack.c.l.b16 %v1236
    %v4272 = vunpack.c.h.b16 %v1236
    %v4273 = vunpack.c.l.b16 %v1237
    %v4274 = vunpack.c.h.b16 %v1237
    %v4275 = vunpack.c.l.b16 %v1238
    %v4276 = vunpack.c.h.b16 %v1238
    %v4277 = vunpack.c.l.b16 %v1239
    %v4278 = vunpack.c.h.b16 %v1239
    %v4279 = vunpack.c.l.b16 %v1240
    %v4280 = vunpack.c.h.b16 %v1240
    %v4281 = vunpack.c.l.b16 %v1241
    %v4282 = vunpack.c.h.b16 %v1241
    %v4283 = vunpack.c.l.b16 %v1242
    %v4284 = vunpack.c.h.b16 %v1242
    %v4285 = vunpack.c.l.b16 %v1243
    %v4286 = vunpack.c.h.b16 %v1243
    %v4287 = vunpack.c.l.b16 %v1244
    %v4288 = vunpack.c.h.b16 %v1244
    %v4289 = vunpack.c.l.b16 %v1245
    %v4290 = vunpack.c.h.b16 %v1245
    %v4291 = vunpack.c.l.b16 %v1246
    %v4292 = vunpack.c.h.b16 %v1246
    %v4293 = vunpack.c.l.b16 %v1247
    %v4294 = vunpack.c.h.b16 %v1247
    %v4295 = vunpack.c.l.b16 %v1248
    %v4296 = vunpack.c.h.b16 %v1248
    %v4297 = vunpack.c.l.b16 %v1249
    %v4298 = vunpack.c.h.b16 %v1249
    %v4299 = vunpack.c.l.b16 %v1250
    %v4300 = vunpack.c.h.b16 %v1250
    %v4301 = vunpack.c.l.b16 %v1251
    %v4302 = vunpack.c.h.b16 %v1251
    %v4303 = vunpack.c.l.b16 %v1252
    %v4304 = vunpack.c.h.b16 %v1252
    %v4305 = vunpack.c.l.b16 %v1253
    %v4306 = vunpack.c.h.b16 %v1253
    %v4307 = vunpack.c.l.b16 %v1254
    %v4308 = vunpack.c.h.b16 %v1254
    %v4309 = vunpack.c.l.b16 %v1255
    %v4310 = vunpack.c.h.b16 %v1255
    %v4311 = vunpack.c.l.b16 %v1256
    %v4312 = vunpack.c.h.b16 %v1256
    %v4313 = vunpack.c.l.b16 %v1257
    %v4314 = vunpack.c.h.b16 %v1257
    %v4315 = vunpack.c.l.b16 %v1258
    %v4316 = vunpack.c.h.b16 %v1258
    %v4317 = vunpack.c.l.b16 %v1259
    %v4318 = vunpack.c.h.b16 %v1259
    %v4319 = vunpack.c.l.b16 %v1260
    %v4320 = vunpack.c.h.b16 %v1260
    %v4321 = vunpack.c.l.b16 %v1261
    %v4322 = vunpack.c.h.b16 %v1261
    %v4323 = vunpack.c.l.b16 %v1262
    %v4324 = vunpack.c.h.b16 %v1262
    %v4325 = vunpack.c.l.b16 %v1263
    %v4326 = vunpack.c.h.b16 %v1263
    %v4327 = vunpack.c.l.b16 %v1264
    %v4328 = vunpack.c.h.b16 %v1264
    %v4329 = vunpack.c.l.b16 %v1265
    %v4330 = vunpack.c.h.b16 %v1265
    %v4331 = vunpack.c.l.b16 %v1266
    %v4332 = vunpack.c.h.b16 %v1266
    %v4333 = vunpack.c.l.b16 %v1267
    %v4334 = vunpack.c.h.b16 %v1267
    %v4335 = vunpack.c.l.b16 %v1268
    %v4336 = vunpack.c.h.b16 %v1268
    %v4337 = vunpack.c.l.b16 %v1269
    %v4338 = vunpack.c.h.b16 %v1269
    %v4339 = vunpack.c.l.b16 %v1270
    %v4340 = vunpack.c.h.b16 %v1270
    %v4341 = vunpack.c.l.b16 %v1271
    %v4342 = vunpack.c.h.b16 %v1271
    %v4343 = vunpack.c.l.b16 %v1272
    %v4344 = vunpack.c.h.b16 %v1272
    %v4345 = vunpack.c.l.b16 %v1273
    %v4346 = vunpack.c.h.b16 %v1273
    %v4347 = vunpack.c.l.b16 %v1274
    %v4348 = vunpack.c.h.b16 %v1274
    %v4349 = vunpack.c.l.b16 %v1275
    %v4350 = vunpack.c.h.b16 %v1275
    %v4351 = vunpack.c.l.b16 %v1276
    %v4352 = vunpack.c.h.b16 %v1276
    %v4353 = vunpack.c.l.b16 %v1277
    %v4354 = vunpack.c.h.b16 %v1277
    %v4355 = vunpack.c.l.b16 %v1278
    %v4356 = vunpack.c.h.b16 %v1278
    %v4357 = vunpack.c.l.b16 %v1279
    %v4358 = vunpack.c.h.b16 %v1279
    %v4359 = vunpack.c.l.b16 %v1280
    %v4360 = vunpack.c.h.b16 %v1280
    %v4361 = vunpack.c.l.b16 %v1281
    %v4362 = vunpack.c.h.b16 %v1281
    %v4363 = vunpack.c.l.b16 %v1282
    %v4364 = vunpack.c.h.b16 %v1282
    %v4365 = vunpack.c.l.b16 %v1283
    %v4366 = vunpack.c.h.b16 %v1283
    %v4367 = vunpack.c.l.b16 %v1284
    %v4368 = vunpack.c.h.b16 %v1284
    %v4369 = vunpack.c.l.b16 %v1285
    %v4370 = vunpack.c.h.b16 %v1285
    %v4371 = vunpack.c.l.b16 %v1286
    %v4372 = vunpack.c.h.b16 %v1286
    %v4373 = vunpack.c.l.b16 %v1287
    %v4374 = vunpack.c.h.b16 %v1287
    %v4375 = vunpack.c.l.b16 %v1288
    %v4376 = vunpack.c.h.b16 %v1288
    %v4377 = vunpack.c.l.b16 %v1289
    %v4378 = vunpack.c.h.b16 %v1289
    %v4379 = vunpack.c.l.b16 %v1290
    %v4380 = vunpack.c.h.b16 %v1290
    %v4381 = vunpack.c.l.b16 %v1291
    %v4382 = vunpack.c.h.b16 %v1291
    %v4383 = vunpack.c.l.b16 %v1292
    %v4384 = vunpack.c.h.b16 %v1292
    %v4385 = vunpack.c.l.b16 %v1293
    %v4386 = vunpack.c.h.b16 %v1293
    %v4387 = vunpack.c.l.b16 %v1294
    %v4388 = vunpack.c.h.b16 %v1294
    %v4389 = vunpack.c.l.b16 %v1295
    %v4390 = vunpack.c.h.b16 %v1295
    %v4391 = vunpack.c.l.b16 %v1296
    %v4392 = vunpack.c.h.b16 %v1296
    %v4393 = vunpack.c.l.b16 %v1297
    %v4394 = vunpack.c.h.b16 %v1297
    %v4395 = vunpack.c.l.b16 %v1298
    %v4396 = vunpack.c.h.b16 %v1298
    %v4397 = vunpack.c.l.b16 %v1299
    %v4398 = vunpack.c.h.b16 %v1299
    %v4399 = vunpack.c.l.b16 %v1300
    %v4400 = vunpack.c.h.b16 %v1300
    %v4401 = vunpack.c.l.b16 %v1301
    %v4402 = vunpack.c.h.b16 %v1301
    %v4403 = vunpack.c.l.b16 %v1302
    %v4404 = vunpack.c.h.b16 %v1302
    %v4405 = vunpack.c.l.b16 %v1303
    %v4406 = vunpack.c.h.b16 %v1303
    %v4407 = vunpack.c.l.b16 %v1304
    %v4408 = vunpack.c.h.b16 %v1304
    %v4409 = vunpack.c.l.b16 %v1305
    %v4410 = vunpack.c.h.b16 %v1305
    %v4411 = vunpack.c.l.b16 %v1306
    %v4412 = vunpack.c.h.b16 %v1306
    %v4413 = vunpack.c.l.b16 %v1307
    %v4414 = vunpack.c.h.b16 %v1307
    %v4415 = vunpack.c.l.b16 %v1308
    %v4416 = vunpack.c.h.b16 %v1308
    %v4417 = vunpack.c.l.b16 %v1309
    %v4418 = vunpack.c.h.b16 %v1309
    %v4419 = vunpack.c.l.b16 %v1310
    %v4420 = vunpack.c.h.b16 %v1310
    %v4421 = vunpack.c.l.b16 %v1311
    %v4422 = vunpack.c.h.b16 %v1311
    %v4423 = vunpack.c.l.b16 %v1312
    %v4424 = vunpack.c.h.b16 %v1312
    %v4425 = vunpack.c.l.b16 %v1313
    %v4426 = vunpack.c.h.b16 %v1313
    %v4427 = vunpack.c.l.b16 %v1314
    %v4428 = vunpack.c.h.b16 %v1314
    %v4429 = vunpack.c.l.b16 %v1315
    %v4430 = vunpack.c.h.b16 %v1315
    %v4431 = vunpack.c.l.b16 %v1316
    %v4432 = vunpack.c.h.b16 %v1316
    %v4433 = vunpack.c.l.b16 %v1317
    %v4434 = vunpack.c.h.b16 %v1317
    %v4435 = vunpack.c.l.b16 %v1318
    %v4436 = vunpack.c.h.b16 %v1318
    %v4437 = vunpack.c.l.b16 %v1319
    %v4438 = vunpack.c.h.b16 %v1319
    %v4439 = vunpack.c.l.b16 %v1320
    %v4440 = vunpack.c.h.b16 %v1320
    %v4441 = vunpack.c.l.b16 %v1321
    %v4442 = vunpack.c.h.b16 %v1321
    %v4443 = vunpack.c.l.b16 %v1322
    %v4444 = vunpack.c.h.b16 %v1322
    %v4445 = vunpack.c.l.b16 %v1323
    %v4446 = vunpack.c.h.b16 %v1323
    %v4447 = vunpack.c.l.b16 %v1324
    %v4448 = vunpack.c.h.b16 %v1324
    %v4449 = vunpack.c.l.b16 %v1325
    %v4450 = vunpack.c.h.b16 %v1325
    %v4451 = vunpack.c.l.b16 %v1326
    %v4452 = vunpack.c.h.b16 %v1326
    %v4453 = vunpack.c.l.b16 %v1327
    %v4454 = vunpack.c.h.b16 %v1327
    %v4455 = vunpack.c.l.b16 %v1328
    %v4456 = vunpack.c.h.b16 %v1328
    %v4457 = vunpack.c.l.b16 %v1329
    %v4458 = vunpack.c.h.b16 %v1329
    %v4459 = vunpack.c.l.b16 %v1330
    %v4460 = vunpack.c.h.b16 %v1330
    %v4461 = vunpack.c.l.b16 %v1331
    %v4462 = vunpack.c.h.b16 %v1331
    %v4463 = vunpack.c.l.b16 %v1332
    %v4464 = vunpack.c.h.b16 %v1332
    %v4465 = vunpack.c.l.b16 %v1333
    %v4466 = vunpack.c.h.b16 %v1333
    %v4467 = vunpack.c.l.b16 %v1334
    %v4468 = vunpack.c.h.b16 %v1334
    %v4469 = vunpack.c.l.b16 %v1335
    %v4470 = vunpack.c.h.b16 %v1335
    %v4471 = vunpack.c.l.b16 %v1336
    %v4472 = vunpack.c.h.b16 %v1336
    %v4473 = vunpack.c.l.b16 %v1337
    %v4474 = vunpack.c.h.b16 %v1337
    %v4475 = vunpack.c.l.b16 %v1338
    %v4476 = vunpack.c.h.b16 %v1338
    %v4477 = vunpack.c.l.b16 %v1339
    %v4478 = vunpack.c.h.b16 %v1339
    %v4479 = vunpack.c.l.b16 %v1340
    %v4480 = vunpack.c.h.b16 %v1340
    %v4481 = vunpack.c.l.b16 %v1341
    %v4482 = vunpack.c.h.b16 %v1341
    %v4483 = vunpack.c.l.b16 %v1342
    %v4484 = vunpack.c.h.b16 %v1342
    %v4485 = vunpack.c.l.b16 %v1343
    %v4486 = vunpack.c.h.b16 %v1343
    %v4487 = vunpack.c.l.b16 %v1344
    %v4488 = vunpack.c.h.b16 %v1344
    %v4489 = vunpack.c.l.b16 %v1345
    %v4490 = vunpack.c.h.b16 %v1345
    %v4491 = vunpack.c.l.b16 %v1346
    %v4492 = vunpack.c.h.b16 %v1346
    %v4493 = vunpack.c.l.b16 %v1347
    %v4494 = vunpack.c.h.b16 %v1347
    %v4495 = vunpack.c.l.b16 %v1348
    %v4496 = vunpack.c.h.b16 %v1348
    %v4497 = vunpack.c.l.b16 %v1349
    %v4498 = vunpack.c.h.b16 %v1349
    %v4499 = vunpack.c.l.b16 %v1350
    %v4500 = vunpack.c.h.b16 %v1350
    %v4501 = vunpack.c.l.b16 %v1351
    %v4502 = vunpack.c.h.b16 %v1351
    %v4503 = vunpack.c.l.b16 %v1352
    %v4504 = vunpack.c.h.b16 %v1352
    %v4505 = vunpack.c.l.b16 %v1353
    %v4506 = vunpack.c.h.b16 %v1353
    %v4507 = vunpack.c.l.b16 %v1354
    %v4508 = vunpack.c.h.b16 %v1354
    %v4509 = vunpack.c.l.b16 %v1355
    %v4510 = vunpack.c.h.b16 %v1355
    %v4511 = vunpack.c.l.b16 %v1356
    %v4512 = vunpack.c.h.b16 %v1356
    %v4513 = vunpack.c.l.b16 %v1357
    %v4514 = vunpack.c.h.b16 %v1357
    %v4515 = vunpack.c.l.b16 %v1358
    %v4516 = vunpack.c.h.b16 %v1358
    %v4517 = vunpack.c.l.b16 %v1359
    %v4518 = vunpack.c.h.b16 %v1359
    %v4519 = vunpack.c.l.b16 %v1360
    %v4520 = vunpack.c.h.b16 %v1360
    %v4521 = vunpack.c.l.b16 %v1361
    %v4522 = vunpack.c.h.b16 %v1361
    %v4523 = vunpack.c.l.b16 %v1362
    %v4524 = vunpack.c.h.b16 %v1362
    %v4525 = vunpack.c.l.b16 %v1363
    %v4526 = vunpack.c.h.b16 %v1363
    %v4527 = vunpack.c.l.b16 %v1364
    %v4528 = vunpack.c.h.b16 %v1364
    %v4529 = vunpack.c.l.b16 %v1365
    %v4530 = vunpack.c.h.b16 %v1365
    %v4531 = vunpack.c.l.b16 %v1366
    %v4532 = vunpack.c.h.b16 %v1366
    %v4533 = vunpack.c.l.b16 %v1367
    %v4534 = vunpack.c.h.b16 %v1367
    %v4535 = vunpack.c.l.b16 %v1368
    %v4536 = vunpack.c.h.b16 %v1368
    %v4537 = vunpack.c.l.b16 %v1369
    %v4538 = vunpack.c.h.b16 %v1369
    %v4539 = vunpack.c.l.b16 %v1370
    %v4540 = vunpack.c.h.b16 %v1370
    %v4541 = vunpack.c.l.b16 %v1371
    %v4542 = vunpack.c.h.b16 %v1371
    %v4543 = vunpack.c.l.b16 %v1372
    %v4544 = vunpack.c.h.b16 %v1372
    %v4545 = vunpack.c.l.b16 %v1373
    %v4546 = vunpack.c.h.b16 %v1373
    %v4547 = vunpack.c.l.b16 %v1374
    %v4548 = vunpack.c.h.b16 %v1374
    %v4549 = vunpack.c.l.b16 %v1375
    %v4550 = vunpack.c.h.b16 %v1375
    %v4551 = vunpack.c.l.b16 %v1376
    %v4552 = vunpack.c.h.b16 %v1376
    %v4553 = vunpack.c.l.b16 %v1377
    %v4554 = vunpack.c.h.b16 %v1377
    %v4555 = vunpack.c.l.b16 %v1378
    %v4556 = vunpack.c.h.b16 %v1378
    %v4557 = vunpack.c.l.b16 %v1379
    %v4558 = vunpack.c.h.b16 %v1379
    %v4559 = vunpack.c.l.b16 %v1380
    %v4560 = vunpack.c.h.b16 %v1380
    %v4561 = vunpack.c.l.b16 %v1381
    %v4562 = vunpack.c.h.b16 %v1381
    %v4563 = vunpack.c.l.b16 %v1382
    %v4564 = vunpack.c.h.b16 %v1382
    %v4565 = vunpack.c.l.b16 %v1383
    %v4566 = vunpack.c.h.b16 %v1383
    %v4567 = vunpack.c.l.b16 %v1384
    %v4568 = vunpack.c.h.b16 %v1384
    %v4569 = vunpack.c.l.b16 %v1385
    %v4570 = vunpack.c.h.b16 %v1385
    %v4571 = vunpack.c.l.b16 %v1386
    %v4572 = vunpack.c.h.b16 %v1386
    %v4573 = vunpack.c.l.b16 %v1387
    %v4574 = vunpack.c.h.b16 %v1387
    %v4575 = vunpack.c.l.b16 %v1388
    %v4576 = vunpack.c.h.b16 %v1388
    %v4577 = vunpack.c.l.b16 %v1389
    %v4578 = vunpack.c.h.b16 %v1389
    %v4579 = vunpack.c.l.b16 %v1390
    %v4580 = vunpack.c.h.b16 %v1390
    %v4581 = vunpack.c.l.b16 %v1391
    %v4582 = vunpack.c.h.b16 %v1391
    %v4583 = vunpack.c.l.b16 %v1392
    %v4584 = vunpack.c.h.b16 %v1392
    %v4585 = vunpack.c.l.b16 %v1393
    %v4586 = vunpack.c.h.b16 %v1393
    %v4587 = vunpack.c.l.b16 %v1394
    %v4588 = vunpack.c.h.b16 %v1394
    %v4589 = vunpack.c.l.b16 %v1395
    %v4590 = vunpack.c.h.b16 %v1395
    %v4591 = vunpack.c.l.b16 %v1396
    %v4592 = vunpack.c.h.b16 %v1396
    %v4593 = vunpack.c.l.b16 %v1397
    %v4594 = vunpack.c.h.b16 %v1397
    %v4595 = vunpack.c.l.b16 %v1398
    %v4596 = vunpack.c.h.b16 %v1398
    %v4597 = vunpack.c.l.b16 %v1399
    %v4598 = vunpack.c.h.b16 %v1399
    %v4599 = vunpack.c.l.b16 %v1400
    %v4600 = vunpack.c.h.b16 %v1400
    %v4601 = vunpack.c.l.b16 %v1401
    %v4602 = vunpack.c.h.b16 %v1401
    %v4603 = vunpack.c.l.b16 %v1402
    %v4604 = vunpack.c.h.b16 %v1402
    %v4605 = vunpack.c.l.b16 %v1403
    %v4606 = vunpack.c.h.b16 %v1403
    %v4607 = vunpack.c.l.b16 %v1404
    %v4608 = vunpack.c.h.b16 %v1404
    %v4609 = vunpack.c.l.b16 %v1405
    %v4610 = vunpack.c.h.b16 %v1405
    %v4611 = vunpack.c.l.b16 %v1406
    %v4612 = vunpack.c.h.b16 %v1406
    %v4613 = vunpack.c.l.b16 %v1407
    %v4614 = vunpack.c.h.b16 %v1407
    %v4615 = vunpack.c.l.b16 %v1408
    %v4616 = vunpack.c.h.b16 %v1408
    %v4617 = vunpack.c.l.b16 %v1409
    %v4618 = vunpack.c.h.b16 %v1409
    %v4619 = vunpack.c.l.b16 %v1410
    %v4620 = vunpack.c.h.b16 %v1410
    %v4621 = vunpack.c.l.b16 %v1411
    %v4622 = vunpack.c.h.b16 %v1411
    %v4623 = vunpack.c.l.b16 %v1412
    %v4624 = vunpack.c.h.b16 %v1412
    %v4625 = vunpack.c.l.b16 %v1413
    %v4626 = vunpack.c.h.b16 %v1413
    %v4627 = vunpack.c.l.b16 %v1414
    %v4628 = vunpack.c.h.b16 %v1414
    %v4629 = vunpack.c.l.b16 %v1415
    %v4630 = vunpack.c.h.b16 %v1415
    %v4631 = vunpack.c.l.b16 %v1416
    %v4632 = vunpack.c.h.b16 %v1416
    %v4633 = vunpack.c.l.b16 %v1417
    %v4634 = vunpack.c.h.b16 %v1417
    %v4635 = vunpack.c.l.b16 %v1418
    %v4636 = vunpack.c.h.b16 %v1418
    %v4637 = vunpack.c.l.b16 %v1419
    %v4638 = vunpack.c.h.b16 %v1419
    %v4639 = vunpack.c.l.b16 %v1420
    %v4640 = vunpack.c.h.b16 %v1420
    %v4641 = vunpack.c.l.b16 %v1421
    %v4642 = vunpack.c.h.b16 %v1421
    %v4643 = vunpack.c.l.b16 %v1422
    %v4644 = vunpack.c.h.b16 %v1422
    %v4645 = vunpack.c.l.b16 %v1423
    %v4646 = vunpack.c.h.b16 %v1423
    %v4647 = vunpack.c.l.b16 %v1424
    %v4648 = vunpack.c.h.b16 %v1424
    %v4649 = vunpack.c.l.b16 %v1425
    %v4650 = vunpack.c.h.b16 %v1425
    %v4651 = vunpack.c.l.b16 %v1426
    %v4652 = vunpack.c.h.b16 %v1426
    %v4653 = vunpack.c.l.b16 %v1427
    %v4654 = vunpack.c.h.b16 %v1427
    %v4655 = vunpack.c.l.b16 %v1428
    %v4656 = vunpack.c.h.b16 %v1428
    %v4657 = vunpack.c.l.b16 %v1429
    %v4658 = vunpack.c.h.b16 %v1429
    %v4659 = vunpack.c.l.b16 %v1430
    %v4660 = vunpack.c.h.b16 %v1430
    %v4661 = vunpack.c.l.b16 %v1431
    %v4662 = vunpack.c.h.b16 %v1431
    %v4663 = vunpack.c.l.b16 %v1432
    %v4664 = vunpack.c.h.b16 %v1432
    %v4665 = vunpack.c.l.b16 %v1433
    %v4666 = vunpack.c.h.b16 %v1433
    %v4667 = vunpack.c.l.b16 %v1434
    %v4668 = vunpack.c.h.b16 %v1434
    %v4669 = vunpack.c.l.b16 %v1435
    %v4670 = vunpack.c.h.b16 %v1435
    %v4671 = vunpack.c.l.b16 %v1436
    %v4672 = vunpack.c.h.b16 %v1436
    %v4673 = vunpack.c.l.b16 %v1437
    %v4674 = vunpack.c.h.b16 %v1437
    %v4675 = vunpack.c.l.b16 %v1438
    %v4676 = vunpack.c.h.b16 %v1438
    %v4677 = vunpack.c.l.b16 %v1439
    %v4678 = vunpack.c.h.b16 %v1439
    %v4679 = vunpack.c.l.b16 %v1440
    %v4680 = vunpack.c.h.b16 %v1440
    %v4681 = vunpack.c.l.b16 %v1441
    %v4682 = vunpack.c.h.b16 %v1441
    %v4683 = vunpack.c.l.b16 %v1442
    %v4684 = vunpack.c.h.b16 %v1442
    %v4685 = vunpack.c.l.b16 %v1443
    %v4686 = vunpack.c.h.b16 %v1443
    %v4687 = vunpack.c.l.b16 %v1444
    %v4688 = vunpack.c.h.b16 %v1444
    %v4689 = vunpack.c.l.b16 %v1445
    %v4690 = vunpack.c.h.b16 %v1445
    %v4691 = vunpack.c.l.b16 %v1446
    %v4692 = vunpack.c.h.b16 %v1446
    %v4693 = vunpack.c.l.b16 %v1447
    %v4694 = vunpack.c.h.b16 %v1447
    %v4695 = vunpack.c.l.b16 %v1448
    %v4696 = vunpack.c.h.b16 %v1448
    %v4697 = vunpack.c.l.b16 %v1449
    %v4698 = vunpack.c.h.b16 %v1449
    %v4699 = vunpack.c.l.b16 %v1450
    %v4700 = vunpack.c.h.b16 %v1450
    %v4701 = vunpack.c.l.b16 %v1451
    %v4702 = vunpack.c.h.b16 %v1451
    %v4703 = vunpack.c.l.b16 %v1452
    %v4704 = vunpack.c.h.b16 %v1452
    %v4705 = vunpack.c.l.b16 %v1453
    %v4706 = vunpack.c.h.b16 %v1453
    %v4707 = vunpack.c.l.b16 %v1454
    %v4708 = vunpack.c.h.b16 %v1454
    %v4709 = vunpack.c.l.b16 %v1455
    %v4710 = vunpack.c.h.b16 %v1455
    %v4711 = vunpack.c.l.b16 %v1456
    %v4712 = vunpack.c.h.b16 %v1456
    %v4713 = vunpack.c.l.b16 %v1457
    %v4714 = vunpack.c.h.b16 %v1457
    %v4715 = vunpack.c.l.b16 %v1458
    %v4716 = vunpack.c.h.b16 %v1458
    %v4717 = vunpack.c.l.b16 %v1459
    %v4718 = vunpack.c.h.b16 %v1459
    %v4719 = vpack.c.b16 %v2679, %v2671
    %v4720 = vpack.c.b16 %v2680, %v2672
    %v4721 = vpack.c.b16 %v2681, %v2673
    %v4722 = vpack.c.b16 %v2682, %v2674
    %v4723 = vpack.c.b16 %v2683, %v2675
    %v4724 = vpack.c.b16 %v2684, %v2676
    %v4725 = vpack.c.b16 %v2685, %v2677
    %v4726 = vpack.c.b16 %v2686, %v2678
    %v4727 = vpack.c.b16 %v2695, %v2687
    %v4728 = vpack.c.b16 %v2696, %v2688
    %v4729 = vpack.c.b16 %v2697, %v2689
    %v4730 = vpack.c.b16 %v2698, %v2690
    %v4731 = vpack.c.b16 %v2699, %v2691
    %v4732 = vpack.c.b16 %v2700, %v2692
    %v4733 = vpack.c.b16 %v2701, %v2693
    %v4734 = vpack.c.b16 %v2702, %v2694
    %v4735 = vpack.c.b16 %v2711, %v2703
    %v4736 = vpack.c.b16 %v2712, %v2704
    %v4737 = vpack.c.b16 %v2713, %v2705
    %v4738 = vpack.c.b16 %v2714, %v2706
    %v4739 = vpack.c.b16 %v2715, %v2707
    %v4740 = vpack.c.b16 %v2716, %v2708
    %v4741 = vpack.c.b16 %v2717, %v2709
    %v4742 = vpack.c.b16 %v2718, %v2710
    %v4743 = vpack.c.b16 %v2727, %v2719
    %v4744 = vpack.c.b16 %v2728, %v2720
    %v4745 = vpack.c.b16 %v2729, %v2721
    %v4746 = vpack.c.b16 %v2730, %v2722
    %v4747 = vpack.c.b16 %v2731, %v2723
    %v4748 = vpack.c.b16 %v2732, %v2724
    %v4749 = vpack.c.b16 %v2733, %v2725
    %v4750 = vpack.c.b16 %v2734, %v2726
    %v4751 = vpack.c.b16 %v2743, %v2735
    %v4752 = vpack.c.b16 %v2744, %v2736
    %v4753 = vpack.c.b16 %v2745, %v2737
    %v4754 = vpack.c.b16 %v2746, %v2738
    %v4755 = vpack.c.b16 %v2747, %v2739
    %v4756 = vpack.c.b16 %v2748, %v2740
    %v4757 = vpack.c.b16 %v2749, %v2741
    %v4758 = vpack.c.b16 %v2750, %v2742
    %v4759 = vpack.c.b16 %v2759, %v2751
    %v4760 = vpack.c.b16 %v2760, %v2752
    %v4761 = vpack.c.b16 %v2761, %v2753
    %v4762 = vpack.c.b16 %v2762, %v2754
    %v4763 = vpack.c.b16 %v2763, %v2755
    %v4764 = vpack.c.b16 %v2764, %v2756
    %v4765 = vpack.c.b16 %v2765, %v2757
    %v4766 = vpack.c.b16 %v2766, %v2758
    %v4767 = vpack.c.b16 %v2775, %v2767
    %v4768 = vpack.c.b16 %v2776, %v2768
    %v4769 = vpack.c.b16 %v2777, %v2769
    %v4770 = vpack.c.b16 %v2778, %v2770
    %v4771 = vpack.c.b16 %v2779, %v2771
    %v4772 = vpack.c.b16 %v2780, %v2772
    %v4773 = vpack.c.b16 %v2781, %v2773
    %v4774 = vpack.c.b16 %v2782, %v2774
    %v4775 = vpack.c.b16 %v2791, %v2783
    %v4776 = vpack.c.b16 %v2792, %v2784
    %v4777 = vpack.c.b16 %v2793, %v2785
    %v4778 = vpack.c.b16 %v2794, %v2786
    %v4779 = vpack.c.b16 %v2795, %v2787
    %v4780 = vpack.c.b16 %v2796, %v2788
    %v4781 = vpack.c.b16 %v2797, %v2789
    %v4782 = vpack.c.b16 %v2798, %v2790
    %v4783 = vpack.c.b16 %v2807, %v2799
    %v4784 = vpack.c.b16 %v2808, %v2800
    %v4785 = vpack.c.b16 %v2809, %v2801
    %v4786 = vpack.c.b16 %v2810, %v2802
    %v4787 = vpack.c.b16 %v2811, %v2803
    %v4788 = vpack.c.b16 %v2812, %v2804
    %v4789 = vpack.c.b16 %v2813, %v2805
    %v4790 = vpack.c.b16 %v2814, %v2806
    %v4791 = vpack.c.b16 %v2823, %v2815
    %v4792 = vpack.c.b16 %v2824, %v2816
    %v4793 = vpack.c.b16 %v2825, %v2817
    %v4794 = vpack.c.b16 %v2826, %v2818
    %v4795 = vpack.c.b16 %v2827, %v2819
    %v4796 = vpack.c.b16 %v2828, %v2820
    %v4797 = vpack.c.b16 %v2829, %v2821
    %v4798 = vpack.c.b16 %v2830, %v2822
    %v4799 = vpack.c.b16 %v2839, %v2831
    %v4800 = vpack.c.b16 %v2840, %v2832
    %v4801 = vpack.c.b16 %v2841, %v2833
    %v4802 = vpack.c.b16 %v2842, %v2834
    %v4803 = vpack.c.b16 %v2843, %v2835
    %v4804 = vpack.c.b16 %v2844, %v2836
    %v4805 = vpack.c.b16 %v2845, %v2837
    %v4806 = vpack.c.b16 %v2846, %v2838
    %v4807 = vpack.c.b16 %v2855, %v2847
    %v4808 = vpack.c.b16 %v2856, %v2848
    %v4809 = vpack.c.b16 %v2857, %v2849
    %v4810 = vpack.c.b16 %v2858, %v2850
    %v4811 = vpack.c.b16 %v2859, %v2851
    %v4812 = vpack.c.b16 %v2860, %v2852
    %v4813 = vpack.c.b16 %v2861, %v2853
    %v4814 = vpack.c.b16 %v2862, %v2854
    %v4815 = vpack.c.b16 %v2871, %v2863
    %v4816 = vpack.c.b16 %v2872, %v2864
    %v4817 = vpack.c.b16 %v2873, %v2865
    %v4818 = vpack.c.b16 %v2874, %v2866
    %v4819 = vpack.c.b16 %v2875, %v2867
    %v4820 = vpack.c.b16 %v2876, %v2868
    %v4821 = vpack.c.b16 %v2877, %v2869
    %v4822 = vpack.c.b16 %v2878, %v2870
    %v4823 = vpack.c.b16 %v2887, %v2879
    %v4824 = vpack.c.b16 %v2888, %v2880
    %v4825 = vpack.c.b16 %v2889, %v2881
    %v4826 = vpack.c.b16 %v2890, %v2882
    %v4827 = vpack.c.b16 %v2891, %v2883
    %v4828 = vpack.c.b16 %v2892, %v2884
    %v4829 = vpack.c.b16 %v2893, %v2885
    %v4830 = vpack.c.b16 %v2894, %v2886
    %v4831 = vpack.c.b16 %v2903, %v2895
    %v4832 = vpack.c.b16 %v2904, %v2896
    %v4833 = vpack.c.b16 %v2905, %v2897
    %v4834 = vpack.c.b16 %v2906, %v2898
    %v4835 = vpack.c.b16 %v2907, %v2899
    %v4836 = vpack.c.b16 %v2908, %v2900
    %v4837 = vpack.c.b16 %v2909, %v2901
    %v4838 = vpack.c.b16 %v2910, %v2902
    %v4839 = vpack.c.b16 %v2919, %v2911
    %v4840 = vpack.c.b16 %v2920, %v2912
    %v4841 = vpack.c.b16 %v2921, %v2913
    %v4842 = vpack.c.b16 %v2922, %v2914
    %v4843 = vpack.c.b16 %v2923, %v2915
    %v4844 = vpack.c.b16 %v2924, %v2916
    %v4845 = vpack.c.b16 %v2925, %v2917
    %v4846 = vpack.c.b16 %v2926, %v2918
    %v4847 = vpack.c.b16 %v2935, %v2927
    %v4848 = vpack.c.b16 %v2936, %v2928
    %v4849 = vpack.c.b16 %v2937, %v2929
    %v4850 = vpack.c.b16 %v2938, %v2930
    %v4851 = vpack.c.b16 %v2939, %v2931
    %v4852 = vpack.c.b16 %v2940, %v2932
    %v4853 = vpack.c.b16 %v2941, %v2933
    %v4854 = vpack.c.b16 %v2942, %v2934
    %v4855 = vpack.c.b16 %v2951, %v2943
    %v4856 = vpack.c.b16 %v2952, %v2944
    %v4857 = vpack.c.b16 %v2953, %v2945
    %v4858 = vpack.c.b16 %v2954, %v2946
    %v4859 = vpack.c.b16 %v2955, %v2947
    %v4860 = vpack.c.b16 %v2956, %v2948
    %v4861 = vpack.c.b16 %v2957, %v2949
    %v4862 = vpack.c.b16 %v2958, %v2950
    %v4863 = vpack.c.b16 %v2967, %v2959
    %v4864 = vpack.c.b16 %v2968, %v2960
    %v4865 = vpack.c.b16 %v2969, %v2961
    %v4866 = vpack.c.b16 %v2970, %v2962
    %v4867 = vpack.c.b16 %v2971, %v2963
    %v4868 = vpack.c.b16 %v2972, %v2964
    %v4869 = vpack.c.b16 %v2973, %v2965
    %v4870 = vpack.c.b16 %v2974, %v2966
    %v4871 = vpack.c.b16 %v2983, %v2975
    %v4872 = vpack.c.b16 %v2984, %v2976
    %v4873 = vpack.c.b16 %v2985, %v2977
    %v4874 = vpack.c.b16 %v2986, %v2978
    %v4875 = vpack.c.b16 %v2987, %v2979
    %v4876 = vpack.c.b16 %v2988, %v2980
    %v4877 = vpack.c.b16 %v2989, %v2981
    %v4878 = vpack.c.b16 %v2990, %v2982
    %v4879 = vpack.c.b16 %v2999, %v2991
    %v4880 = vpack.c.b16 %v3000, %v2992
    %v4881 = vpack.c.b16 %v3001, %v2993
    %v4882 = vpack.c.b16 %v3002, %v2994
    %v4883 = vpack.c.b16 %v3003, %v2995
    %v4884 = vpack.c.b16 %v3004, %v2996
    %v4885 = vpack.c.b16 %v3005, %v2997
    %v4886 = vpack.c.b16 %v3006, %v2998
    %v4887 = vpack.c.b16 %v3015, %v3007
    %v4888 = vpack.c.b16 %v3016, %v3008
    %v4889 = vpack.c.b16 %v3017, %v3009
    %v4890 = vpack.c.b16 %v3018, %v3010
    %v4891 = vpack.c.b16 %v3019, %v3011
    %v4892 = vpack.c.b16 %v3020, %v3012
    %v4893 = vpack.c.b16 %v3021, %v3013
    %v4894 = vpack.c.b16 %v3022, %v3014
    %v4895 = vpack.c.b16 %v3031, %v3023
    %v4896 = vpack.c.b16 %v3032, %v3024
    %v4897 = vpack.c.b16 %v3033, %v3025
    %v4898 = vpack.c.b16 %v3034, %v3026
    %v4899 = vpack.c.b16 %v3035, %v3027
    %v4900 = vpack.c.b16 %v3036, %v3028
    %v4901 = vpack.c.b16 %v3037, %v3029
    %v4902 = vpack.c.b16 %v3038, %v3030
    %v4903 = vpack.c.b16 %v3047, %v3039
    %v4904 = vpack.c.b16 %v3048, %v3040
    %v4905 = vpack.c.b16 %v3049, %v3041
    %v4906 = vpack.c.b16 %v3050, %v3042
    %v4907 = vpack.c.b16 %v3051, %v3043
    %v4908 = vpack.c.b16 %v3052, %v3044
    %v4909 = vpack.c.b16 %v3053, %v3045
    %v4910 = vpack.c.b16 %v3054, %v3046
    %v4911 = vpack.c.b16 %v3063, %v3055
    %v4912 = vpack.c.b16 %v3064, %v3056
    %v4913 = vpack.c.b16 %v3065, %v3057
    %v4914 = vpack.c.b16 %v3066, %v3058
    %v4915 = vpack.c.b16 %v3067, %v3059
    %v4916 = vpack.c.b16 %v3068, %v3060
    %v4917 = vpack.c.b16 %v3069, %v3061
    %v4918 = vpack.c.b16 %v3070, %v3062
    %v4919 = vpack.c.b16 %v3079, %v3071
    %v4920 = vpack.c.b16 %v3080, %v3072
    %v4921 = vpack.c.b16 %v3081, %v3073
    %v4922 = vpack.c.b16 %v3082, %v3074
    %v4923 = vpack.c.b16 %v3083, %v3075
    %v4924 = vpack.c.b16 %v3084, %v3076
    %v4925 = vpack.c.b16 %v3085, %v3077
    %v4926 = vpack.c.b16 %v3086, %v3078
    %v4927 = vpack.c.b16 %v3095, %v3087
    %v4928 = vpack.c.b16 %v3096, %v3088
    %v4929 = vpack.c.b16 %v3097, %v3089
    %v4930 = vpack.c.b16 %v3098, %v3090
    %v4931 = vpack.c.b16 %v3099, %v3091
    %v4932 = vpack.c.b16 %v3100, %v3092
    %v4933 = vpack.c.b16 %v3101, %v3093
    %v4934 = vpack.c.b16 %v3102, %v3094
    %v4935 = vpack.c.b16 %v3111, %v3103
    %v4936 = vpack.c.b16 %v3112, %v3104
    %v4937 = vpack.c.b16 %v3113, %v3105
    %v4938 = vpack.c.b16 %v3114, %v3106
    %v4939 = vpack.c.b16 %v3115, %v3107
    %v4940 = vpack.c.b16 %v3116, %v3108
    %v4941 = vpack.c.b16 %v3117, %v3109
    %v4942 = vpack.c.b16 %v3118, %v3110
    %v4943 = vpack.c.b16 %v3127, %v3119
    %v4944 = vpack.c.b16 %v3128, %v3120
    %v4945 = vpack.c.b16 %v3129, %v3121
    %v4946 = vpack.c.b16 %v3130, %v3122
    %v4947 = vpack.c.b16 %v3131, %v3123
    %v4948 = vpack.c.b16 %v3132, %v3124
    %v4949 = vpack.c.b16 %v3133, %v3125
    %v4950 = vpack.c.b16 %v3134, %v3126
    %v4951 = vpack.c.b16 %v3143, %v3135
    %v4952 = vpack.c.b16 %v3144, %v3136
    %v4953 = vpack.c.b16 %v3145, %v3137
    %v4954 = vpack.c.b16 %v3146, %v3138
    %v4955 = vpack.c.b16 %v3147, %v3139
    %v4956 = vpack.c.b16 %v3148, %v3140
    %v4957 = vpack.c.b16 %v3149, %v3141
    %v4958 = vpack.c.b16 %v3150, %v3142
    %v4959 = vpack.c.b16 %v3159, %v3151
    %v4960 = vpack.c.b16 %v3160, %v3152
    %v4961 = vpack.c.b16 %v3161, %v3153
    %v4962 = vpack.c.b16 %v3162, %v3154
    %v4963 = vpack.c.b16 %v3163, %v3155
    %v4964 = vpack.c.b16 %v3164, %v3156
    %v4965 = vpack.c.b16 %v3165, %v3157
    %v4966 = vpack.c.b16 %v3166, %v3158
    %v4967 = vpack.c.b16 %v3175, %v3167
    %v4968 = vpack.c.b16 %v3176, %v3168
    %v4969 = vpack.c.b16 %v3177, %v3169
    %v4970 = vpack.c.b16 %v3178, %v3170
    %v4971 = vpack.c.b16 %v3179, %v3171
    %v4972 = vpack.c.b16 %v3180, %v3172
    %v4973 = vpack.c.b16 %v3181, %v3173
    %v4974 = vpack.c.b16 %v3182, %v3174
    %v4975 = vpack.c.b16 %v3191, %v3183
    %v4976 = vpack.c.b16 %v3192, %v3184
    %v4977 = vpack.c.b16 %v3193, %v3185
    %v4978 = vpack.c.b16 %v3194, %v3186
    %v4979 = vpack.c.b16 %v3195, %v3187
    %v4980 = vpack.c.b16 %v3196, %v3188
    %v4981 = vpack.c.b16 %v3197, %v3189
    %v4982 = vpack.c.b16 %v3198, %v3190
    %v4983 = vpack.c.b16 %v3207, %v3199
    %v4984 = vpack.c.b16 %v3208, %v3200
    %v4985 = vpack.c.b16 %v3209, %v3201
    %v4986 = vpack.c.b16 %v3210, %v3202
    %v4987 = vpack.c.b16 %v3211, %v3203
    %v4988 = vpack.c.b16 %v3212, %v3204
    %v4989 = vpack.c.b16 %v3213, %v3205
    %v4990 = vpack.c.b16 %v3214, %v3206
    %v4991 = vpack.c.b16 %v3223, %v3215
    %v4992 = vpack.c.b16 %v3224, %v3216
    %v4993 = vpack.c.b16 %v3225, %v3217
    %v4994 = vpack.c.b16 %v3226, %v3218
    %v4995 = vpack.c.b16 %v3227, %v3219
    %v4996 = vpack.c.b16 %v3228, %v3220
    %v4997 = vpack.c.b16 %v3229, %v3221
    %v4998 = vpack.c.b16 %v3230, %v3222
    %v4999 = vpack.c.b16 %v3239, %v3231
    %v5000 = vpack.c.b16 %v3240, %v3232
    %v5001 = vpack.c.b16 %v3241, %v3233
    %v5002 = vpack.c.b16 %v3242, %v3234
    %v5003 = vpack.c.b16 %v3243, %v3235
    %v5004 = vpack.c.b16 %v3244, %v3236
    %v5005 = vpack.c.b16 %v3245, %v3237
    %v5006 = vpack.c.b16 %v3246, %v3238
    %v5007 = vpack.c.b16 %v3255, %v3247
    %v5008 = vpack.c.b16 %v3256, %v3248
    %v5009 = vpack.c.b16 %v3257, %v3249
    %v5010 = vpack.c.b16 %v3258, %v3250
    %v5011 = vpack.c.b16 %v3259, %v3251
    %v5012 = vpack.c.b16 %v3260, %v3252
    %v5013 = vpack.c.b16 %v3261, %v3253
    %v5014 = vpack.c.b16 %v3262, %v3254
    %v5015 = vpack.c.b16 %v3271, %v3263
    %v5016 = vpack.c.b16 %v3272, %v3264
    %v5017 = vpack.c.b16 %v3273, %v3265
    %v5018 = vpack.c.b16 %v3274, %v3266
    %v5019 = vpack.c.b16 %v3275, %v3267
    %v5020 = vpack.c.b16 %v3276, %v3268
    %v5021 = vpack.c.b16 %v3277, %v3269
    %v5022 = vpack.c.b16 %v3278, %v3270
    %v5023 = vpack.c.b16 %v3287, %v3279
    %v5024 = vpack.c.b16 %v3288, %v3280
    %v5025 = vpack.c.b16 %v3289, %v3281
    %v5026 = vpack.c.b16 %v3290, %v3282
    %v5027 = vpack.c.b16 %v3291, %v3283
    %v5028 = vpack.c.b16 %v3292, %v3284
    %v5029 = vpack.c.b16 %v3293, %v3285
    %v5030 = vpack.c.b16 %v3294, %v3286
    %v5031 = vpack.c.b16 %v3303, %v3295
    %v5032 = vpack.c.b16 %v3304, %v3296
    %v5033 = vpack.c.b16 %v3305, %v3297
    %v5034 = vpack.c.b16 %v3306, %v3298
    %v5035 = vpack.c.b16 %v3307, %v3299
    %v5036 = vpack.c.b16 %v3308, %v3300
    %v5037 = vpack.c.b16 %v3309, %v3301
    %v5038 = vpack.c.b16 %v3310, %v3302
    %v5039 = vpack.c.b16 %v3319, %v3311
    %v5040 = vpack.c.b16 %v3320, %v3312
    %v5041 = vpack.c.b16 %v3321, %v3313
    %v5042 = vpack.c.b16 %v3322, %v3314
    %v5043 = vpack.c.b16 %v3323, %v3315
    %v5044 = vpack.c.b16 %v3324, %v3316
    %v5045 = vpack.c.b16 %v3325, %v3317
    %v5046 = vpack.c.b16 %v3326, %v3318
    %v5047 = vpack.c.b16 %v3335, %v3327
    %v5048 = vpack.c.b16 %v3336, %v3328
    %v5049 = vpack.c.b16 %v3337, %v3329
    %v5050 = vpack.c.b16 %v3338, %v3330
    %v5051 = vpack.c.b16 %v3339, %v3331
    %v5052 = vpack.c.b16 %v3340, %v3332
    %v5053 = vpack.c.b16 %v3341, %v3333
    %v5054 = vpack.c.b16 %v3342, %v3334
    %v5055 = vpack.c.b16 %v3351, %v3343
    %v5056 = vpack.c.b16 %v3352, %v3344
    %v5057 = vpack.c.b16 %v3353, %v3345
    %v5058 = vpack.c.b16 %v3354, %v3346
    %v5059 = vpack.c.b16 %v3355, %v3347
    %v5060 = vpack.c.b16 %v3356, %v3348
    %v5061 = vpack.c.b16 %v3357, %v3349
    %v5062 = vpack.c.b16 %v3358, %v3350
    %v5063 = vpack.c.b16 %v3367, %v3359
    %v5064 = vpack.c.b16 %v3368, %v3360
    %v5065 = vpack.c.b16 %v3369, %v3361
    %v5066 = vpack.c.b16 %v3370, %v3362
    %v5067 = vpack.c.b16 %v3371, %v3363
    %v5068 = vpack.c.b16 %v3372, %v3364
    %v5069 = vpack.c.b16 %v3373, %v3365
    %v5070 = vpack.c.b16 %v3374, %v3366
    %v5071 = vpack.c.b16 %v3383, %v3375
    %v5072 = vpack.c.b16 %v3384, %v3376
    %v5073 = vpack.c.b16 %v3385, %v3377
    %v5074 = vpack.c.b16 %v3386, %v3378
    %v5075 = vpack.c.b16 %v3387, %v3379
    %v5076 = vpack.c.b16 %v3388, %v3380
    %v5077 = vpack.c.b16 %v3389, %v3381
    %v5078 = vpack.c.b16 %v3390, %v3382
    %v5079 = vpack.c.b16 %v3399, %v3391
    %v5080 = vpack.c.b16 %v3400, %v3392
    %v5081 = vpack.c.b16 %v3401, %v3393
    %v5082 = vpack.c.b16 %v3402, %v3394
    %v5083 = vpack.c.b16 %v3403, %v3395
    %v5084 = vpack.c.b16 %v3404, %v3396
    %v5085 = vpack.c.b16 %v3405, %v3397
    %v5086 = vpack.c.b16 %v3406, %v3398
    %v5087 = vpack.c.b16 %v3415, %v3407
    %v5088 = vpack.c.b16 %v3416, %v3408
    %v5089 = vpack.c.b16 %v3417, %v3409
    %v5090 = vpack.c.b16 %v3418, %v3410
    %v5091 = vpack.c.b16 %v3419, %v3411
    %v5092 = vpack.c.b16 %v3420, %v3412
    %v5093 = vpack.c.b16 %v3421, %v3413
    %v5094 = vpack.c.b16 %v3422, %v3414
    %v5095 = vpack.c.b16 %v3431, %v3423
    %v5096 = vpack.c.b16 %v3432, %v3424
    %v5097 = vpack.c.b16 %v3433, %v3425
    %v5098 = vpack.c.b16 %v3434, %v3426
    %v5099 = vpack.c.b16 %v3435, %v3427
    %v5100 = vpack.c.b16 %v3436, %v3428
    %v5101 = vpack.c.b16 %v3437, %v3429
    %v5102 = vpack.c.b16 %v3438, %v3430
    %v5103 = vpack.c.b16 %v3447, %v3439
    %v5104 = vpack.c.b16 %v3448, %v3440
    %v5105 = vpack.c.b16 %v3449, %v3441
    %v5106 = vpack.c.b16 %v3450, %v3442
    %v5107 = vpack.c.b16 %v3451, %v3443
    %v5108 = vpack.c.b16 %v3452, %v3444
    %v5109 = vpack.c.b16 %v3453, %v3445
    %v5110 = vpack.c.b16 %v3454, %v3446
    %v5111 = vpack.c.b16 %v3463, %v3455
    %v5112 = vpack.c.b16 %v3464, %v3456
    %v5113 = vpack.c.b16 %v3465, %v3457
    %v5114 = vpack.c.b16 %v3466, %v3458
    %v5115 = vpack.c.b16 %v3467, %v3459
    %v5116 = vpack.c.b16 %v3468, %v3460
    %v5117 = vpack.c.b16 %v3469, %v3461
    %v5118 = vpack.c.b16 %v3470, %v3462
    %v5119 = vpack.c.b16 %v3479, %v3471
    %v5120 = vpack.c.b16 %v3480, %v3472
    %v5121 = vpack.c.b16 %v3481, %v3473
    %v5122 = vpack.c.b16 %v3482, %v3474
    %v5123 = vpack.c.b16 %v3483, %v3475
    %v5124 = vpack.c.b16 %v3484, %v3476
    %v5125 = vpack.c.b16 %v3485, %v3477
    %v5126 = vpack.c.b16 %v3486, %v3478
    %v5127 = vpack.c.b16 %v3495, %v3487
    %v5128 = vpack.c.b16 %v3496, %v3488
    %v5129 = vpack.c.b16 %v3497, %v3489
    %v5130 = vpack.c.b16 %v3498, %v3490
    %v5131 = vpack.c.b16 %v3499, %v3491
    %v5132 = vpack.c.b16 %v3500, %v3492
    %v5133 = vpack.c.b16 %v3501, %v3493
    %v5134 = vpack.c.b16 %v3502, %v3494
    %v5135 = vpack.c.b16 %v3511, %v3503
    %v5136 = vpack.c.b16 %v3512, %v3504
    %v5137 = vpack.c.b16 %v3513, %v3505
    %v5138 = vpack.c.b16 %v3514, %v3506
    %v5139 = vpack.c.b16 %v3515, %v3507
    %v5140 = vpack.c.b16 %v3516, %v3508
    %v5141 = vpack.c.b16 %v3517, %v3509
    %v5142 = vpack.c.b16 %v3518, %v3510
    %v5143 = vpack.c.b16 %v3527, %v3519
    %v5144 = vpack.c.b16 %v3528, %v3520
    %v5145 = vpack.c.b16 %v3529, %v3521
    %v5146 = vpack.c.b16 %v3530, %v3522
    %v5147 = vpack.c.b16 %v3531, %v3523
    %v5148 = vpack.c.b16 %v3532, %v3524
    %v5149 = vpack.c.b16 %v3533, %v3525
    %v5150 = vpack.c.b16 %v3534, %v3526
    %v5151 = vpack.c.b16 %v3543, %v3535
    %v5152 = vpack.c.b16 %v3544, %v3536
    %v5153 = vpack.c.b16 %v3545, %v3537
    %v5154 = vpack.c.b16 %v3546, %v3538
    %v5155 = vpack.c.b16 %v3547, %v3539
    %v5156 = vpack.c.b16 %v3548, %v3540
    %v5157 = vpack.c.b16 %v3549, %v3541
    %v5158 = vpack.c.b16 %v3550, %v3542
    %v5159 = vpack.c.b16 %v3559, %v3551
    %v5160 = vpack.c.b16 %v3560, %v3552
    %v5161 = vpack.c.b16 %v3561, %v3553
    %v5162 = vpack.c.b16 %v3562, %v3554
    %v5163 = vpack.c.b16 %v3563, %v3555
    %v5164 = vpack.c.b16 %v3564, %v3556
    %v5165 = vpack.c.b16 %v3565, %v3557
    %v5166 = vpack.c.b16 %v3566, %v3558
    %v5167 = vpack.c.b16 %v3575, %v3567
    %v5168 = vpack.c.b16 %v3576, %v3568
    %v5169 = vpack.c.b16 %v3577, %v3569
    %v5170 = vpack.c.b16 %v3578, %v3570
    %v5171 = vpack.c.b16 %v3579, %v3571
    %v5172 = vpack.c.b16 %v3580, %v3572
    %v5173 = vpack.c.b16 %v3581, %v3573
    %v5174 = vpack.c.b16 %v3582, %v3574
    %v5175 = vpack.c.b16 %v3591, %v3583
    %v5176 = vpack.c.b16 %v3592, %v3584
    %v5177 = vpack.c.b16 %v3593, %v3585
    %v5178 = vpack.c.b16 %v3594, %v3586
    %v5179 = vpack.c.b16 %v3595, %v3587
    %v5180 = vpack.c.b16 %v3596, %v3588
    %v5181 = vpack.c.b16 %v3597, %v3589
    %v5182 = vpack.c.b16 %v3598, %v3590
    %v5183 = vpack.c.b16 %v3607, %v3599
    %v5184 = vpack.c.b16 %v3608, %v3600
    %v5185 = vpack.c.b16 %v3609, %v3601
    %v5186 = vpack.c.b16 %v3610, %v3602
    %v5187 = vpack.c.b16 %v3611, %v3603
    %v5188 = vpack.c.b16 %v3612, %v3604
    %v5189 = vpack.c.b16 %v3613, %v3605
    %v5190 = vpack.c.b16 %v3614, %v3606
    %v5191 = vpack.c.b16 %v3623, %v3615
    %v5192 = vpack.c.b16 %v3624, %v3616
    %v5193 = vpack.c.b16 %v3625, %v3617
    %v5194 = vpack.c.b16 %v3626, %v3618
    %v5195 = vpack.c.b16 %v3627, %v3619
    %v5196 = vpack.c.b16 %v3628, %v3620
    %v5197 = vpack.c.b16 %v3629, %v3621
    %v5198 = vpack.c.b16 %v3630, %v3622
    %v5199 = vpack.c.b16 %v3639, %v3631
    %v5200 = vpack.c.b16 %v3640, %v3632
    %v5201 = vpack.c.b16 %v3641, %v3633
    %v5202 = vpack.c.b16 %v3642, %v3634
    %v5203 = vpack.c.b16 %v3643, %v3635
    %v5204 = vpack.c.b16 %v3644, %v3636
    %v5205 = vpack.c.b16 %v3645, %v3637
    %v5206 = vpack.c.b16 %v3646, %v3638
    %v5207 = vpack.c.b16 %v3655, %v3647
    %v5208 = vpack.c.b16 %v3656, %v3648
    %v5209 = vpack.c.b16 %v3657, %v3649
    %v5210 = vpack.c.b16 %v3658, %v3650
    %v5211 = vpack.c.b16 %v3659, %v3651
    %v5212 = vpack.c.b16 %v3660, %v3652
    %v5213 = vpack.c.b16 %v3661, %v3653
    %v5214 = vpack.c.b16 %v3662, %v3654
    %v5215 = vpack.c.b16 %v3671, %v3663
    %v5216 = vpack.c.b16 %v3672, %v3664
    %v5217 = vpack.c.b16 %v3673, %v3665
    %v5218 = vpack.c.b16 %v3674, %v3666
    %v5219 = vpack.c.b16 %v3675, %v3667
    %v5220 = vpack.c.b16 %v3676, %v3668
    %v5221 = vpack.c.b16 %v3677, %v3669
    %v5222 = vpack.c.b16 %v3678, %v3670
    %v5223 = vpack.c.b16 %v3687, %v3679
    %v5224 = vpack.c.b16 %v3688, %v3680
    %v5225 = vpack.c.b16 %v3689, %v3681
    %v5226 = vpack.c.b16 %v3690, %v3682
    %v5227 = vpack.c.b16 %v3691, %v3683
    %v5228 = vpack.c.b16 %v3692, %v3684
    %v5229 = vpack.c.b16 %v3693, %v3685
    %v5230 = vpack.c.b16 %v3694, %v3686
    %v5231 = vpack.c.b16 %v3703, %v3695
    %v5232 = vpack.c.b16 %v3704, %v3696
    %v5233 = vpack.c.b16 %v3705, %v3697
    %v5234 = vpack.c.b16 %v3706, %v3698
    %v5235 = vpack.c.b16 %v3707, %v3699
    %v5236 = vpack.c.b16 %v3708, %v3700
    %v5237 = vpack.c.b16 %v3709, %v3701
    %v5238 = vpack.c.b16 %v3710, %v3702
    %v5239 = vpack.c.b16 %v3719, %v3711
    %v5240 = vpack.c.b16 %v3720, %v3712
    %v5241 = vpack.c.b16 %v3721, %v3713
    %v5242 = vpack.c.b16 %v3722, %v3714
    %v5243 = vpack.c.b16 %v3723, %v3715
    %v5244 = vpack.c.b16 %v3724, %v3716
    %v5245 = vpack.c.b16 %v3725, %v3717
    %v5246 = vpack.c.b16 %v3726, %v3718
    %v5247 = vpack.c.b16 %v3735, %v3727
    %v5248 = vpack.c.b16 %v3736, %v3728
    %v5249 = vpack.c.b16 %v3737, %v3729
    %v5250 = vpack.c.b16 %v3738, %v3730
    %v5251 = vpack.c.b16 %v3739, %v3731
    %v5252 = vpack.c.b16 %v3740, %v3732
    %v5253 = vpack.c.b16 %v3741, %v3733
    %v5254 = vpack.c.b16 %v3742, %v3734
    %v5255 = vpack.c.b16 %v3751, %v3743
    %v5256 = vpack.c.b16 %v3752, %v3744
    %v5257 = vpack.c.b16 %v3753, %v3745
    %v5258 = vpack.c.b16 %v3754, %v3746
    %v5259 = vpack.c.b16 %v3755, %v3747
    %v5260 = vpack.c.b16 %v3756, %v3748
    %v5261 = vpack.c.b16 %v3757, %v3749
    %v5262 = vpack.c.b16 %v3758, %v3750
    %v5263 = vpack.c.b16 %v3767, %v3759
    %v5264 = vpack.c.b16 %v3768, %v3760
    %v5265 = vpack.c.b16 %v3769, %v3761
    %v5266 = vpack.c.b16 %v3770, %v3762
    %v5267 = vpack.c.b16 %v3771, %v3763
    %v5268 = vpack.c.b16 %v3772, %v3764
    %v5269 = vpack.c.b16 %v3773, %v3765
    %v5270 = vpack.c.b16 %v3774, %v3766
    %v5271 = vpack.c.b16 %v3783, %v3775
    %v5272 = vpack.c.b16 %v3784, %v3776
    %v5273 = vpack.c.b16 %v3785, %v3777
    %v5274 = vpack.c.b16 %v3786, %v3778
    %v5275 = vpack.c.b16 %v3787, %v3779
    %v5276 = vpack.c.b16 %v3788, %v3780
    %v5277 = vpack.c.b16 %v3789, %v3781
    %v5278 = vpack.c.b16 %v3790, %v3782
    %v5279 = vpack.c.b16 %v3799, %v3791
    %v5280 = vpack.c.b16 %v3800, %v3792
    %v5281 = vpack.c.b16 %v3801, %v3793
    %v5282 = vpack.c.b16 %v3802, %v3794
    %v5283 = vpack.c.b16 %v3803, %v3795
    %v5284 = vpack.c.b16 %v3804, %v3796
    %v5285 = vpack.c.b16 %v3805, %v3797
    %v5286 = vpack.c.b16 %v3806, %v3798
    %v5287 = vpack.c.b16 %v3815, %v3807
    %v5288 = vpack.c.b16 %v3816, %v3808
    %v5289 = vpack.c.b16 %v3817, %v3809
    %v5290 = vpack.c.b16 %v3818, %v3810
    %v5291 = vpack.c.b16 %v3819, %v3811
    %v5292 = vpack.c.b16 %v3820, %v3812
    %v5293 = vpack.c.b16 %v3821, %v3813
    %v5294 = vpack.c.b16 %v3822, %v3814
    %v5295 = vpack.c.b16 %v3831, %v3823
    %v5296 = vpack.c.b16 %v3832, %v3824
    %v5297 = vpack.c.b16 %v3833, %v3825
    %v5298 = vpack.c.b16 %v3834, %v3826
    %v5299 = vpack.c.b16 %v3835, %v3827
    %v5300 = vpack.c.b16 %v3836, %v3828
    %v5301 = vpack.c.b16 %v3837, %v3829
    %v5302 = vpack.c.b16 %v3838, %v3830
    %v5303 = vpack.c.b16 %v3847, %v3839
    %v5304 = vpack.c.b16 %v3848, %v3840
    %v5305 = vpack.c.b16 %v3849, %v3841
    %v5306 = vpack.c.b16 %v3850, %v3842
    %v5307 = vpack.c.b16 %v3851, %v3843
    %v5308 = vpack.c.b16 %v3852, %v3844
    %v5309 = vpack.c.b16 %v3853, %v3845
    %v5310 = vpack.c.b16 %v3854, %v3846
    %v5311 = vpack.c.b16 %v3863, %v3855
    %v5312 = vpack.c.b16 %v3864, %v3856
    %v5313 = vpack.c.b16 %v3865, %v3857
    %v5314 = vpack.c.b16 %v3866, %v3858
    %v5315 = vpack.c.b16 %v3867, %v3859
    %v5316 = vpack.c.b16 %v3868, %v3860
    %v5317 = vpack.c.b16 %v3869, %v3861
    %v5318 = vpack.c.b16 %v3870, %v3862
    %v5319 = vpack.c.b16 %v3879, %v3871
    %v5320 = vpack.c.b16 %v3880, %v3872
    %v5321 = vpack.c.b16 %v3881, %v3873
    %v5322 = vpack.c.b16 %v3882, %v3874
    %v5323 = vpack.c.b16 %v3883, %v3875
    %v5324 = vpack.c.b16 %v3884, %v3876
    %v5325 = vpack.c.b16 %v3885, %v3877
    %v5326 = vpack.c.b16 %v3886, %v3878
    %v5327 = vpack.c.b16 %v3895, %v3887
    %v5328 = vpack.c.b16 %v3896, %v3888
    %v5329 = vpack.c.b16 %v3897, %v3889
    %v5330 = vpack.c.b16 %v3898, %v3890
    %v5331 = vpack.c.b16 %v3899, %v3891
    %v5332 = vpack.c.b16 %v3900, %v3892
    %v5333 = vpack.c.b16 %v3901, %v3893
    %v5334 = vpack.c.b16 %v3902, %v3894
    %v5335 = vpack.c.b16 %v3911, %v3903
    %v5336 = vpack.c.b16 %v3912, %v3904
    %v5337 = vpack.c.b16 %v3913, %v3905
    %v5338 = vpack.c.b16 %v3914, %v3906
    %v5339 = vpack.c.b16 %v3915, %v3907
    %v5340 = vpack.c.b16 %v3916, %v3908
    %v5341 = vpack.c.b16 %v3917, %v3909
    %v5342 = vpack.c.b16 %v3918, %v3910
    %v5343 = vpack.c.b16 %v3927, %v3919
    %v5344 = vpack.c.b16 %v3928, %v3920
    %v5345 = vpack.c.b16 %v3929, %v3921
    %v5346 = vpack.c.b16 %v3930, %v3922
    %v5347 = vpack.c.b16 %v3931, %v3923
    %v5348 = vpack.c.b16 %v3932, %v3924
    %v5349 = vpack.c.b16 %v3933, %v3925
    %v5350 = vpack.c.b16 %v3934, %v3926
    %v5351 = vpack.c.b16 %v3943, %v3935
    %v5352 = vpack.c.b16 %v3944, %v3936
    %v5353 = vpack.c.b16 %v3945, %v3937
    %v5354 = vpack.c.b16 %v3946, %v3938
    %v5355 = vpack.c.b16 %v3947, %v3939
    %v5356 = vpack.c.b16 %v3948, %v3940
    %v5357 = vpack.c.b16 %v3949, %v3941
    %v5358 = vpack.c.b16 %v3950, %v3942
    %v5359 = vpack.c.b16 %v3959, %v3951
    %v5360 = vpack.c.b16 %v3960, %v3952
    %v5361 = vpack.c.b16 %v3961, %v3953
    %v5362 = vpack.c.b16 %v3962, %v3954
    %v5363 = vpack.c.b16 %v3963, %v3955
    %v5364 = vpack.c.b16 %v3964, %v3956
    %v5365 = vpack.c.b16 %v3965, %v3957
    %v5366 = vpack.c.b16 %v3966, %v3958
    %v5367 = vpack.c.b16 %v3975, %v3967
    %v5368 = vpack.c.b16 %v3976, %v3968
    %v5369 = vpack.c.b16 %v3977, %v3969
    %v5370 = vpack.c.b16 %v3978, %v3970
    %v5371 = vpack.c.b16 %v3979, %v3971
    %v5372 = vpack.c.b16 %v3980, %v3972
    %v5373 = vpack.c.b16 %v3981, %v3973
    %v5374 = vpack.c.b16 %v3982, %v3974
    %v5375 = vpack.c.b16 %v3991, %v3983
    %v5376 = vpack.c.b16 %v3992, %v3984
    %v5377 = vpack.c.b16 %v3993, %v3985
    %v5378 = vpack.c.b16 %v3994, %v3986
    %v5379 = vpack.c.b16 %v3995, %v3987
    %v5380 = vpack.c.b16 %v3996, %v3988
    %v5381 = vpack.c.b16 %v3997, %v3989
    %v5382 = vpack.c.b16 %v3998, %v3990
    %v5383 = vpack.c.b16 %v4007, %v3999
    %v5384 = vpack.c.b16 %v4008, %v4000
    %v5385 = vpack.c.b16 %v4009, %v4001
    %v5386 = vpack.c.b16 %v4010, %v4002
    %v5387 = vpack.c.b16 %v4011, %v4003
    %v5388 = vpack.c.b16 %v4012, %v4004
    %v5389 = vpack.c.b16 %v4013, %v4005
    %v5390 = vpack.c.b16 %v4014, %v4006
    %v5391 = vpack.c.b16 %v4023, %v4015
    %v5392 = vpack.c.b16 %v4024, %v4016
    %v5393 = vpack.c.b16 %v4025, %v4017
    %v5394 = vpack.c.b16 %v4026, %v4018
    %v5395 = vpack.c.b16 %v4027, %v4019
    %v5396 = vpack.c.b16 %v4028, %v4020
    %v5397 = vpack.c.b16 %v4029, %v4021
    %v5398 = vpack.c.b16 %v4030, %v4022
    %v5399 = vpack.c.b16 %v4039, %v4031
    %v5400 = vpack.c.b16 %v4040, %v4032
    %v5401 = vpack.c.b16 %v4041, %v4033
    %v5402 = vpack.c.b16 %v4042, %v4034
    %v5403 = vpack.c.b16 %v4043, %v4035
    %v5404 = vpack.c.b16 %v4044, %v4036
    %v5405 = vpack.c.b16 %v4045, %v4037
    %v5406 = vpack.c.b16 %v4046, %v4038
    %v5407 = vpack.c.b16 %v4055, %v4047
    %v5408 = vpack.c.b16 %v4056, %v4048
    %v5409 = vpack.c.b16 %v4057, %v4049
    %v5410 = vpack.c.b16 %v4058, %v4050
    %v5411 = vpack.c.b16 %v4059, %v4051
    %v5412 = vpack.c.b16 %v4060, %v4052
    %v5413 = vpack.c.b16 %v4061, %v4053
    %v5414 = vpack.c.b16 %v4062, %v4054
    %v5415 = vpack.c.b16 %v4071, %v4063
    %v5416 = vpack.c.b16 %v4072, %v4064
    %v5417 = vpack.c.b16 %v4073, %v4065
    %v5418 = vpack.c.b16 %v4074, %v4066
    %v5419 = vpack.c.b16 %v4075, %v4067
    %v5420 = vpack.c.b16 %v4076, %v4068
    %v5421 = vpack.c.b16 %v4077, %v4069
    %v5422 = vpack.c.b16 %v4078, %v4070
    %v5423 = vpack.c.b16 %v4087, %v4079
    %v5424 = vpack.c.b16 %v4088, %v4080
    %v5425 = vpack.c.b16 %v4089, %v4081
    %v5426 = vpack.c.b16 %v4090, %v4082
    %v5427 = vpack.c.b16 %v4091, %v4083
    %v5428 = vpack.c.b16 %v4092, %v4084
    %v5429 = vpack.c.b16 %v4093, %v4085
    %v5430 = vpack.c.b16 %v4094, %v4086
    %v5431 = vpack.c.b16 %v4103, %v4095
    %v5432 = vpack.c.b16 %v4104, %v4096
    %v5433 = vpack.c.b16 %v4105, %v4097
    %v5434 = vpack.c.b16 %v4106, %v4098
    %v5435 = vpack.c.b16 %v4107, %v4099
    %v5436 = vpack.c.b16 %v4108, %v4100
    %v5437 = vpack.c.b16 %v4109, %v4101
    %v5438 = vpack.c.b16 %v4110, %v4102
    %v5439 = vpack.c.b16 %v4119, %v4111
    %v5440 = vpack.c.b16 %v4120, %v4112
    %v5441 = vpack.c.b16 %v4121, %v4113
    %v5442 = vpack.c.b16 %v4122, %v4114
    %v5443 = vpack.c.b16 %v4123, %v4115
    %v5444 = vpack.c.b16 %v4124, %v4116
    %v5445 = vpack.c.b16 %v4125, %v4117
    %v5446 = vpack.c.b16 %v4126, %v4118
    %v5447 = vpack.c.b16 %v4135, %v4127
    %v5448 = vpack.c.b16 %v4136, %v4128
    %v5449 = vpack.c.b16 %v4137, %v4129
    %v5450 = vpack.c.b16 %v4138, %v4130
    %v5451 = vpack.c.b16 %v4139, %v4131
    %v5452 = vpack.c.b16 %v4140, %v4132
    %v5453 = vpack.c.b16 %v4141, %v4133
    %v5454 = vpack.c.b16 %v4142, %v4134
    %v5455 = vpack.c.b16 %v4151, %v4143
    %v5456 = vpack.c.b16 %v4152, %v4144
    %v5457 = vpack.c.b16 %v4153, %v4145
    %v5458 = vpack.c.b16 %v4154, %v4146
    %v5459 = vpack.c.b16 %v4155, %v4147
    %v5460 = vpack.c.b16 %v4156, %v4148
    %v5461 = vpack.c.b16 %v4157, %v4149
    %v5462 = vpack.c.b16 %v4158, %v4150
    %v5463 = vpack.c.b16 %v4167, %v4159
    %v5464 = vpack.c.b16 %v4168, %v4160
    %v5465 = vpack.c.b16 %v4169, %v4161
    %v5466 = vpack.c.b16 %v4170, %v4162
    %v5467 = vpack.c.b16 %v4171, %v4163
    %v5468 = vpack.c.b16 %v4172, %v4164
    %v5469 = vpack.c.b16 %v4173, %v4165
    %v5470 = vpack.c.b16 %v4174, %v4166
    %v5471 = vpack.c.b16 %v4183, %v4175
    %v5472 = vpack.c.b16 %v4184, %v4176
    %v5473 = vpack.c.b16 %v4185, %v4177
    %v5474 = vpack.c.b16 %v4186, %v4178
    %v5475 = vpack.c.b16 %v4187, %v4179
    %v5476 = vpack.c.b16 %v4188, %v4180
    %v5477 = vpack.c.b16 %v4189, %v4181
    %v5478 = vpack.c.b16 %v4190, %v4182
    %v5479 = vpack.c.b16 %v4199, %v4191
    %v5480 = vpack.c.b16 %v4200, %v4192
    %v5481 = vpack.c.b16 %v4201, %v4193
    %v5482 = vpack.c.b16 %v4202, %v4194
    %v5483 = vpack.c.b16 %v4203, %v4195
    %v5484 = vpack.c.b16 %v4204, %v4196
    %v5485 = vpack.c.b16 %v4205, %v4197
    %v5486 = vpack.c.b16 %v4206, %v4198
    %v5487 = vpack.c.b16 %v4215, %v4207
    %v5488 = vpack.c.b16 %v4216, %v4208
    %v5489 = vpack.c.b16 %v4217, %v4209
    %v5490 = vpack.c.b16 %v4218, %v4210
    %v5491 = vpack.c.b16 %v4219, %v4211
    %v5492 = vpack.c.b16 %v4220, %v4212
    %v5493 = vpack.c.b16 %v4221, %v4213
    %v5494 = vpack.c.b16 %v4222, %v4214
    %v5495 = vpack.c.b16 %v4231, %v4223
    %v5496 = vpack.c.b16 %v4232, %v4224
    %v5497 = vpack.c.b16 %v4233, %v4225
    %v5498 = vpack.c.b16 %v4234, %v4226
    %v5499 = vpack.c.b16 %v4235, %v4227
    %v5500 = vpack.c.b16 %v4236, %v4228
    %v5501 = vpack.c.b16 %v4237, %v4229
    %v5502 = vpack.c.b16 %v4238, %v4230
    %v5503 = vpack.c.b16 %v4247, %v4239
    %v5504 = vpack.c.b16 %v4248, %v4240
    %v5505 = vpack.c.b16 %v4249, %v4241
    %v5506 = vpack.c.b16 %v4250, %v4242
    %v5507 = vpack.c.b16 %v4251, %v4243
    %v5508 = vpack.c.b16 %v4252, %v4244
    %v5509 = vpack.c.b16 %v4253, %v4245
    %v5510 = vpack.c.b16 %v4254, %v4246
    %v5511 = vpack.c.b16 %v4263, %v4255
    %v5512 = vpack.c.b16 %v4264, %v4256
    %v5513 = vpack.c.b16 %v4265, %v4257
    %v5514 = vpack.c.b16 %v4266, %v4258
    %v5515 = vpack.c.b16 %v4267, %v4259
    %v5516 = vpack.c.b16 %v4268, %v4260
    %v5517 = vpack.c.b16 %v4269, %v4261
    %v5518 = vpack.c.b16 %v4270, %v4262
    %v5519 = vpack.c.b16 %v4279, %v4271
    %v5520 = vpack.c.b16 %v4280, %v4272
    %v5521 = vpack.c.b16 %v4281, %v4273
    %v5522 = vpack.c.b16 %v4282, %v4274
    %v5523 = vpack.c.b16 %v4283, %v4275
    %v5524 = vpack.c.b16 %v4284, %v4276
    %v5525 = vpack.c.b16 %v4285, %v4277
    %v5526 = vpack.c.b16 %v4286, %v4278
    %v5527 = vpack.c.b16 %v4295, %v4287
    %v5528 = vpack.c.b16 %v4296, %v4288
    %v5529 = vpack.c.b16 %v4297, %v4289
    %v5530 = vpack.c.b16 %v4298, %v4290
    %v5531 = vpack.c.b16 %v4299, %v4291
    %v5532 = vpack.c.b16 %v4300, %v4292
    %v5533 = vpack.c.b16 %v4301, %v4293
    %v5534 = vpack.c.b16 %v4302, %v4294
    %v5535 = vpack.c.b16 %v4311, %v4303
    %v5536 = vpack.c.b16 %v4312, %v4304
    %v5537 = vpack.c.b16 %v4313, %v4305
    %v5538 = vpack.c.b16 %v4314, %v4306
    %v5539 = vpack.c.b16 %v4315, %v4307
    %v5540 = vpack.c.b16 %v4316, %v4308
    %v5541 = vpack.c.b16 %v4317, %v4309
    %v5542 = vpack.c.b16 %v4318, %v4310
    %v5543 = vpack.c.b16 %v4327, %v4319
    %v5544 = vpack.c.b16 %v4328, %v4320
    %v5545 = vpack.c.b16 %v4329, %v4321
    %v5546 = vpack.c.b16 %v4330, %v4322
    %v5547 = vpack.c.b16 %v4331, %v4323
    %v5548 = vpack.c.b16 %v4332, %v4324
    %v5549 = vpack.c.b16 %v4333, %v4325
    %v5550 = vpack.c.b16 %v4334, %v4326
    %v5551 = vpack.c.b16 %v4343, %v4335
    %v5552 = vpack.c.b16 %v4344, %v4336
    %v5553 = vpack.c.b16 %v4345, %v4337
    %v5554 = vpack.c.b16 %v4346, %v4338
    %v5555 = vpack.c.b16 %v4347, %v4339
    %v5556 = vpack.c.b16 %v4348, %v4340
    %v5557 = vpack.c.b16 %v4349, %v4341
    %v5558 = vpack.c.b16 %v4350, %v4342
    %v5559 = vpack.c.b16 %v4359, %v4351
    %v5560 = vpack.c.b16 %v4360, %v4352
    %v5561 = vpack.c.b16 %v4361, %v4353
    %v5562 = vpack.c.b16 %v4362, %v4354
    %v5563 = vpack.c.b16 %v4363, %v4355
    %v5564 = vpack.c.b16 %v4364, %v4356
    %v5565 = vpack.c.b16 %v4365, %v4357
    %v5566 = vpack.c.b16 %v4366, %v4358
    %v5567 = vpack.c.b16 %v4375, %v4367
    %v5568 = vpack.c.b16 %v4376, %v4368
    %v5569 = vpack.c.b16 %v4377, %v4369
    %v5570 = vpack.c.b16 %v4378, %v4370
    %v5571 = vpack.c.b16 %v4379, %v4371
    %v5572 = vpack.c.b16 %v4380, %v4372
    %v5573 = vpack.c.b16 %v4381, %v4373
    %v5574 = vpack.c.b16 %v4382, %v4374
    %v5575 = vpack.c.b16 %v4391, %v4383
    %v5576 = vpack.c.b16 %v4392, %v4384
    %v5577 = vpack.c.b16 %v4393, %v4385
    %v5578 = vpack.c.b16 %v4394, %v4386
    %v5579 = vpack.c.b16 %v4395, %v4387
    %v5580 = vpack.c.b16 %v4396, %v4388
    %v5581 = vpack.c.b16 %v4397, %v4389
    %v5582 = vpack.c.b16 %v4398, %v4390
    %v5583 = vpack.c.b16 %v4407, %v4399
    %v5584 = vpack.c.b16 %v4408, %v4400
    %v5585 = vpack.c.b16 %v4409, %v4401
    %v5586 = vpack.c.b16 %v4410, %v4402
    %v5587 = vpack.c.b16 %v4411, %v4403
    %v5588 = vpack.c.b16 %v4412, %v4404
    %v5589 = vpack.c.b16 %v4413, %v4405
    %v5590 = vpack.c.b16 %v4414, %v4406
    %v5591 = vpack.c.b16 %v4423, %v4415
    %v5592 = vpack.c.b16 %v4424, %v4416
    %v5593 = vpack.c.b16 %v4425, %v4417
    %v5594 = vpack.c.b16 %v4426, %v4418
    %v5595 = vpack.c.b16 %v4427, %v4419
    %v5596 = vpack.c.b16 %v4428, %v4420
    %v5597 = vpack.c.b16 %v4429, %v4421
    %v5598 = vpack.c.b16 %v4430, %v4422
    %v5599 = vpack.c.b16 %v4439, %v4431
    %v5600 = vpack.c.b16 %v4440, %v4432
    %v5601 = vpack.c.b16 %v4441, %v4433
    %v5602 = vpack.c.b16 %v4442, %v4434
    %v5603 = vpack.c.b16 %v4443, %v4435
    %v5604 = vpack.c.b16 %v4444, %v4436
    %v5605 = vpack.c.b16 %v4445, %v4437
    %v5606 = vpack.c.b16 %v4446, %v4438
    %v5607 = vpack.c.b16 %v4455, %v4447
    %v5608 = vpack.c.b16 %v4456, %v4448
    %v5609 = vpack.c.b16 %v4457, %v4449
    %v5610 = vpack.c.b16 %v4458, %v4450
    %v5611 = vpack.c.b16 %v4459, %v4451
    %v5612 = vpack.c.b16 %v4460, %v4452
    %v5613 = vpack.c.b16 %v4461, %v4453
    %v5614 = vpack.c.b16 %v4462, %v4454
    %v5615 = vpack.c.b16 %v4471, %v4463
    %v5616 = vpack.c.b16 %v4472, %v4464
    %v5617 = vpack.c.b16 %v4473, %v4465
    %v5618 = vpack.c.b16 %v4474, %v4466
    %v5619 = vpack.c.b16 %v4475, %v4467
    %v5620 = vpack.c.b16 %v4476, %v4468
    %v5621 = vpack.c.b16 %v4477, %v4469
    %v5622 = vpack.c.b16 %v4478, %v4470
    %v5623 = vpack.c.b16 %v4487, %v4479
    %v5624 = vpack.c.b16 %v4488, %v4480
    %v5625 = vpack.c.b16 %v4489, %v4481
    %v5626 = vpack.c.b16 %v4490, %v4482
    %v5627 = vpack.c.b16 %v4491, %v4483
    %v5628 = vpack.c.b16 %v4492, %v4484
    %v5629 = vpack.c.b16 %v4493, %v4485
    %v5630 = vpack.c.b16 %v4494, %v4486
    %v5631 = vpack.c.b16 %v4503, %v4495
    %v5632 = vpack.c.b16 %v4504, %v4496
    %v5633 = vpack.c.b16 %v4505, %v4497
    %v5634 = vpack.c.b16 %v4506, %v4498
    %v5635 = vpack.c.b16 %v4507, %v4499
    %v5636 = vpack.c.b16 %v4508, %v4500
    %v5637 = vpack.c.b16 %v4509, %v4501
    %v5638 = vpack.c.b16 %v4510, %v4502
    %v5639 = vpack.c.b16 %v4519, %v4511
    %v5640 = vpack.c.b16 %v4520, %v4512
    %v5641 = vpack.c.b16 %v4521, %v4513
    %v5642 = vpack.c.b16 %v4522, %v4514
    %v5643 = vpack.c.b16 %v4523, %v4515
    %v5644 = vpack.c.b16 %v4524, %v4516
    %v5645 = vpack.c.b16 %v4525, %v4517
    %v5646 = vpack.c.b16 %v4526, %v4518
    %v5647 = vpack.c.b16 %v4535, %v4527
    %v5648 = vpack.c.b16 %v4536, %v4528
    %v5649 = vpack.c.b16 %v4537, %v4529
    %v5650 = vpack.c.b16 %v4538, %v4530
    %v5651 = vpack.c.b16 %v4539, %v4531
    %v5652 = vpack.c.b16 %v4540, %v4532
    %v5653 = vpack.c.b16 %v4541, %v4533
    %v5654 = vpack.c.b16 %v4542, %v4534
    %v5655 = vpack.c.b16 %v4551, %v4543
    %v5656 = vpack.c.b16 %v4552, %v4544
    %v5657 = vpack.c.b16 %v4553, %v4545
    %v5658 = vpack.c.b16 %v4554, %v4546
    %v5659 = vpack.c.b16 %v4555, %v4547
    %v5660 = vpack.c.b16 %v4556, %v4548
    %v5661 = vpack.c.b16 %v4557, %v4549
    %v5662 = vpack.c.b16 %v4558, %v4550
    %v5663 = vpack.c.b16 %v4567, %v4559
    %v5664 = vpack.c.b16 %v4568, %v4560
    %v5665 = vpack.c.b16 %v4569, %v4561
    %v5666 = vpack.c.b16 %v4570, %v4562
    %v5667 = vpack.c.b16 %v4571, %v4563
    %v5668 = vpack.c.b16 %v4572, %v4564
    %v5669 = vpack.c.b16 %v4573, %v4565
    %v5670 = vpack.c.b16 %v4574, %v4566
    %v5671 = vpack.c.b16 %v4583, %v4575
    %v5672 = vpack.c.b16 %v4584, %v4576
    %v5673 = vpack.c.b16 %v4585, %v4577
    %v5674 = vpack.c.b16 %v4586, %v4578
    %v5675 = vpack.c.b16 %v4587, %v4579
    %v5676 = vpack.c.b16 %v4588, %v4580
    %v5677 = vpack.c.b16 %v4589, %v4581
    %v5678 = vpack.c.b16 %v4590, %v4582
    %v5679 = vpack.c.b16 %v4599, %v4591
    %v5680 = vpack.c.b16 %v4600, %v4592
    %v5681 = vpack.c.b16 %v4601, %v4593
    %v5682 = vpack.c.b16 %v4602, %v4594
    %v5683 = vpack.c.b16 %v4603, %v4595
    %v5684 = vpack.c.b16 %v4604, %v4596
    %v5685 = vpack.c.b16 %v4605, %v4597
    %v5686 = vpack.c.b16 %v4606, %v4598
    %v5687 = vpack.c.b16 %v4615, %v4607
    %v5688 = vpack.c.b16 %v4616, %v4608
    %v5689 = vpack.c.b16 %v4617, %v4609
    %v5690 = vpack.c.b16 %v4618, %v4610
    %v5691 = vpack.c.b16 %v4619, %v4611
    %v5692 = vpack.c.b16 %v4620, %v4612
    %v5693 = vpack.c.b16 %v4621, %v4613
    %v5694 = vpack.c.b16 %v4622, %v4614
    %v5695 = vpack.c.b16 %v4631, %v4623
    %v5696 = vpack.c.b16 %v4632, %v4624
    %v5697 = vpack.c.b16 %v4633, %v4625
    %v5698 = vpack.c.b16 %v4634, %v4626
    %v5699 = vpack.c.b16 %v4635, %v4627
    %v5700 = vpack.c.b16 %v4636, %v4628
    %v5701 = vpack.c.b16 %v4637, %v4629
    %v5702 = vpack.c.b16 %v4638, %v4630
    %v5703 = vpack.c.b16 %v4647, %v4639
    %v5704 = vpack.c.b16 %v4648, %v4640
    %v5705 = vpack.c.b16 %v4649, %v4641
    %v5706 = vpack.c.b16 %v4650, %v4642
    %v5707 = vpack.c.b16 %v4651, %v4643
    %v5708 = vpack.c.b16 %v4652, %v4644
    %v5709 = vpack.c.b16 %v4653, %v4645
    %v5710 = vpack.c.b16 %v4654, %v4646
    %v5711 = vpack.c.b16 %v4663, %v4655
    %v5712 = vpack.c.b16 %v4664, %v4656
    %v5713 = vpack.c.b16 %v4665, %v4657
    %v5714 = vpack.c.b16 %v4666, %v4658
    %v5715 = vpack.c.b16 %v4667, %v4659
    %v5716 = vpack.c.b16 %v4668, %v4660
    %v5717 = vpack.c.b16 %v4669, %v4661
    %v5718 = vpack.c.b16 %v4670, %v4662
    %v5719 = vpack.c.b16 %v4679, %v4671
    %v5720 = vpack.c.b16 %v4680, %v4672
    %v5721 = vpack.c.b16 %v4681, %v4673
    %v5722 = vpack.c.b16 %v4682, %v4674
    %v5723 = vpack.c.b16 %v4683, %v4675
    %v5724 = vpack.c.b16 %v4684, %v4676
    %v5725 = vpack.c.b16 %v4685, %v4677
    %v5726 = vpack.c.b16 %v4686, %v4678
    %v5727 = vpack.c.b16 %v4695, %v4687
    %v5728 = vpack.c.b16 %v4696, %v4688
    %v5729 = vpack.c.b16 %v4697, %v4689
    %v5730 = vpack.c.b16 %v4698, %v4690
    %v5731 = vpack.c.b16 %v4699, %v4691
    %v5732 = vpack.c.b16 %v4700, %v4692
    %v5733 = vpack.c.b16 %v4701, %v4693
    %v5734 = vpack.c.b16 %v4702, %v4694
    %v5735 = vpack.c.b16 %v4711, %v4703
    %v5736 = vpack.c.b16 %v4712, %v4704
    %v5737 = vpack.c.b16 %v4713, %v4705
    %v5738 = vpack.c.b16 %v4714, %v4706
    %v5739 = vpack.c.b16 %v4715, %v4707
    %v5740 = vpack.c.b16 %v4716, %v4708
    %v5741 = vpack.c.b16 %v4717, %v4709
    %v5742 = vpack.c.b16 %v4718, %v4710
    %6767 = vmatprep.subr.bf16.mxu0 %v4776
    %6768 = vmatpush1.bf16.msra.mxu0 %v4775
    %6769 = vmatprep.subr.bf16.mxu0 %v4768
    %6770 = vmatpush1.bf16.msra.mxu0 %v4767
    %6771 = vmatprep.subr.bf16.mxu0 %v4760
    %6772 = vmatpush1.bf16.msra.mxu0 %v4759
    %6773 = vmatprep.subr.bf16.mxu0 %v4752
    %6774 = vmatpush1.bf16.msra.mxu0 %v4751
    %6775 = vmatprep.subr.bf16.mxu0 %v4744
    %6776 = vmatpush1.bf16.msra.mxu0 %v4743
    %6777 = vmatprep.subr.bf16.mxu0 %v4736
    %6778 = vmatpush1.bf16.msra.mxu0 %v4735
    %6779 = vmatprep.subr.bf16.mxu0 %v4728
    %6780 = vmatpush1.bf16.msra.mxu0 %v4727
    %6781 = vmatprep.subr.bf16.mxu0 %v4720
    %6782 = vmatpush1.bf16.msra.mxu0 %v4719
    %6783 = vmatprep.subr.bf16.mxu0 %v4840
    %6784 = vmatpush2.bf16.msra.mxu0 %v4839
    %6785 = vmatprep.subr.bf16.mxu0 %v4832
    %6786 = vmatpush2.bf16.msra.mxu0 %v4831
    %6787 = vmatprep.subr.bf16.mxu0 %v4824
    %6788 = vmatpush2.bf16.msra.mxu0 %v4823
    %6789 = vmatprep.subr.bf16.mxu0 %v4816
    %6790 = vmatpush2.bf16.msra.mxu0 %v4815
    %6791 = vmatprep.subr.bf16.mxu0 %v4808
    %6792 = vmatpush2.bf16.msra.mxu0 %v4807
    %6793 = vmatprep.subr.bf16.mxu0 %v4800
    %6794 = vmatpush2.bf16.msra.mxu0 %v4799
    %6795 = vmatprep.subr.bf16.mxu0 %v4792
    %6796 = vmatpush2.bf16.msra.mxu0 %v4791
    %6797 = vmatprep.subr.bf16.mxu0 %v4784
    %6798 = vmatpush2.bf16.msra.mxu0 %v4783
    %6799 = vmatprep.mubr.bf16.mxu0 %v1616
    %6800 = vmatmul.mubr.bf16.gmra.mxu0 %v1615
    %v6801 = vpop.f32.mrf.mxu0
    %v6802 = vadd.f32 %v1497, %v6801
    %v6803 = vpop.f32.mrf.mxu0
    %v6804 = vadd.f32 %v1501, %v6803
    %v6805 = vpop.f32.mrf.mxu0
    %v6806 = vpop.f32.mrf.mxu0
    %6807 = vdwg.mxu0
    %6808 = vmatprep.subr.bf16.mxu0 %v4904
    %6809 = vmatpush1.bf16.msra.mxu0 %v4903
    %6810 = vmatprep.subr.bf16.mxu0 %v4896
    %6811 = vmatpush1.bf16.msra.mxu0 %v4895
    %6812 = vmatprep.subr.bf16.mxu0 %v4888
    %6813 = vmatpush1.bf16.msra.mxu0 %v4887
    %6814 = vmatprep.subr.bf16.mxu0 %v4880
    %6815 = vmatpush1.bf16.msra.mxu0 %v4879
    %6816 = vmatprep.subr.bf16.mxu0 %v4872
    %6817 = vmatpush1.bf16.msra.mxu0 %v4871
    %6818 = vmatprep.subr.bf16.mxu0 %v4864
    %6819 = vmatpush1.bf16.msra.mxu0 %v4863
    %6820 = vmatprep.subr.bf16.mxu0 %v4856
    %6821 = vmatpush1.bf16.msra.mxu0 %v4855
    %6822 = vmatprep.subr.bf16.mxu0 %v4848
    %6823 = vmatpush1.bf16.msra.mxu0 %v4847
    %6824 = vmatprep.subr.bf16.mxu0 %v4968
    %6825 = vmatpush2.bf16.msra.mxu0 %v4967
    %6826 = vmatprep.subr.bf16.mxu0 %v4960
    %6827 = vmatpush2.bf16.msra.mxu0 %v4959
    %6828 = vmatprep.subr.bf16.mxu0 %v4952
    %6829 = vmatpush2.bf16.msra.mxu0 %v4951
    %6830 = vmatprep.subr.bf16.mxu0 %v4944
    %6831 = vmatpush2.bf16.msra.mxu0 %v4943
    %6832 = vmatprep.subr.bf16.mxu0 %v4936
    %6833 = vmatpush2.bf16.msra.mxu0 %v4935
    %6834 = vmatprep.subr.bf16.mxu0 %v4928
    %6835 = vmatpush2.bf16.msra.mxu0 %v4927
    %6836 = vmatprep.subr.bf16.mxu0 %v4920
    %6837 = vmatpush2.bf16.msra.mxu0 %v4919
    %6838 = vmatprep.subr.bf16.mxu0 %v4912
    %6839 = vmatpush2.bf16.msra.mxu0 %v4911
    %6840 = vmatprep.mubr.bf16.mxu0 %v1618
    %6841 = vmatmul.mubr.bf16.gmra.mxu0 %v1617
    %v6842 = vpop.f32.mrf.mxu0
    %v6843 = vadd.f32 %v6802, %v6842
    %v6844 = vpop.f32.mrf.mxu0
    %v6845 = vadd.f32 %v6804, %v6844
    %v6846 = vpop.f32.mrf.mxu0
    %v6847 = vpop.f32.mrf.mxu0
    %6848 = vdwg.mxu0
    %6849 = vmatprep.subr.bf16.mxu0 %v5032
    %6850 = vmatpush1.bf16.msra.mxu0 %v5031
    %6851 = vmatprep.subr.bf16.mxu0 %v5024
    %6852 = vmatpush1.bf16.msra.mxu0 %v5023
    %6853 = vmatprep.subr.bf16.mxu0 %v5016
    %6854 = vmatpush1.bf16.msra.mxu0 %v5015
    %6855 = vmatprep.subr.bf16.mxu0 %v5008
    %6856 = vmatpush1.bf16.msra.mxu0 %v5007
    %6857 = vmatprep.subr.bf16.mxu0 %v5000
    %6858 = vmatpush1.bf16.msra.mxu0 %v4999
    %6859 = vmatprep.subr.bf16.mxu0 %v4992
    %6860 = vmatpush1.bf16.msra.mxu0 %v4991
    %6861 = vmatprep.subr.bf16.mxu0 %v4984
    %6862 = vmatpush1.bf16.msra.mxu0 %v4983
    %6863 = vmatprep.subr.bf16.mxu0 %v4976
    %6864 = vmatpush1.bf16.msra.mxu0 %v4975
    %6865 = vmatprep.subr.bf16.mxu0 %v5096
    %6866 = vmatpush2.bf16.msra.mxu0 %v5095
    %6867 = vmatprep.subr.bf16.mxu0 %v5088
    %6868 = vmatpush2.bf16.msra.mxu0 %v5087
    %6869 = vmatprep.subr.bf16.mxu0 %v5080
    %6870 = vmatpush2.bf16.msra.mxu0 %v5079
    %6871 = vmatprep.subr.bf16.mxu0 %v5072
    %6872 = vmatpush2.bf16.msra.mxu0 %v5071
    %6873 = vmatprep.subr.bf16.mxu0 %v5064
    %6874 = vmatpush2.bf16.msra.mxu0 %v5063
    %6875 = vmatprep.subr.bf16.mxu0 %v5056
    %6876 = vmatpush2.bf16.msra.mxu0 %v5055
    %6877 = vmatprep.subr.bf16.mxu0 %v5048
    %6878 = vmatpush2.bf16.msra.mxu0 %v5047
    %6879 = vmatprep.subr.bf16.mxu0 %v5040
    %6880 = vmatpush2.bf16.msra.mxu0 %v5039
    %6881 = vmatprep.mubr.bf16.mxu0 %v1620
    %6882 = vmatmul.mubr.bf16.gmra.mxu0 %v1619
    %v6883 = vpop.f32.mrf.mxu0
    %v6884 = vadd.f32 %v6843, %v6883
    %v6885 = vpop.f32.mrf.mxu0
    %v6886 = vadd.f32 %v6845, %v6885
    %v6887 = vpop.f32.mrf.mxu0
    %v6888 = vpop.f32.mrf.mxu0
    %6889 = vdwg.mxu0
    %6890 = vmatprep.subr.bf16.mxu0 %v5160
    %6891 = vmatpush1.bf16.msra.mxu0 %v5159
    %6892 = vmatprep.subr.bf16.mxu0 %v5152
    %6893 = vmatpush1.bf16.msra.mxu0 %v5151
    %6894 = vmatprep.subr.bf16.mxu0 %v5144
    %6895 = vmatpush1.bf16.msra.mxu0 %v5143
    %6896 = vmatprep.subr.bf16.mxu0 %v5136
    %6897 = vmatpush1.bf16.msra.mxu0 %v5135
    %6898 = vmatprep.subr.bf16.mxu0 %v5128
    %6899 = vmatpush1.bf16.msra.mxu0 %v5127
    %6900 = vmatprep.subr.bf16.mxu0 %v5120
    %6901 = vmatpush1.bf16.msra.mxu0 %v5119
    %6902 = vmatprep.subr.bf16.mxu0 %v5112
    %6903 = vmatpush1.bf16.msra.mxu0 %v5111
    %6904 = vmatprep.subr.bf16.mxu0 %v5104
    %6905 = vmatpush1.bf16.msra.mxu0 %v5103
    %6906 = vmatprep.subr.bf16.mxu0 %v5224
    %6907 = vmatpush2.bf16.msra.mxu0 %v5223
    %6908 = vmatprep.subr.bf16.mxu0 %v5216
    %6909 = vmatpush2.bf16.msra.mxu0 %v5215
    %6910 = vmatprep.subr.bf16.mxu0 %v5208
    %6911 = vmatpush2.bf16.msra.mxu0 %v5207
    %6912 = vmatprep.subr.bf16.mxu0 %v5200
    %6913 = vmatpush2.bf16.msra.mxu0 %v5199
    %6914 = vmatprep.subr.bf16.mxu0 %v5192
    %6915 = vmatpush2.bf16.msra.mxu0 %v5191
    %6916 = vmatprep.subr.bf16.mxu0 %v5184
    %6917 = vmatpush2.bf16.msra.mxu0 %v5183
    %6918 = vmatprep.subr.bf16.mxu0 %v5176
    %6919 = vmatpush2.bf16.msra.mxu0 %v5175
    %6920 = vmatprep.subr.bf16.mxu0 %v5168
    %6921 = vmatpush2.bf16.msra.mxu0 %v5167
    %6922 = vmatprep.mubr.bf16.mxu0 %v1622
    %6923 = vmatmul.mubr.bf16.gmra.mxu0 %v1621
    %v6924 = vpop.f32.mrf.mxu0
    %v6925 = vadd.f32 %v6884, %v6924
    %v6926 = vpop.f32.mrf.mxu0
    %v6927 = vadd.f32 %v6886, %v6926
    %v6928 = vpop.f32.mrf.mxu0
    %v6929 = vpop.f32.mrf.mxu0
    %6930 = vdwg.mxu0
    %6931 = vmatprep.subr.bf16.mxu0 %v5288
    %6932 = vmatpush1.bf16.msra.mxu0 %v5287
    %6933 = vmatprep.subr.bf16.mxu0 %v5280
    %6934 = vmatpush1.bf16.msra.mxu0 %v5279
    %6935 = vmatprep.subr.bf16.mxu0 %v5272
    %6936 = vmatpush1.bf16.msra.mxu0 %v5271
    %6937 = vmatprep.subr.bf16.mxu0 %v5264
    %6938 = vmatpush1.bf16.msra.mxu0 %v5263
    %6939 = vmatprep.subr.bf16.mxu0 %v5256
    %6940 = vmatpush1.bf16.msra.mxu0 %v5255
    %6941 = vmatprep.subr.bf16.mxu0 %v5248
    %6942 = vmatpush1.bf16.msra.mxu0 %v5247
    %6943 = vmatprep.subr.bf16.mxu0 %v5240
    %6944 = vmatpush1.bf16.msra.mxu0 %v5239
    %6945 = vmatprep.subr.bf16.mxu0 %v5232
    %6946 = vmatpush1.bf16.msra.mxu0 %v5231
    %6947 = vmatprep.subr.bf16.mxu0 %v5352
    %6948 = vmatpush2.bf16.msra.mxu0 %v5351
    %6949 = vmatprep.subr.bf16.mxu0 %v5344
    %6950 = vmatpush2.bf16.msra.mxu0 %v5343
    %6951 = vmatprep.subr.bf16.mxu0 %v5336
    %6952 = vmatpush2.bf16.msra.mxu0 %v5335
    %6953 = vmatprep.subr.bf16.mxu0 %v5328
    %6954 = vmatpush2.bf16.msra.mxu0 %v5327
    %6955 = vmatprep.subr.bf16.mxu0 %v5320
    %6956 = vmatpush2.bf16.msra.mxu0 %v5319
    %6957 = vmatprep.subr.bf16.mxu0 %v5312
    %6958 = vmatpush2.bf16.msra.mxu0 %v5311
    %6959 = vmatprep.subr.bf16.mxu0 %v5304
    %6960 = vmatpush2.bf16.msra.mxu0 %v5303
    %6961 = vmatprep.subr.bf16.mxu0 %v5296
    %6962 = vmatpush2.bf16.msra.mxu0 %v5295
    %6963 = vmatprep.mubr.bf16.mxu0 %v1624
    %6964 = vmatmul.mubr.bf16.gmra.mxu0 %v1623
    %v6965 = vpop.f32.mrf.mxu0
    %v6966 = vadd.f32 %v6925, %v6965
    %v6967 = vpop.f32.mrf.mxu0
    %v6968 = vadd.f32 %v6927, %v6967
    %v6969 = vpop.f32.mrf.mxu0
    %v6970 = vpop.f32.mrf.mxu0
    %6971 = vdwg.mxu0
    %6972 = vmatprep.subr.bf16.mxu0 %v5416
    %6973 = vmatpush1.bf16.msra.mxu0 %v5415
    %6974 = vmatprep.subr.bf16.mxu0 %v5408
    %6975 = vmatpush1.bf16.msra.mxu0 %v5407
    %6976 = vmatprep.subr.bf16.mxu0 %v5400
    %6977 = vmatpush1.bf16.msra.mxu0 %v5399
    %6978 = vmatprep.subr.bf16.mxu0 %v5392
    %6979 = vmatpush1.bf16.msra.mxu0 %v5391
    %6980 = vmatprep.subr.bf16.mxu0 %v5384
    %6981 = vmatpush1.bf16.msra.mxu0 %v5383
    %6982 = vmatprep.subr.bf16.mxu0 %v5376
    %6983 = vmatpush1.bf16.msra.mxu0 %v5375
    %6984 = vmatprep.subr.bf16.mxu0 %v5368
    %6985 = vmatpush1.bf16.msra.mxu0 %v5367
    %6986 = vmatprep.subr.bf16.mxu0 %v5360
    %6987 = vmatpush1.bf16.msra.mxu0 %v5359
    %6988 = vmatprep.subr.bf16.mxu0 %v5480
    %6989 = vmatpush2.bf16.msra.mxu0 %v5479
    %6990 = vmatprep.subr.bf16.mxu0 %v5472
    %6991 = vmatpush2.bf16.msra.mxu0 %v5471
    %6992 = vmatprep.subr.bf16.mxu0 %v5464
    %6993 = vmatpush2.bf16.msra.mxu0 %v5463
    %6994 = vmatprep.subr.bf16.mxu0 %v5456
    %6995 = vmatpush2.bf16.msra.mxu0 %v5455
    %6996 = vmatprep.subr.bf16.mxu0 %v5448
    %6997 = vmatpush2.bf16.msra.mxu0 %v5447
    %6998 = vmatprep.subr.bf16.mxu0 %v5440
    %6999 = vmatpush2.bf16.msra.mxu0 %v5439
    %7000 = vmatprep.subr.bf16.mxu0 %v5432
    %7001 = vmatpush2.bf16.msra.mxu0 %v5431
    %7002 = vmatprep.subr.bf16.mxu0 %v5424
    %7003 = vmatpush2.bf16.msra.mxu0 %v5423
    %7004 = vmatprep.mubr.bf16.mxu0 %v1626
    %7005 = vmatmul.mubr.bf16.gmra.mxu0 %v1625
    %v7006 = vpop.f32.mrf.mxu0
    %v7007 = vadd.f32 %v6966, %v7006
    %v7008 = vpop.f32.mrf.mxu0
    %v7009 = vadd.f32 %v6968, %v7008
    %v7010 = vpop.f32.mrf.mxu0
    %v7011 = vpop.f32.mrf.mxu0
    %7012 = vdwg.mxu0
    %7013 = vmatprep.subr.bf16.mxu0 %v5544
    %7014 = vmatpush1.bf16.msra.mxu0 %v5543
    %7015 = vmatprep.subr.bf16.mxu0 %v5536
    %7016 = vmatpush1.bf16.msra.mxu0 %v5535
    %7017 = vmatprep.subr.bf16.mxu0 %v5528
    %7018 = vmatpush1.bf16.msra.mxu0 %v5527
    %7019 = vmatprep.subr.bf16.mxu0 %v5520
    %7020 = vmatpush1.bf16.msra.mxu0 %v5519
    %7021 = vmatprep.subr.bf16.mxu0 %v5512
    %7022 = vmatpush1.bf16.msra.mxu0 %v5511
    %7023 = vmatprep.subr.bf16.mxu0 %v5504
    %7024 = vmatpush1.bf16.msra.mxu0 %v5503
    %7025 = vmatprep.subr.bf16.mxu0 %v5496
    %7026 = vmatpush1.bf16.msra.mxu0 %v5495
    %7027 = vmatprep.subr.bf16.mxu0 %v5488
    %7028 = vmatpush1.bf16.msra.mxu0 %v5487
    %7029 = vmatprep.subr.bf16.mxu0 %v5608
    %7030 = vmatpush2.bf16.msra.mxu0 %v5607
    %7031 = vmatprep.subr.bf16.mxu0 %v5600
    %7032 = vmatpush2.bf16.msra.mxu0 %v5599
    %7033 = vmatprep.subr.bf16.mxu0 %v5592
    %7034 = vmatpush2.bf16.msra.mxu0 %v5591
    %7035 = vmatprep.subr.bf16.mxu0 %v5584
    %7036 = vmatpush2.bf16.msra.mxu0 %v5583
    %7037 = vmatprep.subr.bf16.mxu0 %v5576
    %7038 = vmatpush2.bf16.msra.mxu0 %v5575
    %7039 = vmatprep.subr.bf16.mxu0 %v5568
    %7040 = vmatpush2.bf16.msra.mxu0 %v5567
    %7041 = vmatprep.subr.bf16.mxu0 %v5560
    %7042 = vmatpush2.bf16.msra.mxu0 %v5559
    %7043 = vmatprep.subr.bf16.mxu0 %v5552
    %7044 = vmatpush2.bf16.msra.mxu0 %v5551
    %7045 = vmatprep.mubr.bf16.mxu0 %v1628
    %7046 = vmatmul.mubr.bf16.gmra.mxu0 %v1627
    %v7047 = vpop.f32.mrf.mxu0
    %v7048 = vadd.f32 %v7007, %v7047
    %v7049 = vpop.f32.mrf.mxu0
    %v7050 = vadd.f32 %v7009, %v7049
    %v7051 = vpop.f32.mrf.mxu0
    %v7052 = vpop.f32.mrf.mxu0
    %7053 = vdwg.mxu0
    %7054 = vmatprep.subr.bf16.mxu0 %v5672
    %7055 = vmatpush1.bf16.msra.mxu0 %v5671
    %7056 = vmatprep.subr.bf16.mxu0 %v5664
    %7057 = vmatpush1.bf16.msra.mxu0 %v5663
    %7058 = vmatprep.subr.bf16.mxu0 %v5656
    %7059 = vmatpush1.bf16.msra.mxu0 %v5655
    %7060 = vmatprep.subr.bf16.mxu0 %v5648
    %7061 = vmatpush1.bf16.msra.mxu0 %v5647
    %7062 = vmatprep.subr.bf16.mxu0 %v5640
    %7063 = vmatpush1.bf16.msra.mxu0 %v5639
    %7064 = vmatprep.subr.bf16.mxu0 %v5632
    %7065 = vmatpush1.bf16.msra.mxu0 %v5631
    %7066 = vmatprep.subr.bf16.mxu0 %v5624
    %7067 = vmatpush1.bf16.msra.mxu0 %v5623
    %7068 = vmatprep.subr.bf16.mxu0 %v5616
    %7069 = vmatpush1.bf16.msra.mxu0 %v5615
    %7070 = vmatprep.subr.bf16.mxu0 %v5736
    %7071 = vmatpush2.bf16.msra.mxu0 %v5735
    %7072 = vmatprep.subr.bf16.mxu0 %v5728
    %7073 = vmatpush2.bf16.msra.mxu0 %v5727
    %7074 = vmatprep.subr.bf16.mxu0 %v5720
    %7075 = vmatpush2.bf16.msra.mxu0 %v5719
    %7076 = vmatprep.subr.bf16.mxu0 %v5712
    %7077 = vmatpush2.bf16.msra.mxu0 %v5711
    %7078 = vmatprep.subr.bf16.mxu0 %v5704
    %7079 = vmatpush2.bf16.msra.mxu0 %v5703
    %7080 = vmatprep.subr.bf16.mxu0 %v5696
    %7081 = vmatpush2.bf16.msra.mxu0 %v5695
    %7082 = vmatprep.subr.bf16.mxu0 %v5688
    %7083 = vmatpush2.bf16.msra.mxu0 %v5687
    %7084 = vmatprep.subr.bf16.mxu0 %v5680
    %7085 = vmatpush2.bf16.msra.mxu0 %v5679
    %7086 = vmatprep.mubr.bf16.mxu0 %v1630
    %7087 = vmatmul.mubr.bf16.gmra.mxu0 %v1629
    %v7088 = vpop.f32.mrf.mxu0
    %v7089 = vadd.f32 %v7048, %v7088
    %v7090 = vpop.f32.mrf.mxu0
    %v7091 = vadd.f32 %v7050, %v7090
    %v7092 = vpop.f32.mrf.mxu0
    %v7093 = vpop.f32.mrf.mxu0
    %7094 = vdwg.mxu0
    %7095 = vmatprep.subr.bf16.mxu0 %v4778
    %7096 = vmatpush1.bf16.msra.mxu0 %v4777
    %7097 = vmatprep.subr.bf16.mxu0 %v4770
    %7098 = vmatpush1.bf16.msra.mxu0 %v4769
    %7099 = vmatprep.subr.bf16.mxu0 %v4762
    %7100 = vmatpush1.bf16.msra.mxu0 %v4761
    %7101 = vmatprep.subr.bf16.mxu0 %v4754
    %7102 = vmatpush1.bf16.msra.mxu0 %v4753
    %7103 = vmatprep.subr.bf16.mxu0 %v4746
    %7104 = vmatpush1.bf16.msra.mxu0 %v4745
    %7105 = vmatprep.subr.bf16.mxu0 %v4738
    %7106 = vmatpush1.bf16.msra.mxu0 %v4737
    %7107 = vmatprep.subr.bf16.mxu0 %v4730
    %7108 = vmatpush1.bf16.msra.mxu0 %v4729
    %7109 = vmatprep.subr.bf16.mxu0 %v4722
    %7110 = vmatpush1.bf16.msra.mxu0 %v4721
    %7111 = vmatprep.subr.bf16.mxu0 %v4842
    %7112 = vmatpush2.bf16.msra.mxu0 %v4841
    %7113 = vmatprep.subr.bf16.mxu0 %v4834
    %7114 = vmatpush2.bf16.msra.mxu0 %v4833
    %7115 = vmatprep.subr.bf16.mxu0 %v4826
    %7116 = vmatpush2.bf16.msra.mxu0 %v4825
    %7117 = vmatprep.subr.bf16.mxu0 %v4818
    %7118 = vmatpush2.bf16.msra.mxu0 %v4817
    %7119 = vmatprep.subr.bf16.mxu0 %v4810
    %7120 = vmatpush2.bf16.msra.mxu0 %v4809
    %7121 = vmatprep.subr.bf16.mxu0 %v4802
    %7122 = vmatpush2.bf16.msra.mxu0 %v4801
    %7123 = vmatprep.subr.bf16.mxu0 %v4794
    %7124 = vmatpush2.bf16.msra.mxu0 %v4793
    %7125 = vmatprep.subr.bf16.mxu0 %v4786
    %7126 = vmatpush2.bf16.msra.mxu0 %v4785
    %7127 = vmatprep.mubr.bf16.mxu0 %v1616
    %7128 = vmatmul.mubr.bf16.gmra.mxu0 %v1615
    %v7129 = vpop.f32.mrf.mxu0
    %v7130 = vadd.f32 %v1505, %v7129
    %v7131 = vpop.f32.mrf.mxu0
    %v7132 = vadd.f32 %v1509, %v7131
    %v7133 = vpop.f32.mrf.mxu0
    %v7134 = vpop.f32.mrf.mxu0
    %7135 = vdwg.mxu0
    %7136 = vmatprep.subr.bf16.mxu0 %v4906
    %7137 = vmatpush1.bf16.msra.mxu0 %v4905
    %7138 = vmatprep.subr.bf16.mxu0 %v4898
    %7139 = vmatpush1.bf16.msra.mxu0 %v4897
    %7140 = vmatprep.subr.bf16.mxu0 %v4890
    %7141 = vmatpush1.bf16.msra.mxu0 %v4889
    %7142 = vmatprep.subr.bf16.mxu0 %v4882
    %7143 = vmatpush1.bf16.msra.mxu0 %v4881
    %7144 = vmatprep.subr.bf16.mxu0 %v4874
    %7145 = vmatpush1.bf16.msra.mxu0 %v4873
    %7146 = vmatprep.subr.bf16.mxu0 %v4866
    %7147 = vmatpush1.bf16.msra.mxu0 %v4865
    %7148 = vmatprep.subr.bf16.mxu0 %v4858
    %7149 = vmatpush1.bf16.msra.mxu0 %v4857
    %7150 = vmatprep.subr.bf16.mxu0 %v4850
    %7151 = vmatpush1.bf16.msra.mxu0 %v4849
    %7152 = vmatprep.subr.bf16.mxu0 %v4970
    %7153 = vmatpush2.bf16.msra.mxu0 %v4969
    %7154 = vmatprep.subr.bf16.mxu0 %v4962
    %7155 = vmatpush2.bf16.msra.mxu0 %v4961
    %7156 = vmatprep.subr.bf16.mxu0 %v4954
    %7157 = vmatpush2.bf16.msra.mxu0 %v4953
    %7158 = vmatprep.subr.bf16.mxu0 %v4946
    %7159 = vmatpush2.bf16.msra.mxu0 %v4945
    %7160 = vmatprep.subr.bf16.mxu0 %v4938
    %7161 = vmatpush2.bf16.msra.mxu0 %v4937
    %7162 = vmatprep.subr.bf16.mxu0 %v4930
    %7163 = vmatpush2.bf16.msra.mxu0 %v4929
    %7164 = vmatprep.subr.bf16.mxu0 %v4922
    %7165 = vmatpush2.bf16.msra.mxu0 %v4921
    %7166 = vmatprep.subr.bf16.mxu0 %v4914
    %7167 = vmatpush2.bf16.msra.mxu0 %v4913
    %7168 = vmatprep.mubr.bf16.mxu0 %v1618
    %7169 = vmatmul.mubr.bf16.gmra.mxu0 %v1617
    %v7170 = vpop.f32.mrf.mxu0
    %v7171 = vadd.f32 %v7130, %v7170
    %v7172 = vpop.f32.mrf.mxu0
    %v7173 = vadd.f32 %v7132, %v7172
    %v7174 = vpop.f32.mrf.mxu0
    %v7175 = vpop.f32.mrf.mxu0
    %7176 = vdwg.mxu0
    %7177 = vmatprep.subr.bf16.mxu0 %v5034
    %7178 = vmatpush1.bf16.msra.mxu0 %v5033
    %7179 = vmatprep.subr.bf16.mxu0 %v5026
    %7180 = vmatpush1.bf16.msra.mxu0 %v5025
    %7181 = vmatprep.subr.bf16.mxu0 %v5018
    %7182 = vmatpush1.bf16.msra.mxu0 %v5017
    %7183 = vmatprep.subr.bf16.mxu0 %v5010
    %7184 = vmatpush1.bf16.msra.mxu0 %v5009
    %7185 = vmatprep.subr.bf16.mxu0 %v5002
    %7186 = vmatpush1.bf16.msra.mxu0 %v5001
    %7187 = vmatprep.subr.bf16.mxu0 %v4994
    %7188 = vmatpush1.bf16.msra.mxu0 %v4993
    %7189 = vmatprep.subr.bf16.mxu0 %v4986
    %7190 = vmatpush1.bf16.msra.mxu0 %v4985
    %7191 = vmatprep.subr.bf16.mxu0 %v4978
    %7192 = vmatpush1.bf16.msra.mxu0 %v4977
    %7193 = vmatprep.subr.bf16.mxu0 %v5098
    %7194 = vmatpush2.bf16.msra.mxu0 %v5097
    %7195 = vmatprep.subr.bf16.mxu0 %v5090
    %7196 = vmatpush2.bf16.msra.mxu0 %v5089
    %7197 = vmatprep.subr.bf16.mxu0 %v5082
    %7198 = vmatpush2.bf16.msra.mxu0 %v5081
    %7199 = vmatprep.subr.bf16.mxu0 %v5074
    %7200 = vmatpush2.bf16.msra.mxu0 %v5073
    %7201 = vmatprep.subr.bf16.mxu0 %v5066
    %7202 = vmatpush2.bf16.msra.mxu0 %v5065
    %7203 = vmatprep.subr.bf16.mxu0 %v5058
    %7204 = vmatpush2.bf16.msra.mxu0 %v5057
    %7205 = vmatprep.subr.bf16.mxu0 %v5050
    %7206 = vmatpush2.bf16.msra.mxu0 %v5049
    %7207 = vmatprep.subr.bf16.mxu0 %v5042
    %7208 = vmatpush2.bf16.msra.mxu0 %v5041
    %7209 = vmatprep.mubr.bf16.mxu0 %v1620
    %7210 = vmatmul.mubr.bf16.gmra.mxu0 %v1619
    %v7211 = vpop.f32.mrf.mxu0
    %v7212 = vadd.f32 %v7171, %v7211
    %v7213 = vpop.f32.mrf.mxu0
    %v7214 = vadd.f32 %v7173, %v7213
    %v7215 = vpop.f32.mrf.mxu0
    %v7216 = vpop.f32.mrf.mxu0
    %7217 = vdwg.mxu0
    %7218 = vmatprep.subr.bf16.mxu0 %v5162
    %7219 = vmatpush1.bf16.msra.mxu0 %v5161
    %7220 = vmatprep.subr.bf16.mxu0 %v5154
    %7221 = vmatpush1.bf16.msra.mxu0 %v5153
    %7222 = vmatprep.subr.bf16.mxu0 %v5146
    %7223 = vmatpush1.bf16.msra.mxu0 %v5145
    %7224 = vmatprep.subr.bf16.mxu0 %v5138
    %7225 = vmatpush1.bf16.msra.mxu0 %v5137
    %7226 = vmatprep.subr.bf16.mxu0 %v5130
    %7227 = vmatpush1.bf16.msra.mxu0 %v5129
    %7228 = vmatprep.subr.bf16.mxu0 %v5122
    %7229 = vmatpush1.bf16.msra.mxu0 %v5121
    %7230 = vmatprep.subr.bf16.mxu0 %v5114
    %7231 = vmatpush1.bf16.msra.mxu0 %v5113
    %7232 = vmatprep.subr.bf16.mxu0 %v5106
    %7233 = vmatpush1.bf16.msra.mxu0 %v5105
    %7234 = vmatprep.subr.bf16.mxu0 %v5226
    %7235 = vmatpush2.bf16.msra.mxu0 %v5225
    %7236 = vmatprep.subr.bf16.mxu0 %v5218
    %7237 = vmatpush2.bf16.msra.mxu0 %v5217
    %7238 = vmatprep.subr.bf16.mxu0 %v5210
    %7239 = vmatpush2.bf16.msra.mxu0 %v5209
    %7240 = vmatprep.subr.bf16.mxu0 %v5202
    %7241 = vmatpush2.bf16.msra.mxu0 %v5201
    %7242 = vmatprep.subr.bf16.mxu0 %v5194
    %7243 = vmatpush2.bf16.msra.mxu0 %v5193
    %7244 = vmatprep.subr.bf16.mxu0 %v5186
    %7245 = vmatpush2.bf16.msra.mxu0 %v5185
    %7246 = vmatprep.subr.bf16.mxu0 %v5178
    %7247 = vmatpush2.bf16.msra.mxu0 %v5177
    %7248 = vmatprep.subr.bf16.mxu0 %v5170
    %7249 = vmatpush2.bf16.msra.mxu0 %v5169
    %7250 = vmatprep.mubr.bf16.mxu0 %v1622
    %7251 = vmatmul.mubr.bf16.gmra.mxu0 %v1621
    %v7252 = vpop.f32.mrf.mxu0
    %v7253 = vadd.f32 %v7212, %v7252
    %v7254 = vpop.f32.mrf.mxu0
    %v7255 = vadd.f32 %v7214, %v7254
    %v7256 = vpop.f32.mrf.mxu0
    %v7257 = vpop.f32.mrf.mxu0
    %7258 = vdwg.mxu0
    %7259 = vmatprep.subr.bf16.mxu0 %v5290
    %7260 = vmatpush1.bf16.msra.mxu0 %v5289
    %7261 = vmatprep.subr.bf16.mxu0 %v5282
    %7262 = vmatpush1.bf16.msra.mxu0 %v5281
    %7263 = vmatprep.subr.bf16.mxu0 %v5274
    %7264 = vmatpush1.bf16.msra.mxu0 %v5273
    %7265 = vmatprep.subr.bf16.mxu0 %v5266
    %7266 = vmatpush1.bf16.msra.mxu0 %v5265
    %7267 = vmatprep.subr.bf16.mxu0 %v5258
    %7268 = vmatpush1.bf16.msra.mxu0 %v5257
    %7269 = vmatprep.subr.bf16.mxu0 %v5250
    %7270 = vmatpush1.bf16.msra.mxu0 %v5249
    %7271 = vmatprep.subr.bf16.mxu0 %v5242
    %7272 = vmatpush1.bf16.msra.mxu0 %v5241
    %7273 = vmatprep.subr.bf16.mxu0 %v5234
    %7274 = vmatpush1.bf16.msra.mxu0 %v5233
    %7275 = vmatprep.subr.bf16.mxu0 %v5354
    %7276 = vmatpush2.bf16.msra.mxu0 %v5353
    %7277 = vmatprep.subr.bf16.mxu0 %v5346
    %7278 = vmatpush2.bf16.msra.mxu0 %v5345
    %7279 = vmatprep.subr.bf16.mxu0 %v5338
    %7280 = vmatpush2.bf16.msra.mxu0 %v5337
    %7281 = vmatprep.subr.bf16.mxu0 %v5330
    %7282 = vmatpush2.bf16.msra.mxu0 %v5329
    %7283 = vmatprep.subr.bf16.mxu0 %v5322
    %7284 = vmatpush2.bf16.msra.mxu0 %v5321
    %7285 = vmatprep.subr.bf16.mxu0 %v5314
    %7286 = vmatpush2.bf16.msra.mxu0 %v5313
    %7287 = vmatprep.subr.bf16.mxu0 %v5306
    %7288 = vmatpush2.bf16.msra.mxu0 %v5305
    %7289 = vmatprep.subr.bf16.mxu0 %v5298
    %7290 = vmatpush2.bf16.msra.mxu0 %v5297
    %7291 = vmatprep.mubr.bf16.mxu0 %v1624
    %7292 = vmatmul.mubr.bf16.gmra.mxu0 %v1623
    %v7293 = vpop.f32.mrf.mxu0
    %v7294 = vadd.f32 %v7253, %v7293
    %v7295 = vpop.f32.mrf.mxu0
    %v7296 = vadd.f32 %v7255, %v7295
    %v7297 = vpop.f32.mrf.mxu0
    %v7298 = vpop.f32.mrf.mxu0
    %7299 = vdwg.mxu0
    %7300 = vmatprep.subr.bf16.mxu0 %v5418
    %7301 = vmatpush1.bf16.msra.mxu0 %v5417
    %7302 = vmatprep.subr.bf16.mxu0 %v5410
    %7303 = vmatpush1.bf16.msra.mxu0 %v5409
    %7304 = vmatprep.subr.bf16.mxu0 %v5402
    %7305 = vmatpush1.bf16.msra.mxu0 %v5401
    %7306 = vmatprep.subr.bf16.mxu0 %v5394
    %7307 = vmatpush1.bf16.msra.mxu0 %v5393
    %7308 = vmatprep.subr.bf16.mxu0 %v5386
    %7309 = vmatpush1.bf16.msra.mxu0 %v5385
    %7310 = vmatprep.subr.bf16.mxu0 %v5378
    %7311 = vmatpush1.bf16.msra.mxu0 %v5377
    %7312 = vmatprep.subr.bf16.mxu0 %v5370
    %7313 = vmatpush1.bf16.msra.mxu0 %v5369
    %7314 = vmatprep.subr.bf16.mxu0 %v5362
    %7315 = vmatpush1.bf16.msra.mxu0 %v5361
    %7316 = vmatprep.subr.bf16.mxu0 %v5482
    %7317 = vmatpush2.bf16.msra.mxu0 %v5481
    %7318 = vmatprep.subr.bf16.mxu0 %v5474
    %7319 = vmatpush2.bf16.msra.mxu0 %v5473
    %7320 = vmatprep.subr.bf16.mxu0 %v5466
    %7321 = vmatpush2.bf16.msra.mxu0 %v5465
    %7322 = vmatprep.subr.bf16.mxu0 %v5458
    %7323 = vmatpush2.bf16.msra.mxu0 %v5457
    %7324 = vmatprep.subr.bf16.mxu0 %v5450
    %7325 = vmatpush2.bf16.msra.mxu0 %v5449
    %7326 = vmatprep.subr.bf16.mxu0 %v5442
    %7327 = vmatpush2.bf16.msra.mxu0 %v5441
    %7328 = vmatprep.subr.bf16.mxu0 %v5434
    %7329 = vmatpush2.bf16.msra.mxu0 %v5433
    %7330 = vmatprep.subr.bf16.mxu0 %v5426
    %7331 = vmatpush2.bf16.msra.mxu0 %v5425
    %7332 = vmatprep.mubr.bf16.mxu0 %v1626
    %7333 = vmatmul.mubr.bf16.gmra.mxu0 %v1625
    %v7334 = vpop.f32.mrf.mxu0
    %v7335 = vadd.f32 %v7294, %v7334
    %v7336 = vpop.f32.mrf.mxu0
    %v7337 = vadd.f32 %v7296, %v7336
    %v7338 = vpop.f32.mrf.mxu0
    %v7339 = vpop.f32.mrf.mxu0
    %7340 = vdwg.mxu0
    %7341 = vmatprep.subr.bf16.mxu0 %v5546
    %7342 = vmatpush1.bf16.msra.mxu0 %v5545
    %7343 = vmatprep.subr.bf16.mxu0 %v5538
    %7344 = vmatpush1.bf16.msra.mxu0 %v5537
    %7345 = vmatprep.subr.bf16.mxu0 %v5530
    %7346 = vmatpush1.bf16.msra.mxu0 %v5529
    %7347 = vmatprep.subr.bf16.mxu0 %v5522
    %7348 = vmatpush1.bf16.msra.mxu0 %v5521
    %7349 = vmatprep.subr.bf16.mxu0 %v5514
    %7350 = vmatpush1.bf16.msra.mxu0 %v5513
    %7351 = vmatprep.subr.bf16.mxu0 %v5506
    %7352 = vmatpush1.bf16.msra.mxu0 %v5505
    %7353 = vmatprep.subr.bf16.mxu0 %v5498
    %7354 = vmatpush1.bf16.msra.mxu0 %v5497
    %7355 = vmatprep.subr.bf16.mxu0 %v5490
    %7356 = vmatpush1.bf16.msra.mxu0 %v5489
    %7357 = vmatprep.subr.bf16.mxu0 %v5610
    %7358 = vmatpush2.bf16.msra.mxu0 %v5609
    %7359 = vmatprep.subr.bf16.mxu0 %v5602
    %7360 = vmatpush2.bf16.msra.mxu0 %v5601
    %7361 = vmatprep.subr.bf16.mxu0 %v5594
    %7362 = vmatpush2.bf16.msra.mxu0 %v5593
    %7363 = vmatprep.subr.bf16.mxu0 %v5586
    %7364 = vmatpush2.bf16.msra.mxu0 %v5585
    %7365 = vmatprep.subr.bf16.mxu0 %v5578
    %7366 = vmatpush2.bf16.msra.mxu0 %v5577
    %7367 = vmatprep.subr.bf16.mxu0 %v5570
    %7368 = vmatpush2.bf16.msra.mxu0 %v5569
    %7369 = vmatprep.subr.bf16.mxu0 %v5562
    %7370 = vmatpush2.bf16.msra.mxu0 %v5561
    %7371 = vmatprep.subr.bf16.mxu0 %v5554
    %7372 = vmatpush2.bf16.msra.mxu0 %v5553
    %7373 = vmatprep.mubr.bf16.mxu0 %v1628
    %7374 = vmatmul.mubr.bf16.gmra.mxu0 %v1627
    %v7375 = vpop.f32.mrf.mxu0
    %v7376 = vadd.f32 %v7335, %v7375
    %v7377 = vpop.f32.mrf.mxu0
    %v7378 = vadd.f32 %v7337, %v7377
    %v7379 = vpop.f32.mrf.mxu0
    %v7380 = vpop.f32.mrf.mxu0
    %7381 = vdwg.mxu0
    %7382 = vmatprep.subr.bf16.mxu0 %v5674
    %7383 = vmatpush1.bf16.msra.mxu0 %v5673
    %7384 = vmatprep.subr.bf16.mxu0 %v5666
    %7385 = vmatpush1.bf16.msra.mxu0 %v5665
    %7386 = vmatprep.subr.bf16.mxu0 %v5658
    %7387 = vmatpush1.bf16.msra.mxu0 %v5657
    %7388 = vmatprep.subr.bf16.mxu0 %v5650
    %7389 = vmatpush1.bf16.msra.mxu0 %v5649
    %7390 = vmatprep.subr.bf16.mxu0 %v5642
    %7391 = vmatpush1.bf16.msra.mxu0 %v5641
    %7392 = vmatprep.subr.bf16.mxu0 %v5634
    %7393 = vmatpush1.bf16.msra.mxu0 %v5633
    %7394 = vmatprep.subr.bf16.mxu0 %v5626
    %7395 = vmatpush1.bf16.msra.mxu0 %v5625
    %7396 = vmatprep.subr.bf16.mxu0 %v5618
    %7397 = vmatpush1.bf16.msra.mxu0 %v5617
    %7398 = vmatprep.subr.bf16.mxu0 %v5738
    %7399 = vmatpush2.bf16.msra.mxu0 %v5737
    %7400 = vmatprep.subr.bf16.mxu0 %v5730
    %7401 = vmatpush2.bf16.msra.mxu0 %v5729
    %7402 = vmatprep.subr.bf16.mxu0 %v5722
    %7403 = vmatpush2.bf16.msra.mxu0 %v5721
    %7404 = vmatprep.subr.bf16.mxu0 %v5714
    %7405 = vmatpush2.bf16.msra.mxu0 %v5713
    %7406 = vmatprep.subr.bf16.mxu0 %v5706
    %7407 = vmatpush2.bf16.msra.mxu0 %v5705
    %7408 = vmatprep.subr.bf16.mxu0 %v5698
    %7409 = vmatpush2.bf16.msra.mxu0 %v5697
    %7410 = vmatprep.subr.bf16.mxu0 %v5690
    %7411 = vmatpush2.bf16.msra.mxu0 %v5689
    %7412 = vmatprep.subr.bf16.mxu0 %v5682
    %7413 = vmatpush2.bf16.msra.mxu0 %v5681
    %7414 = vmatprep.mubr.bf16.mxu0 %v1630
    %7415 = vmatmul.mubr.bf16.gmra.mxu0 %v1629
    %v7416 = vpop.f32.mrf.mxu0
    %v7417 = vadd.f32 %v7376, %v7416
    %v7418 = vpop.f32.mrf.mxu0
    %v7419 = vadd.f32 %v7378, %v7418
    %v7420 = vpop.f32.mrf.mxu0
    %v7421 = vpop.f32.mrf.mxu0
    %7422 = vdwg.mxu0
    %7423 = vmatprep.subr.bf16.mxu0 %v4780
    %7424 = vmatpush1.bf16.msra.mxu0 %v4779
    %7425 = vmatprep.subr.bf16.mxu0 %v4772
    %7426 = vmatpush1.bf16.msra.mxu0 %v4771
    %7427 = vmatprep.subr.bf16.mxu0 %v4764
    %7428 = vmatpush1.bf16.msra.mxu0 %v4763
    %7429 = vmatprep.subr.bf16.mxu0 %v4756
    %7430 = vmatpush1.bf16.msra.mxu0 %v4755
    %7431 = vmatprep.subr.bf16.mxu0 %v4748
    %7432 = vmatpush1.bf16.msra.mxu0 %v4747
    %7433 = vmatprep.subr.bf16.mxu0 %v4740
    %7434 = vmatpush1.bf16.msra.mxu0 %v4739
    %7435 = vmatprep.subr.bf16.mxu0 %v4732
    %7436 = vmatpush1.bf16.msra.mxu0 %v4731
    %7437 = vmatprep.subr.bf16.mxu0 %v4724
    %7438 = vmatpush1.bf16.msra.mxu0 %v4723
    %7439 = vmatprep.subr.bf16.mxu0 %v4844
    %7440 = vmatpush2.bf16.msra.mxu0 %v4843
    %7441 = vmatprep.subr.bf16.mxu0 %v4836
    %7442 = vmatpush2.bf16.msra.mxu0 %v4835
    %7443 = vmatprep.subr.bf16.mxu0 %v4828
    %7444 = vmatpush2.bf16.msra.mxu0 %v4827
    %7445 = vmatprep.subr.bf16.mxu0 %v4820
    %7446 = vmatpush2.bf16.msra.mxu0 %v4819
    %7447 = vmatprep.subr.bf16.mxu0 %v4812
    %7448 = vmatpush2.bf16.msra.mxu0 %v4811
    %7449 = vmatprep.subr.bf16.mxu0 %v4804
    %7450 = vmatpush2.bf16.msra.mxu0 %v4803
    %7451 = vmatprep.subr.bf16.mxu0 %v4796
    %7452 = vmatpush2.bf16.msra.mxu0 %v4795
    %7453 = vmatprep.subr.bf16.mxu0 %v4788
    %7454 = vmatpush2.bf16.msra.mxu0 %v4787
    %7455 = vmatprep.mubr.bf16.mxu0 %v1616
    %7456 = vmatmul.mubr.bf16.gmra.mxu0 %v1615
    %v7457 = vpop.f32.mrf.mxu0
    %v7458 = vadd.f32 %v1513, %v7457
    %v7459 = vpop.f32.mrf.mxu0
    %v7460 = vadd.f32 %v1517, %v7459
    %v7461 = vpop.f32.mrf.mxu0
    %v7462 = vpop.f32.mrf.mxu0
    %7463 = vdwg.mxu0
    %7464 = vmatprep.subr.bf16.mxu0 %v4908
    %7465 = vmatpush1.bf16.msra.mxu0 %v4907
    %7466 = vmatprep.subr.bf16.mxu0 %v4900
    %7467 = vmatpush1.bf16.msra.mxu0 %v4899
    %7468 = vmatprep.subr.bf16.mxu0 %v4892
    %7469 = vmatpush1.bf16.msra.mxu0 %v4891
    %7470 = vmatprep.subr.bf16.mxu0 %v4884
    %7471 = vmatpush1.bf16.msra.mxu0 %v4883
    %7472 = vmatprep.subr.bf16.mxu0 %v4876
    %7473 = vmatpush1.bf16.msra.mxu0 %v4875
    %7474 = vmatprep.subr.bf16.mxu0 %v4868
    %7475 = vmatpush1.bf16.msra.mxu0 %v4867
    %7476 = vmatprep.subr.bf16.mxu0 %v4860
    %7477 = vmatpush1.bf16.msra.mxu0 %v4859
    %7478 = vmatprep.subr.bf16.mxu0 %v4852
    %7479 = vmatpush1.bf16.msra.mxu0 %v4851
    %7480 = vmatprep.subr.bf16.mxu0 %v4972
    %7481 = vmatpush2.bf16.msra.mxu0 %v4971
    %7482 = vmatprep.subr.bf16.mxu0 %v4964
    %7483 = vmatpush2.bf16.msra.mxu0 %v4963
    %7484 = vmatprep.subr.bf16.mxu0 %v4956
    %7485 = vmatpush2.bf16.msra.mxu0 %v4955
    %7486 = vmatprep.subr.bf16.mxu0 %v4948
    %7487 = vmatpush2.bf16.msra.mxu0 %v4947
    %7488 = vmatprep.subr.bf16.mxu0 %v4940
    %7489 = vmatpush2.bf16.msra.mxu0 %v4939
    %7490 = vmatprep.subr.bf16.mxu0 %v4932
    %7491 = vmatpush2.bf16.msra.mxu0 %v4931
    %7492 = vmatprep.subr.bf16.mxu0 %v4924
    %7493 = vmatpush2.bf16.msra.mxu0 %v4923
    %7494 = vmatprep.subr.bf16.mxu0 %v4916
    %7495 = vmatpush2.bf16.msra.mxu0 %v4915
    %7496 = vmatprep.mubr.bf16.mxu0 %v1618
    %7497 = vmatmul.mubr.bf16.gmra.mxu0 %v1617
    %v7498 = vpop.f32.mrf.mxu0
    %v7499 = vadd.f32 %v7458, %v7498
    %v7500 = vpop.f32.mrf.mxu0
    %v7501 = vadd.f32 %v7460, %v7500
    %v7502 = vpop.f32.mrf.mxu0
    %v7503 = vpop.f32.mrf.mxu0
    %7504 = vdwg.mxu0
    %7505 = vmatprep.subr.bf16.mxu0 %v5036
    %7506 = vmatpush1.bf16.msra.mxu0 %v5035
    %7507 = vmatprep.subr.bf16.mxu0 %v5028
    %7508 = vmatpush1.bf16.msra.mxu0 %v5027
    %7509 = vmatprep.subr.bf16.mxu0 %v5020
    %7510 = vmatpush1.bf16.msra.mxu0 %v5019
    %7511 = vmatprep.subr.bf16.mxu0 %v5012
    %7512 = vmatpush1.bf16.msra.mxu0 %v5011
    %7513 = vmatprep.subr.bf16.mxu0 %v5004
    %7514 = vmatpush1.bf16.msra.mxu0 %v5003
    %7515 = vmatprep.subr.bf16.mxu0 %v4996
    %7516 = vmatpush1.bf16.msra.mxu0 %v4995
    %7517 = vmatprep.subr.bf16.mxu0 %v4988
    %7518 = vmatpush1.bf16.msra.mxu0 %v4987
    %7519 = vmatprep.subr.bf16.mxu0 %v4980
    %7520 = vmatpush1.bf16.msra.mxu0 %v4979
    %7521 = vmatprep.subr.bf16.mxu0 %v5100
    %7522 = vmatpush2.bf16.msra.mxu0 %v5099
    %7523 = vmatprep.subr.bf16.mxu0 %v5092
    %7524 = vmatpush2.bf16.msra.mxu0 %v5091
    %7525 = vmatprep.subr.bf16.mxu0 %v5084
    %7526 = vmatpush2.bf16.msra.mxu0 %v5083
    %7527 = vmatprep.subr.bf16.mxu0 %v5076
    %7528 = vmatpush2.bf16.msra.mxu0 %v5075
    %7529 = vmatprep.subr.bf16.mxu0 %v5068
    %7530 = vmatpush2.bf16.msra.mxu0 %v5067
    %7531 = vmatprep.subr.bf16.mxu0 %v5060
    %7532 = vmatpush2.bf16.msra.mxu0 %v5059
    %7533 = vmatprep.subr.bf16.mxu0 %v5052
    %7534 = vmatpush2.bf16.msra.mxu0 %v5051
    %7535 = vmatprep.subr.bf16.mxu0 %v5044
    %7536 = vmatpush2.bf16.msra.mxu0 %v5043
    %7537 = vmatprep.mubr.bf16.mxu0 %v1620
    %7538 = vmatmul.mubr.bf16.gmra.mxu0 %v1619
    %v7539 = vpop.f32.mrf.mxu0
    %v7540 = vadd.f32 %v7499, %v7539
    %v7541 = vpop.f32.mrf.mxu0
    %v7542 = vadd.f32 %v7501, %v7541
    %v7543 = vpop.f32.mrf.mxu0
    %v7544 = vpop.f32.mrf.mxu0
    %7545 = vdwg.mxu0
    %7546 = vmatprep.subr.bf16.mxu0 %v5164
    %7547 = vmatpush1.bf16.msra.mxu0 %v5163
    %7548 = vmatprep.subr.bf16.mxu0 %v5156
    %7549 = vmatpush1.bf16.msra.mxu0 %v5155
    %7550 = vmatprep.subr.bf16.mxu0 %v5148
    %7551 = vmatpush1.bf16.msra.mxu0 %v5147
    %7552 = vmatprep.subr.bf16.mxu0 %v5140
    %7553 = vmatpush1.bf16.msra.mxu0 %v5139
    %7554 = vmatprep.subr.bf16.mxu0 %v5132
    %7555 = vmatpush1.bf16.msra.mxu0 %v5131
    %7556 = vmatprep.subr.bf16.mxu0 %v5124
    %7557 = vmatpush1.bf16.msra.mxu0 %v5123
    %7558 = vmatprep.subr.bf16.mxu0 %v5116
    %7559 = vmatpush1.bf16.msra.mxu0 %v5115
    %7560 = vmatprep.subr.bf16.mxu0 %v5108
    %7561 = vmatpush1.bf16.msra.mxu0 %v5107
    %7562 = vmatprep.subr.bf16.mxu0 %v5228
    %7563 = vmatpush2.bf16.msra.mxu0 %v5227
    %7564 = vmatprep.subr.bf16.mxu0 %v5220
    %7565 = vmatpush2.bf16.msra.mxu0 %v5219
    %7566 = vmatprep.subr.bf16.mxu0 %v5212
    %7567 = vmatpush2.bf16.msra.mxu0 %v5211
    %7568 = vmatprep.subr.bf16.mxu0 %v5204
    %7569 = vmatpush2.bf16.msra.mxu0 %v5203
    %7570 = vmatprep.subr.bf16.mxu0 %v5196
    %7571 = vmatpush2.bf16.msra.mxu0 %v5195
    %7572 = vmatprep.subr.bf16.mxu0 %v5188
    %7573 = vmatpush2.bf16.msra.mxu0 %v5187
    %7574 = vmatprep.subr.bf16.mxu0 %v5180
    %7575 = vmatpush2.bf16.msra.mxu0 %v5179
    %7576 = vmatprep.subr.bf16.mxu0 %v5172
    %7577 = vmatpush2.bf16.msra.mxu0 %v5171
    %7578 = vmatprep.mubr.bf16.mxu0 %v1622
    %7579 = vmatmul.mubr.bf16.gmra.mxu0 %v1621
    %v7580 = vpop.f32.mrf.mxu0
    %v7581 = vadd.f32 %v7540, %v7580
    %v7582 = vpop.f32.mrf.mxu0
    %v7583 = vadd.f32 %v7542, %v7582
    %v7584 = vpop.f32.mrf.mxu0
    %v7585 = vpop.f32.mrf.mxu0
    %7586 = vdwg.mxu0
    %7587 = vmatprep.subr.bf16.mxu0 %v5292
    %7588 = vmatpush1.bf16.msra.mxu0 %v5291
    %7589 = vmatprep.subr.bf16.mxu0 %v5284
    %7590 = vmatpush1.bf16.msra.mxu0 %v5283
    %7591 = vmatprep.subr.bf16.mxu0 %v5276
    %7592 = vmatpush1.bf16.msra.mxu0 %v5275
    %7593 = vmatprep.subr.bf16.mxu0 %v5268
    %7594 = vmatpush1.bf16.msra.mxu0 %v5267
    %7595 = vmatprep.subr.bf16.mxu0 %v5260
    %7596 = vmatpush1.bf16.msra.mxu0 %v5259
    %7597 = vmatprep.subr.bf16.mxu0 %v5252
    %7598 = vmatpush1.bf16.msra.mxu0 %v5251
    %7599 = vmatprep.subr.bf16.mxu0 %v5244
    %7600 = vmatpush1.bf16.msra.mxu0 %v5243
    %7601 = vmatprep.subr.bf16.mxu0 %v5236
    %7602 = vmatpush1.bf16.msra.mxu0 %v5235
    %7603 = vmatprep.subr.bf16.mxu0 %v5356
    %7604 = vmatpush2.bf16.msra.mxu0 %v5355
    %7605 = vmatprep.subr.bf16.mxu0 %v5348
    %7606 = vmatpush2.bf16.msra.mxu0 %v5347
    %7607 = vmatprep.subr.bf16.mxu0 %v5340
    %7608 = vmatpush2.bf16.msra.mxu0 %v5339
    %7609 = vmatprep.subr.bf16.mxu0 %v5332
    %7610 = vmatpush2.bf16.msra.mxu0 %v5331
    %7611 = vmatprep.subr.bf16.mxu0 %v5324
    %7612 = vmatpush2.bf16.msra.mxu0 %v5323
    %7613 = vmatprep.subr.bf16.mxu0 %v5316
    %7614 = vmatpush2.bf16.msra.mxu0 %v5315
    %7615 = vmatprep.subr.bf16.mxu0 %v5308
    %7616 = vmatpush2.bf16.msra.mxu0 %v5307
    %7617 = vmatprep.subr.bf16.mxu0 %v5300
    %7618 = vmatpush2.bf16.msra.mxu0 %v5299
    %7619 = vmatprep.mubr.bf16.mxu0 %v1624
    %7620 = vmatmul.mubr.bf16.gmra.mxu0 %v1623
    %v7621 = vpop.f32.mrf.mxu0
    %v7622 = vadd.f32 %v7581, %v7621
    %v7623 = vpop.f32.mrf.mxu0
    %v7624 = vadd.f32 %v7583, %v7623
    %v7625 = vpop.f32.mrf.mxu0
    %v7626 = vpop.f32.mrf.mxu0
    %7627 = vdwg.mxu0
    %7628 = vmatprep.subr.bf16.mxu0 %v5420
    %7629 = vmatpush1.bf16.msra.mxu0 %v5419
    %7630 = vmatprep.subr.bf16.mxu0 %v5412
    %7631 = vmatpush1.bf16.msra.mxu0 %v5411
    %7632 = vmatprep.subr.bf16.mxu0 %v5404
    %7633 = vmatpush1.bf16.msra.mxu0 %v5403
    %7634 = vmatprep.subr.bf16.mxu0 %v5396
    %7635 = vmatpush1.bf16.msra.mxu0 %v5395
    %7636 = vmatprep.subr.bf16.mxu0 %v5388
    %7637 = vmatpush1.bf16.msra.mxu0 %v5387
    %7638 = vmatprep.subr.bf16.mxu0 %v5380
    %7639 = vmatpush1.bf16.msra.mxu0 %v5379
    %7640 = vmatprep.subr.bf16.mxu0 %v5372
    %7641 = vmatpush1.bf16.msra.mxu0 %v5371
    %7642 = vmatprep.subr.bf16.mxu0 %v5364
    %7643 = vmatpush1.bf16.msra.mxu0 %v5363
    %7644 = vmatprep.subr.bf16.mxu0 %v5484
    %7645 = vmatpush2.bf16.msra.mxu0 %v5483
    %7646 = vmatprep.subr.bf16.mxu0 %v5476
    %7647 = vmatpush2.bf16.msra.mxu0 %v5475
    %7648 = vmatprep.subr.bf16.mxu0 %v5468
    %7649 = vmatpush2.bf16.msra.mxu0 %v5467
    %7650 = vmatprep.subr.bf16.mxu0 %v5460
    %7651 = vmatpush2.bf16.msra.mxu0 %v5459
    %7652 = vmatprep.subr.bf16.mxu0 %v5452
    %7653 = vmatpush2.bf16.msra.mxu0 %v5451
    %7654 = vmatprep.subr.bf16.mxu0 %v5444
    %7655 = vmatpush2.bf16.msra.mxu0 %v5443
    %7656 = vmatprep.subr.bf16.mxu0 %v5436
    %7657 = vmatpush2.bf16.msra.mxu0 %v5435
    %7658 = vmatprep.subr.bf16.mxu0 %v5428
    %7659 = vmatpush2.bf16.msra.mxu0 %v5427
    %7660 = vmatprep.mubr.bf16.mxu0 %v1626
    %7661 = vmatmul.mubr.bf16.gmra.mxu0 %v1625
    %v7662 = vpop.f32.mrf.mxu0
    %v7663 = vadd.f32 %v7622, %v7662
    %v7664 = vpop.f32.mrf.mxu0
    %v7665 = vadd.f32 %v7624, %v7664
    %v7666 = vpop.f32.mrf.mxu0
    %v7667 = vpop.f32.mrf.mxu0
    %7668 = vdwg.mxu0
    %7669 = vmatprep.subr.bf16.mxu0 %v5548
    %7670 = vmatpush1.bf16.msra.mxu0 %v5547
    %7671 = vmatprep.subr.bf16.mxu0 %v5540
    %7672 = vmatpush1.bf16.msra.mxu0 %v5539
    %7673 = vmatprep.subr.bf16.mxu0 %v5532
    %7674 = vmatpush1.bf16.msra.mxu0 %v5531
    %7675 = vmatprep.subr.bf16.mxu0 %v5524
    %7676 = vmatpush1.bf16.msra.mxu0 %v5523
    %7677 = vmatprep.subr.bf16.mxu0 %v5516
    %7678 = vmatpush1.bf16.msra.mxu0 %v5515
    %7679 = vmatprep.subr.bf16.mxu0 %v5508
    %7680 = vmatpush1.bf16.msra.mxu0 %v5507
    %7681 = vmatprep.subr.bf16.mxu0 %v5500
    %7682 = vmatpush1.bf16.msra.mxu0 %v5499
    %7683 = vmatprep.subr.bf16.mxu0 %v5492
    %7684 = vmatpush1.bf16.msra.mxu0 %v5491
    %7685 = vmatprep.subr.bf16.mxu0 %v5612
    %7686 = vmatpush2.bf16.msra.mxu0 %v5611
    %7687 = vmatprep.subr.bf16.mxu0 %v5604
    %7688 = vmatpush2.bf16.msra.mxu0 %v5603
    %7689 = vmatprep.subr.bf16.mxu0 %v5596
    %7690 = vmatpush2.bf16.msra.mxu0 %v5595
    %7691 = vmatprep.subr.bf16.mxu0 %v5588
    %7692 = vmatpush2.bf16.msra.mxu0 %v5587
    %7693 = vmatprep.subr.bf16.mxu0 %v5580
    %7694 = vmatpush2.bf16.msra.mxu0 %v5579
    %7695 = vmatprep.subr.bf16.mxu0 %v5572
    %7696 = vmatpush2.bf16.msra.mxu0 %v5571
    %7697 = vmatprep.subr.bf16.mxu0 %v5564
    %7698 = vmatpush2.bf16.msra.mxu0 %v5563
    %7699 = vmatprep.subr.bf16.mxu0 %v5556
    %7700 = vmatpush2.bf16.msra.mxu0 %v5555
    %7701 = vmatprep.mubr.bf16.mxu0 %v1628
    %7702 = vmatmul.mubr.bf16.gmra.mxu0 %v1627
    %v7703 = vpop.f32.mrf.mxu0
    %v7704 = vadd.f32 %v7663, %v7703
    %v7705 = vpop.f32.mrf.mxu0
    %v7706 = vadd.f32 %v7665, %v7705
    %v7707 = vpop.f32.mrf.mxu0
    %v7708 = vpop.f32.mrf.mxu0
    %7709 = vdwg.mxu0
    %7710 = vmatprep.subr.bf16.mxu0 %v5676
    %7711 = vmatpush1.bf16.msra.mxu0 %v5675
    %7712 = vmatprep.subr.bf16.mxu0 %v5668
    %7713 = vmatpush1.bf16.msra.mxu0 %v5667
    %7714 = vmatprep.subr.bf16.mxu0 %v5660
    %7715 = vmatpush1.bf16.msra.mxu0 %v5659
    %7716 = vmatprep.subr.bf16.mxu0 %v5652
    %7717 = vmatpush1.bf16.msra.mxu0 %v5651
    %7718 = vmatprep.subr.bf16.mxu0 %v5644
    %7719 = vmatpush1.bf16.msra.mxu0 %v5643
    %7720 = vmatprep.subr.bf16.mxu0 %v5636
    %7721 = vmatpush1.bf16.msra.mxu0 %v5635
    %7722 = vmatprep.subr.bf16.mxu0 %v5628
    %7723 = vmatpush1.bf16.msra.mxu0 %v5627
    %7724 = vmatprep.subr.bf16.mxu0 %v5620
    %7725 = vmatpush1.bf16.msra.mxu0 %v5619
    %7726 = vmatprep.subr.bf16.mxu0 %v5740
    %7727 = vmatpush2.bf16.msra.mxu0 %v5739
    %7728 = vmatprep.subr.bf16.mxu0 %v5732
    %7729 = vmatpush2.bf16.msra.mxu0 %v5731
    %7730 = vmatprep.subr.bf16.mxu0 %v5724
    %7731 = vmatpush2.bf16.msra.mxu0 %v5723
    %7732 = vmatprep.subr.bf16.mxu0 %v5716
    %7733 = vmatpush2.bf16.msra.mxu0 %v5715
    %7734 = vmatprep.subr.bf16.mxu0 %v5708
    %7735 = vmatpush2.bf16.msra.mxu0 %v5707
    %7736 = vmatprep.subr.bf16.mxu0 %v5700
    %7737 = vmatpush2.bf16.msra.mxu0 %v5699
    %7738 = vmatprep.subr.bf16.mxu0 %v5692
    %7739 = vmatpush2.bf16.msra.mxu0 %v5691
    %7740 = vmatprep.subr.bf16.mxu0 %v5684
    %7741 = vmatpush2.bf16.msra.mxu0 %v5683
    %7742 = vmatprep.mubr.bf16.mxu0 %v1630
    %7743 = vmatmul.mubr.bf16.gmra.mxu0 %v1629
    %v7744 = vpop.f32.mrf.mxu0
    %v7745 = vadd.f32 %v7704, %v7744
    %v7746 = vpop.f32.mrf.mxu0
    %v7747 = vadd.f32 %v7706, %v7746
    %v7748 = vpop.f32.mrf.mxu0
    %v7749 = vpop.f32.mrf.mxu0
    %7750 = vdwg.mxu0
    %7751 = vmatprep.subr.bf16.mxu0 %v4782
    %7752 = vmatpush1.bf16.msra.mxu0 %v4781
    %7753 = vmatprep.subr.bf16.mxu0 %v4774
    %7754 = vmatpush1.bf16.msra.mxu0 %v4773
    %7755 = vmatprep.subr.bf16.mxu0 %v4766
    %7756 = vmatpush1.bf16.msra.mxu0 %v4765
    %7757 = vmatprep.subr.bf16.mxu0 %v4758
    %7758 = vmatpush1.bf16.msra.mxu0 %v4757
    %7759 = vmatprep.subr.bf16.mxu0 %v4750
    %7760 = vmatpush1.bf16.msra.mxu0 %v4749
    %7761 = vmatprep.subr.bf16.mxu0 %v4742
    %7762 = vmatpush1.bf16.msra.mxu0 %v4741
    %7763 = vmatprep.subr.bf16.mxu0 %v4734
    %7764 = vmatpush1.bf16.msra.mxu0 %v4733
    %7765 = vmatprep.subr.bf16.mxu0 %v4726
    %7766 = vmatpush1.bf16.msra.mxu0 %v4725
    %7767 = vmatprep.subr.bf16.mxu0 %v4846
    %7768 = vmatpush2.bf16.msra.mxu0 %v4845
    %7769 = vmatprep.subr.bf16.mxu0 %v4838
    %7770 = vmatpush2.bf16.msra.mxu0 %v4837
    %7771 = vmatprep.subr.bf16.mxu0 %v4830
    %7772 = vmatpush2.bf16.msra.mxu0 %v4829
    %7773 = vmatprep.subr.bf16.mxu0 %v4822
    %7774 = vmatpush2.bf16.msra.mxu0 %v4821
    %7775 = vmatprep.subr.bf16.mxu0 %v4814
    %7776 = vmatpush2.bf16.msra.mxu0 %v4813
    %7777 = vmatprep.subr.bf16.mxu0 %v4806
    %7778 = vmatpush2.bf16.msra.mxu0 %v4805
    %7779 = vmatprep.subr.bf16.mxu0 %v4798
    %7780 = vmatpush2.bf16.msra.mxu0 %v4797
    %7781 = vmatprep.subr.bf16.mxu0 %v4790
    %7782 = vmatpush2.bf16.msra.mxu0 %v4789
    %7783 = vmatprep.mubr.bf16.mxu0 %v1616
    %7784 = vmatmul.mubr.bf16.gmra.mxu0 %v1615
    %v7785 = vpop.f32.mrf.mxu0
    %v7786 = vadd.f32 %v1521, %v7785
    %v7787 = vpop.f32.mrf.mxu0
    %v7788 = vadd.f32 %v1525, %v7787
    %v7789 = vpop.f32.mrf.mxu0
    %v7790 = vpop.f32.mrf.mxu0
    %7791 = vdwg.mxu0
    %7792 = vmatprep.subr.bf16.mxu0 %v4910
    %7793 = vmatpush1.bf16.msra.mxu0 %v4909
    %7794 = vmatprep.subr.bf16.mxu0 %v4902
    %7795 = vmatpush1.bf16.msra.mxu0 %v4901
    %7796 = vmatprep.subr.bf16.mxu0 %v4894
    %7797 = vmatpush1.bf16.msra.mxu0 %v4893
    %7798 = vmatprep.subr.bf16.mxu0 %v4886
    %7799 = vmatpush1.bf16.msra.mxu0 %v4885
    %7800 = vmatprep.subr.bf16.mxu0 %v4878
    %7801 = vmatpush1.bf16.msra.mxu0 %v4877
    %7802 = vmatprep.subr.bf16.mxu0 %v4870
    %7803 = vmatpush1.bf16.msra.mxu0 %v4869
    %7804 = vmatprep.subr.bf16.mxu0 %v4862
    %7805 = vmatpush1.bf16.msra.mxu0 %v4861
    %7806 = vmatprep.subr.bf16.mxu0 %v4854
    %7807 = vmatpush1.bf16.msra.mxu0 %v4853
    %7808 = vmatprep.subr.bf16.mxu0 %v4974
    %7809 = vmatpush2.bf16.msra.mxu0 %v4973
    %7810 = vmatprep.subr.bf16.mxu0 %v4966
    %7811 = vmatpush2.bf16.msra.mxu0 %v4965
    %7812 = vmatprep.subr.bf16.mxu0 %v4958
    %7813 = vmatpush2.bf16.msra.mxu0 %v4957
    %7814 = vmatprep.subr.bf16.mxu0 %v4950
    %7815 = vmatpush2.bf16.msra.mxu0 %v4949
    %7816 = vmatprep.subr.bf16.mxu0 %v4942
    %7817 = vmatpush2.bf16.msra.mxu0 %v4941
    %7818 = vmatprep.subr.bf16.mxu0 %v4934
    %7819 = vmatpush2.bf16.msra.mxu0 %v4933
    %7820 = vmatprep.subr.bf16.mxu0 %v4926
    %7821 = vmatpush2.bf16.msra.mxu0 %v4925
    %7822 = vmatprep.subr.bf16.mxu0 %v4918
    %7823 = vmatpush2.bf16.msra.mxu0 %v4917
    %7824 = vmatprep.mubr.bf16.mxu0 %v1618
    %7825 = vmatmul.mubr.bf16.gmra.mxu0 %v1617
    %v7826 = vpop.f32.mrf.mxu0
    %v7827 = vadd.f32 %v7786, %v7826
    %v7828 = vpop.f32.mrf.mxu0
    %v7829 = vadd.f32 %v7788, %v7828
    %v7830 = vpop.f32.mrf.mxu0
    %v7831 = vpop.f32.mrf.mxu0
    %7832 = vdwg.mxu0
    %7833 = vmatprep.subr.bf16.mxu0 %v5038
    %7834 = vmatpush1.bf16.msra.mxu0 %v5037
    %7835 = vmatprep.subr.bf16.mxu0 %v5030
    %7836 = vmatpush1.bf16.msra.mxu0 %v5029
    %7837 = vmatprep.subr.bf16.mxu0 %v5022
    %7838 = vmatpush1.bf16.msra.mxu0 %v5021
    %7839 = vmatprep.subr.bf16.mxu0 %v5014
    %7840 = vmatpush1.bf16.msra.mxu0 %v5013
    %7841 = vmatprep.subr.bf16.mxu0 %v5006
    %7842 = vmatpush1.bf16.msra.mxu0 %v5005
    %7843 = vmatprep.subr.bf16.mxu0 %v4998
    %7844 = vmatpush1.bf16.msra.mxu0 %v4997
    %7845 = vmatprep.subr.bf16.mxu0 %v4990
    %7846 = vmatpush1.bf16.msra.mxu0 %v4989
    %7847 = vmatprep.subr.bf16.mxu0 %v4982
    %7848 = vmatpush1.bf16.msra.mxu0 %v4981
    %7849 = vmatprep.subr.bf16.mxu0 %v5102
    %7850 = vmatpush2.bf16.msra.mxu0 %v5101
    %7851 = vmatprep.subr.bf16.mxu0 %v5094
    %7852 = vmatpush2.bf16.msra.mxu0 %v5093
    %7853 = vmatprep.subr.bf16.mxu0 %v5086
    %7854 = vmatpush2.bf16.msra.mxu0 %v5085
    %7855 = vmatprep.subr.bf16.mxu0 %v5078
    %7856 = vmatpush2.bf16.msra.mxu0 %v5077
    %7857 = vmatprep.subr.bf16.mxu0 %v5070
    %7858 = vmatpush2.bf16.msra.mxu0 %v5069
    %7859 = vmatprep.subr.bf16.mxu0 %v5062
    %7860 = vmatpush2.bf16.msra.mxu0 %v5061
    %7861 = vmatprep.subr.bf16.mxu0 %v5054
    %7862 = vmatpush2.bf16.msra.mxu0 %v5053
    %7863 = vmatprep.subr.bf16.mxu0 %v5046
    %7864 = vmatpush2.bf16.msra.mxu0 %v5045
    %7865 = vmatprep.mubr.bf16.mxu0 %v1620
    %7866 = vmatmul.mubr.bf16.gmra.mxu0 %v1619
    %v7867 = vpop.f32.mrf.mxu0
    %v7868 = vadd.f32 %v7827, %v7867
    %v7869 = vpop.f32.mrf.mxu0
    %v7870 = vadd.f32 %v7829, %v7869
    %v7871 = vpop.f32.mrf.mxu0
    %v7872 = vpop.f32.mrf.mxu0
    %7873 = vdwg.mxu0
    %7874 = vmatprep.subr.bf16.mxu0 %v5166
    %7875 = vmatpush1.bf16.msra.mxu0 %v5165
    %7876 = vmatprep.subr.bf16.mxu0 %v5158
    %7877 = vmatpush1.bf16.msra.mxu0 %v5157
    %7878 = vmatprep.subr.bf16.mxu0 %v5150
    %7879 = vmatpush1.bf16.msra.mxu0 %v5149
    %7880 = vmatprep.subr.bf16.mxu0 %v5142
    %7881 = vmatpush1.bf16.msra.mxu0 %v5141
    %7882 = vmatprep.subr.bf16.mxu0 %v5134
    %7883 = vmatpush1.bf16.msra.mxu0 %v5133
    %7884 = vmatprep.subr.bf16.mxu0 %v5126
    %7885 = vmatpush1.bf16.msra.mxu0 %v5125
    %7886 = vmatprep.subr.bf16.mxu0 %v5118
    %7887 = vmatpush1.bf16.msra.mxu0 %v5117
    %7888 = vmatprep.subr.bf16.mxu0 %v5110
    %7889 = vmatpush1.bf16.msra.mxu0 %v5109
    %7890 = vmatprep.subr.bf16.mxu0 %v5230
    %7891 = vmatpush2.bf16.msra.mxu0 %v5229
    %7892 = vmatprep.subr.bf16.mxu0 %v5222
    %7893 = vmatpush2.bf16.msra.mxu0 %v5221
    %7894 = vmatprep.subr.bf16.mxu0 %v5214
    %7895 = vmatpush2.bf16.msra.mxu0 %v5213
    %7896 = vmatprep.subr.bf16.mxu0 %v5206
    %7897 = vmatpush2.bf16.msra.mxu0 %v5205
    %7898 = vmatprep.subr.bf16.mxu0 %v5198
    %7899 = vmatpush2.bf16.msra.mxu0 %v5197
    %7900 = vmatprep.subr.bf16.mxu0 %v5190
    %7901 = vmatpush2.bf16.msra.mxu0 %v5189
    %7902 = vmatprep.subr.bf16.mxu0 %v5182
    %7903 = vmatpush2.bf16.msra.mxu0 %v5181
    %7904 = vmatprep.subr.bf16.mxu0 %v5174
    %7905 = vmatpush2.bf16.msra.mxu0 %v5173
    %7906 = vmatprep.mubr.bf16.mxu0 %v1622
    %7907 = vmatmul.mubr.bf16.gmra.mxu0 %v1621
    %v7908 = vpop.f32.mrf.mxu0
    %v7909 = vadd.f32 %v7868, %v7908
    %v7910 = vpop.f32.mrf.mxu0
    %v7911 = vadd.f32 %v7870, %v7910
    %v7912 = vpop.f32.mrf.mxu0
    %v7913 = vpop.f32.mrf.mxu0
    %7914 = vdwg.mxu0
    %7915 = vmatprep.subr.bf16.mxu0 %v5294
    %7916 = vmatpush1.bf16.msra.mxu0 %v5293
    %7917 = vmatprep.subr.bf16.mxu0 %v5286
    %7918 = vmatpush1.bf16.msra.mxu0 %v5285
    %7919 = vmatprep.subr.bf16.mxu0 %v5278
    %7920 = vmatpush1.bf16.msra.mxu0 %v5277
    %7921 = vmatprep.subr.bf16.mxu0 %v5270
    %7922 = vmatpush1.bf16.msra.mxu0 %v5269
    %7923 = vmatprep.subr.bf16.mxu0 %v5262
    %7924 = vmatpush1.bf16.msra.mxu0 %v5261
    %7925 = vmatprep.subr.bf16.mxu0 %v5254
    %7926 = vmatpush1.bf16.msra.mxu0 %v5253
    %7927 = vmatprep.subr.bf16.mxu0 %v5246
    %7928 = vmatpush1.bf16.msra.mxu0 %v5245
    %7929 = vmatprep.subr.bf16.mxu0 %v5238
    %7930 = vmatpush1.bf16.msra.mxu0 %v5237
    %7931 = vmatprep.subr.bf16.mxu0 %v5358
    %7932 = vmatpush2.bf16.msra.mxu0 %v5357
    %7933 = vmatprep.subr.bf16.mxu0 %v5350
    %7934 = vmatpush2.bf16.msra.mxu0 %v5349
    %7935 = vmatprep.subr.bf16.mxu0 %v5342
    %7936 = vmatpush2.bf16.msra.mxu0 %v5341
    %7937 = vmatprep.subr.bf16.mxu0 %v5334
    %7938 = vmatpush2.bf16.msra.mxu0 %v5333
    %7939 = vmatprep.subr.bf16.mxu0 %v5326
    %7940 = vmatpush2.bf16.msra.mxu0 %v5325
    %7941 = vmatprep.subr.bf16.mxu0 %v5318
    %7942 = vmatpush2.bf16.msra.mxu0 %v5317
    %7943 = vmatprep.subr.bf16.mxu0 %v5310
    %7944 = vmatpush2.bf16.msra.mxu0 %v5309
    %7945 = vmatprep.subr.bf16.mxu0 %v5302
    %7946 = vmatpush2.bf16.msra.mxu0 %v5301
    %7947 = vmatprep.mubr.bf16.mxu0 %v1624
    %7948 = vmatmul.mubr.bf16.gmra.mxu0 %v1623
    %v7949 = vpop.f32.mrf.mxu0
    %v7950 = vadd.f32 %v7909, %v7949
    %v7951 = vpop.f32.mrf.mxu0
    %v7952 = vadd.f32 %v7911, %v7951
    %v7953 = vpop.f32.mrf.mxu0
    %v7954 = vpop.f32.mrf.mxu0
    %7955 = vdwg.mxu0
    %7956 = vmatprep.subr.bf16.mxu0 %v5422
    %7957 = vmatpush1.bf16.msra.mxu0 %v5421
    %7958 = vmatprep.subr.bf16.mxu0 %v5414
    %7959 = vmatpush1.bf16.msra.mxu0 %v5413
    %7960 = vmatprep.subr.bf16.mxu0 %v5406
    %7961 = vmatpush1.bf16.msra.mxu0 %v5405
    %7962 = vmatprep.subr.bf16.mxu0 %v5398
    %7963 = vmatpush1.bf16.msra.mxu0 %v5397
    %7964 = vmatprep.subr.bf16.mxu0 %v5390
    %7965 = vmatpush1.bf16.msra.mxu0 %v5389
    %7966 = vmatprep.subr.bf16.mxu0 %v5382
    %7967 = vmatpush1.bf16.msra.mxu0 %v5381
    %7968 = vmatprep.subr.bf16.mxu0 %v5374
    %7969 = vmatpush1.bf16.msra.mxu0 %v5373
    %7970 = vmatprep.subr.bf16.mxu0 %v5366
    %7971 = vmatpush1.bf16.msra.mxu0 %v5365
    %7972 = vmatprep.subr.bf16.mxu0 %v5486
    %7973 = vmatpush2.bf16.msra.mxu0 %v5485
    %7974 = vmatprep.subr.bf16.mxu0 %v5478
    %7975 = vmatpush2.bf16.msra.mxu0 %v5477
    %7976 = vmatprep.subr.bf16.mxu0 %v5470
    %7977 = vmatpush2.bf16.msra.mxu0 %v5469
    %7978 = vmatprep.subr.bf16.mxu0 %v5462
    %7979 = vmatpush2.bf16.msra.mxu0 %v5461
    %7980 = vmatprep.subr.bf16.mxu0 %v5454
    %7981 = vmatpush2.bf16.msra.mxu0 %v5453
    %7982 = vmatprep.subr.bf16.mxu0 %v5446
    %7983 = vmatpush2.bf16.msra.mxu0 %v5445
    %7984 = vmatprep.subr.bf16.mxu0 %v5438
    %7985 = vmatpush2.bf16.msra.mxu0 %v5437
    %7986 = vmatprep.subr.bf16.mxu0 %v5430
    %7987 = vmatpush2.bf16.msra.mxu0 %v5429
    %7988 = vmatprep.mubr.bf16.mxu0 %v1626
    %7989 = vmatmul.mubr.bf16.gmra.mxu0 %v1625
    %v7990 = vpop.f32.mrf.mxu0
    %v7991 = vadd.f32 %v7950, %v7990
    %v7992 = vpop.f32.mrf.mxu0
    %v7993 = vadd.f32 %v7952, %v7992
    %v7994 = vpop.f32.mrf.mxu0
    %v7995 = vpop.f32.mrf.mxu0
    %7996 = vdwg.mxu0
    %7997 = vmatprep.subr.bf16.mxu0 %v5550
    %7998 = vmatpush1.bf16.msra.mxu0 %v5549
    %7999 = vmatprep.subr.bf16.mxu0 %v5542
    %8000 = vmatpush1.bf16.msra.mxu0 %v5541
    %8001 = vmatprep.subr.bf16.mxu0 %v5534
    %8002 = vmatpush1.bf16.msra.mxu0 %v5533
    %8003 = vmatprep.subr.bf16.mxu0 %v5526
    %8004 = vmatpush1.bf16.msra.mxu0 %v5525
    %8005 = vmatprep.subr.bf16.mxu0 %v5518
    %8006 = vmatpush1.bf16.msra.mxu0 %v5517
    %8007 = vmatprep.subr.bf16.mxu0 %v5510
    %8008 = vmatpush1.bf16.msra.mxu0 %v5509
    %8009 = vmatprep.subr.bf16.mxu0 %v5502
    %8010 = vmatpush1.bf16.msra.mxu0 %v5501
    %8011 = vmatprep.subr.bf16.mxu0 %v5494
    %8012 = vmatpush1.bf16.msra.mxu0 %v5493
    %8013 = vmatprep.subr.bf16.mxu0 %v5614
    %8014 = vmatpush2.bf16.msra.mxu0 %v5613
    %8015 = vmatprep.subr.bf16.mxu0 %v5606
    %8016 = vmatpush2.bf16.msra.mxu0 %v5605
    %8017 = vmatprep.subr.bf16.mxu0 %v5598
    %8018 = vmatpush2.bf16.msra.mxu0 %v5597
    %8019 = vmatprep.subr.bf16.mxu0 %v5590
    %8020 = vmatpush2.bf16.msra.mxu0 %v5589
    %8021 = vmatprep.subr.bf16.mxu0 %v5582
    %8022 = vmatpush2.bf16.msra.mxu0 %v5581
    %8023 = vmatprep.subr.bf16.mxu0 %v5574
    %8024 = vmatpush2.bf16.msra.mxu0 %v5573
    %8025 = vmatprep.subr.bf16.mxu0 %v5566
    %8026 = vmatpush2.bf16.msra.mxu0 %v5565
    %8027 = vmatprep.subr.bf16.mxu0 %v5558
    %8028 = vmatpush2.bf16.msra.mxu0 %v5557
    %8029 = vmatprep.mubr.bf16.mxu0 %v1628
    %8030 = vmatmul.mubr.bf16.gmra.mxu0 %v1627
    %v8031 = vpop.f32.mrf.mxu0
    %v8032 = vadd.f32 %v7991, %v8031
    %v8033 = vpop.f32.mrf.mxu0
    %v8034 = vadd.f32 %v7993, %v8033
    %v8035 = vpop.f32.mrf.mxu0
    %v8036 = vpop.f32.mrf.mxu0
    %8037 = vdwg.mxu0
    %8038 = vmatprep.subr.bf16.mxu0 %v5678
    %8039 = vmatpush1.bf16.msra.mxu0 %v5677
    %8040 = vmatprep.subr.bf16.mxu0 %v5670
    %8041 = vmatpush1.bf16.msra.mxu0 %v5669
    %8042 = vmatprep.subr.bf16.mxu0 %v5662
    %8043 = vmatpush1.bf16.msra.mxu0 %v5661
    %8044 = vmatprep.subr.bf16.mxu0 %v5654
    %8045 = vmatpush1.bf16.msra.mxu0 %v5653
    %8046 = vmatprep.subr.bf16.mxu0 %v5646
    %8047 = vmatpush1.bf16.msra.mxu0 %v5645
    %8048 = vmatprep.subr.bf16.mxu0 %v5638
    %8049 = vmatpush1.bf16.msra.mxu0 %v5637
    %8050 = vmatprep.subr.bf16.mxu0 %v5630
    %8051 = vmatpush1.bf16.msra.mxu0 %v5629
    %8052 = vmatprep.subr.bf16.mxu0 %v5622
    %8053 = vmatpush1.bf16.msra.mxu0 %v5621
    %8054 = vmatprep.subr.bf16.mxu0 %v5742
    %8055 = vmatpush2.bf16.msra.mxu0 %v5741
    %8056 = vmatprep.subr.bf16.mxu0 %v5734
    %8057 = vmatpush2.bf16.msra.mxu0 %v5733
    %8058 = vmatprep.subr.bf16.mxu0 %v5726
    %8059 = vmatpush2.bf16.msra.mxu0 %v5725
    %8060 = vmatprep.subr.bf16.mxu0 %v5718
    %8061 = vmatpush2.bf16.msra.mxu0 %v5717
    %8062 = vmatprep.subr.bf16.mxu0 %v5710
    %8063 = vmatpush2.bf16.msra.mxu0 %v5709
    %8064 = vmatprep.subr.bf16.mxu0 %v5702
    %8065 = vmatpush2.bf16.msra.mxu0 %v5701
    %8066 = vmatprep.subr.bf16.mxu0 %v5694
    %8067 = vmatpush2.bf16.msra.mxu0 %v5693
    %8068 = vmatprep.subr.bf16.mxu0 %v5686
    %8069 = vmatpush2.bf16.msra.mxu0 %v5685
    %8070 = vmatprep.mubr.bf16.mxu0 %v1630
    %8071 = vmatmul.mubr.bf16.gmra.mxu0 %v1629
    %v8072 = vpop.f32.mrf.mxu0
    %v8073 = vadd.f32 %v8032, %v8072
    %v8074 = vpop.f32.mrf.mxu0
    %v8075 = vadd.f32 %v8034, %v8074
    %v8076 = vpop.f32.mrf.mxu0
    %v8077 = vpop.f32.mrf.mxu0
    %8078 = vdwg.mxu0
    %v8079 = vmax.f32 %v7089, 0.0
    %v8080 = vmax.f32 %v7091, 0.0
    %v8081 = vmax.f32 %v7417, 0.0
    %v8082 = vmax.f32 %v7419, 0.0
    %v8083 = vmax.f32 %v7745, 0.0
    %v8084 = vmax.f32 %v7747, 0.0
    %v8085 = vmax.f32 %v8073, 0.0
    %v8086 = vmax.f32 %v8075, 0.0
    %v8087 = vld [vmem:[#allocation8] sm:$0xff]
    %v8088 = vld [vmem:[#allocation8 + $0x8] sm:$0xff]
    %v8089 = vld [vmem:[#allocation8 + $0x10] sm:$0xff]
    %v8090 = vld [vmem:[#allocation8 + $0x18] sm:$0xff]
    %v8091 = vld [vmem:[#allocation8 + $0x20] sm:$0xff]
    %v8092 = vld [vmem:[#allocation8 + $0x28] sm:$0xff]
    %v8093 = vld [vmem:[#allocation8 + $0x30] sm:$0xff]
    %v8094 = vld [vmem:[#allocation8 + $0x38] sm:$0xff]
    %v8095 = vld [vmem:[#allocation8 + $0x40] sm:$0xff]
    %v8096 = vld [vmem:[#allocation8 + $0x48] sm:$0xff]
    %v8097 = vld [vmem:[#allocation8 + $0x50] sm:$0xff]
    %v8098 = vld [vmem:[#allocation8 + $0x58] sm:$0xff]
    %v8099 = vld [vmem:[#allocation8 + $0x60] sm:$0xff]
    %v8100 = vld [vmem:[#allocation8 + $0x68] sm:$0xff]
    %v8101 = vld [vmem:[#allocation8 + $0x70] sm:$0xff]
    %v8102 = vld [vmem:[#allocation8 + $0x78] sm:$0xff]
    %v8103 = vld [vmem:[#allocation8 + $0x80] sm:$0xff]
    %v8104 = vld [vmem:[#allocation8 + $0x88] sm:$0xff]
    %v8105 = vld [vmem:[#allocation8 + $0x90] sm:$0xff]
    %v8106 = vld [vmem:[#allocation8 + $0x98] sm:$0xff]
    %v8107 = vld [vmem:[#allocation8 + $0xa0] sm:$0xff]
    %v8108 = vld [vmem:[#allocation8 + $0xa8] sm:$0xff]
    %v8109 = vld [vmem:[#allocation8 + $0xb0] sm:$0xff]
    %v8110 = vld [vmem:[#allocation8 + $0xb8] sm:$0xff]
    %v8111 = vld [vmem:[#allocation8 + $0xc0] sm:$0xff]
    %v8112 = vld [vmem:[#allocation8 + $0xc8] sm:$0xff]
    %v8113 = vld [vmem:[#allocation8 + $0xd0] sm:$0xff]
    %v8114 = vld [vmem:[#allocation8 + $0xd8] sm:$0xff]
    %v8115 = vld [vmem:[#allocation8 + $0xe0] sm:$0xff]
    %v8116 = vld [vmem:[#allocation8 + $0xe8] sm:$0xff]
    %v8117 = vld [vmem:[#allocation8 + $0xf0] sm:$0xff]
    %v8118 = vld [vmem:[#allocation8 + $0xf8] sm:$0xff]
    %v8119 = vld [vmem:[#allocation8 + $0x100] sm:$0xff]
    %v8120 = vld [vmem:[#allocation8 + $0x108] sm:$0xff]
    %v8121 = vld [vmem:[#allocation8 + $0x110] sm:$0xff]
    %v8122 = vld [vmem:[#allocation8 + $0x118] sm:$0xff]
    %v8123 = vld [vmem:[#allocation8 + $0x120] sm:$0xff]
    %v8124 = vld [vmem:[#allocation8 + $0x128] sm:$0xff]
    %v8125 = vld [vmem:[#allocation8 + $0x130] sm:$0xff]
    %v8126 = vld [vmem:[#allocation8 + $0x138] sm:$0xff]
    %v8127 = vld [vmem:[#allocation8 + $0x140] sm:$0xff]
    %v8128 = vld [vmem:[#allocation8 + $0x148] sm:$0xff]
    %v8129 = vld [vmem:[#allocation8 + $0x150] sm:$0xff]
    %v8130 = vld [vmem:[#allocation8 + $0x158] sm:$0xff]
    %v8131 = vld [vmem:[#allocation8 + $0x160] sm:$0xff]
    %v8132 = vld [vmem:[#allocation8 + $0x168] sm:$0xff]
    %v8133 = vld [vmem:[#allocation8 + $0x170] sm:$0xff]
    %v8134 = vld [vmem:[#allocation8 + $0x178] sm:$0xff]
    %v8135 = vld [vmem:[#allocation8 + $0x180] sm:$0xff]
    %v8136 = vld [vmem:[#allocation8 + $0x188] sm:$0xff]
    %v8137 = vld [vmem:[#allocation8 + $0x190] sm:$0xff]
    %v8138 = vld [vmem:[#allocation8 + $0x198] sm:$0xff]
    %v8139 = vld [vmem:[#allocation8 + $0x1a0] sm:$0xff]
    %v8140 = vld [vmem:[#allocation8 + $0x1a8] sm:$0xff]
    %v8141 = vld [vmem:[#allocation8 + $0x1b0] sm:$0xff]
    %v8142 = vld [vmem:[#allocation8 + $0x1b8] sm:$0xff]
    %v8143 = vld [vmem:[#allocation8 + $0x1c0] sm:$0xff]
    %v8144 = vld [vmem:[#allocation8 + $0x1c8] sm:$0xff]
    %v8145 = vld [vmem:[#allocation8 + $0x1d0] sm:$0xff]
    %v8146 = vld [vmem:[#allocation8 + $0x1d8] sm:$0xff]
    %v8147 = vld [vmem:[#allocation8 + $0x1e0] sm:$0xff]
    %v8148 = vld [vmem:[#allocation8 + $0x1e8] sm:$0xff]
    %v8149 = vld [vmem:[#allocation8 + $0x1f0] sm:$0xff]
    %v8150 = vld [vmem:[#allocation8 + $0x1f8] sm:$0xff]
    %v8151 = vld [vmem:[#allocation8 + $0x200] sm:$0xff]
    %v8152 = vld [vmem:[#allocation8 + $0x208] sm:$0xff]
    %v8153 = vld [vmem:[#allocation8 + $0x210] sm:$0xff]
    %v8154 = vld [vmem:[#allocation8 + $0x218] sm:$0xff]
    %v8155 = vld [vmem:[#allocation8 + $0x220] sm:$0xff]
    %v8156 = vld [vmem:[#allocation8 + $0x228] sm:$0xff]
    %v8157 = vld [vmem:[#allocation8 + $0x230] sm:$0xff]
    %v8158 = vld [vmem:[#allocation8 + $0x238] sm:$0xff]
    %v8159 = vld [vmem:[#allocation8 + $0x240] sm:$0xff]
    %v8160 = vld [vmem:[#allocation8 + $0x248] sm:$0xff]
    %v8161 = vld [vmem:[#allocation8 + $0x250] sm:$0xff]
    %v8162 = vld [vmem:[#allocation8 + $0x258] sm:$0xff]
    %v8163 = vld [vmem:[#allocation8 + $0x260] sm:$0xff]
    %v8164 = vld [vmem:[#allocation8 + $0x268] sm:$0xff]
    %v8165 = vld [vmem:[#allocation8 + $0x270] sm:$0xff]
    %v8166 = vld [vmem:[#allocation8 + $0x278] sm:$0xff]
    %v8167 = vld [vmem:[#allocation8 + $0x280] sm:$0xff]
    %v8168 = vld [vmem:[#allocation8 + $0x288] sm:$0xff]
    %v8169 = vld [vmem:[#allocation8 + $0x290] sm:$0xff]
    %v8170 = vld [vmem:[#allocation8 + $0x298] sm:$0xff]
    %v8171 = vld [vmem:[#allocation8 + $0x2a0] sm:$0xff]
    %v8172 = vld [vmem:[#allocation8 + $0x2a8] sm:$0xff]
    %v8173 = vld [vmem:[#allocation8 + $0x2b0] sm:$0xff]
    %v8174 = vld [vmem:[#allocation8 + $0x2b8] sm:$0xff]
    %v8175 = vld [vmem:[#allocation8 + $0x2c0] sm:$0xff]
    %v8176 = vld [vmem:[#allocation8 + $0x2c8] sm:$0xff]
    %v8177 = vld [vmem:[#allocation8 + $0x2d0] sm:$0xff]
    %v8178 = vld [vmem:[#allocation8 + $0x2d8] sm:$0xff]
    %v8179 = vld [vmem:[#allocation8 + $0x2e0] sm:$0xff]
    %v8180 = vld [vmem:[#allocation8 + $0x2e8] sm:$0xff]
    %v8181 = vld [vmem:[#allocation8 + $0x2f0] sm:$0xff]
    %v8182 = vld [vmem:[#allocation8 + $0x2f8] sm:$0xff]
    %v8183 = vld [vmem:[#allocation8 + $0x300] sm:$0xff]
    %v8184 = vld [vmem:[#allocation8 + $0x308] sm:$0xff]
    %v8185 = vld [vmem:[#allocation8 + $0x310] sm:$0xff]
    %v8186 = vld [vmem:[#allocation8 + $0x318] sm:$0xff]
    %v8187 = vld [vmem:[#allocation8 + $0x320] sm:$0xff]
    %v8188 = vld [vmem:[#allocation8 + $0x328] sm:$0xff]
    %v8189 = vld [vmem:[#allocation8 + $0x330] sm:$0xff]
    %v8190 = vld [vmem:[#allocation8 + $0x338] sm:$0xff]
    %v8191 = vld [vmem:[#allocation8 + $0x340] sm:$0xff]
    %v8192 = vld [vmem:[#allocation8 + $0x348] sm:$0xff]
    %v8193 = vld [vmem:[#allocation8 + $0x350] sm:$0xff]
    %v8194 = vld [vmem:[#allocation8 + $0x358] sm:$0xff]
    %v8195 = vld [vmem:[#allocation8 + $0x360] sm:$0xff]
    %v8196 = vld [vmem:[#allocation8 + $0x368] sm:$0xff]
    %v8197 = vld [vmem:[#allocation8 + $0x370] sm:$0xff]
    %v8198 = vld [vmem:[#allocation8 + $0x378] sm:$0xff]
    %v8199 = vld [vmem:[#allocation8 + $0x380] sm:$0xff]
    %v8200 = vld [vmem:[#allocation8 + $0x388] sm:$0xff]
    %v8201 = vld [vmem:[#allocation8 + $0x390] sm:$0xff]
    %v8202 = vld [vmem:[#allocation8 + $0x398] sm:$0xff]
    %v8203 = vld [vmem:[#allocation8 + $0x3a0] sm:$0xff]
    %v8204 = vld [vmem:[#allocation8 + $0x3a8] sm:$0xff]
    %v8205 = vld [vmem:[#allocation8 + $0x3b0] sm:$0xff]
    %v8206 = vld [vmem:[#allocation8 + $0x3b8] sm:$0xff]
    %v8207 = vld [vmem:[#allocation8 + $0x3c0] sm:$0xff]
    %v8208 = vld [vmem:[#allocation8 + $0x3c8] sm:$0xff]
    %v8209 = vld [vmem:[#allocation8 + $0x3d0] sm:$0xff]
    %v8210 = vld [vmem:[#allocation8 + $0x3d8] sm:$0xff]
    %v8211 = vld [vmem:[#allocation8 + $0x3e0] sm:$0xff]
    %v8212 = vld [vmem:[#allocation8 + $0x3e8] sm:$0xff]
    %v8213 = vld [vmem:[#allocation8 + $0x3f0] sm:$0xff]
    %v8214 = vld [vmem:[#allocation8 + $0x3f8] sm:$0xff]
    %v8215 = vld [vmem:[#allocation8 + $0x400] sm:$0xff]
    %v8216 = vld [vmem:[#allocation8 + $0x408] sm:$0xff]
    %v8217 = vld [vmem:[#allocation8 + $0x410] sm:$0xff]
    %v8218 = vld [vmem:[#allocation8 + $0x418] sm:$0xff]
    %v8219 = vld [vmem:[#allocation8 + $0x420] sm:$0xff]
    %v8220 = vld [vmem:[#allocation8 + $0x428] sm:$0xff]
    %v8221 = vld [vmem:[#allocation8 + $0x430] sm:$0xff]
    %v8222 = vld [vmem:[#allocation8 + $0x438] sm:$0xff]
    %v8223 = vld [vmem:[#allocation8 + $0x440] sm:$0xff]
    %v8224 = vld [vmem:[#allocation8 + $0x448] sm:$0xff]
    %v8225 = vld [vmem:[#allocation8 + $0x450] sm:$0xff]
    %v8226 = vld [vmem:[#allocation8 + $0x458] sm:$0xff]
    %v8227 = vld [vmem:[#allocation8 + $0x460] sm:$0xff]
    %v8228 = vld [vmem:[#allocation8 + $0x468] sm:$0xff]
    %v8229 = vld [vmem:[#allocation8 + $0x470] sm:$0xff]
    %v8230 = vld [vmem:[#allocation8 + $0x478] sm:$0xff]
    %v8231 = vld [vmem:[#allocation8 + $0x480] sm:$0xff]
    %v8232 = vld [vmem:[#allocation8 + $0x488] sm:$0xff]
    %v8233 = vld [vmem:[#allocation8 + $0x490] sm:$0xff]
    %v8234 = vld [vmem:[#allocation8 + $0x498] sm:$0xff]
    %v8235 = vld [vmem:[#allocation8 + $0x4a0] sm:$0xff]
    %v8236 = vld [vmem:[#allocation8 + $0x4a8] sm:$0xff]
    %v8237 = vld [vmem:[#allocation8 + $0x4b0] sm:$0xff]
    %v8238 = vld [vmem:[#allocation8 + $0x4b8] sm:$0xff]
    %v8239 = vld [vmem:[#allocation8 + $0x4c0] sm:$0xff]
    %v8240 = vld [vmem:[#allocation8 + $0x4c8] sm:$0xff]
    %v8241 = vld [vmem:[#allocation8 + $0x4d0] sm:$0xff]
    %v8242 = vld [vmem:[#allocation8 + $0x4d8] sm:$0xff]
    %v8243 = vld [vmem:[#allocation8 + $0x4e0] sm:$0xff]
    %v8244 = vld [vmem:[#allocation8 + $0x4e8] sm:$0xff]
    %v8245 = vld [vmem:[#allocation8 + $0x4f0] sm:$0xff]
    %v8246 = vld [vmem:[#allocation8 + $0x4f8] sm:$0xff]
    %v8247 = vld [vmem:[#allocation8 + $0x500] sm:$0xff]
    %v8248 = vld [vmem:[#allocation8 + $0x508] sm:$0xff]
    %v8249 = vld [vmem:[#allocation8 + $0x510] sm:$0xff]
    %v8250 = vld [vmem:[#allocation8 + $0x518] sm:$0xff]
    %v8251 = vld [vmem:[#allocation8 + $0x520] sm:$0xff]
    %v8252 = vld [vmem:[#allocation8 + $0x528] sm:$0xff]
    %v8253 = vld [vmem:[#allocation8 + $0x530] sm:$0xff]
    %v8254 = vld [vmem:[#allocation8 + $0x538] sm:$0xff]
    %v8255 = vld [vmem:[#allocation8 + $0x540] sm:$0xff]
    %v8256 = vld [vmem:[#allocation8 + $0x548] sm:$0xff]
    %v8257 = vld [vmem:[#allocation8 + $0x550] sm:$0xff]
    %v8258 = vld [vmem:[#allocation8 + $0x558] sm:$0xff]
    %v8259 = vld [vmem:[#allocation8 + $0x560] sm:$0xff]
    %v8260 = vld [vmem:[#allocation8 + $0x568] sm:$0xff]
    %v8261 = vld [vmem:[#allocation8 + $0x570] sm:$0xff]
    %v8262 = vld [vmem:[#allocation8 + $0x578] sm:$0xff]
    %v8263 = vld [vmem:[#allocation8 + $0x580] sm:$0xff]
    %v8264 = vld [vmem:[#allocation8 + $0x588] sm:$0xff]
    %v8265 = vld [vmem:[#allocation8 + $0x590] sm:$0xff]
    %v8266 = vld [vmem:[#allocation8 + $0x598] sm:$0xff]
    %v8267 = vld [vmem:[#allocation8 + $0x5a0] sm:$0xff]
    %v8268 = vld [vmem:[#allocation8 + $0x5a8] sm:$0xff]
    %v8269 = vld [vmem:[#allocation8 + $0x5b0] sm:$0xff]
    %v8270 = vld [vmem:[#allocation8 + $0x5b8] sm:$0xff]
    %v8271 = vld [vmem:[#allocation8 + $0x5c0] sm:$0xff]
    %v8272 = vld [vmem:[#allocation8 + $0x5c8] sm:$0xff]
    %v8273 = vld [vmem:[#allocation8 + $0x5d0] sm:$0xff]
    %v8274 = vld [vmem:[#allocation8 + $0x5d8] sm:$0xff]
    %v8275 = vld [vmem:[#allocation8 + $0x5e0] sm:$0xff]
    %v8276 = vld [vmem:[#allocation8 + $0x5e8] sm:$0xff]
    %v8277 = vld [vmem:[#allocation8 + $0x5f0] sm:$0xff]
    %v8278 = vld [vmem:[#allocation8 + $0x5f8] sm:$0xff]
    %v8279 = vld [vmem:[#allocation8 + $0x600] sm:$0xff]
    %v8280 = vld [vmem:[#allocation8 + $0x608] sm:$0xff]
    %v8281 = vld [vmem:[#allocation8 + $0x610] sm:$0xff]
    %v8282 = vld [vmem:[#allocation8 + $0x618] sm:$0xff]
    %v8283 = vld [vmem:[#allocation8 + $0x620] sm:$0xff]
    %v8284 = vld [vmem:[#allocation8 + $0x628] sm:$0xff]
    %v8285 = vld [vmem:[#allocation8 + $0x630] sm:$0xff]
    %v8286 = vld [vmem:[#allocation8 + $0x638] sm:$0xff]
    %v8287 = vld [vmem:[#allocation8 + $0x640] sm:$0xff]
    %v8288 = vld [vmem:[#allocation8 + $0x648] sm:$0xff]
    %v8289 = vld [vmem:[#allocation8 + $0x650] sm:$0xff]
    %v8290 = vld [vmem:[#allocation8 + $0x658] sm:$0xff]
    %v8291 = vld [vmem:[#allocation8 + $0x660] sm:$0xff]
    %v8292 = vld [vmem:[#allocation8 + $0x668] sm:$0xff]
    %v8293 = vld [vmem:[#allocation8 + $0x670] sm:$0xff]
    %v8294 = vld [vmem:[#allocation8 + $0x678] sm:$0xff]
    %v8295 = vld [vmem:[#allocation8 + $0x680] sm:$0xff]
    %v8296 = vld [vmem:[#allocation8 + $0x688] sm:$0xff]
    %v8297 = vld [vmem:[#allocation8 + $0x690] sm:$0xff]
    %v8298 = vld [vmem:[#allocation8 + $0x698] sm:$0xff]
    %v8299 = vld [vmem:[#allocation8 + $0x6a0] sm:$0xff]
    %v8300 = vld [vmem:[#allocation8 + $0x6a8] sm:$0xff]
    %v8301 = vld [vmem:[#allocation8 + $0x6b0] sm:$0xff]
    %v8302 = vld [vmem:[#allocation8 + $0x6b8] sm:$0xff]
    %v8303 = vld [vmem:[#allocation8 + $0x6c0] sm:$0xff]
    %v8304 = vld [vmem:[#allocation8 + $0x6c8] sm:$0xff]
    %v8305 = vld [vmem:[#allocation8 + $0x6d0] sm:$0xff]
    %v8306 = vld [vmem:[#allocation8 + $0x6d8] sm:$0xff]
    %v8307 = vld [vmem:[#allocation8 + $0x6e0] sm:$0xff]
    %v8308 = vld [vmem:[#allocation8 + $0x6e8] sm:$0xff]
    %v8309 = vld [vmem:[#allocation8 + $0x6f0] sm:$0xff]
    %v8310 = vld [vmem:[#allocation8 + $0x6f8] sm:$0xff]
    %v8311 = vld [vmem:[#allocation8 + $0x700] sm:$0xff]
    %v8312 = vld [vmem:[#allocation8 + $0x708] sm:$0xff]
    %v8313 = vld [vmem:[#allocation8 + $0x710] sm:$0xff]
    %v8314 = vld [vmem:[#allocation8 + $0x718] sm:$0xff]
    %v8315 = vld [vmem:[#allocation8 + $0x720] sm:$0xff]
    %v8316 = vld [vmem:[#allocation8 + $0x728] sm:$0xff]
    %v8317 = vld [vmem:[#allocation8 + $0x730] sm:$0xff]
    %v8318 = vld [vmem:[#allocation8 + $0x738] sm:$0xff]
    %v8319 = vld [vmem:[#allocation8 + $0x740] sm:$0xff]
    %v8320 = vld [vmem:[#allocation8 + $0x748] sm:$0xff]
    %v8321 = vld [vmem:[#allocation8 + $0x750] sm:$0xff]
    %v8322 = vld [vmem:[#allocation8 + $0x758] sm:$0xff]
    %v8323 = vld [vmem:[#allocation8 + $0x760] sm:$0xff]
    %v8324 = vld [vmem:[#allocation8 + $0x768] sm:$0xff]
    %v8325 = vld [vmem:[#allocation8 + $0x770] sm:$0xff]
    %v8326 = vld [vmem:[#allocation8 + $0x778] sm:$0xff]
    %v8327 = vld [vmem:[#allocation8 + $0x780] sm:$0xff]
    %v8328 = vld [vmem:[#allocation8 + $0x788] sm:$0xff]
    %v8329 = vld [vmem:[#allocation8 + $0x790] sm:$0xff]
    %v8330 = vld [vmem:[#allocation8 + $0x798] sm:$0xff]
    %v8331 = vld [vmem:[#allocation8 + $0x7a0] sm:$0xff]
    %v8332 = vld [vmem:[#allocation8 + $0x7a8] sm:$0xff]
    %v8333 = vld [vmem:[#allocation8 + $0x7b0] sm:$0xff]
    %v8334 = vld [vmem:[#allocation8 + $0x7b8] sm:$0xff]
    %v8335 = vld [vmem:[#allocation8 + $0x7c0] sm:$0xff]
    %v8336 = vld [vmem:[#allocation8 + $0x7c8] sm:$0xff]
    %v8337 = vld [vmem:[#allocation8 + $0x7d0] sm:$0xff]
    %v8338 = vld [vmem:[#allocation8 + $0x7d8] sm:$0xff]
    %v8339 = vld [vmem:[#allocation8 + $0x7e0] sm:$0xff]
    %v8340 = vld [vmem:[#allocation8 + $0x7e8] sm:$0xff]
    %v8341 = vld [vmem:[#allocation8 + $0x7f0] sm:$0xff]
    %v8342 = vld [vmem:[#allocation8 + $0x7f8] sm:$0xff]
    %v8343 = vld [vmem:[#allocation5 + $0x8] sm:$0xf]
    %v8344 = vpack.c.bf16 %v8079, %v8079
    %v8345 = vpack.c.bf16 %v8080, %v8080
    %v8346 = vpack.c.bf16 %v8081, %v8081
    %v8347 = vpack.c.bf16 %v8082, %v8082
    %v8348 = vpack.c.bf16 %v8083, %v8083
    %v8349 = vpack.c.bf16 %v8084, %v8084
    %v8350 = vpack.c.bf16 %v8085, %v8085
    %v8351 = vpack.c.bf16 %v8086, %v8086
    %v8353 = vlaneseq
    %v8354 = vshrl.u32 %v8353, 7
    %v8355 = vsub.s32 0, %v8354
    %v8356 = vrot.slane %v8343, %v8355
    %v8357 = vlaneseq
    %v8358 = vshrl.u32 %v8357, 7
    %v8359 = vsub.s32 1, %v8358
    %v8360 = vrot.slane %v8343, %v8359
    %v8361 = vlaneseq
    %v8362 = vshrl.u32 %v8361, 7
    %v8363 = vsub.s32 2, %v8362
    %v8364 = vrot.slane %v8343, %v8363
    %v8365 = vlaneseq
    %v8366 = vshrl.u32 %v8365, 7
    %v8367 = vsub.s32 3, %v8366
    %v8368 = vrot.slane %v8343, %v8367
    %v8629 = vunpack.c.l.b16 %v8087
    %v8630 = vunpack.c.h.b16 %v8087
    %v8631 = vunpack.c.l.b16 %v8088
    %v8632 = vunpack.c.h.b16 %v8088
    %v8633 = vunpack.c.l.b16 %v8089
    %v8634 = vunpack.c.h.b16 %v8089
    %v8635 = vunpack.c.l.b16 %v8090
    %v8636 = vunpack.c.h.b16 %v8090
    %v8637 = vunpack.c.l.b16 %v8091
    %v8638 = vunpack.c.h.b16 %v8091
    %v8639 = vunpack.c.l.b16 %v8092
    %v8640 = vunpack.c.h.b16 %v8092
    %v8641 = vunpack.c.l.b16 %v8093
    %v8642 = vunpack.c.h.b16 %v8093
    %v8643 = vunpack.c.l.b16 %v8094
    %v8644 = vunpack.c.h.b16 %v8094
    %v8645 = vunpack.c.l.b16 %v8095
    %v8646 = vunpack.c.h.b16 %v8095
    %v8647 = vunpack.c.l.b16 %v8096
    %v8648 = vunpack.c.h.b16 %v8096
    %v8649 = vunpack.c.l.b16 %v8097
    %v8650 = vunpack.c.h.b16 %v8097
    %v8651 = vunpack.c.l.b16 %v8098
    %v8652 = vunpack.c.h.b16 %v8098
    %v8653 = vunpack.c.l.b16 %v8099
    %v8654 = vunpack.c.h.b16 %v8099
    %v8655 = vunpack.c.l.b16 %v8100
    %v8656 = vunpack.c.h.b16 %v8100
    %v8657 = vunpack.c.l.b16 %v8101
    %v8658 = vunpack.c.h.b16 %v8101
    %v8659 = vunpack.c.l.b16 %v8102
    %v8660 = vunpack.c.h.b16 %v8102
    %v8661 = vunpack.c.l.b16 %v8103
    %v8662 = vunpack.c.h.b16 %v8103
    %v8663 = vunpack.c.l.b16 %v8104
    %v8664 = vunpack.c.h.b16 %v8104
    %v8665 = vunpack.c.l.b16 %v8105
    %v8666 = vunpack.c.h.b16 %v8105
    %v8667 = vunpack.c.l.b16 %v8106
    %v8668 = vunpack.c.h.b16 %v8106
    %v8669 = vunpack.c.l.b16 %v8107
    %v8670 = vunpack.c.h.b16 %v8107
    %v8671 = vunpack.c.l.b16 %v8108
    %v8672 = vunpack.c.h.b16 %v8108
    %v8673 = vunpack.c.l.b16 %v8109
    %v8674 = vunpack.c.h.b16 %v8109
    %v8675 = vunpack.c.l.b16 %v8110
    %v8676 = vunpack.c.h.b16 %v8110
    %v8677 = vunpack.c.l.b16 %v8111
    %v8678 = vunpack.c.h.b16 %v8111
    %v8679 = vunpack.c.l.b16 %v8112
    %v8680 = vunpack.c.h.b16 %v8112
    %v8681 = vunpack.c.l.b16 %v8113
    %v8682 = vunpack.c.h.b16 %v8113
    %v8683 = vunpack.c.l.b16 %v8114
    %v8684 = vunpack.c.h.b16 %v8114
    %v8685 = vunpack.c.l.b16 %v8115
    %v8686 = vunpack.c.h.b16 %v8115
    %v8687 = vunpack.c.l.b16 %v8116
    %v8688 = vunpack.c.h.b16 %v8116
    %v8689 = vunpack.c.l.b16 %v8117
    %v8690 = vunpack.c.h.b16 %v8117
    %v8691 = vunpack.c.l.b16 %v8118
    %v8692 = vunpack.c.h.b16 %v8118
    %v8693 = vunpack.c.l.b16 %v8119
    %v8694 = vunpack.c.h.b16 %v8119
    %v8695 = vunpack.c.l.b16 %v8120
    %v8696 = vunpack.c.h.b16 %v8120
    %v8697 = vunpack.c.l.b16 %v8121
    %v8698 = vunpack.c.h.b16 %v8121
    %v8699 = vunpack.c.l.b16 %v8122
    %v8700 = vunpack.c.h.b16 %v8122
    %v8701 = vunpack.c.l.b16 %v8123
    %v8702 = vunpack.c.h.b16 %v8123
    %v8703 = vunpack.c.l.b16 %v8124
    %v8704 = vunpack.c.h.b16 %v8124
    %v8705 = vunpack.c.l.b16 %v8125
    %v8706 = vunpack.c.h.b16 %v8125
    %v8707 = vunpack.c.l.b16 %v8126
    %v8708 = vunpack.c.h.b16 %v8126
    %v8709 = vunpack.c.l.b16 %v8127
    %v8710 = vunpack.c.h.b16 %v8127
    %v8711 = vunpack.c.l.b16 %v8128
    %v8712 = vunpack.c.h.b16 %v8128
    %v8713 = vunpack.c.l.b16 %v8129
    %v8714 = vunpack.c.h.b16 %v8129
    %v8715 = vunpack.c.l.b16 %v8130
    %v8716 = vunpack.c.h.b16 %v8130
    %v8717 = vunpack.c.l.b16 %v8131
    %v8718 = vunpack.c.h.b16 %v8131
    %v8719 = vunpack.c.l.b16 %v8132
    %v8720 = vunpack.c.h.b16 %v8132
    %v8721 = vunpack.c.l.b16 %v8133
    %v8722 = vunpack.c.h.b16 %v8133
    %v8723 = vunpack.c.l.b16 %v8134
    %v8724 = vunpack.c.h.b16 %v8134
    %v8725 = vunpack.c.l.b16 %v8135
    %v8726 = vunpack.c.h.b16 %v8135
    %v8727 = vunpack.c.l.b16 %v8136
    %v8728 = vunpack.c.h.b16 %v8136
    %v8729 = vunpack.c.l.b16 %v8137
    %v8730 = vunpack.c.h.b16 %v8137
    %v8731 = vunpack.c.l.b16 %v8138
    %v8732 = vunpack.c.h.b16 %v8138
    %v8733 = vunpack.c.l.b16 %v8139
    %v8734 = vunpack.c.h.b16 %v8139
    %v8735 = vunpack.c.l.b16 %v8140
    %v8736 = vunpack.c.h.b16 %v8140
    %v8737 = vunpack.c.l.b16 %v8141
    %v8738 = vunpack.c.h.b16 %v8141
    %v8739 = vunpack.c.l.b16 %v8142
    %v8740 = vunpack.c.h.b16 %v8142
    %v8741 = vunpack.c.l.b16 %v8143
    %v8742 = vunpack.c.h.b16 %v8143
    %v8743 = vunpack.c.l.b16 %v8144
    %v8744 = vunpack.c.h.b16 %v8144
    %v8745 = vunpack.c.l.b16 %v8145
    %v8746 = vunpack.c.h.b16 %v8145
    %v8747 = vunpack.c.l.b16 %v8146
    %v8748 = vunpack.c.h.b16 %v8146
    %v8749 = vunpack.c.l.b16 %v8147
    %v8750 = vunpack.c.h.b16 %v8147
    %v8751 = vunpack.c.l.b16 %v8148
    %v8752 = vunpack.c.h.b16 %v8148
    %v8753 = vunpack.c.l.b16 %v8149
    %v8754 = vunpack.c.h.b16 %v8149
    %v8755 = vunpack.c.l.b16 %v8150
    %v8756 = vunpack.c.h.b16 %v8150
    %v8757 = vunpack.c.l.b16 %v8151
    %v8758 = vunpack.c.h.b16 %v8151
    %v8759 = vunpack.c.l.b16 %v8152
    %v8760 = vunpack.c.h.b16 %v8152
    %v8761 = vunpack.c.l.b16 %v8153
    %v8762 = vunpack.c.h.b16 %v8153
    %v8763 = vunpack.c.l.b16 %v8154
    %v8764 = vunpack.c.h.b16 %v8154
    %v8765 = vunpack.c.l.b16 %v8155
    %v8766 = vunpack.c.h.b16 %v8155
    %v8767 = vunpack.c.l.b16 %v8156
    %v8768 = vunpack.c.h.b16 %v8156
    %v8769 = vunpack.c.l.b16 %v8157
    %v8770 = vunpack.c.h.b16 %v8157
    %v8771 = vunpack.c.l.b16 %v8158
    %v8772 = vunpack.c.h.b16 %v8158
    %v8773 = vunpack.c.l.b16 %v8159
    %v8774 = vunpack.c.h.b16 %v8159
    %v8775 = vunpack.c.l.b16 %v8160
    %v8776 = vunpack.c.h.b16 %v8160
    %v8777 = vunpack.c.l.b16 %v8161
    %v8778 = vunpack.c.h.b16 %v8161
    %v8779 = vunpack.c.l.b16 %v8162
    %v8780 = vunpack.c.h.b16 %v8162
    %v8781 = vunpack.c.l.b16 %v8163
    %v8782 = vunpack.c.h.b16 %v8163
    %v8783 = vunpack.c.l.b16 %v8164
    %v8784 = vunpack.c.h.b16 %v8164
    %v8785 = vunpack.c.l.b16 %v8165
    %v8786 = vunpack.c.h.b16 %v8165
    %v8787 = vunpack.c.l.b16 %v8166
    %v8788 = vunpack.c.h.b16 %v8166
    %v8789 = vunpack.c.l.b16 %v8167
    %v8790 = vunpack.c.h.b16 %v8167
    %v8791 = vunpack.c.l.b16 %v8168
    %v8792 = vunpack.c.h.b16 %v8168
    %v8793 = vunpack.c.l.b16 %v8169
    %v8794 = vunpack.c.h.b16 %v8169
    %v8795 = vunpack.c.l.b16 %v8170
    %v8796 = vunpack.c.h.b16 %v8170
    %v8797 = vunpack.c.l.b16 %v8171
    %v8798 = vunpack.c.h.b16 %v8171
    %v8799 = vunpack.c.l.b16 %v8172
    %v8800 = vunpack.c.h.b16 %v8172
    %v8801 = vunpack.c.l.b16 %v8173
    %v8802 = vunpack.c.h.b16 %v8173
    %v8803 = vunpack.c.l.b16 %v8174
    %v8804 = vunpack.c.h.b16 %v8174
    %v8805 = vunpack.c.l.b16 %v8175
    %v8806 = vunpack.c.h.b16 %v8175
    %v8807 = vunpack.c.l.b16 %v8176
    %v8808 = vunpack.c.h.b16 %v8176
    %v8809 = vunpack.c.l.b16 %v8177
    %v8810 = vunpack.c.h.b16 %v8177
    %v8811 = vunpack.c.l.b16 %v8178
    %v8812 = vunpack.c.h.b16 %v8178
    %v8813 = vunpack.c.l.b16 %v8179
    %v8814 = vunpack.c.h.b16 %v8179
    %v8815 = vunpack.c.l.b16 %v8180
    %v8816 = vunpack.c.h.b16 %v8180
    %v8817 = vunpack.c.l.b16 %v8181
    %v8818 = vunpack.c.h.b16 %v8181
    %v8819 = vunpack.c.l.b16 %v8182
    %v8820 = vunpack.c.h.b16 %v8182
    %v8821 = vunpack.c.l.b16 %v8183
    %v8822 = vunpack.c.h.b16 %v8183
    %v8823 = vunpack.c.l.b16 %v8184
    %v8824 = vunpack.c.h.b16 %v8184
    %v8825 = vunpack.c.l.b16 %v8185
    %v8826 = vunpack.c.h.b16 %v8185
    %v8827 = vunpack.c.l.b16 %v8186
    %v8828 = vunpack.c.h.b16 %v8186
    %v8829 = vunpack.c.l.b16 %v8187
    %v8830 = vunpack.c.h.b16 %v8187
    %v8831 = vunpack.c.l.b16 %v8188
    %v8832 = vunpack.c.h.b16 %v8188
    %v8833 = vunpack.c.l.b16 %v8189
    %v8834 = vunpack.c.h.b16 %v8189
    %v8835 = vunpack.c.l.b16 %v8190
    %v8836 = vunpack.c.h.b16 %v8190
    %v8837 = vunpack.c.l.b16 %v8191
    %v8838 = vunpack.c.h.b16 %v8191
    %v8839 = vunpack.c.l.b16 %v8192
    %v8840 = vunpack.c.h.b16 %v8192
    %v8841 = vunpack.c.l.b16 %v8193
    %v8842 = vunpack.c.h.b16 %v8193
    %v8843 = vunpack.c.l.b16 %v8194
    %v8844 = vunpack.c.h.b16 %v8194
    %v8845 = vunpack.c.l.b16 %v8195
    %v8846 = vunpack.c.h.b16 %v8195
    %v8847 = vunpack.c.l.b16 %v8196
    %v8848 = vunpack.c.h.b16 %v8196
    %v8849 = vunpack.c.l.b16 %v8197
    %v8850 = vunpack.c.h.b16 %v8197
    %v8851 = vunpack.c.l.b16 %v8198
    %v8852 = vunpack.c.h.b16 %v8198
    %v8853 = vunpack.c.l.b16 %v8199
    %v8854 = vunpack.c.h.b16 %v8199
    %v8855 = vunpack.c.l.b16 %v8200
    %v8856 = vunpack.c.h.b16 %v8200
    %v8857 = vunpack.c.l.b16 %v8201
    %v8858 = vunpack.c.h.b16 %v8201
    %v8859 = vunpack.c.l.b16 %v8202
    %v8860 = vunpack.c.h.b16 %v8202
    %v8861 = vunpack.c.l.b16 %v8203
    %v8862 = vunpack.c.h.b16 %v8203
    %v8863 = vunpack.c.l.b16 %v8204
    %v8864 = vunpack.c.h.b16 %v8204
    %v8865 = vunpack.c.l.b16 %v8205
    %v8866 = vunpack.c.h.b16 %v8205
    %v8867 = vunpack.c.l.b16 %v8206
    %v8868 = vunpack.c.h.b16 %v8206
    %v8869 = vunpack.c.l.b16 %v8207
    %v8870 = vunpack.c.h.b16 %v8207
    %v8871 = vunpack.c.l.b16 %v8208
    %v8872 = vunpack.c.h.b16 %v8208
    %v8873 = vunpack.c.l.b16 %v8209
    %v8874 = vunpack.c.h.b16 %v8209
    %v8875 = vunpack.c.l.b16 %v8210
    %v8876 = vunpack.c.h.b16 %v8210
    %v8877 = vunpack.c.l.b16 %v8211
    %v8878 = vunpack.c.h.b16 %v8211
    %v8879 = vunpack.c.l.b16 %v8212
    %v8880 = vunpack.c.h.b16 %v8212
    %v8881 = vunpack.c.l.b16 %v8213
    %v8882 = vunpack.c.h.b16 %v8213
    %v8883 = vunpack.c.l.b16 %v8214
    %v8884 = vunpack.c.h.b16 %v8214
    %v8885 = vunpack.c.l.b16 %v8215
    %v8886 = vunpack.c.h.b16 %v8215
    %v8887 = vunpack.c.l.b16 %v8216
    %v8888 = vunpack.c.h.b16 %v8216
    %v8889 = vunpack.c.l.b16 %v8217
    %v8890 = vunpack.c.h.b16 %v8217
    %v8891 = vunpack.c.l.b16 %v8218
    %v8892 = vunpack.c.h.b16 %v8218
    %v8893 = vunpack.c.l.b16 %v8219
    %v8894 = vunpack.c.h.b16 %v8219
    %v8895 = vunpack.c.l.b16 %v8220
    %v8896 = vunpack.c.h.b16 %v8220
    %v8897 = vunpack.c.l.b16 %v8221
    %v8898 = vunpack.c.h.b16 %v8221
    %v8899 = vunpack.c.l.b16 %v8222
    %v8900 = vunpack.c.h.b16 %v8222
    %v8901 = vunpack.c.l.b16 %v8223
    %v8902 = vunpack.c.h.b16 %v8223
    %v8903 = vunpack.c.l.b16 %v8224
    %v8904 = vunpack.c.h.b16 %v8224
    %v8905 = vunpack.c.l.b16 %v8225
    %v8906 = vunpack.c.h.b16 %v8225
    %v8907 = vunpack.c.l.b16 %v8226
    %v8908 = vunpack.c.h.b16 %v8226
    %v8909 = vunpack.c.l.b16 %v8227
    %v8910 = vunpack.c.h.b16 %v8227
    %v8911 = vunpack.c.l.b16 %v8228
    %v8912 = vunpack.c.h.b16 %v8228
    %v8913 = vunpack.c.l.b16 %v8229
    %v8914 = vunpack.c.h.b16 %v8229
    %v8915 = vunpack.c.l.b16 %v8230
    %v8916 = vunpack.c.h.b16 %v8230
    %v8917 = vunpack.c.l.b16 %v8231
    %v8918 = vunpack.c.h.b16 %v8231
    %v8919 = vunpack.c.l.b16 %v8232
    %v8920 = vunpack.c.h.b16 %v8232
    %v8921 = vunpack.c.l.b16 %v8233
    %v8922 = vunpack.c.h.b16 %v8233
    %v8923 = vunpack.c.l.b16 %v8234
    %v8924 = vunpack.c.h.b16 %v8234
    %v8925 = vunpack.c.l.b16 %v8235
    %v8926 = vunpack.c.h.b16 %v8235
    %v8927 = vunpack.c.l.b16 %v8236
    %v8928 = vunpack.c.h.b16 %v8236
    %v8929 = vunpack.c.l.b16 %v8237
    %v8930 = vunpack.c.h.b16 %v8237
    %v8931 = vunpack.c.l.b16 %v8238
    %v8932 = vunpack.c.h.b16 %v8238
    %v8933 = vunpack.c.l.b16 %v8239
    %v8934 = vunpack.c.h.b16 %v8239
    %v8935 = vunpack.c.l.b16 %v8240
    %v8936 = vunpack.c.h.b16 %v8240
    %v8937 = vunpack.c.l.b16 %v8241
    %v8938 = vunpack.c.h.b16 %v8241
    %v8939 = vunpack.c.l.b16 %v8242
    %v8940 = vunpack.c.h.b16 %v8242
    %v8941 = vunpack.c.l.b16 %v8243
    %v8942 = vunpack.c.h.b16 %v8243
    %v8943 = vunpack.c.l.b16 %v8244
    %v8944 = vunpack.c.h.b16 %v8244
    %v8945 = vunpack.c.l.b16 %v8245
    %v8946 = vunpack.c.h.b16 %v8245
    %v8947 = vunpack.c.l.b16 %v8246
    %v8948 = vunpack.c.h.b16 %v8246
    %v8949 = vunpack.c.l.b16 %v8247
    %v8950 = vunpack.c.h.b16 %v8247
    %v8951 = vunpack.c.l.b16 %v8248
    %v8952 = vunpack.c.h.b16 %v8248
    %v8953 = vunpack.c.l.b16 %v8249
    %v8954 = vunpack.c.h.b16 %v8249
    %v8955 = vunpack.c.l.b16 %v8250
    %v8956 = vunpack.c.h.b16 %v8250
    %v8957 = vunpack.c.l.b16 %v8251
    %v8958 = vunpack.c.h.b16 %v8251
    %v8959 = vunpack.c.l.b16 %v8252
    %v8960 = vunpack.c.h.b16 %v8252
    %v8961 = vunpack.c.l.b16 %v8253
    %v8962 = vunpack.c.h.b16 %v8253
    %v8963 = vunpack.c.l.b16 %v8254
    %v8964 = vunpack.c.h.b16 %v8254
    %v8965 = vunpack.c.l.b16 %v8255
    %v8966 = vunpack.c.h.b16 %v8255
    %v8967 = vunpack.c.l.b16 %v8256
    %v8968 = vunpack.c.h.b16 %v8256
    %v8969 = vunpack.c.l.b16 %v8257
    %v8970 = vunpack.c.h.b16 %v8257
    %v8971 = vunpack.c.l.b16 %v8258
    %v8972 = vunpack.c.h.b16 %v8258
    %v8973 = vunpack.c.l.b16 %v8259
    %v8974 = vunpack.c.h.b16 %v8259
    %v8975 = vunpack.c.l.b16 %v8260
    %v8976 = vunpack.c.h.b16 %v8260
    %v8977 = vunpack.c.l.b16 %v8261
    %v8978 = vunpack.c.h.b16 %v8261
    %v8979 = vunpack.c.l.b16 %v8262
    %v8980 = vunpack.c.h.b16 %v8262
    %v8981 = vunpack.c.l.b16 %v8263
    %v8982 = vunpack.c.h.b16 %v8263
    %v8983 = vunpack.c.l.b16 %v8264
    %v8984 = vunpack.c.h.b16 %v8264
    %v8985 = vunpack.c.l.b16 %v8265
    %v8986 = vunpack.c.h.b16 %v8265
    %v8987 = vunpack.c.l.b16 %v8266
    %v8988 = vunpack.c.h.b16 %v8266
    %v8989 = vunpack.c.l.b16 %v8267
    %v8990 = vunpack.c.h.b16 %v8267
    %v8991 = vunpack.c.l.b16 %v8268
    %v8992 = vunpack.c.h.b16 %v8268
    %v8993 = vunpack.c.l.b16 %v8269
    %v8994 = vunpack.c.h.b16 %v8269
    %v8995 = vunpack.c.l.b16 %v8270
    %v8996 = vunpack.c.h.b16 %v8270
    %v8997 = vunpack.c.l.b16 %v8271
    %v8998 = vunpack.c.h.b16 %v8271
    %v8999 = vunpack.c.l.b16 %v8272
    %v9000 = vunpack.c.h.b16 %v8272
    %v9001 = vunpack.c.l.b16 %v8273
    %v9002 = vunpack.c.h.b16 %v8273
    %v9003 = vunpack.c.l.b16 %v8274
    %v9004 = vunpack.c.h.b16 %v8274
    %v9005 = vunpack.c.l.b16 %v8275
    %v9006 = vunpack.c.h.b16 %v8275
    %v9007 = vunpack.c.l.b16 %v8276
    %v9008 = vunpack.c.h.b16 %v8276
    %v9009 = vunpack.c.l.b16 %v8277
    %v9010 = vunpack.c.h.b16 %v8277
    %v9011 = vunpack.c.l.b16 %v8278
    %v9012 = vunpack.c.h.b16 %v8278
    %v9013 = vunpack.c.l.b16 %v8279
    %v9014 = vunpack.c.h.b16 %v8279
    %v9015 = vunpack.c.l.b16 %v8280
    %v9016 = vunpack.c.h.b16 %v8280
    %v9017 = vunpack.c.l.b16 %v8281
    %v9018 = vunpack.c.h.b16 %v8281
    %v9019 = vunpack.c.l.b16 %v8282
    %v9020 = vunpack.c.h.b16 %v8282
    %v9021 = vunpack.c.l.b16 %v8283
    %v9022 = vunpack.c.h.b16 %v8283
    %v9023 = vunpack.c.l.b16 %v8284
    %v9024 = vunpack.c.h.b16 %v8284
    %v9025 = vunpack.c.l.b16 %v8285
    %v9026 = vunpack.c.h.b16 %v8285
    %v9027 = vunpack.c.l.b16 %v8286
    %v9028 = vunpack.c.h.b16 %v8286
    %v9029 = vunpack.c.l.b16 %v8287
    %v9030 = vunpack.c.h.b16 %v8287
    %v9031 = vunpack.c.l.b16 %v8288
    %v9032 = vunpack.c.h.b16 %v8288
    %v9033 = vunpack.c.l.b16 %v8289
    %v9034 = vunpack.c.h.b16 %v8289
    %v9035 = vunpack.c.l.b16 %v8290
    %v9036 = vunpack.c.h.b16 %v8290
    %v9037 = vunpack.c.l.b16 %v8291
    %v9038 = vunpack.c.h.b16 %v8291
    %v9039 = vunpack.c.l.b16 %v8292
    %v9040 = vunpack.c.h.b16 %v8292
    %v9041 = vunpack.c.l.b16 %v8293
    %v9042 = vunpack.c.h.b16 %v8293
    %v9043 = vunpack.c.l.b16 %v8294
    %v9044 = vunpack.c.h.b16 %v8294
    %v9045 = vunpack.c.l.b16 %v8295
    %v9046 = vunpack.c.h.b16 %v8295
    %v9047 = vunpack.c.l.b16 %v8296
    %v9048 = vunpack.c.h.b16 %v8296
    %v9049 = vunpack.c.l.b16 %v8297
    %v9050 = vunpack.c.h.b16 %v8297
    %v9051 = vunpack.c.l.b16 %v8298
    %v9052 = vunpack.c.h.b16 %v8298
    %v9053 = vunpack.c.l.b16 %v8299
    %v9054 = vunpack.c.h.b16 %v8299
    %v9055 = vunpack.c.l.b16 %v8300
    %v9056 = vunpack.c.h.b16 %v8300
    %v9057 = vunpack.c.l.b16 %v8301
    %v9058 = vunpack.c.h.b16 %v8301
    %v9059 = vunpack.c.l.b16 %v8302
    %v9060 = vunpack.c.h.b16 %v8302
    %v9061 = vunpack.c.l.b16 %v8303
    %v9062 = vunpack.c.h.b16 %v8303
    %v9063 = vunpack.c.l.b16 %v8304
    %v9064 = vunpack.c.h.b16 %v8304
    %v9065 = vunpack.c.l.b16 %v8305
    %v9066 = vunpack.c.h.b16 %v8305
    %v9067 = vunpack.c.l.b16 %v8306
    %v9068 = vunpack.c.h.b16 %v8306
    %v9069 = vunpack.c.l.b16 %v8307
    %v9070 = vunpack.c.h.b16 %v8307
    %v9071 = vunpack.c.l.b16 %v8308
    %v9072 = vunpack.c.h.b16 %v8308
    %v9073 = vunpack.c.l.b16 %v8309
    %v9074 = vunpack.c.h.b16 %v8309
    %v9075 = vunpack.c.l.b16 %v8310
    %v9076 = vunpack.c.h.b16 %v8310
    %v9077 = vunpack.c.l.b16 %v8311
    %v9078 = vunpack.c.h.b16 %v8311
    %v9079 = vunpack.c.l.b16 %v8312
    %v9080 = vunpack.c.h.b16 %v8312
    %v9081 = vunpack.c.l.b16 %v8313
    %v9082 = vunpack.c.h.b16 %v8313
    %v9083 = vunpack.c.l.b16 %v8314
    %v9084 = vunpack.c.h.b16 %v8314
    %v9085 = vunpack.c.l.b16 %v8315
    %v9086 = vunpack.c.h.b16 %v8315
    %v9087 = vunpack.c.l.b16 %v8316
    %v9088 = vunpack.c.h.b16 %v8316
    %v9089 = vunpack.c.l.b16 %v8317
    %v9090 = vunpack.c.h.b16 %v8317
    %v9091 = vunpack.c.l.b16 %v8318
    %v9092 = vunpack.c.h.b16 %v8318
    %v9093 = vunpack.c.l.b16 %v8319
    %v9094 = vunpack.c.h.b16 %v8319
    %v9095 = vunpack.c.l.b16 %v8320
    %v9096 = vunpack.c.h.b16 %v8320
    %v9097 = vunpack.c.l.b16 %v8321
    %v9098 = vunpack.c.h.b16 %v8321
    %v9099 = vunpack.c.l.b16 %v8322
    %v9100 = vunpack.c.h.b16 %v8322
    %v9101 = vunpack.c.l.b16 %v8323
    %v9102 = vunpack.c.h.b16 %v8323
    %v9103 = vunpack.c.l.b16 %v8324
    %v9104 = vunpack.c.h.b16 %v8324
    %v9105 = vunpack.c.l.b16 %v8325
    %v9106 = vunpack.c.h.b16 %v8325
    %v9107 = vunpack.c.l.b16 %v8326
    %v9108 = vunpack.c.h.b16 %v8326
    %v9109 = vunpack.c.l.b16 %v8327
    %v9110 = vunpack.c.h.b16 %v8327
    %v9111 = vunpack.c.l.b16 %v8328
    %v9112 = vunpack.c.h.b16 %v8328
    %v9113 = vunpack.c.l.b16 %v8329
    %v9114 = vunpack.c.h.b16 %v8329
    %v9115 = vunpack.c.l.b16 %v8330
    %v9116 = vunpack.c.h.b16 %v8330
    %v9117 = vunpack.c.l.b16 %v8331
    %v9118 = vunpack.c.h.b16 %v8331
    %v9119 = vunpack.c.l.b16 %v8332
    %v9120 = vunpack.c.h.b16 %v8332
    %v9121 = vunpack.c.l.b16 %v8333
    %v9122 = vunpack.c.h.b16 %v8333
    %v9123 = vunpack.c.l.b16 %v8334
    %v9124 = vunpack.c.h.b16 %v8334
    %v9125 = vunpack.c.l.b16 %v8335
    %v9126 = vunpack.c.h.b16 %v8335
    %v9127 = vunpack.c.l.b16 %v8336
    %v9128 = vunpack.c.h.b16 %v8336
    %v9129 = vunpack.c.l.b16 %v8337
    %v9130 = vunpack.c.h.b16 %v8337
    %v9131 = vunpack.c.l.b16 %v8338
    %v9132 = vunpack.c.h.b16 %v8338
    %v9133 = vunpack.c.l.b16 %v8339
    %v9134 = vunpack.c.h.b16 %v8339
    %v9135 = vunpack.c.l.b16 %v8340
    %v9136 = vunpack.c.h.b16 %v8340
    %v9137 = vunpack.c.l.b16 %v8341
    %v9138 = vunpack.c.h.b16 %v8341
    %v9139 = vunpack.c.l.b16 %v8342
    %v9140 = vunpack.c.h.b16 %v8342
    %v9141 = vpack.c.b16 %v8633, %v8629
    %v9142 = vpack.c.b16 %v8634, %v8630
    %v9143 = vpack.c.b16 %v8635, %v8631
    %v9144 = vpack.c.b16 %v8636, %v8632
    %v9145 = vpack.c.b16 %v8641, %v8637
    %v9146 = vpack.c.b16 %v8642, %v8638
    %v9147 = vpack.c.b16 %v8643, %v8639
    %v9148 = vpack.c.b16 %v8644, %v8640
    %v9149 = vpack.c.b16 %v8649, %v8645
    %v9150 = vpack.c.b16 %v8650, %v8646
    %v9151 = vpack.c.b16 %v8651, %v8647
    %v9152 = vpack.c.b16 %v8652, %v8648
    %v9153 = vpack.c.b16 %v8657, %v8653
    %v9154 = vpack.c.b16 %v8658, %v8654
    %v9155 = vpack.c.b16 %v8659, %v8655
    %v9156 = vpack.c.b16 %v8660, %v8656
    %v9157 = vpack.c.b16 %v8665, %v8661
    %v9158 = vpack.c.b16 %v8666, %v8662
    %v9159 = vpack.c.b16 %v8667, %v8663
    %v9160 = vpack.c.b16 %v8668, %v8664
    %v9161 = vpack.c.b16 %v8673, %v8669
    %v9162 = vpack.c.b16 %v8674, %v8670
    %v9163 = vpack.c.b16 %v8675, %v8671
    %v9164 = vpack.c.b16 %v8676, %v8672
    %v9165 = vpack.c.b16 %v8681, %v8677
    %v9166 = vpack.c.b16 %v8682, %v8678
    %v9167 = vpack.c.b16 %v8683, %v8679
    %v9168 = vpack.c.b16 %v8684, %v8680
    %v9169 = vpack.c.b16 %v8689, %v8685
    %v9170 = vpack.c.b16 %v8690, %v8686
    %v9171 = vpack.c.b16 %v8691, %v8687
    %v9172 = vpack.c.b16 %v8692, %v8688
    %v9173 = vpack.c.b16 %v8697, %v8693
    %v9174 = vpack.c.b16 %v8698, %v8694
    %v9175 = vpack.c.b16 %v8699, %v8695
    %v9176 = vpack.c.b16 %v8700, %v8696
    %v9177 = vpack.c.b16 %v8705, %v8701
    %v9178 = vpack.c.b16 %v8706, %v8702
    %v9179 = vpack.c.b16 %v8707, %v8703
    %v9180 = vpack.c.b16 %v8708, %v8704
    %v9181 = vpack.c.b16 %v8713, %v8709
    %v9182 = vpack.c.b16 %v8714, %v8710
    %v9183 = vpack.c.b16 %v8715, %v8711
    %v9184 = vpack.c.b16 %v8716, %v8712
    %v9185 = vpack.c.b16 %v8721, %v8717
    %v9186 = vpack.c.b16 %v8722, %v8718
    %v9187 = vpack.c.b16 %v8723, %v8719
    %v9188 = vpack.c.b16 %v8724, %v8720
    %v9189 = vpack.c.b16 %v8729, %v8725
    %v9190 = vpack.c.b16 %v8730, %v8726
    %v9191 = vpack.c.b16 %v8731, %v8727
    %v9192 = vpack.c.b16 %v8732, %v8728
    %v9193 = vpack.c.b16 %v8737, %v8733
    %v9194 = vpack.c.b16 %v8738, %v8734
    %v9195 = vpack.c.b16 %v8739, %v8735
    %v9196 = vpack.c.b16 %v8740, %v8736
    %v9197 = vpack.c.b16 %v8745, %v8741
    %v9198 = vpack.c.b16 %v8746, %v8742
    %v9199 = vpack.c.b16 %v8747, %v8743
    %v9200 = vpack.c.b16 %v8748, %v8744
    %v9201 = vpack.c.b16 %v8753, %v8749
    %v9202 = vpack.c.b16 %v8754, %v8750
    %v9203 = vpack.c.b16 %v8755, %v8751
    %v9204 = vpack.c.b16 %v8756, %v8752
    %v9205 = vpack.c.b16 %v8761, %v8757
    %v9206 = vpack.c.b16 %v8762, %v8758
    %v9207 = vpack.c.b16 %v8763, %v8759
    %v9208 = vpack.c.b16 %v8764, %v8760
    %v9209 = vpack.c.b16 %v8769, %v8765
    %v9210 = vpack.c.b16 %v8770, %v8766
    %v9211 = vpack.c.b16 %v8771, %v8767
    %v9212 = vpack.c.b16 %v8772, %v8768
    %v9213 = vpack.c.b16 %v8777, %v8773
    %v9214 = vpack.c.b16 %v8778, %v8774
    %v9215 = vpack.c.b16 %v8779, %v8775
    %v9216 = vpack.c.b16 %v8780, %v8776
    %v9217 = vpack.c.b16 %v8785, %v8781
    %v9218 = vpack.c.b16 %v8786, %v8782
    %v9219 = vpack.c.b16 %v8787, %v8783
    %v9220 = vpack.c.b16 %v8788, %v8784
    %v9221 = vpack.c.b16 %v8793, %v8789
    %v9222 = vpack.c.b16 %v8794, %v8790
    %v9223 = vpack.c.b16 %v8795, %v8791
    %v9224 = vpack.c.b16 %v8796, %v8792
    %v9225 = vpack.c.b16 %v8801, %v8797
    %v9226 = vpack.c.b16 %v8802, %v8798
    %v9227 = vpack.c.b16 %v8803, %v8799
    %v9228 = vpack.c.b16 %v8804, %v8800
    %v9229 = vpack.c.b16 %v8809, %v8805
    %v9230 = vpack.c.b16 %v8810, %v8806
    %v9231 = vpack.c.b16 %v8811, %v8807
    %v9232 = vpack.c.b16 %v8812, %v8808
    %v9233 = vpack.c.b16 %v8817, %v8813
    %v9234 = vpack.c.b16 %v8818, %v8814
    %v9235 = vpack.c.b16 %v8819, %v8815
    %v9236 = vpack.c.b16 %v8820, %v8816
    %v9237 = vpack.c.b16 %v8825, %v8821
    %v9238 = vpack.c.b16 %v8826, %v8822
    %v9239 = vpack.c.b16 %v8827, %v8823
    %v9240 = vpack.c.b16 %v8828, %v8824
    %v9241 = vpack.c.b16 %v8833, %v8829
    %v9242 = vpack.c.b16 %v8834, %v8830
    %v9243 = vpack.c.b16 %v8835, %v8831
    %v9244 = vpack.c.b16 %v8836, %v8832
    %v9245 = vpack.c.b16 %v8841, %v8837
    %v9246 = vpack.c.b16 %v8842, %v8838
    %v9247 = vpack.c.b16 %v8843, %v8839
    %v9248 = vpack.c.b16 %v8844, %v8840
    %v9249 = vpack.c.b16 %v8849, %v8845
    %v9250 = vpack.c.b16 %v8850, %v8846
    %v9251 = vpack.c.b16 %v8851, %v8847
    %v9252 = vpack.c.b16 %v8852, %v8848
    %v9253 = vpack.c.b16 %v8857, %v8853
    %v9254 = vpack.c.b16 %v8858, %v8854
    %v9255 = vpack.c.b16 %v8859, %v8855
    %v9256 = vpack.c.b16 %v8860, %v8856
    %v9257 = vpack.c.b16 %v8865, %v8861
    %v9258 = vpack.c.b16 %v8866, %v8862
    %v9259 = vpack.c.b16 %v8867, %v8863
    %v9260 = vpack.c.b16 %v8868, %v8864
    %v9261 = vpack.c.b16 %v8873, %v8869
    %v9262 = vpack.c.b16 %v8874, %v8870
    %v9263 = vpack.c.b16 %v8875, %v8871
    %v9264 = vpack.c.b16 %v8876, %v8872
    %v9265 = vpack.c.b16 %v8881, %v8877
    %v9266 = vpack.c.b16 %v8882, %v8878
    %v9267 = vpack.c.b16 %v8883, %v8879
    %v9268 = vpack.c.b16 %v8884, %v8880
    %v9269 = vpack.c.b16 %v8889, %v8885
    %v9270 = vpack.c.b16 %v8890, %v8886
    %v9271 = vpack.c.b16 %v8891, %v8887
    %v9272 = vpack.c.b16 %v8892, %v8888
    %v9273 = vpack.c.b16 %v8897, %v8893
    %v9274 = vpack.c.b16 %v8898, %v8894
    %v9275 = vpack.c.b16 %v8899, %v8895
    %v9276 = vpack.c.b16 %v8900, %v8896
    %v9277 = vpack.c.b16 %v8905, %v8901
    %v9278 = vpack.c.b16 %v8906, %v8902
    %v9279 = vpack.c.b16 %v8907, %v8903
    %v9280 = vpack.c.b16 %v8908, %v8904
    %v9281 = vpack.c.b16 %v8913, %v8909
    %v9282 = vpack.c.b16 %v8914, %v8910
    %v9283 = vpack.c.b16 %v8915, %v8911
    %v9284 = vpack.c.b16 %v8916, %v8912
    %v9285 = vpack.c.b16 %v8921, %v8917
    %v9286 = vpack.c.b16 %v8922, %v8918
    %v9287 = vpack.c.b16 %v8923, %v8919
    %v9288 = vpack.c.b16 %v8924, %v8920
    %v9289 = vpack.c.b16 %v8929, %v8925
    %v9290 = vpack.c.b16 %v8930, %v8926
    %v9291 = vpack.c.b16 %v8931, %v8927
    %v9292 = vpack.c.b16 %v8932, %v8928
    %v9293 = vpack.c.b16 %v8937, %v8933
    %v9294 = vpack.c.b16 %v8938, %v8934
    %v9295 = vpack.c.b16 %v8939, %v8935
    %v9296 = vpack.c.b16 %v8940, %v8936
    %v9297 = vpack.c.b16 %v8945, %v8941
    %v9298 = vpack.c.b16 %v8946, %v8942
    %v9299 = vpack.c.b16 %v8947, %v8943
    %v9300 = vpack.c.b16 %v8948, %v8944
    %v9301 = vpack.c.b16 %v8953, %v8949
    %v9302 = vpack.c.b16 %v8954, %v8950
    %v9303 = vpack.c.b16 %v8955, %v8951
    %v9304 = vpack.c.b16 %v8956, %v8952
    %v9305 = vpack.c.b16 %v8961, %v8957
    %v9306 = vpack.c.b16 %v8962, %v8958
    %v9307 = vpack.c.b16 %v8963, %v8959
    %v9308 = vpack.c.b16 %v8964, %v8960
    %v9309 = vpack.c.b16 %v8969, %v8965
    %v9310 = vpack.c.b16 %v8970, %v8966
    %v9311 = vpack.c.b16 %v8971, %v8967
    %v9312 = vpack.c.b16 %v8972, %v8968
    %v9313 = vpack.c.b16 %v8977, %v8973
    %v9314 = vpack.c.b16 %v8978, %v8974
    %v9315 = vpack.c.b16 %v8979, %v8975
    %v9316 = vpack.c.b16 %v8980, %v8976
    %v9317 = vpack.c.b16 %v8985, %v8981
    %v9318 = vpack.c.b16 %v8986, %v8982
    %v9319 = vpack.c.b16 %v8987, %v8983
    %v9320 = vpack.c.b16 %v8988, %v8984
    %v9321 = vpack.c.b16 %v8993, %v8989
    %v9322 = vpack.c.b16 %v8994, %v8990
    %v9323 = vpack.c.b16 %v8995, %v8991
    %v9324 = vpack.c.b16 %v8996, %v8992
    %v9325 = vpack.c.b16 %v9001, %v8997
    %v9326 = vpack.c.b16 %v9002, %v8998
    %v9327 = vpack.c.b16 %v9003, %v8999
    %v9328 = vpack.c.b16 %v9004, %v9000
    %v9329 = vpack.c.b16 %v9009, %v9005
    %v9330 = vpack.c.b16 %v9010, %v9006
    %v9331 = vpack.c.b16 %v9011, %v9007
    %v9332 = vpack.c.b16 %v9012, %v9008
    %v9333 = vpack.c.b16 %v9017, %v9013
    %v9334 = vpack.c.b16 %v9018, %v9014
    %v9335 = vpack.c.b16 %v9019, %v9015
    %v9336 = vpack.c.b16 %v9020, %v9016
    %v9337 = vpack.c.b16 %v9025, %v9021
    %v9338 = vpack.c.b16 %v9026, %v9022
    %v9339 = vpack.c.b16 %v9027, %v9023
    %v9340 = vpack.c.b16 %v9028, %v9024
    %v9341 = vpack.c.b16 %v9033, %v9029
    %v9342 = vpack.c.b16 %v9034, %v9030
    %v9343 = vpack.c.b16 %v9035, %v9031
    %v9344 = vpack.c.b16 %v9036, %v9032
    %v9345 = vpack.c.b16 %v9041, %v9037
    %v9346 = vpack.c.b16 %v9042, %v9038
    %v9347 = vpack.c.b16 %v9043, %v9039
    %v9348 = vpack.c.b16 %v9044, %v9040
    %v9349 = vpack.c.b16 %v9049, %v9045
    %v9350 = vpack.c.b16 %v9050, %v9046
    %v9351 = vpack.c.b16 %v9051, %v9047
    %v9352 = vpack.c.b16 %v9052, %v9048
    %v9353 = vpack.c.b16 %v9057, %v9053
    %v9354 = vpack.c.b16 %v9058, %v9054
    %v9355 = vpack.c.b16 %v9059, %v9055
    %v9356 = vpack.c.b16 %v9060, %v9056
    %v9357 = vpack.c.b16 %v9065, %v9061
    %v9358 = vpack.c.b16 %v9066, %v9062
    %v9359 = vpack.c.b16 %v9067, %v9063
    %v9360 = vpack.c.b16 %v9068, %v9064
    %v9361 = vpack.c.b16 %v9073, %v9069
    %v9362 = vpack.c.b16 %v9074, %v9070
    %v9363 = vpack.c.b16 %v9075, %v9071
    %v9364 = vpack.c.b16 %v9076, %v9072
    %v9365 = vpack.c.b16 %v9081, %v9077
    %v9366 = vpack.c.b16 %v9082, %v9078
    %v9367 = vpack.c.b16 %v9083, %v9079
    %v9368 = vpack.c.b16 %v9084, %v9080
    %v9369 = vpack.c.b16 %v9089, %v9085
    %v9370 = vpack.c.b16 %v9090, %v9086
    %v9371 = vpack.c.b16 %v9091, %v9087
    %v9372 = vpack.c.b16 %v9092, %v9088
    %v9373 = vpack.c.b16 %v9097, %v9093
    %v9374 = vpack.c.b16 %v9098, %v9094
    %v9375 = vpack.c.b16 %v9099, %v9095
    %v9376 = vpack.c.b16 %v9100, %v9096
    %v9377 = vpack.c.b16 %v9105, %v9101
    %v9378 = vpack.c.b16 %v9106, %v9102
    %v9379 = vpack.c.b16 %v9107, %v9103
    %v9380 = vpack.c.b16 %v9108, %v9104
    %v9381 = vpack.c.b16 %v9113, %v9109
    %v9382 = vpack.c.b16 %v9114, %v9110
    %v9383 = vpack.c.b16 %v9115, %v9111
    %v9384 = vpack.c.b16 %v9116, %v9112
    %v9385 = vpack.c.b16 %v9121, %v9117
    %v9386 = vpack.c.b16 %v9122, %v9118
    %v9387 = vpack.c.b16 %v9123, %v9119
    %v9388 = vpack.c.b16 %v9124, %v9120
    %v9389 = vpack.c.b16 %v9129, %v9125
    %v9390 = vpack.c.b16 %v9130, %v9126
    %v9391 = vpack.c.b16 %v9131, %v9127
    %v9392 = vpack.c.b16 %v9132, %v9128
    %v9393 = vpack.c.b16 %v9137, %v9133
    %v9394 = vpack.c.b16 %v9138, %v9134
    %v9395 = vpack.c.b16 %v9139, %v9135
    %v9396 = vpack.c.b16 %v9140, %v9136
    %9653 = vmatprep.subr.bf16.mxu0 %v9170
    %9654 = vmatpush1.bf16.msra.mxu0 %v9169
    %9655 = vmatprep.subr.bf16.mxu0 %v9166
    %9656 = vmatpush1.bf16.msra.mxu0 %v9165
    %9657 = vmatprep.subr.bf16.mxu0 %v9162
    %9658 = vmatpush1.bf16.msra.mxu0 %v9161
    %9659 = vmatprep.subr.bf16.mxu0 %v9158
    %9660 = vmatpush1.bf16.msra.mxu0 %v9157
    %9661 = vmatprep.subr.bf16.mxu0 %v9154
    %9662 = vmatpush1.bf16.msra.mxu0 %v9153
    %9663 = vmatprep.subr.bf16.mxu0 %v9150
    %9664 = vmatpush1.bf16.msra.mxu0 %v9149
    %9665 = vmatprep.subr.bf16.mxu0 %v9146
    %9666 = vmatpush1.bf16.msra.mxu0 %v9145
    %9667 = vmatprep.subr.bf16.mxu0 %v9142
    %9668 = vmatpush1.bf16.msra.mxu0 %v9141
    %9669 = vmatprep.subr.bf16.mxu0 %v9202
    %9670 = vmatpush2.bf16.msra.mxu0 %v9201
    %9671 = vmatprep.subr.bf16.mxu0 %v9198
    %9672 = vmatpush2.bf16.msra.mxu0 %v9197
    %9673 = vmatprep.subr.bf16.mxu0 %v9194
    %9674 = vmatpush2.bf16.msra.mxu0 %v9193
    %9675 = vmatprep.subr.bf16.mxu0 %v9190
    %9676 = vmatpush2.bf16.msra.mxu0 %v9189
    %9677 = vmatprep.subr.bf16.mxu0 %v9186
    %9678 = vmatpush2.bf16.msra.mxu0 %v9185
    %9679 = vmatprep.subr.bf16.mxu0 %v9182
    %9680 = vmatpush2.bf16.msra.mxu0 %v9181
    %9681 = vmatprep.subr.bf16.mxu0 %v9178
    %9682 = vmatpush2.bf16.msra.mxu0 %v9177
    %9683 = vmatprep.subr.bf16.mxu0 %v9174
    %9684 = vmatpush2.bf16.msra.mxu0 %v9173
    %9685 = vmatprep.mubr.bf16.mxu0 %v8345
    %9686 = vmatmul.mubr.bf16.gmra.mxu0 %v8344
    %v9687 = vpop.f32.mrf.mxu0
    %v9688 = vadd.f32 %v8356, %v9687
    %v9689 = vpop.f32.mrf.mxu0
    %v9690 = vadd.f32 %v8360, %v9689
    %v9691 = vpop.f32.mrf.mxu0
    %v9692 = vpop.f32.mrf.mxu0
    %9693 = vdwg.mxu0
    %9694 = vmatprep.subr.bf16.mxu0 %v9234
    %9695 = vmatpush1.bf16.msra.mxu0 %v9233
    %9696 = vmatprep.subr.bf16.mxu0 %v9230
    %9697 = vmatpush1.bf16.msra.mxu0 %v9229
    %9698 = vmatprep.subr.bf16.mxu0 %v9226
    %9699 = vmatpush1.bf16.msra.mxu0 %v9225
    %9700 = vmatprep.subr.bf16.mxu0 %v9222
    %9701 = vmatpush1.bf16.msra.mxu0 %v9221
    %9702 = vmatprep.subr.bf16.mxu0 %v9218
    %9703 = vmatpush1.bf16.msra.mxu0 %v9217
    %9704 = vmatprep.subr.bf16.mxu0 %v9214
    %9705 = vmatpush1.bf16.msra.mxu0 %v9213
    %9706 = vmatprep.subr.bf16.mxu0 %v9210
    %9707 = vmatpush1.bf16.msra.mxu0 %v9209
    %9708 = vmatprep.subr.bf16.mxu0 %v9206
    %9709 = vmatpush1.bf16.msra.mxu0 %v9205
    %9710 = vmatprep.subr.bf16.mxu0 %v9266
    %9711 = vmatpush2.bf16.msra.mxu0 %v9265
    %9712 = vmatprep.subr.bf16.mxu0 %v9262
    %9713 = vmatpush2.bf16.msra.mxu0 %v9261
    %9714 = vmatprep.subr.bf16.mxu0 %v9258
    %9715 = vmatpush2.bf16.msra.mxu0 %v9257
    %9716 = vmatprep.subr.bf16.mxu0 %v9254
    %9717 = vmatpush2.bf16.msra.mxu0 %v9253
    %9718 = vmatprep.subr.bf16.mxu0 %v9250
    %9719 = vmatpush2.bf16.msra.mxu0 %v9249
    %9720 = vmatprep.subr.bf16.mxu0 %v9246
    %9721 = vmatpush2.bf16.msra.mxu0 %v9245
    %9722 = vmatprep.subr.bf16.mxu0 %v9242
    %9723 = vmatpush2.bf16.msra.mxu0 %v9241
    %9724 = vmatprep.subr.bf16.mxu0 %v9238
    %9725 = vmatpush2.bf16.msra.mxu0 %v9237
    %9726 = vmatprep.mubr.bf16.mxu0 %v8347
    %9727 = vmatmul.mubr.bf16.gmra.mxu0 %v8346
    %v9728 = vpop.f32.mrf.mxu0
    %v9729 = vadd.f32 %v9688, %v9728
    %v9730 = vpop.f32.mrf.mxu0
    %v9731 = vadd.f32 %v9690, %v9730
    %v9732 = vpop.f32.mrf.mxu0
    %v9733 = vpop.f32.mrf.mxu0
    %9734 = vdwg.mxu0
    %9735 = vmatprep.subr.bf16.mxu0 %v9298
    %9736 = vmatpush1.bf16.msra.mxu0 %v9297
    %9737 = vmatprep.subr.bf16.mxu0 %v9294
    %9738 = vmatpush1.bf16.msra.mxu0 %v9293
    %9739 = vmatprep.subr.bf16.mxu0 %v9290
    %9740 = vmatpush1.bf16.msra.mxu0 %v9289
    %9741 = vmatprep.subr.bf16.mxu0 %v9286
    %9742 = vmatpush1.bf16.msra.mxu0 %v9285
    %9743 = vmatprep.subr.bf16.mxu0 %v9282
    %9744 = vmatpush1.bf16.msra.mxu0 %v9281
    %9745 = vmatprep.subr.bf16.mxu0 %v9278
    %9746 = vmatpush1.bf16.msra.mxu0 %v9277
    %9747 = vmatprep.subr.bf16.mxu0 %v9274
    %9748 = vmatpush1.bf16.msra.mxu0 %v9273
    %9749 = vmatprep.subr.bf16.mxu0 %v9270
    %9750 = vmatpush1.bf16.msra.mxu0 %v9269
    %9751 = vmatprep.subr.bf16.mxu0 %v9330
    %9752 = vmatpush2.bf16.msra.mxu0 %v9329
    %9753 = vmatprep.subr.bf16.mxu0 %v9326
    %9754 = vmatpush2.bf16.msra.mxu0 %v9325
    %9755 = vmatprep.subr.bf16.mxu0 %v9322
    %9756 = vmatpush2.bf16.msra.mxu0 %v9321
    %9757 = vmatprep.subr.bf16.mxu0 %v9318
    %9758 = vmatpush2.bf16.msra.mxu0 %v9317
    %9759 = vmatprep.subr.bf16.mxu0 %v9314
    %9760 = vmatpush2.bf16.msra.mxu0 %v9313
    %9761 = vmatprep.subr.bf16.mxu0 %v9310
    %9762 = vmatpush2.bf16.msra.mxu0 %v9309
    %9763 = vmatprep.subr.bf16.mxu0 %v9306
    %9764 = vmatpush2.bf16.msra.mxu0 %v9305
    %9765 = vmatprep.subr.bf16.mxu0 %v9302
    %9766 = vmatpush2.bf16.msra.mxu0 %v9301
    %9767 = vmatprep.mubr.bf16.mxu0 %v8349
    %9768 = vmatmul.mubr.bf16.gmra.mxu0 %v8348
    %v9769 = vpop.f32.mrf.mxu0
    %v9770 = vadd.f32 %v9729, %v9769
    %v9771 = vpop.f32.mrf.mxu0
    %v9772 = vadd.f32 %v9731, %v9771
    %v9773 = vpop.f32.mrf.mxu0
    %v9774 = vpop.f32.mrf.mxu0
    %9775 = vdwg.mxu0
    %9776 = vmatprep.subr.bf16.mxu0 %v9362
    %9777 = vmatpush1.bf16.msra.mxu0 %v9361
    %9778 = vmatprep.subr.bf16.mxu0 %v9358
    %9779 = vmatpush1.bf16.msra.mxu0 %v9357
    %9780 = vmatprep.subr.bf16.mxu0 %v9354
    %9781 = vmatpush1.bf16.msra.mxu0 %v9353
    %9782 = vmatprep.subr.bf16.mxu0 %v9350
    %9783 = vmatpush1.bf16.msra.mxu0 %v9349
    %9784 = vmatprep.subr.bf16.mxu0 %v9346
    %9785 = vmatpush1.bf16.msra.mxu0 %v9345
    %9786 = vmatprep.subr.bf16.mxu0 %v9342
    %9787 = vmatpush1.bf16.msra.mxu0 %v9341
    %9788 = vmatprep.subr.bf16.mxu0 %v9338
    %9789 = vmatpush1.bf16.msra.mxu0 %v9337
    %9790 = vmatprep.subr.bf16.mxu0 %v9334
    %9791 = vmatpush1.bf16.msra.mxu0 %v9333
    %9792 = vmatprep.subr.bf16.mxu0 %v9394
    %9793 = vmatpush2.bf16.msra.mxu0 %v9393
    %9794 = vmatprep.subr.bf16.mxu0 %v9390
    %9795 = vmatpush2.bf16.msra.mxu0 %v9389
    %9796 = vmatprep.subr.bf16.mxu0 %v9386
    %9797 = vmatpush2.bf16.msra.mxu0 %v9385
    %9798 = vmatprep.subr.bf16.mxu0 %v9382
    %9799 = vmatpush2.bf16.msra.mxu0 %v9381
    %9800 = vmatprep.subr.bf16.mxu0 %v9378
    %9801 = vmatpush2.bf16.msra.mxu0 %v9377
    %9802 = vmatprep.subr.bf16.mxu0 %v9374
    %9803 = vmatpush2.bf16.msra.mxu0 %v9373
    %9804 = vmatprep.subr.bf16.mxu0 %v9370
    %9805 = vmatpush2.bf16.msra.mxu0 %v9369
    %9806 = vmatprep.subr.bf16.mxu0 %v9366
    %9807 = vmatpush2.bf16.msra.mxu0 %v9365
    %9808 = vmatprep.mubr.bf16.mxu0 %v8351
    %9809 = vmatmul.mubr.bf16.gmra.mxu0 %v8350
    %v9810 = vpop.f32.mrf.mxu0
    %v9811 = vadd.f32 %v9770, %v9810
    %v9812 = vpop.f32.mrf.mxu0
    %v9813 = vadd.f32 %v9772, %v9812
    %v9814 = vpop.f32.mrf.mxu0
    %v9815 = vpop.f32.mrf.mxu0
    %9816 = vdwg.mxu0
    %9817 = vmatprep.subr.bf16.mxu0 %v9172
    %9818 = vmatpush1.bf16.msra.mxu0 %v9171
    %9819 = vmatprep.subr.bf16.mxu0 %v9168
    %9820 = vmatpush1.bf16.msra.mxu0 %v9167
    %9821 = vmatprep.subr.bf16.mxu0 %v9164
    %9822 = vmatpush1.bf16.msra.mxu0 %v9163
    %9823 = vmatprep.subr.bf16.mxu0 %v9160
    %9824 = vmatpush1.bf16.msra.mxu0 %v9159
    %9825 = vmatprep.subr.bf16.mxu0 %v9156
    %9826 = vmatpush1.bf16.msra.mxu0 %v9155
    %9827 = vmatprep.subr.bf16.mxu0 %v9152
    %9828 = vmatpush1.bf16.msra.mxu0 %v9151
    %9829 = vmatprep.subr.bf16.mxu0 %v9148
    %9830 = vmatpush1.bf16.msra.mxu0 %v9147
    %9831 = vmatprep.subr.bf16.mxu0 %v9144
    %9832 = vmatpush1.bf16.msra.mxu0 %v9143
    %9833 = vmatprep.subr.bf16.mxu0 %v9204
    %9834 = vmatpush2.bf16.msra.mxu0 %v9203
    %9835 = vmatprep.subr.bf16.mxu0 %v9200
    %9836 = vmatpush2.bf16.msra.mxu0 %v9199
    %9837 = vmatprep.subr.bf16.mxu0 %v9196
    %9838 = vmatpush2.bf16.msra.mxu0 %v9195
    %9839 = vmatprep.subr.bf16.mxu0 %v9192
    %9840 = vmatpush2.bf16.msra.mxu0 %v9191
    %9841 = vmatprep.subr.bf16.mxu0 %v9188
    %9842 = vmatpush2.bf16.msra.mxu0 %v9187
    %9843 = vmatprep.subr.bf16.mxu0 %v9184
    %9844 = vmatpush2.bf16.msra.mxu0 %v9183
    %9845 = vmatprep.subr.bf16.mxu0 %v9180
    %9846 = vmatpush2.bf16.msra.mxu0 %v9179
    %9847 = vmatprep.subr.bf16.mxu0 %v9176
    %9848 = vmatpush2.bf16.msra.mxu0 %v9175
    %9849 = vmatprep.mubr.bf16.mxu0 %v8345
    %9850 = vmatmul.mubr.bf16.gmra.mxu0 %v8344
    %v9851 = vpop.f32.mrf.mxu0
    %v9852 = vadd.f32 %v8364, %v9851
    %v9853 = vpop.f32.mrf.mxu0
    %v9854 = vadd.f32 %v8368, %v9853
    %v9855 = vpop.f32.mrf.mxu0
    %v9856 = vpop.f32.mrf.mxu0
    %9857 = vdwg.mxu0
    %9858 = vmatprep.subr.bf16.mxu0 %v9236
    %9859 = vmatpush1.bf16.msra.mxu0 %v9235
    %9860 = vmatprep.subr.bf16.mxu0 %v9232
    %9861 = vmatpush1.bf16.msra.mxu0 %v9231
    %9862 = vmatprep.subr.bf16.mxu0 %v9228
    %9863 = vmatpush1.bf16.msra.mxu0 %v9227
    %9864 = vmatprep.subr.bf16.mxu0 %v9224
    %9865 = vmatpush1.bf16.msra.mxu0 %v9223
    %9866 = vmatprep.subr.bf16.mxu0 %v9220
    %9867 = vmatpush1.bf16.msra.mxu0 %v9219
    %9868 = vmatprep.subr.bf16.mxu0 %v9216
    %9869 = vmatpush1.bf16.msra.mxu0 %v9215
    %9870 = vmatprep.subr.bf16.mxu0 %v9212
    %9871 = vmatpush1.bf16.msra.mxu0 %v9211
    %9872 = vmatprep.subr.bf16.mxu0 %v9208
    %9873 = vmatpush1.bf16.msra.mxu0 %v9207
    %9874 = vmatprep.subr.bf16.mxu0 %v9268
    %9875 = vmatpush2.bf16.msra.mxu0 %v9267
    %9876 = vmatprep.subr.bf16.mxu0 %v9264
    %9877 = vmatpush2.bf16.msra.mxu0 %v9263
    %9878 = vmatprep.subr.bf16.mxu0 %v9260
    %9879 = vmatpush2.bf16.msra.mxu0 %v9259
    %9880 = vmatprep.subr.bf16.mxu0 %v9256
    %9881 = vmatpush2.bf16.msra.mxu0 %v9255
    %9882 = vmatprep.subr.bf16.mxu0 %v9252
    %9883 = vmatpush2.bf16.msra.mxu0 %v9251
    %9884 = vmatprep.subr.bf16.mxu0 %v9248
    %9885 = vmatpush2.bf16.msra.mxu0 %v9247
    %9886 = vmatprep.subr.bf16.mxu0 %v9244
    %9887 = vmatpush2.bf16.msra.mxu0 %v9243
    %9888 = vmatprep.subr.bf16.mxu0 %v9240
    %9889 = vmatpush2.bf16.msra.mxu0 %v9239
    %9890 = vmatprep.mubr.bf16.mxu0 %v8347
    %9891 = vmatmul.mubr.bf16.gmra.mxu0 %v8346
    %v9892 = vpop.f32.mrf.mxu0
    %v9893 = vadd.f32 %v9852, %v9892
    %v9894 = vpop.f32.mrf.mxu0
    %v9895 = vadd.f32 %v9854, %v9894
    %v9896 = vpop.f32.mrf.mxu0
    %v9897 = vpop.f32.mrf.mxu0
    %9898 = vdwg.mxu0
    %9899 = vmatprep.subr.bf16.mxu0 %v9300
    %9900 = vmatpush1.bf16.msra.mxu0 %v9299
    %9901 = vmatprep.subr.bf16.mxu0 %v9296
    %9902 = vmatpush1.bf16.msra.mxu0 %v9295
    %9903 = vmatprep.subr.bf16.mxu0 %v9292
    %9904 = vmatpush1.bf16.msra.mxu0 %v9291
    %9905 = vmatprep.subr.bf16.mxu0 %v9288
    %9906 = vmatpush1.bf16.msra.mxu0 %v9287
    %9907 = vmatprep.subr.bf16.mxu0 %v9284
    %9908 = vmatpush1.bf16.msra.mxu0 %v9283
    %9909 = vmatprep.subr.bf16.mxu0 %v9280
    %9910 = vmatpush1.bf16.msra.mxu0 %v9279
    %9911 = vmatprep.subr.bf16.mxu0 %v9276
    %9912 = vmatpush1.bf16.msra.mxu0 %v9275
    %9913 = vmatprep.subr.bf16.mxu0 %v9272
    %9914 = vmatpush1.bf16.msra.mxu0 %v9271
    %9915 = vmatprep.subr.bf16.mxu0 %v9332
    %9916 = vmatpush2.bf16.msra.mxu0 %v9331
    %9917 = vmatprep.subr.bf16.mxu0 %v9328
    %9918 = vmatpush2.bf16.msra.mxu0 %v9327
    %9919 = vmatprep.subr.bf16.mxu0 %v9324
    %9920 = vmatpush2.bf16.msra.mxu0 %v9323
    %9921 = vmatprep.subr.bf16.mxu0 %v9320
    %9922 = vmatpush2.bf16.msra.mxu0 %v9319
    %9923 = vmatprep.subr.bf16.mxu0 %v9316
    %9924 = vmatpush2.bf16.msra.mxu0 %v9315
    %9925 = vmatprep.subr.bf16.mxu0 %v9312
    %9926 = vmatpush2.bf16.msra.mxu0 %v9311
    %9927 = vmatprep.subr.bf16.mxu0 %v9308
    %9928 = vmatpush2.bf16.msra.mxu0 %v9307
    %9929 = vmatprep.subr.bf16.mxu0 %v9304
    %9930 = vmatpush2.bf16.msra.mxu0 %v9303
    %9931 = vmatprep.mubr.bf16.mxu0 %v8349
    %9932 = vmatmul.mubr.bf16.gmra.mxu0 %v8348
    %v9933 = vpop.f32.mrf.mxu0
    %v9934 = vadd.f32 %v9893, %v9933
    %v9935 = vpop.f32.mrf.mxu0
    %v9936 = vadd.f32 %v9895, %v9935
    %v9937 = vpop.f32.mrf.mxu0
    %v9938 = vpop.f32.mrf.mxu0
    %9939 = vdwg.mxu0
    %9940 = vmatprep.subr.bf16.mxu0 %v9364
    %9941 = vmatpush1.bf16.msra.mxu0 %v9363
    %9942 = vmatprep.subr.bf16.mxu0 %v9360
    %9943 = vmatpush1.bf16.msra.mxu0 %v9359
    %9944 = vmatprep.subr.bf16.mxu0 %v9356
    %9945 = vmatpush1.bf16.msra.mxu0 %v9355
    %9946 = vmatprep.subr.bf16.mxu0 %v9352
    %9947 = vmatpush1.bf16.msra.mxu0 %v9351
    %9948 = vmatprep.subr.bf16.mxu0 %v9348
    %9949 = vmatpush1.bf16.msra.mxu0 %v9347
    %9950 = vmatprep.subr.bf16.mxu0 %v9344
    %9951 = vmatpush1.bf16.msra.mxu0 %v9343
    %9952 = vmatprep.subr.bf16.mxu0 %v9340
    %9953 = vmatpush1.bf16.msra.mxu0 %v9339
    %9954 = vmatprep.subr.bf16.mxu0 %v9336
    %9955 = vmatpush1.bf16.msra.mxu0 %v9335
    %9956 = vmatprep.subr.bf16.mxu0 %v9396
    %9957 = vmatpush2.bf16.msra.mxu0 %v9395
    %9958 = vmatprep.subr.bf16.mxu0 %v9392
    %9959 = vmatpush2.bf16.msra.mxu0 %v9391
    %9960 = vmatprep.subr.bf16.mxu0 %v9388
    %9961 = vmatpush2.bf16.msra.mxu0 %v9387
    %9962 = vmatprep.subr.bf16.mxu0 %v9384
    %9963 = vmatpush2.bf16.msra.mxu0 %v9383
    %9964 = vmatprep.subr.bf16.mxu0 %v9380
    %9965 = vmatpush2.bf16.msra.mxu0 %v9379
    %9966 = vmatprep.subr.bf16.mxu0 %v9376
    %9967 = vmatpush2.bf16.msra.mxu0 %v9375
    %9968 = vmatprep.subr.bf16.mxu0 %v9372
    %9969 = vmatpush2.bf16.msra.mxu0 %v9371
    %9970 = vmatprep.subr.bf16.mxu0 %v9368
    %9971 = vmatpush2.bf16.msra.mxu0 %v9367
    %9972 = vmatprep.mubr.bf16.mxu0 %v8351
    %9973 = vmatmul.mubr.bf16.gmra.mxu0 %v8350
    %v9974 = vpop.f32.mrf.mxu0
    %v9975 = vadd.f32 %v9934, %v9974
    %v9976 = vpop.f32.mrf.mxu0
    %v9977 = vadd.f32 %v9936, %v9976
    %v9978 = vpop.f32.mrf.mxu0
    %v9979 = vpop.f32.mrf.mxu0
    %9980 = vdwg.mxu0
    %v9981 = vmax.f32 %v9811, 0.0
    %v9982 = vmax.f32 %v9813, 0.0
    %v9983 = vmax.f32 %v9975, 0.0
    %v9984 = vmax.f32 %v9977, 0.0
    %v9985 = vld [vmem:[#allocation10] sm:$0xff]
    %v9986 = vld [vmem:[#allocation10 + $0x8] sm:$0xff]
    %v9987 = vld [vmem:[#allocation10 + $0x10] sm:$0xff]
    %v9988 = vld [vmem:[#allocation10 + $0x18] sm:$0xff]
    %v9989 = vld [vmem:[#allocation10 + $0x20] sm:$0xff]
    %v9990 = vld [vmem:[#allocation10 + $0x28] sm:$0xff]
    %v9991 = vld [vmem:[#allocation10 + $0x30] sm:$0xff]
    %v9992 = vld [vmem:[#allocation10 + $0x38] sm:$0xff]
    %v9993 = vld [vmem:[#allocation10 + $0x40] sm:$0xff]
    %v9994 = vld [vmem:[#allocation10 + $0x48] sm:$0xff]
    %v9995 = vld [vmem:[#allocation10 + $0x50] sm:$0xff]
    %v9996 = vld [vmem:[#allocation10 + $0x58] sm:$0xff]
    %v9997 = vld [vmem:[#allocation10 + $0x60] sm:$0xff]
    %v9998 = vld [vmem:[#allocation10 + $0x68] sm:$0xff]
    %v9999 = vld [vmem:[#allocation10 + $0x70] sm:$0xff]
    %v10000 = vld [vmem:[#allocation10 + $0x78] sm:$0xff]
    %v10001 = vld [vmem:[#allocation10 + $0x80] sm:$0xff]
    %v10002 = vld [vmem:[#allocation10 + $0x88] sm:$0xff]
    %v10003 = vld [vmem:[#allocation10 + $0x90] sm:$0xff]
    %v10004 = vld [vmem:[#allocation10 + $0x98] sm:$0xff]
    %v10005 = vld [vmem:[#allocation10 + $0xa0] sm:$0xff]
    %v10006 = vld [vmem:[#allocation10 + $0xa8] sm:$0xff]
    %v10007 = vld [vmem:[#allocation10 + $0xb0] sm:$0xff]
    %v10008 = vld [vmem:[#allocation10 + $0xb8] sm:$0xff]
    %v10009 = vld [vmem:[#allocation10 + $0xc0] sm:$0xff]
    %v10010 = vld [vmem:[#allocation10 + $0xc8] sm:$0xff]
    %v10011 = vld [vmem:[#allocation10 + $0xd0] sm:$0xff]
    %v10012 = vld [vmem:[#allocation10 + $0xd8] sm:$0xff]
    %v10013 = vld [vmem:[#allocation10 + $0xe0] sm:$0xff]
    %v10014 = vld [vmem:[#allocation10 + $0xe8] sm:$0xff]
    %v10015 = vld [vmem:[#allocation10 + $0xf0] sm:$0xff]
    %v10016 = vld [vmem:[#allocation10 + $0xf8] sm:$0xff]
    %v10017 = vld [vmem:[#allocation10 + $0x100] sm:$0xff]
    %v10018 = vld [vmem:[#allocation10 + $0x108] sm:$0xff]
    %v10019 = vld [vmem:[#allocation10 + $0x110] sm:$0xff]
    %v10020 = vld [vmem:[#allocation10 + $0x118] sm:$0xff]
    %v10021 = vld [vmem:[#allocation10 + $0x120] sm:$0xff]
    %v10022 = vld [vmem:[#allocation10 + $0x128] sm:$0xff]
    %v10023 = vld [vmem:[#allocation10 + $0x130] sm:$0xff]
    %v10024 = vld [vmem:[#allocation10 + $0x138] sm:$0xff]
    %v10025 = vld [vmem:[#allocation10 + $0x140] sm:$0xff]
    %v10026 = vld [vmem:[#allocation10 + $0x148] sm:$0xff]
    %v10027 = vld [vmem:[#allocation10 + $0x150] sm:$0xff]
    %v10028 = vld [vmem:[#allocation10 + $0x158] sm:$0xff]
    %v10029 = vld [vmem:[#allocation10 + $0x160] sm:$0xff]
    %v10030 = vld [vmem:[#allocation10 + $0x168] sm:$0xff]
    %v10031 = vld [vmem:[#allocation10 + $0x170] sm:$0xff]
    %v10032 = vld [vmem:[#allocation10 + $0x178] sm:$0xff]
    %v10033 = vld [vmem:[#allocation10 + $0x180] sm:$0xff]
    %v10034 = vld [vmem:[#allocation10 + $0x188] sm:$0xff]
    %v10035 = vld [vmem:[#allocation10 + $0x190] sm:$0xff]
    %v10036 = vld [vmem:[#allocation10 + $0x198] sm:$0xff]
    %v10037 = vld [vmem:[#allocation10 + $0x1a0] sm:$0xff]
    %v10038 = vld [vmem:[#allocation10 + $0x1a8] sm:$0xff]
    %v10039 = vld [vmem:[#allocation10 + $0x1b0] sm:$0xff]
    %v10040 = vld [vmem:[#allocation10 + $0x1b8] sm:$0xff]
    %v10041 = vld [vmem:[#allocation10 + $0x1c0] sm:$0xff]
    %v10042 = vld [vmem:[#allocation10 + $0x1c8] sm:$0xff]
    %v10043 = vld [vmem:[#allocation10 + $0x1d0] sm:$0xff]
    %v10044 = vld [vmem:[#allocation10 + $0x1d8] sm:$0xff]
    %v10045 = vld [vmem:[#allocation10 + $0x1e0] sm:$0xff]
    %v10046 = vld [vmem:[#allocation10 + $0x1e8] sm:$0xff]
    %v10047 = vld [vmem:[#allocation10 + $0x1f0] sm:$0xff]
    %v10048 = vld [vmem:[#allocation10 + $0x1f8] sm:$0xff]
    %v10049 = vld [vmem:[#allocation5 + $0xc] sm:$0x3]
    %v10050 = vpack.c.bf16 %v9981, %v9981
    %v10051 = vpack.c.bf16 %v9982, %v9982
    %v10052 = vpack.c.bf16 %v9983, %v9983
    %v10053 = vpack.c.bf16 %v9984, %v9984
    %v10055 = vlaneseq
    %v10056 = vshrl.u32 %v10055, 7
    %v10057 = vsub.s32 0, %v10056
    %v10058 = vrot.slane %v10049, %v10057
    %v10059 = vlaneseq
    %v10060 = vshrl.u32 %v10059, 7
    %v10061 = vsub.s32 1, %v10060
    %v10062 = vrot.slane %v10049, %v10061
    %v10129 = vunpack.c.l.b16 %v9985
    %v10130 = vunpack.c.h.b16 %v9985
    %v10131 = vunpack.c.l.b16 %v9986
    %v10132 = vunpack.c.h.b16 %v9986
    %v10133 = vunpack.c.l.b16 %v9987
    %v10134 = vunpack.c.h.b16 %v9987
    %v10135 = vunpack.c.l.b16 %v9988
    %v10136 = vunpack.c.h.b16 %v9988
    %v10137 = vunpack.c.l.b16 %v9989
    %v10138 = vunpack.c.h.b16 %v9989
    %v10139 = vunpack.c.l.b16 %v9990
    %v10140 = vunpack.c.h.b16 %v9990
    %v10141 = vunpack.c.l.b16 %v9991
    %v10142 = vunpack.c.h.b16 %v9991
    %v10143 = vunpack.c.l.b16 %v9992
    %v10144 = vunpack.c.h.b16 %v9992
    %v10145 = vunpack.c.l.b16 %v9993
    %v10146 = vunpack.c.h.b16 %v9993
    %v10147 = vunpack.c.l.b16 %v9994
    %v10148 = vunpack.c.h.b16 %v9994
    %v10149 = vunpack.c.l.b16 %v9995
    %v10150 = vunpack.c.h.b16 %v9995
    %v10151 = vunpack.c.l.b16 %v9996
    %v10152 = vunpack.c.h.b16 %v9996
    %v10153 = vunpack.c.l.b16 %v9997
    %v10154 = vunpack.c.h.b16 %v9997
    %v10155 = vunpack.c.l.b16 %v9998
    %v10156 = vunpack.c.h.b16 %v9998
    %v10157 = vunpack.c.l.b16 %v9999
    %v10158 = vunpack.c.h.b16 %v9999
    %v10159 = vunpack.c.l.b16 %v10000
    %v10160 = vunpack.c.h.b16 %v10000
    %v10161 = vunpack.c.l.b16 %v10001
    %v10162 = vunpack.c.h.b16 %v10001
    %v10163 = vunpack.c.l.b16 %v10002
    %v10164 = vunpack.c.h.b16 %v10002
    %v10165 = vunpack.c.l.b16 %v10003
    %v10166 = vunpack.c.h.b16 %v10003
    %v10167 = vunpack.c.l.b16 %v10004
    %v10168 = vunpack.c.h.b16 %v10004
    %v10169 = vunpack.c.l.b16 %v10005
    %v10170 = vunpack.c.h.b16 %v10005
    %v10171 = vunpack.c.l.b16 %v10006
    %v10172 = vunpack.c.h.b16 %v10006
    %v10173 = vunpack.c.l.b16 %v10007
    %v10174 = vunpack.c.h.b16 %v10007
    %v10175 = vunpack.c.l.b16 %v10008
    %v10176 = vunpack.c.h.b16 %v10008
    %v10177 = vunpack.c.l.b16 %v10009
    %v10178 = vunpack.c.h.b16 %v10009
    %v10179 = vunpack.c.l.b16 %v10010
    %v10180 = vunpack.c.h.b16 %v10010
    %v10181 = vunpack.c.l.b16 %v10011
    %v10182 = vunpack.c.h.b16 %v10011
    %v10183 = vunpack.c.l.b16 %v10012
    %v10184 = vunpack.c.h.b16 %v10012
    %v10185 = vunpack.c.l.b16 %v10013
    %v10186 = vunpack.c.h.b16 %v10013
    %v10187 = vunpack.c.l.b16 %v10014
    %v10188 = vunpack.c.h.b16 %v10014
    %v10189 = vunpack.c.l.b16 %v10015
    %v10190 = vunpack.c.h.b16 %v10015
    %v10191 = vunpack.c.l.b16 %v10016
    %v10192 = vunpack.c.h.b16 %v10016
    %v10193 = vunpack.c.l.b16 %v10017
    %v10194 = vunpack.c.h.b16 %v10017
    %v10195 = vunpack.c.l.b16 %v10018
    %v10196 = vunpack.c.h.b16 %v10018
    %v10197 = vunpack.c.l.b16 %v10019
    %v10198 = vunpack.c.h.b16 %v10019
    %v10199 = vunpack.c.l.b16 %v10020
    %v10200 = vunpack.c.h.b16 %v10020
    %v10201 = vunpack.c.l.b16 %v10021
    %v10202 = vunpack.c.h.b16 %v10021
    %v10203 = vunpack.c.l.b16 %v10022
    %v10204 = vunpack.c.h.b16 %v10022
    %v10205 = vunpack.c.l.b16 %v10023
    %v10206 = vunpack.c.h.b16 %v10023
    %v10207 = vunpack.c.l.b16 %v10024
    %v10208 = vunpack.c.h.b16 %v10024
    %v10209 = vunpack.c.l.b16 %v10025
    %v10210 = vunpack.c.h.b16 %v10025
    %v10211 = vunpack.c.l.b16 %v10026
    %v10212 = vunpack.c.h.b16 %v10026
    %v10213 = vunpack.c.l.b16 %v10027
    %v10214 = vunpack.c.h.b16 %v10027
    %v10215 = vunpack.c.l.b16 %v10028
    %v10216 = vunpack.c.h.b16 %v10028
    %v10217 = vunpack.c.l.b16 %v10029
    %v10218 = vunpack.c.h.b16 %v10029
    %v10219 = vunpack.c.l.b16 %v10030
    %v10220 = vunpack.c.h.b16 %v10030
    %v10221 = vunpack.c.l.b16 %v10031
    %v10222 = vunpack.c.h.b16 %v10031
    %v10223 = vunpack.c.l.b16 %v10032
    %v10224 = vunpack.c.h.b16 %v10032
    %v10225 = vunpack.c.l.b16 %v10033
    %v10226 = vunpack.c.h.b16 %v10033
    %v10227 = vunpack.c.l.b16 %v10034
    %v10228 = vunpack.c.h.b16 %v10034
    %v10229 = vunpack.c.l.b16 %v10035
    %v10230 = vunpack.c.h.b16 %v10035
    %v10231 = vunpack.c.l.b16 %v10036
    %v10232 = vunpack.c.h.b16 %v10036
    %v10233 = vunpack.c.l.b16 %v10037
    %v10234 = vunpack.c.h.b16 %v10037
    %v10235 = vunpack.c.l.b16 %v10038
    %v10236 = vunpack.c.h.b16 %v10038
    %v10237 = vunpack.c.l.b16 %v10039
    %v10238 = vunpack.c.h.b16 %v10039
    %v10239 = vunpack.c.l.b16 %v10040
    %v10240 = vunpack.c.h.b16 %v10040
    %v10241 = vunpack.c.l.b16 %v10041
    %v10242 = vunpack.c.h.b16 %v10041
    %v10243 = vunpack.c.l.b16 %v10042
    %v10244 = vunpack.c.h.b16 %v10042
    %v10245 = vunpack.c.l.b16 %v10043
    %v10246 = vunpack.c.h.b16 %v10043
    %v10247 = vunpack.c.l.b16 %v10044
    %v10248 = vunpack.c.h.b16 %v10044
    %v10249 = vunpack.c.l.b16 %v10045
    %v10250 = vunpack.c.h.b16 %v10045
    %v10251 = vunpack.c.l.b16 %v10046
    %v10252 = vunpack.c.h.b16 %v10046
    %v10253 = vunpack.c.l.b16 %v10047
    %v10254 = vunpack.c.h.b16 %v10047
    %v10255 = vunpack.c.l.b16 %v10048
    %v10256 = vunpack.c.h.b16 %v10048
    %v10257 = vpack.c.b16 %v10131, %v10129
    %v10258 = vpack.c.b16 %v10132, %v10130
    %v10259 = vpack.c.b16 %v10135, %v10133
    %v10260 = vpack.c.b16 %v10136, %v10134
    %v10261 = vpack.c.b16 %v10139, %v10137
    %v10262 = vpack.c.b16 %v10140, %v10138
    %v10263 = vpack.c.b16 %v10143, %v10141
    %v10264 = vpack.c.b16 %v10144, %v10142
    %v10265 = vpack.c.b16 %v10147, %v10145
    %v10266 = vpack.c.b16 %v10148, %v10146
    %v10267 = vpack.c.b16 %v10151, %v10149
    %v10268 = vpack.c.b16 %v10152, %v10150
    %v10269 = vpack.c.b16 %v10155, %v10153
    %v10270 = vpack.c.b16 %v10156, %v10154
    %v10271 = vpack.c.b16 %v10159, %v10157
    %v10272 = vpack.c.b16 %v10160, %v10158
    %v10273 = vpack.c.b16 %v10163, %v10161
    %v10274 = vpack.c.b16 %v10164, %v10162
    %v10275 = vpack.c.b16 %v10167, %v10165
    %v10276 = vpack.c.b16 %v10168, %v10166
    %v10277 = vpack.c.b16 %v10171, %v10169
    %v10278 = vpack.c.b16 %v10172, %v10170
    %v10279 = vpack.c.b16 %v10175, %v10173
    %v10280 = vpack.c.b16 %v10176, %v10174
    %v10281 = vpack.c.b16 %v10179, %v10177
    %v10282 = vpack.c.b16 %v10180, %v10178
    %v10283 = vpack.c.b16 %v10183, %v10181
    %v10284 = vpack.c.b16 %v10184, %v10182
    %v10285 = vpack.c.b16 %v10187, %v10185
    %v10286 = vpack.c.b16 %v10188, %v10186
    %v10287 = vpack.c.b16 %v10191, %v10189
    %v10288 = vpack.c.b16 %v10192, %v10190
    %v10289 = vpack.c.b16 %v10195, %v10193
    %v10290 = vpack.c.b16 %v10196, %v10194
    %v10291 = vpack.c.b16 %v10199, %v10197
    %v10292 = vpack.c.b16 %v10200, %v10198
    %v10293 = vpack.c.b16 %v10203, %v10201
    %v10294 = vpack.c.b16 %v10204, %v10202
    %v10295 = vpack.c.b16 %v10207, %v10205
    %v10296 = vpack.c.b16 %v10208, %v10206
    %v10297 = vpack.c.b16 %v10211, %v10209
    %v10298 = vpack.c.b16 %v10212, %v10210
    %v10299 = vpack.c.b16 %v10215, %v10213
    %v10300 = vpack.c.b16 %v10216, %v10214
    %v10301 = vpack.c.b16 %v10219, %v10217
    %v10302 = vpack.c.b16 %v10220, %v10218
    %v10303 = vpack.c.b16 %v10223, %v10221
    %v10304 = vpack.c.b16 %v10224, %v10222
    %v10305 = vpack.c.b16 %v10227, %v10225
    %v10306 = vpack.c.b16 %v10228, %v10226
    %v10307 = vpack.c.b16 %v10231, %v10229
    %v10308 = vpack.c.b16 %v10232, %v10230
    %v10309 = vpack.c.b16 %v10235, %v10233
    %v10310 = vpack.c.b16 %v10236, %v10234
    %v10311 = vpack.c.b16 %v10239, %v10237
    %v10312 = vpack.c.b16 %v10240, %v10238
    %v10313 = vpack.c.b16 %v10243, %v10241
    %v10314 = vpack.c.b16 %v10244, %v10242
    %v10315 = vpack.c.b16 %v10247, %v10245
    %v10316 = vpack.c.b16 %v10248, %v10246
    %v10317 = vpack.c.b16 %v10251, %v10249
    %v10318 = vpack.c.b16 %v10252, %v10250
    %v10319 = vpack.c.b16 %v10255, %v10253
    %v10320 = vpack.c.b16 %v10256, %v10254
    %10385 = vmatprep.subr.bf16.mxu0 %v10272
    %10386 = vmatpush1.bf16.msra.mxu0 %v10271
    %10387 = vmatprep.subr.bf16.mxu0 %v10270
    %10388 = vmatpush1.bf16.msra.mxu0 %v10269
    %10389 = vmatprep.subr.bf16.mxu0 %v10268
    %10390 = vmatpush1.bf16.msra.mxu0 %v10267
    %10391 = vmatprep.subr.bf16.mxu0 %v10266
    %10392 = vmatpush1.bf16.msra.mxu0 %v10265
    %10393 = vmatprep.subr.bf16.mxu0 %v10264
    %10394 = vmatpush1.bf16.msra.mxu0 %v10263
    %10395 = vmatprep.subr.bf16.mxu0 %v10262
    %10396 = vmatpush1.bf16.msra.mxu0 %v10261
    %10397 = vmatprep.subr.bf16.mxu0 %v10260
    %10398 = vmatpush1.bf16.msra.mxu0 %v10259
    %10399 = vmatprep.subr.bf16.mxu0 %v10258
    %10400 = vmatpush1.bf16.msra.mxu0 %v10257
    %10401 = vmatprep.subr.bf16.mxu0 %v10288
    %10402 = vmatpush2.bf16.msra.mxu0 %v10287
    %10403 = vmatprep.subr.bf16.mxu0 %v10286
    %10404 = vmatpush2.bf16.msra.mxu0 %v10285
    %10405 = vmatprep.subr.bf16.mxu0 %v10284
    %10406 = vmatpush2.bf16.msra.mxu0 %v10283
    %10407 = vmatprep.subr.bf16.mxu0 %v10282
    %10408 = vmatpush2.bf16.msra.mxu0 %v10281
    %10409 = vmatprep.subr.bf16.mxu0 %v10280
    %10410 = vmatpush2.bf16.msra.mxu0 %v10279
    %10411 = vmatprep.subr.bf16.mxu0 %v10278
    %10412 = vmatpush2.bf16.msra.mxu0 %v10277
    %10413 = vmatprep.subr.bf16.mxu0 %v10276
    %10414 = vmatpush2.bf16.msra.mxu0 %v10275
    %10415 = vmatprep.subr.bf16.mxu0 %v10274
    %10416 = vmatpush2.bf16.msra.mxu0 %v10273
    %10417 = vmatprep.mubr.bf16.mxu0 %v10051
    %10418 = vmatmul.mubr.bf16.gmra.mxu0 %v10050
    %v10419 = vpop.f32.mrf.mxu0
    %v10420 = vadd.f32 %v10058, %v10419
    %v10421 = vpop.f32.mrf.mxu0
    %v10422 = vadd.f32 %v10062, %v10421
    %v10423 = vpop.f32.mrf.mxu0
    %v10424 = vpop.f32.mrf.mxu0
    %10425 = vdwg.mxu0
    %10426 = vmatprep.subr.bf16.mxu0 %v10304
    %10427 = vmatpush1.bf16.msra.mxu0 %v10303
    %10428 = vmatprep.subr.bf16.mxu0 %v10302
    %10429 = vmatpush1.bf16.msra.mxu0 %v10301
    %10430 = vmatprep.subr.bf16.mxu0 %v10300
    %10431 = vmatpush1.bf16.msra.mxu0 %v10299
    %10432 = vmatprep.subr.bf16.mxu0 %v10298
    %10433 = vmatpush1.bf16.msra.mxu0 %v10297
    %10434 = vmatprep.subr.bf16.mxu0 %v10296
    %10435 = vmatpush1.bf16.msra.mxu0 %v10295
    %10436 = vmatprep.subr.bf16.mxu0 %v10294
    %10437 = vmatpush1.bf16.msra.mxu0 %v10293
    %10438 = vmatprep.subr.bf16.mxu0 %v10292
    %10439 = vmatpush1.bf16.msra.mxu0 %v10291
    %10440 = vmatprep.subr.bf16.mxu0 %v10290
    %10441 = vmatpush1.bf16.msra.mxu0 %v10289
    %10442 = vmatprep.subr.bf16.mxu0 %v10320
    %10443 = vmatpush2.bf16.msra.mxu0 %v10319
    %10444 = vmatprep.subr.bf16.mxu0 %v10318
    %10445 = vmatpush2.bf16.msra.mxu0 %v10317
    %10446 = vmatprep.subr.bf16.mxu0 %v10316
    %10447 = vmatpush2.bf16.msra.mxu0 %v10315
    %10448 = vmatprep.subr.bf16.mxu0 %v10314
    %10449 = vmatpush2.bf16.msra.mxu0 %v10313
    %10450 = vmatprep.subr.bf16.mxu0 %v10312
    %10451 = vmatpush2.bf16.msra.mxu0 %v10311
    %10452 = vmatprep.subr.bf16.mxu0 %v10310
    %10453 = vmatpush2.bf16.msra.mxu0 %v10309
    %10454 = vmatprep.subr.bf16.mxu0 %v10308
    %10455 = vmatpush2.bf16.msra.mxu0 %v10307
    %10456 = vmatprep.subr.bf16.mxu0 %v10306
    %10457 = vmatpush2.bf16.msra.mxu0 %v10305
    %10458 = vmatprep.mubr.bf16.mxu0 %v10053
    %10459 = vmatmul.mubr.bf16.gmra.mxu0 %v10052
    %v10460 = vpop.f32.mrf.mxu0
    %v10461 = vadd.f32 %v10420, %v10460
    %v10462 = vpop.f32.mrf.mxu0
    %v10463 = vadd.f32 %v10422, %v10462
    %v10464 = vpop.f32.mrf.mxu0
    %v10465 = vpop.f32.mrf.mxu0
    %10466 = vdwg.mxu0
    %v10467 = vmax.f32 %v10461, 0.0
    %v10468 = vmax.f32 %v10463, 0.0
    %v10469 = vld [vmem:[#allocation11] sm:$0xf]
    %v10470 = vld [vmem:[#allocation11 + $0x4] sm:$0xf]
    %v10471 = vld [vmem:[#allocation11 + $0x8] sm:$0xf]
    %v10472 = vld [vmem:[#allocation11 + $0xc] sm:$0xf]
    %v10473 = vld [vmem:[#allocation11 + $0x10] sm:$0xf]
    %v10474 = vld [vmem:[#allocation11 + $0x14] sm:$0xf]
    %v10475 = vld [vmem:[#allocation11 + $0x18] sm:$0xf]
    %v10476 = vld [vmem:[#allocation11 + $0x1c] sm:$0xf]
    %v10477 = vld [vmem:[#allocation11 + $0x20] sm:$0xf]
    %v10478 = vld [vmem:[#allocation11 + $0x24] sm:$0xf]
    %v10479 = vld [vmem:[#allocation11 + $0x28] sm:$0xf]
    %v10480 = vld [vmem:[#allocation11 + $0x2c] sm:$0xf]
    %v10481 = vld [vmem:[#allocation11 + $0x30] sm:$0xf]
    %v10482 = vld [vmem:[#allocation11 + $0x34] sm:$0xf]
    %v10483 = vld [vmem:[#allocation11 + $0x38] sm:$0xf]
    %v10484 = vld [vmem:[#allocation11 + $0x3c] sm:$0xf]
    %v10485 = vld [vmem:[#allocation11 + $0x40] sm:$0xf]
    %v10486 = vld [vmem:[#allocation11 + $0x44] sm:$0xf]
    %v10487 = vld [vmem:[#allocation11 + $0x48] sm:$0xf]
    %v10488 = vld [vmem:[#allocation11 + $0x4c] sm:$0xf]
    %v10489 = vld [vmem:[#allocation11 + $0x50] sm:$0xf]
    %v10490 = vld [vmem:[#allocation11 + $0x54] sm:$0xf]
    %v10491 = vld [vmem:[#allocation11 + $0x58] sm:$0xf]
    %v10492 = vld [vmem:[#allocation11 + $0x5c] sm:$0xf]
    %v10493 = vld [vmem:[#allocation11 + $0x60] sm:$0xf]
    %v10494 = vld [vmem:[#allocation11 + $0x64] sm:$0xf]
    %v10495 = vld [vmem:[#allocation11 + $0x68] sm:$0xf]
    %v10496 = vld [vmem:[#allocation11 + $0x6c] sm:$0xf]
    %v10497 = vld [vmem:[#allocation11 + $0x70] sm:$0xf]
    %v10498 = vld [vmem:[#allocation11 + $0x74] sm:$0xf]
    %v10499 = vld [vmem:[#allocation11 + $0x78] sm:$0xf]
    %v10500 = vld [vmem:[#allocation11 + $0x7c] sm:$0xf]
    %v10501 = vld [vmem:[#allocation5 + $0xe] sm:$0x1]
    %v10502 = vpack.c.bf16 %v10467, %v10467
    %v10503 = vpack.c.bf16 %v10468, %v10468
    %v10505 = vlaneseq
    %v10506 = vshrl.u32 %v10505, 7
    %v10507 = vsub.s32 0, %v10506
    %v10508 = vrot.slane %v10501, %v10507
    %v10542 = vunpack.c.l.b16 %v10469
    %v10543 = vunpack.c.l.b16 %v10470
    %v10544 = vunpack.c.l.b16 %v10471
    %v10545 = vunpack.c.l.b16 %v10472
    %v10546 = vunpack.c.l.b16 %v10473
    %v10547 = vunpack.c.l.b16 %v10474
    %v10548 = vunpack.c.l.b16 %v10475
    %v10549 = vunpack.c.l.b16 %v10476
    %v10550 = vunpack.c.l.b16 %v10477
    %v10551 = vunpack.c.l.b16 %v10478
    %v10552 = vunpack.c.l.b16 %v10479
    %v10553 = vunpack.c.l.b16 %v10480
    %v10554 = vunpack.c.l.b16 %v10481
    %v10555 = vunpack.c.l.b16 %v10482
    %v10556 = vunpack.c.l.b16 %v10483
    %v10557 = vunpack.c.l.b16 %v10484
    %v10558 = vunpack.c.l.b16 %v10485
    %v10559 = vunpack.c.l.b16 %v10486
    %v10560 = vunpack.c.l.b16 %v10487
    %v10561 = vunpack.c.l.b16 %v10488
    %v10562 = vunpack.c.l.b16 %v10489
    %v10563 = vunpack.c.l.b16 %v10490
    %v10564 = vunpack.c.l.b16 %v10491
    %v10565 = vunpack.c.l.b16 %v10492
    %v10566 = vunpack.c.l.b16 %v10493
    %v10567 = vunpack.c.l.b16 %v10494
    %v10568 = vunpack.c.l.b16 %v10495
    %v10569 = vunpack.c.l.b16 %v10496
    %v10570 = vunpack.c.l.b16 %v10497
    %v10571 = vunpack.c.l.b16 %v10498
    %v10572 = vunpack.c.l.b16 %v10499
    %v10573 = vunpack.c.l.b16 %v10500
    %v10574 = vpack.c.b16 %v10543, %v10542
    %v10575 = vpack.c.b16 %v10545, %v10544
    %v10576 = vpack.c.b16 %v10547, %v10546
    %v10577 = vpack.c.b16 %v10549, %v10548
    %v10578 = vpack.c.b16 %v10551, %v10550
    %v10579 = vpack.c.b16 %v10553, %v10552
    %v10580 = vpack.c.b16 %v10555, %v10554
    %v10581 = vpack.c.b16 %v10557, %v10556
    %v10582 = vpack.c.b16 %v10559, %v10558
    %v10583 = vpack.c.b16 %v10561, %v10560
    %v10584 = vpack.c.b16 %v10563, %v10562
    %v10585 = vpack.c.b16 %v10565, %v10564
    %v10586 = vpack.c.b16 %v10567, %v10566
    %v10587 = vpack.c.b16 %v10569, %v10568
    %v10588 = vpack.c.b16 %v10571, %v10570
    %v10589 = vpack.c.b16 %v10573, %v10572
    %10606 = vmatprep.subr.bf16.mxu0 0
    %10607 = vmatpush1.bf16.msra.mxu0 %v10581
    %10608 = vmatprep.subr.bf16.mxu0 0
    %10609 = vmatpush1.bf16.msra.mxu0 %v10580
    %10610 = vmatprep.subr.bf16.mxu0 0
    %10611 = vmatpush1.bf16.msra.mxu0 %v10579
    %10612 = vmatprep.subr.bf16.mxu0 0
    %10613 = vmatpush1.bf16.msra.mxu0 %v10578
    %10614 = vmatprep.subr.bf16.mxu0 0
    %10615 = vmatpush1.bf16.msra.mxu0 %v10577
    %10616 = vmatprep.subr.bf16.mxu0 0
    %10617 = vmatpush1.bf16.msra.mxu0 %v10576
    %10618 = vmatprep.subr.bf16.mxu0 0
    %10619 = vmatpush1.bf16.msra.mxu0 %v10575
    %10620 = vmatprep.subr.bf16.mxu0 0
    %10621 = vmatpush1.bf16.msra.mxu0 %v10574
    %10622 = vmatprep.subr.bf16.mxu0 0
    %10623 = vmatpush2.bf16.msra.mxu0 %v10589
    %10624 = vmatprep.subr.bf16.mxu0 0
    %10625 = vmatpush2.bf16.msra.mxu0 %v10588
    %10626 = vmatprep.subr.bf16.mxu0 0
    %10627 = vmatpush2.bf16.msra.mxu0 %v10587
    %10628 = vmatprep.subr.bf16.mxu0 0
    %10629 = vmatpush2.bf16.msra.mxu0 %v10586
    %10630 = vmatprep.subr.bf16.mxu0 0
    %10631 = vmatpush2.bf16.msra.mxu0 %v10585
    %10632 = vmatprep.subr.bf16.mxu0 0
    %10633 = vmatpush2.bf16.msra.mxu0 %v10584
    %10634 = vmatprep.subr.bf16.mxu0 0
    %10635 = vmatpush2.bf16.msra.mxu0 %v10583
    %10636 = vmatprep.subr.bf16.mxu0 0
    %10637 = vmatpush2.bf16.msra.mxu0 %v10582
    %10638 = vmatprep.mubr.bf16.mxu0 %v10503
    %10639 = vmatmul.mubr.bf16.gmra.mxu0 %v10502
    %v10640 = vpop.f32.mrf.mxu0
    %v10641 = vadd.f32 %v10508, %v10640
    %v10642 = vpop.f32.mrf.mxu0
    %v10643 = vpop.f32.mrf.mxu0
    %v10644 = vpop.f32.mrf.mxu0
    %10645 = vdwg.mxu0
    %v10646 = vmax.f32 %v10641, 0.0
    %v10647 = vld [vmem:[%s6] sm:$0xf]
    %v10648 = vld [vmem:[%s6 + $0x4] sm:$0xf]
    %v10649 = vld [vmem:[%s6 + $0x8] sm:$0xf]
    %v10650 = vld [vmem:[%s6 + $0xc] sm:$0xf]
    %v10651 = vld [vmem:[%s6 + $0x10] sm:$0xf]
    %v10652 = vld [vmem:[%s6 + $0x14] sm:$0xf]
    %v10653 = vld [vmem:[%s6 + $0x18] sm:$0xf]
    %v10654 = vld [vmem:[%s6 + $0x1c] sm:$0xf]
    %v10655 = vld [vmem:[%s6 + $0x20] sm:$0xf]
    %v10656 = vld [vmem:[%s6 + $0x24] sm:$0xf]
    %v10657 = vld [vmem:[%s6 + $0x28] sm:$0xf]
    %v10658 = vld [vmem:[%s6 + $0x2c] sm:$0xf]
    %v10659 = vld [vmem:[%s6 + $0x30] sm:$0xf]
    %v10660 = vld [vmem:[%s6 + $0x34] sm:$0xf]
    %v10661 = vld [vmem:[%s6 + $0x38] sm:$0xf]
    %v10662 = vld [vmem:[%s6 + $0x3c] sm:$0xf]
    %v10663 = vld [vmem:[#allocation5 + $0xf] sm:$0x1]
    %v10664 = vpack.c.bf16 %v10646, %v10646
    %v10666 = vlaneseq
    %v10667 = vshrl.u32 %v10666, 7
    %v10668 = vsub.s32 0, %v10667
    %v10669 = vrot.slane %v10663, %v10668
    %v10687 = vunpack.c.l.b16 %v10647
    %v10688 = vunpack.c.l.b16 %v10648
    %v10689 = vunpack.c.l.b16 %v10649
    %v10690 = vunpack.c.l.b16 %v10650
    %v10691 = vunpack.c.l.b16 %v10651
    %v10692 = vunpack.c.l.b16 %v10652
    %v10693 = vunpack.c.l.b16 %v10653
    %v10694 = vunpack.c.l.b16 %v10654
    %v10695 = vunpack.c.l.b16 %v10655
    %v10696 = vunpack.c.l.b16 %v10656
    %v10697 = vunpack.c.l.b16 %v10657
    %v10698 = vunpack.c.l.b16 %v10658
    %v10699 = vunpack.c.l.b16 %v10659
    %v10700 = vunpack.c.l.b16 %v10660
    %v10701 = vunpack.c.l.b16 %v10661
    %v10702 = vunpack.c.l.b16 %v10662
    %v10703 = vpack.c.b16 %v10688, %v10687
    %v10704 = vpack.c.b16 %v10690, %v10689
    %v10705 = vpack.c.b16 %v10692, %v10691
    %v10706 = vpack.c.b16 %v10694, %v10693
    %v10707 = vpack.c.b16 %v10696, %v10695
    %v10708 = vpack.c.b16 %v10698, %v10697
    %v10709 = vpack.c.b16 %v10700, %v10699
    %v10710 = vpack.c.b16 %v10702, %v10701
    %10719 = vmatprep.subr.bf16.mxu0 0
    %10720 = vmatpush1.bf16.msra.mxu0 %v10710
    %10721 = vmatprep.subr.bf16.mxu0 0
    %10722 = vmatpush1.bf16.msra.mxu0 %v10709
    %10723 = vmatprep.subr.bf16.mxu0 0
    %10724 = vmatpush1.bf16.msra.mxu0 %v10708
    %10725 = vmatprep.subr.bf16.mxu0 0
    %10726 = vmatpush1.bf16.msra.mxu0 %v10707
    %10727 = vmatprep.subr.bf16.mxu0 0
    %10728 = vmatpush1.bf16.msra.mxu0 %v10706
    %10729 = vmatprep.subr.bf16.mxu0 0
    %10730 = vmatpush1.bf16.msra.mxu0 %v10705
    %10731 = vmatprep.subr.bf16.mxu0 0
    %10732 = vmatpush1.bf16.msra.mxu0 %v10704
    %10733 = vmatprep.subr.bf16.mxu0 0
    %10734 = vmatpush1.bf16.msra.mxu0 %v10703
    %10735 = vmatprep.subr.bf16.mxu0 0
    %10736 = vmatpush2.bf16.msra.mxu0 0
    %10737 = vmatprep.subr.bf16.mxu0 0
    %10738 = vmatpush2.bf16.msra.mxu0 0
    %10739 = vmatprep.subr.bf16.mxu0 0
    %10740 = vmatpush2.bf16.msra.mxu0 0
    %10741 = vmatprep.subr.bf16.mxu0 0
    %10742 = vmatpush2.bf16.msra.mxu0 0
    %10743 = vmatprep.subr.bf16.mxu0 0
    %10744 = vmatpush2.bf16.msra.mxu0 0
    %10745 = vmatprep.subr.bf16.mxu0 0
    %10746 = vmatpush2.bf16.msra.mxu0 0
    %10747 = vmatprep.subr.bf16.mxu0 0
    %10748 = vmatpush2.bf16.msra.mxu0 0
    %10749 = vmatprep.subr.bf16.mxu0 0
    %10750 = vmatpush2.bf16.msra.mxu0 0
    %10751 = vmatprep.mubr.bf16.mxu0 0
    %10752 = vmatmul.mubr.bf16.gmra.mxu0 %v10664
    %v10753 = vpop.f32.mrf.mxu0
    %v10754 = vadd.f32 %v10669, %v10753
    %v10755 = vpop.f32.mrf.mxu0
    %v10756 = vpop.f32.mrf.mxu0
    %v10757 = vpop.f32.mrf.mxu0
    %10758 = vdwg.mxu0
    %v10759 = vmax.f32 %v10754, 0.0
    %v10760 = vld [vmem:[%s7] sm:$0xf]
    %v10761 = vld [vmem:[%s7 + $0x4] sm:$0xf]
    %v10762 = vld [vmem:[%s7 + $0x8] sm:$0xf]
    %v10763 = vld [vmem:[%s7 + $0xc] sm:$0xf]
    %v10764 = vld [vmem:[%s7 + $0x10] sm:$0xf]
    %v10765 = vld [vmem:[%s7 + $0x14] sm:$0xf]
    %v10766 = vld [vmem:[%s7 + $0x18] sm:$0xf]
    %v10767 = vld [vmem:[%s7 + $0x1c] sm:$0xf]
    %v10768 = vld [vmem:[#allocation5 + $0x10] sm:$0x1]
    %v10769 = vpack.c.bf16 %v10759, %v10759
    %v10771 = vlaneseq
    %v10772 = vshrl.u32 %v10771, 7
    %v10773 = vsub.s32 0, %v10772
    %v10774 = vrot.slane %v10768, %v10773
    %v10784 = vunpack.c.l.b16 %v10760
    %v10785 = vunpack.c.l.b16 %v10761
    %v10786 = vunpack.c.l.b16 %v10762
    %v10787 = vunpack.c.l.b16 %v10763
    %v10788 = vunpack.c.l.b16 %v10764
    %v10789 = vunpack.c.l.b16 %v10765
    %v10790 = vunpack.c.l.b16 %v10766
    %v10791 = vunpack.c.l.b16 %v10767
    %v10792 = vpack.c.b16 %v10785, %v10784
    %v10793 = vpack.c.b16 %v10787, %v10786
    %v10794 = vpack.c.b16 %v10789, %v10788
    %v10795 = vpack.c.b16 %v10791, %v10790
    %vm10800 = vcmask 523264
    %v10802 = vsel %vm10800, %v10769, 0
    %10804 = vmatprep.subr.bf16.mxu0 0
    %10805 = vmatpush1.bf16.msra.mxu0 0
    %10806 = vmatprep.subr.bf16.mxu0 0
    %10807 = vmatpush1.bf16.msra.mxu0 0
    %10808 = vmatprep.subr.bf16.mxu0 0
    %10809 = vmatpush1.bf16.msra.mxu0 0
    %10810 = vmatprep.subr.bf16.mxu0 0
    %10811 = vmatpush1.bf16.msra.mxu0 0
    %10812 = vmatprep.subr.bf16.mxu0 0
    %10813 = vmatpush1.bf16.msra.mxu0 %v10795
    %10814 = vmatprep.subr.bf16.mxu0 0
    %10815 = vmatpush1.bf16.msra.mxu0 %v10794
    %10816 = vmatprep.subr.bf16.mxu0 0
    %10817 = vmatpush1.bf16.msra.mxu0 %v10793
    %10818 = vmatprep.subr.bf16.mxu0 0
    %10819 = vmatpush1.bf16.msra.mxu0 %v10792
    %10820 = vmatprep.subr.bf16.mxu0 0
    %10821 = vmatpush2.bf16.msra.mxu0 0
    %10822 = vmatprep.subr.bf16.mxu0 0
    %10823 = vmatpush2.bf16.msra.mxu0 0
    %10824 = vmatprep.subr.bf16.mxu0 0
    %10825 = vmatpush2.bf16.msra.mxu0 0
    %10826 = vmatprep.subr.bf16.mxu0 0
    %10827 = vmatpush2.bf16.msra.mxu0 0
    %10828 = vmatprep.subr.bf16.mxu0 0
    %10829 = vmatpush2.bf16.msra.mxu0 0
    %10830 = vmatprep.subr.bf16.mxu0 0
    %10831 = vmatpush2.bf16.msra.mxu0 0
    %10832 = vmatprep.subr.bf16.mxu0 0
    %10833 = vmatpush2.bf16.msra.mxu0 0
    %10834 = vmatprep.subr.bf16.mxu0 0
    %10835 = vmatpush2.bf16.msra.mxu0 0
    %10836 = vmatprep.mubr.bf16.mxu0 0
    %10837 = vmatmul.mubr.bf16.gmra.mxu0 %v10802
    %v10838 = vpop.f32.mrf.mxu0
    %v10839 = vadd.f32 %v10774, %v10838
    %v10840 = vpop.f32.mrf.mxu0
    %v10841 = vpop.f32.mrf.mxu0
    %v10842 = vpop.f32.mrf.mxu0
    %10843 = vdwg.mxu0
    %v10844 = vmax.f32 %v10839, 0.0
    %v10845 = vld [vmem:[%s8] sm:$0xf]
    %v10846 = vld [vmem:[%s8 + $0x4] sm:$0xf]
    %v10847 = vld [vmem:[%s8 + $0x8] sm:$0xf]
    %v10848 = vld [vmem:[%s8 + $0xc] sm:$0xf]
    %v10849 = vld [vmem:[#allocation5 + $0x11] sm:$0x1]
    %v10850 = vpack.c.bf16 %v10844, %v10844
    %v10852 = vlaneseq
    %v10853 = vshrl.u32 %v10852, 7
    %v10854 = vsub.s32 0, %v10853
    %v10855 = vrot.slane %v10849, %v10854
    %v10861 = vunpack.c.l.b16 %v10845
    %v10862 = vunpack.c.l.b16 %v10846
    %v10863 = vunpack.c.l.b16 %v10847
    %v10864 = vunpack.c.l.b16 %v10848
    %v10865 = vpack.c.b16 %v10862, %v10861
    %v10866 = vpack.c.b16 %v10864, %v10863
    %vm10869 = vcmask 261120
    %v10871 = vsel %vm10869, %v10850, 0
    %10873 = vmatprep.subr.bf16.mxu0 0
    %10874 = vmatpush1.bf16.msra.mxu0 0
    %10875 = vmatprep.subr.bf16.mxu0 0
    %10876 = vmatpush1.bf16.msra.mxu0 0
    %10877 = vmatprep.subr.bf16.mxu0 0
    %10878 = vmatpush1.bf16.msra.mxu0 0
    %10879 = vmatprep.subr.bf16.mxu0 0
    %10880 = vmatpush1.bf16.msra.mxu0 0
    %10881 = vmatprep.subr.bf16.mxu0 0
    %10882 = vmatpush1.bf16.msra.mxu0 0
    %10883 = vmatprep.subr.bf16.mxu0 0
    %10884 = vmatpush1.bf16.msra.mxu0 0
    %10885 = vmatprep.subr.bf16.mxu0 0
    %10886 = vmatpush1.bf16.msra.mxu0 %v10866
    %10887 = vmatprep.subr.bf16.mxu0 0
    %10888 = vmatpush1.bf16.msra.mxu0 %v10865
    %10889 = vmatprep.subr.bf16.mxu0 0
    %10890 = vmatpush2.bf16.msra.mxu0 0
    %10891 = vmatprep.subr.bf16.mxu0 0
    %10892 = vmatpush2.bf16.msra.mxu0 0
    %10893 = vmatprep.subr.bf16.mxu0 0
    %10894 = vmatpush2.bf16.msra.mxu0 0
    %10895 = vmatprep.subr.bf16.mxu0 0
    %10896 = vmatpush2.bf16.msra.mxu0 0
    %10897 = vmatprep.subr.bf16.mxu0 0
    %10898 = vmatpush2.bf16.msra.mxu0 0
    %10899 = vmatprep.subr.bf16.mxu0 0
    %10900 = vmatpush2.bf16.msra.mxu0 0
    %10901 = vmatprep.subr.bf16.mxu0 0
    %10902 = vmatpush2.bf16.msra.mxu0 0
    %10903 = vmatprep.subr.bf16.mxu0 0
    %10904 = vmatpush2.bf16.msra.mxu0 0
    %10905 = vmatprep.mubr.bf16.mxu0 0
    %10906 = vmatmul.mubr.bf16.gmra.mxu0 %v10871
    %v10907 = vpop.f32.mrf.mxu0
    %v10908 = vadd.f32 %v10855, %v10907
    %v10909 = vpop.f32.mrf.mxu0
    %v10910 = vpop.f32.mrf.mxu0
    %v10911 = vpop.f32.mrf.mxu0
    %10912 = vdwg.mxu0
    %v10913 = vtanh.pop %v10908
    %vm10914 = vcmask 17408
    %10915 = vst.msk [vmem:[#allocation13] sm:$0x3] %vm10914, %v10913
    // Predicated region
    $region62: #{tpu_custom_call.1} parent=1 // pred_check
      _
    $region63: #{tpu_custom_call.1} parent=1 // pred_check_branch
      %10917 = sbr.rel (0) target = $region65
    $region64: #{tpu_custom_call.1} parent=1 // pred_region
      %s10919 = ssub.s32 32, 32
      %10920 = vsyncadd [#allocation4], %s10919
      %s10922 = sshll.u32 [#allocation13], 4
      %s10923 = int_to_ptr.vmem [resolvable:$true] %s10922
      %10925 = dma.vmem_to_hbm [thread:$0]  %s10923, 32, %s9, [#allocation4]
    $region65: #{tpu_custom_call.1} parent=1 // pred_fallthru
      _
    // Predicated region
    $region66: #{tpu_custom_call.1} parent=1 // pred_check
      _
    $region67: #{tpu_custom_call.1} parent=1 // pred_check_branch
      %10927 = sbr.rel (0) target = $region69
    $region68: #{tpu_custom_call.1} parent=1 // pred_region
      %10928 = dma.done [#allocation4], 32
    $region69: #{tpu_custom_call.1} parent=1 // pred_fallthru
      _
    %10929 = vsyncpa [#allocation3], 1
    %10930 = vsyncpa [#allocation6], 1
    %10931 = vsyncpa [#allocation9], 1
    %10932 = vsyncpa [#allocation12], 1
    %10933 = vsyncpa [#allocation4], 1

</llo_original>
